<compile_context>
chip_gen: v7x
topology: tpu7x:2x2x1
jax: 0.10.0
libtpu: 0.0.40
codegen_flags: <defaults>
</compile_context>

<pallas_src>
import numpy as np
import jax
import jax.numpy as jnp
from jax import lax
from jax.experimental import pallas as pl
from jax.experimental.pallas import tpu as pltpu


# ----------------------------- fused Pallas kernel ---------------------------

def _encoder_kernel(p1_ref, w1_ref, b1_ref,
                    s2_ref, w2_ref, b2_ref, g_ref, beta_ref,
                    s3_ref, w3_ref, b3_ref,
                    sf_ref, l1_ref, lb1_ref, l2_ref, lb2_ref,
                    o_ref):
    f32 = jnp.float32

    # ---- conv1 (1->8, s2, p1) as im2col GEMM + ReLU -------------------------
    y1 = jnp.dot(p1_ref[...], w1_ref[...], preferred_element_type=f32)
    y1 = jnp.maximum(y1 + b1_ref[...], 0.0)                      # (N*196, 8)

    # ---- conv2 (8->16, s2, p1): 9 taps, gather via selection matmuls --------
    acc2 = jnp.zeros((s2_ref.shape[1], w2_ref.shape[2]), f32)    # (N*49, 16)
    for t in range(9):
        tap = jnp.dot(s2_ref[t], y1, preferred_element_type=f32)      # (N*49, 8)
        acc2 = acc2 + jnp.dot(tap, w2_ref[t], preferred_element_type=f32)
    acc2 = acc2 + b2_ref[...]

    # BatchNorm2d(16): train-mode batch stats over rows (= N*H*W), biased var.
    m = jnp.mean(acc2, axis=0, keepdims=True)
    d = acc2 - m
    var = jnp.mean(d * d, axis=0, keepdims=True)
    y2 = d * lax.rsqrt(var + 1e-5) * g_ref[...] + beta_ref[...]
    y2 = jnp.maximum(y2, 0.0)                                    # (N*49, 16)

    # ---- conv3 (16->32, s2, p0) + ReLU ---------------------------------------
    acc3 = jnp.zeros((s3_ref.shape[1], w3_ref.shape[2]), f32)    # (N*9, 32)
    for t in range(9):
        tap = jnp.dot(s3_ref[t], y2, preferred_element_type=f32)      # (N*9, 16)
        acc3 = acc3 + jnp.dot(tap, w3_ref[t], preferred_element_type=f32)
    y3 = jnp.maximum(acc3 + b3_ref[...], 0.0)                    # (N*9, 32)

    # ---- flatten + Linear(288, fc2) + ReLU ------------------------------------
    # lw1 rows were pre-permuted to (spatial position, channel) order, so the
    # PyTorch channel-major flatten becomes a sum over the 9 spatial positions
    # of (N, 32) @ (32, fc2); the per-position row pick is a tiny 0/1 matmul.
    hid = jnp.zeros((sf_ref.shape[1], l1_ref.shape[2]), f32)     # (N, fc2)
    for p in range(9):
        rows = jnp.dot(sf_ref[p], y3, preferred_element_type=f32)     # (N, 32)
        hid = hid + jnp.dot(rows, l1_ref[p], preferred_element_type=f32)
    hid = jnp.maximum(hid + lb1_ref[...], 0.0)

    # ---- Linear(fc2, enc) ------------------------------------------------------
    o_ref[...] = jnp.dot(hid, l2_ref[...], preferred_element_type=f32) \
        + lb2_ref[...]


def _fs(shape):
    # full-array block, single grid point
    return pl.BlockSpec(shape, lambda *_: (0,) * len(shape))


# --------------------- one-time prep: weights & selections -------------------

def _conv_select(n_batch, h_in, w_in, h_out, w_out, stride, pad):
    """(9, N*h_out*w_out, N*h_in*w_in) 0/1 gather matrices, one per 3x3 tap.
    Row (n, oh, ow) of tap (kh, kw) picks input row (n, s*oh+kh-pad, s*ow+kw-pad),
    or is all-zero if that position lies in the conv zero-padding."""
    m_out, m_in = h_out * w_out, h_in * w_in
    s = np.zeros((9, n_batch * m_out, n_batch * m_in), np.float32)
    for kh in range(3):
        for kw in range(3):
            t = kh * 3 + kw
            for oh in range(h_out):
                for ow in range(w_out):
                    h = stride * oh + kh - pad
                    w = stride * ow + kw - pad
                    if 0 <= h < h_in and 0 <= w < w_in:
                        for n in range(n_batch):
                            s[t, n * m_out + oh * w_out + ow,
                                 n * m_in + h * w_in + w] = 1.0
    return jnp.asarray(s)


def _flatten_select(n_batch, n_pos):
    """(n_pos, N, N*n_pos): tap p picks row (n, p) out of the (N*n_pos) rows."""
    s = np.zeros((n_pos, n_batch, n_batch * n_pos), np.float32)
    for p in range(n_pos):
        for n in range(n_batch):
            s[p, n, n * n_pos + p] = 1.0
    return jnp.asarray(s)


def prepare_encoder(params, batch):
    """One-time weight permutation + selection-matrix construction."""
    fc2 = params["lw1"].shape[1]
    return {
        # conv weights in tap-major (kh, kw) order, each tap (Cin, Cout)
        "w1": params["cw1"].reshape(8, 9).T,                              # (9, 8)
        "b1": params["cb1"].reshape(1, 8),
        "w2": jnp.transpose(params["cw2"], (2, 3, 1, 0)).reshape(9, 8, 16),
        "b2": params["cb2"].reshape(1, 16),
        "g": params["bn_g"].reshape(1, 16),
        "beta": params["bn_b"].reshape(1, 16),
        "w3": jnp.transpose(params["cw3"], (2, 3, 1, 0)).reshape(9, 16, 32),
        "b3": params["cb3"].reshape(1, 32),
        # lw1 rows permuted from PyTorch (c, h, w) order to (position, channel)
        "l1": params["lw1"].reshape(32, 9, fc2).transpose(1, 0, 2),       # (9,32,fc2)
        "lb1": params["lb1"].reshape(1, fc2),
        "l2": params["lw2"],
        "lb2": params["lb2"].reshape(1, -1),
        # in-kernel gather matrices (conv2: 14x14->7x7 p1; conv3: 7x7->3x3 p0)
        "s2": _conv_select(batch, 14, 14, 7, 7, 2, 1),
        "s3": _conv_select(batch, 7, 7, 3, 3, 2, 0),
        "sf": _flatten_select(batch, 9),
    }


# --------------------------------- forward ------------------------------------

def encoder_forward(x_nchw, prep):
    """x_nchw: (N, 1, 28, 28) float32, PyTorch layout."""
    n = x_nchw.shape[0]

    # conv1 im2col on the raw 1-channel input — the only remaining XLA glue.
    x = x_nchw[:, 0].astype(jnp.float32)                         # (N, 28, 28)
    xp = jnp.pad(x, ((0, 0), (1, 1), (1, 1)))                    # (N, 30, 30)
    cols = [xp[:, kh:kh + 28:2, kw:kw + 28:2]
            for kh in range(3) for kw in range(3)]
    p1 = jnp.stack(cols, axis=-1).reshape(n * 196, 9)            # (N*196, 9)

    enc = prep["lb2"].shape[1]
    args = (p1, prep["w1"], prep["b1"],
            prep["s2"], prep["w2"], prep["b2"], prep["g"], prep["beta"],
            prep["s3"], prep["w3"], prep["b3"],
            prep["sf"], prep["l1"], prep["lb1"], prep["l2"], prep["lb2"])

    return pl.pallas_call(
        _encoder_kernel,
        out_shape=jax.ShapeDtypeStruct((n, enc), jnp.float32),
        grid=(1,),
        in_specs=[_fs(a.shape) for a in args],
        out_specs=_fs((n, enc)),
        compiler_params=pltpu.CompilerParams(
            dimension_semantics=("arbitrary",)),
    )(*args)


# ------------------------------ param init ------------------------------------

def init_params(key, encoded_space_dim, fc2_input_dim):
    ks = jax.random.split(key, 10)

    def conv_w(k, cout, cin):
        fan_in = cin * 9
        return (jax.random.normal(k, (cout, cin, 3, 3), jnp.float32)
                / jnp.sqrt(fan_in))

    def lin_w(k, din, dout):
        return jax.random.normal(k, (din, dout), jnp.float32) / jnp.sqrt(din)

    return {
        "cw1": conv_w(ks[0], 8, 1),
        "cb1": 0.01 * jax.random.normal(ks[1], (8,), jnp.float32),
        "cw2": conv_w(ks[2], 16, 8),
        "cb2": 0.01 * jax.random.normal(ks[3], (16,), jnp.float32),
        "bn_g": jnp.ones((16,), jnp.float32),
        "bn_b": jnp.zeros((16,), jnp.float32),
        "cw3": conv_w(ks[4], 32, 16),
        "cb3": 0.01 * jax.random.normal(ks[5], (32,), jnp.float32),
        "lw1": lin_w(ks[6], 3 * 3 * 32, fc2_input_dim),
        "lb1": 0.01 * jax.random.normal(ks[7], (fc2_input_dim,), jnp.float32),
        "lw2": lin_w(ks[8], fc2_input_dim, encoded_space_dim),
        "lb2": 0.01 * jax.random.normal(ks[9], (encoded_space_dim,),
                                        jnp.float32),
    }


# ---------------------- pure-JAX reference (sanity) ----------------------------

def encoder_reference(x_nchw, params):
    dn = ("NCHW", "OIHW", "NCHW")

    def conv(x, w, b, stride, pad):
        y = lax.conv_general_dilated(x, w, (stride, stride),
                                     [(pad, pad), (pad, pad)],
                                     dimension_numbers=dn)
        return y + b.reshape(1, -1, 1, 1)

    y = jnp.maximum(conv(x_nchw, params["cw1"], params["cb1"], 2, 1), 0.0)
    y = conv(y, params["cw2"], params["cb2"], 2, 1)
    m = jnp.mean(y, axis=(0, 2, 3), keepdims=True)
    v = jnp.mean((y - m) ** 2, axis=(0, 2, 3), keepdims=True)
    y = (y - m) * lax.rsqrt(v + 1e-5)
    y = y * params["bn_g"].reshape(1, -1, 1, 1) + params["bn_b"].reshape(1, -1, 1, 1)
    y = jnp.maximum(y, 0.0)
    y = jnp.maximum(conv(y, params["cw3"], params["cb3"], 2, 0), 0.0)
    flat = y.reshape(y.shape[0], -1)
    h = jnp.maximum(flat @ params["lw1"] + params["lb1"], 0.0)
    return h @ params["lw2"] + params["lb2"]


# ----------------------------------- main --------------------------------------

if __name__ == "__main__":
    encoded_space_dim = 8
    fc2_input_dim = 32
    batch = 2

    key = jax.random.PRNGKey(0)
    k_x, k_p = jax.random.split(key)
    # input spatial size is fixed at 28x28 by the 3*3*32 flatten in the module
    x = jax.random.normal(k_x, (batch, 1, 28, 28), jnp.float32)
    params = init_params(k_p, encoded_space_dim, fc2_input_dim)

    prep = prepare_encoder(params, batch)          # one-time weight/selection prep
    fwd = jax.jit(encoder_forward)

    out = jax.block_until_ready(fwd(x, prep))
    assert out.shape == (batch, encoded_space_dim)

    ref = jax.block_until_ready(encoder_reference(x, params))
    assert jnp.allclose(out, ref, rtol=1e-3, atol=1e-3), (
        f"max abs diff {jnp.max(jnp.abs(out - ref))}")

    print("KERNEL_OK")
</pallas_src>

<mosaic_0001>
module attributes {stable_mosaic.version = 11 : i64} {
  func.func @_encoder_kernel(%arg0: i32, %arg1: memref<392x9xf32, #tpu.memory_space<vmem>>, %arg2: memref<9x8xf32, #tpu.memory_space<vmem>>, %arg3: memref<1x8xf32, #tpu.memory_space<vmem>>, %arg4: memref<9x98x392xf32, #tpu.memory_space<vmem>>, %arg5: memref<9x8x16xf32, #tpu.memory_space<vmem>>, %arg6: memref<1x16xf32, #tpu.memory_space<vmem>>, %arg7: memref<1x16xf32, #tpu.memory_space<vmem>>, %arg8: memref<1x16xf32, #tpu.memory_space<vmem>>, %arg9: memref<9x18x98xf32, #tpu.memory_space<vmem>>, %arg10: memref<9x16x32xf32, #tpu.memory_space<vmem>>, %arg11: memref<1x32xf32, #tpu.memory_space<vmem>>, %arg12: memref<9x2x18xf32, #tpu.memory_space<vmem>>, %arg13: memref<9x32x32xf32, #tpu.memory_space<vmem>>, %arg14: memref<1x32xf32, #tpu.memory_space<vmem>>, %arg15: memref<32x8xf32, #tpu.memory_space<vmem>>, %arg16: memref<1x8xf32, #tpu.memory_space<vmem>>, %arg17: memref<2x8xf32, #tpu.memory_space<vmem>>) attributes {dimension_semantics = [#tpu.dimension_semantics<arbitrary>], iteration_bounds = array<i64: 1>, scalar_prefetch = 0 : i64, scratch_operands = 0 : i64, tpu.core_type = #tpu.core_type<tc>, window_params = [{pipeline_mode = #tpu.pipeline_mode<synchronous>, transform_indices = @transform_0, window_bounds = array<i64: 392, 9>}, {pipeline_mode = #tpu.pipeline_mode<synchronous>, transform_indices = @transform_1, window_bounds = array<i64: 9, 8>}, {pipeline_mode = #tpu.pipeline_mode<synchronous>, transform_indices = @transform_2, window_bounds = array<i64: 1, 8>}, {pipeline_mode = #tpu.pipeline_mode<synchronous>, transform_indices = @transform_3, window_bounds = array<i64: 9, 98, 392>}, {pipeline_mode = #tpu.pipeline_mode<synchronous>, transform_indices = @transform_4, window_bounds = array<i64: 9, 8, 16>}, {pipeline_mode = #tpu.pipeline_mode<synchronous>, transform_indices = @transform_5, window_bounds = array<i64: 1, 16>}, {pipeline_mode = #tpu.pipeline_mode<synchronous>, transform_indices = @transform_6, window_bounds = array<i64: 1, 16>}, {pipeline_mode = #tpu.pipeline_mode<synchronous>, transform_indices = @transform_7, window_bounds = array<i64: 1, 16>}, {pipeline_mode = #tpu.pipeline_mode<synchronous>, transform_indices = @transform_8, window_bounds = array<i64: 9, 18, 98>}, {pipeline_mode = #tpu.pipeline_mode<synchronous>, transform_indices = @transform_9, window_bounds = array<i64: 9, 16, 32>}, {pipeline_mode = #tpu.pipeline_mode<synchronous>, transform_indices = @transform_10, window_bounds = array<i64: 1, 32>}, {pipeline_mode = #tpu.pipeline_mode<synchronous>, transform_indices = @transform_11, window_bounds = array<i64: 9, 2, 18>}, {pipeline_mode = #tpu.pipeline_mode<synchronous>, transform_indices = @transform_12, window_bounds = array<i64: 9, 32, 32>}, {pipeline_mode = #tpu.pipeline_mode<synchronous>, transform_indices = @transform_13, window_bounds = array<i64: 1, 32>}, {pipeline_mode = #tpu.pipeline_mode<synchronous>, transform_indices = @transform_14, window_bounds = array<i64: 32, 8>}, {pipeline_mode = #tpu.pipeline_mode<synchronous>, transform_indices = @transform_15, window_bounds = array<i64: 1, 8>}, {pipeline_mode = #tpu.pipeline_mode<synchronous>, transform_indices = @transform_16, window_bounds = array<i64: 2, 8>}]} {
    %c0 = arith.constant 0 : index
    %c0_0 = arith.constant 0 : index
    %0 = vector.load %arg1[%c0, %c0_0] : memref<392x9xf32, #tpu.memory_space<vmem>>, vector<392x9xf32>
    %c0_1 = arith.constant 0 : index
    %c0_2 = arith.constant 0 : index
    %1 = vector.load %arg2[%c0_1, %c0_2] : memref<9x8xf32, #tpu.memory_space<vmem>>, vector<9x8xf32>
    %cst = arith.constant dense<0.000000e+00> : vector<392x8xf32>
    %2 = tpu.matmul %0, %1, %cst {dimension_numbers = #tpu.dot_dimension_numbers<[1], [0], [0], [1], [0, 0, 1, 1], [], []>} : vector<392x9xf32>, vector<9x8xf32>, vector<392x8xf32> -> vector<392x8xf32>
    %c0_3 = arith.constant 0 : index
    %c0_4 = arith.constant 0 : index
    %3 = vector.load %arg3[%c0_3, %c0_4] : memref<1x8xf32, #tpu.memory_space<vmem>>, vector<1x8xf32>
    %4 = vector.broadcast %3 : vector<1x8xf32> to vector<392x8xf32>
    %5 = arith.addf %2, %4 : vector<392x8xf32>
    %cst_5 = arith.constant 0.000000e+00 : f32
    %6 = vector.broadcast %cst_5 : f32 to vector<392x8xf32>
    %7 = arith.maximumf %5, %6 : vector<392x8xf32>
    %cst_6 = arith.constant 0.000000e+00 : f32
    %8 = vector.broadcast %cst_6 : f32 to vector<98x16xf32>
    %c0_7 = arith.constant 0 : index
    %c0_8 = arith.constant 0 : index
    %c0_9 = arith.constant 0 : index
    %9 = vector.load %arg4[%c0_7, %c0_8, %c0_9] : memref<9x98x392xf32, #tpu.memory_space<vmem>>, vector<1x98x392xf32>
    %10 = vector.shape_cast %9 : vector<1x98x392xf32> to vector<98x392xf32>
    %cst_10 = arith.constant dense<0.000000e+00> : vector<98x8xf32>
    %11 = tpu.matmul %10, %7, %cst_10 {dimension_numbers = #tpu.dot_dimension_numbers<[1], [0], [0], [1], [0, 0, 1, 1], [], []>} : vector<98x392xf32>, vector<392x8xf32>, vector<98x8xf32> -> vector<98x8xf32>
    %c0_11 = arith.constant 0 : index
    %c0_12 = arith.constant 0 : index
    %c0_13 = arith.constant 0 : index
    %12 = vector.load %arg5[%c0_11, %c0_12, %c0_13] : memref<9x8x16xf32, #tpu.memory_space<vmem>>, vector<1x8x16xf32>
    %13 = vector.shape_cast %12 : vector<1x8x16xf32> to vector<8x16xf32>
    %cst_14 = arith.constant dense<0.000000e+00> : vector<98x16xf32>
    %14 = tpu.matmul %11, %13, %cst_14 {dimension_numbers = #tpu.dot_dimension_numbers<[1], [0], [0], [1], [0, 0, 1, 1], [], []>} : vector<98x8xf32>, vector<8x16xf32>, vector<98x16xf32> -> vector<98x16xf32>
    %15 = arith.addf %8, %14 : vector<98x16xf32>
    %c1 = arith.constant 1 : index
    %c0_15 = arith.constant 0 : index
    %c0_16 = arith.constant 0 : index
    %16 = vector.load %arg4[%c1, %c0_15, %c0_16] : memref<9x98x392xf32, #tpu.memory_space<vmem>>, vector<1x98x392xf32>
    %17 = vector.shape_cast %16 : vector<1x98x392xf32> to vector<98x392xf32>
    %cst_17 = arith.constant dense<0.000000e+00> : vector<98x8xf32>
    %18 = tpu.matmul %17, %7, %cst_17 {dimension_numbers = #tpu.dot_dimension_numbers<[1], [0], [0], [1], [0, 0, 1, 1], [], []>} : vector<98x392xf32>, vector<392x8xf32>, vector<98x8xf32> -> vector<98x8xf32>
    %c1_18 = arith.constant 1 : index
    %c0_19 = arith.constant 0 : index
    %c0_20 = arith.constant 0 : index
    %19 = vector.load %arg5[%c1_18, %c0_19, %c0_20] : memref<9x8x16xf32, #tpu.memory_space<vmem>>, vector<1x8x16xf32>
    %20 = vector.shape_cast %19 : vector<1x8x16xf32> to vector<8x16xf32>
    %cst_21 = arith.constant dense<0.000000e+00> : vector<98x16xf32>
    %21 = tpu.matmul %18, %20, %cst_21 {dimension_numbers = #tpu.dot_dimension_numbers<[1], [0], [0], [1], [0, 0, 1, 1], [], []>} : vector<98x8xf32>, vector<8x16xf32>, vector<98x16xf32> -> vector<98x16xf32>
    %22 = arith.addf %15, %21 : vector<98x16xf32>
    %c2 = arith.constant 2 : index
    %c0_22 = arith.constant 0 : index
    %c0_23 = arith.constant 0 : index
    %23 = vector.load %arg4[%c2, %c0_22, %c0_23] : memref<9x98x392xf32, #tpu.memory_space<vmem>>, vector<1x98x392xf32>
    %24 = vector.shape_cast %23 : vector<1x98x392xf32> to vector<98x392xf32>
    %cst_24 = arith.constant dense<0.000000e+00> : vector<98x8xf32>
    %25 = tpu.matmul %24, %7, %cst_24 {dimension_numbers = #tpu.dot_dimension_numbers<[1], [0], [0], [1], [0, 0, 1, 1], [], []>} : vector<98x392xf32>, vector<392x8xf32>, vector<98x8xf32> -> vector<98x8xf32>
    %c2_25 = arith.constant 2 : index
    %c0_26 = arith.constant 0 : index
    %c0_27 = arith.constant 0 : index
    %26 = vector.load %arg5[%c2_25, %c0_26, %c0_27] : memref<9x8x16xf32, #tpu.memory_space<vmem>>, vector<1x8x16xf32>
    %27 = vector.shape_cast %26 : vector<1x8x16xf32> to vector<8x16xf32>
    %cst_28 = arith.constant dense<0.000000e+00> : vector<98x16xf32>
    %28 = tpu.matmul %25, %27, %cst_28 {dimension_numbers = #tpu.dot_dimension_numbers<[1], [0], [0], [1], [0, 0, 1, 1], [], []>} : vector<98x8xf32>, vector<8x16xf32>, vector<98x16xf32> -> vector<98x16xf32>
    %29 = arith.addf %22, %28 : vector<98x16xf32>
    %c3 = arith.constant 3 : index
    %c0_29 = arith.constant 0 : index
    %c0_30 = arith.constant 0 : index
    %30 = vector.load %arg4[%c3, %c0_29, %c0_30] : memref<9x98x392xf32, #tpu.memory_space<vmem>>, vector<1x98x392xf32>
    %31 = vector.shape_cast %30 : vector<1x98x392xf32> to vector<98x392xf32>
    %cst_31 = arith.constant dense<0.000000e+00> : vector<98x8xf32>
    %32 = tpu.matmul %31, %7, %cst_31 {dimension_numbers = #tpu.dot_dimension_numbers<[1], [0], [0], [1], [0, 0, 1, 1], [], []>} : vector<98x392xf32>, vector<392x8xf32>, vector<98x8xf32> -> vector<98x8xf32>
    %c3_32 = arith.constant 3 : index
    %c0_33 = arith.constant 0 : index
    %c0_34 = arith.constant 0 : index
    %33 = vector.load %arg5[%c3_32, %c0_33, %c0_34] : memref<9x8x16xf32, #tpu.memory_space<vmem>>, vector<1x8x16xf32>
    %34 = vector.shape_cast %33 : vector<1x8x16xf32> to vector<8x16xf32>
    %cst_35 = arith.constant dense<0.000000e+00> : vector<98x16xf32>
    %35 = tpu.matmul %32, %34, %cst_35 {dimension_numbers = #tpu.dot_dimension_numbers<[1], [0], [0], [1], [0, 0, 1, 1], [], []>} : vector<98x8xf32>, vector<8x16xf32>, vector<98x16xf32> -> vector<98x16xf32>
    %36 = arith.addf %29, %35 : vector<98x16xf32>
    %c4 = arith.constant 4 : index
    %c0_36 = arith.constant 0 : index
    %c0_37 = arith.constant 0 : index
    %37 = vector.load %arg4[%c4, %c0_36, %c0_37] : memref<9x98x392xf32, #tpu.memory_space<vmem>>, vector<1x98x392xf32>
    %38 = vector.shape_cast %37 : vector<1x98x392xf32> to vector<98x392xf32>
    %cst_38 = arith.constant dense<0.000000e+00> : vector<98x8xf32>
    %39 = tpu.matmul %38, %7, %cst_38 {dimension_numbers = #tpu.dot_dimension_numbers<[1], [0], [0], [1], [0, 0, 1, 1], [], []>} : vector<98x392xf32>, vector<392x8xf32>, vector<98x8xf32> -> vector<98x8xf32>
    %c4_39 = arith.constant 4 : index
    %c0_40 = arith.constant 0 : index
    %c0_41 = arith.constant 0 : index
    %40 = vector.load %arg5[%c4_39, %c0_40, %c0_41] : memref<9x8x16xf32, #tpu.memory_space<vmem>>, vector<1x8x16xf32>
    %41 = vector.shape_cast %40 : vector<1x8x16xf32> to vector<8x16xf32>
    %cst_42 = arith.constant dense<0.000000e+00> : vector<98x16xf32>
    %42 = tpu.matmul %39, %41, %cst_42 {dimension_numbers = #tpu.dot_dimension_numbers<[1], [0], [0], [1], [0, 0, 1, 1], [], []>} : vector<98x8xf32>, vector<8x16xf32>, vector<98x16xf32> -> vector<98x16xf32>
    %43 = arith.addf %36, %42 : vector<98x16xf32>
    %c5 = arith.constant 5 : index
    %c0_43 = arith.constant 0 : index
    %c0_44 = arith.constant 0 : index
    %44 = vector.load %arg4[%c5, %c0_43, %c0_44] : memref<9x98x392xf32, #tpu.memory_space<vmem>>, vector<1x98x392xf32>
    %45 = vector.shape_cast %44 : vector<1x98x392xf32> to vector<98x392xf32>
    %cst_45 = arith.constant dense<0.000000e+00> : vector<98x8xf32>
    %46 = tpu.matmul %45, %7, %cst_45 {dimension_numbers = #tpu.dot_dimension_numbers<[1], [0], [0], [1], [0, 0, 1, 1], [], []>} : vector<98x392xf32>, vector<392x8xf32>, vector<98x8xf32> -> vector<98x8xf32>
    %c5_46 = arith.constant 5 : index
    %c0_47 = arith.constant 0 : index
    %c0_48 = arith.constant 0 : index
    %47 = vector.load %arg5[%c5_46, %c0_47, %c0_48] : memref<9x8x16xf32, #tpu.memory_space<vmem>>, vector<1x8x16xf32>
    %48 = vector.shape_cast %47 : vector<1x8x16xf32> to vector<8x16xf32>
    %cst_49 = arith.constant dense<0.000000e+00> : vector<98x16xf32>
    %49 = tpu.matmul %46, %48, %cst_49 {dimension_numbers = #tpu.dot_dimension_numbers<[1], [0], [0], [1], [0, 0, 1, 1], [], []>} : vector<98x8xf32>, vector<8x16xf32>, vector<98x16xf32> -> vector<98x16xf32>
    %50 = arith.addf %43, %49 : vector<98x16xf32>
    %c6 = arith.constant 6 : index
    %c0_50 = arith.constant 0 : index
    %c0_51 = arith.constant 0 : index
    %51 = vector.load %arg4[%c6, %c0_50, %c0_51] : memref<9x98x392xf32, #tpu.memory_space<vmem>>, vector<1x98x392xf32>
    %52 = vector.shape_cast %51 : vector<1x98x392xf32> to vector<98x392xf32>
    %cst_52 = arith.constant dense<0.000000e+00> : vector<98x8xf32>
    %53 = tpu.matmul %52, %7, %cst_52 {dimension_numbers = #tpu.dot_dimension_numbers<[1], [0], [0], [1], [0, 0, 1, 1], [], []>} : vector<98x392xf32>, vector<392x8xf32>, vector<98x8xf32> -> vector<98x8xf32>
    %c6_53 = arith.constant 6 : index
    %c0_54 = arith.constant 0 : index
    %c0_55 = arith.constant 0 : index
    %54 = vector.load %arg5[%c6_53, %c0_54, %c0_55] : memref<9x8x16xf32, #tpu.memory_space<vmem>>, vector<1x8x16xf32>
    %55 = vector.shape_cast %54 : vector<1x8x16xf32> to vector<8x16xf32>
    %cst_56 = arith.constant dense<0.000000e+00> : vector<98x16xf32>
    %56 = tpu.matmul %53, %55, %cst_56 {dimension_numbers = #tpu.dot_dimension_numbers<[1], [0], [0], [1], [0, 0, 1, 1], [], []>} : vector<98x8xf32>, vector<8x16xf32>, vector<98x16xf32> -> vector<98x16xf32>
    %57 = arith.addf %50, %56 : vector<98x16xf32>
    %c7 = arith.constant 7 : index
    %c0_57 = arith.constant 0 : index
    %c0_58 = arith.constant 0 : index
    %58 = vector.load %arg4[%c7, %c0_57, %c0_58] : memref<9x98x392xf32, #tpu.memory_space<vmem>>, vector<1x98x392xf32>
    %59 = vector.shape_cast %58 : vector<1x98x392xf32> to vector<98x392xf32>
    %cst_59 = arith.constant dense<0.000000e+00> : vector<98x8xf32>
    %60 = tpu.matmul %59, %7, %cst_59 {dimension_numbers = #tpu.dot_dimension_numbers<[1], [0], [0], [1], [0, 0, 1, 1], [], []>} : vector<98x392xf32>, vector<392x8xf32>, vector<98x8xf32> -> vector<98x8xf32>
    %c7_60 = arith.constant 7 : index
    %c0_61 = arith.constant 0 : index
    %c0_62 = arith.constant 0 : index
    %61 = vector.load %arg5[%c7_60, %c0_61, %c0_62] : memref<9x8x16xf32, #tpu.memory_space<vmem>>, vector<1x8x16xf32>
    %62 = vector.shape_cast %61 : vector<1x8x16xf32> to vector<8x16xf32>
    %cst_63 = arith.constant dense<0.000000e+00> : vector<98x16xf32>
    %63 = tpu.matmul %60, %62, %cst_63 {dimension_numbers = #tpu.dot_dimension_numbers<[1], [0], [0], [1], [0, 0, 1, 1], [], []>} : vector<98x8xf32>, vector<8x16xf32>, vector<98x16xf32> -> vector<98x16xf32>
    %64 = arith.addf %57, %63 : vector<98x16xf32>
    %c8 = arith.constant 8 : index
    %c0_64 = arith.constant 0 : index
    %c0_65 = arith.constant 0 : index
    %65 = vector.load %arg4[%c8, %c0_64, %c0_65] : memref<9x98x392xf32, #tpu.memory_space<vmem>>, vector<1x98x392xf32>
    %66 = vector.shape_cast %65 : vector<1x98x392xf32> to vector<98x392xf32>
    %cst_66 = arith.constant dense<0.000000e+00> : vector<98x8xf32>
    %67 = tpu.matmul %66, %7, %cst_66 {dimension_numbers = #tpu.dot_dimension_numbers<[1], [0], [0], [1], [0, 0, 1, 1], [], []>} : vector<98x392xf32>, vector<392x8xf32>, vector<98x8xf32> -> vector<98x8xf32>
    %c8_67 = arith.constant 8 : index
    %c0_68 = arith.constant 0 : index
    %c0_69 = arith.constant 0 : index
    %68 = vector.load %arg5[%c8_67, %c0_68, %c0_69] : memref<9x8x16xf32, #tpu.memory_space<vmem>>, vector<1x8x16xf32>
    %69 = vector.shape_cast %68 : vector<1x8x16xf32> to vector<8x16xf32>
    %cst_70 = arith.constant dense<0.000000e+00> : vector<98x16xf32>
    %70 = tpu.matmul %67, %69, %cst_70 {dimension_numbers = #tpu.dot_dimension_numbers<[1], [0], [0], [1], [0, 0, 1, 1], [], []>} : vector<98x8xf32>, vector<8x16xf32>, vector<98x16xf32> -> vector<98x16xf32>
    %71 = arith.addf %64, %70 : vector<98x16xf32>
    %c0_71 = arith.constant 0 : index
    %c0_72 = arith.constant 0 : index
    %72 = vector.load %arg6[%c0_71, %c0_72] : memref<1x16xf32, #tpu.memory_space<vmem>>, vector<1x16xf32>
    %73 = vector.broadcast %72 : vector<1x16xf32> to vector<98x16xf32>
    %74 = arith.addf %71, %73 : vector<98x16xf32>
    %cst_73 = arith.constant dense<0.000000e+00> : vector<16xf32>
    %75 = vector.multi_reduction <add>, %74, %cst_73 [0] : vector<98x16xf32> to vector<16xf32>
    %76 = vector.shape_cast %75 : vector<16xf32> to vector<1x16xf32>
    %cst_74 = arith.constant 9.800000e+01 : f32
    %77 = vector.broadcast %cst_74 : f32 to vector<1x16xf32>
    %78 = arith.divf %76, %77 : vector<1x16xf32>
    %79 = vector.broadcast %78 : vector<1x16xf32> to vector<98x16xf32>
    %80 = arith.subf %74, %79 : vector<98x16xf32>
    %81 = arith.mulf %80, %80 : vector<98x16xf32>
    %cst_75 = arith.constant dense<0.000000e+00> : vector<16xf32>
    %82 = vector.multi_reduction <add>, %81, %cst_75 [0] : vector<98x16xf32> to vector<16xf32>
    %83 = vector.shape_cast %82 : vector<16xf32> to vector<1x16xf32>
    %cst_76 = arith.constant 9.800000e+01 : f32
    %84 = vector.broadcast %cst_76 : f32 to vector<1x16xf32>
    %85 = arith.divf %83, %84 : vector<1x16xf32>
    %cst_77 = arith.constant 9.99999974E-6 : f32
    %86 = vector.broadcast %cst_77 : f32 to vector<1x16xf32>
    %87 = arith.addf %85, %86 : vector<1x16xf32>
    %88 = math.rsqrt %87 : vector<1x16xf32>
    %89 = vector.broadcast %88 : vector<1x16xf32> to vector<98x16xf32>
    %90 = arith.mulf %80, %89 : vector<98x16xf32>
    %c0_78 = arith.constant 0 : index
    %c0_79 = arith.constant 0 : index
    %91 = vector.load %arg7[%c0_78, %c0_79] : memref<1x16xf32, #tpu.memory_space<vmem>>, vector<1x16xf32>
    %92 = vector.broadcast %91 : vector<1x16xf32> to vector<98x16xf32>
    %93 = arith.mulf %90, %92 : vector<98x16xf32>
    %c0_80 = arith.constant 0 : index
    %c0_81 = arith.constant 0 : index
    %94 = vector.load %arg8[%c0_80, %c0_81] : memref<1x16xf32, #tpu.memory_space<vmem>>, vector<1x16xf32>
    %95 = vector.broadcast %94 : vector<1x16xf32> to vector<98x16xf32>
    %96 = arith.addf %93, %95 : vector<98x16xf32>
    %cst_82 = arith.constant 0.000000e+00 : f32
    %97 = vector.broadcast %cst_82 : f32 to vector<98x16xf32>
    %98 = arith.maximumf %96, %97 : vector<98x16xf32>
    %cst_83 = arith.constant 0.000000e+00 : f32
    %99 = vector.broadcast %cst_83 : f32 to vector<18x32xf32>
    %c0_84 = arith.constant 0 : index
    %c0_85 = arith.constant 0 : index
    %c0_86 = arith.constant 0 : index
    %100 = vector.load %arg9[%c0_84, %c0_85, %c0_86] : memref<9x18x98xf32, #tpu.memory_space<vmem>>, vector<1x18x98xf32>
    %101 = vector.shape_cast %100 : vector<1x18x98xf32> to vector<18x98xf32>
    %cst_87 = arith.constant dense<0.000000e+00> : vector<18x16xf32>
    %102 = tpu.matmul %101, %98, %cst_87 {dimension_numbers = #tpu.dot_dimension_numbers<[1], [0], [0], [1], [0, 0, 1, 1], [], []>} : vector<18x98xf32>, vector<98x16xf32>, vector<18x16xf32> -> vector<18x16xf32>
    %c0_88 = arith.constant 0 : index
    %c0_89 = arith.constant 0 : index
    %c0_90 = arith.constant 0 : index
    %103 = vector.load %arg10[%c0_88, %c0_89, %c0_90] : memref<9x16x32xf32, #tpu.memory_space<vmem>>, vector<1x16x32xf32>
    %104 = vector.shape_cast %103 : vector<1x16x32xf32> to vector<16x32xf32>
    %cst_91 = arith.constant dense<0.000000e+00> : vector<18x32xf32>
    %105 = tpu.matmul %102, %104, %cst_91 {dimension_numbers = #tpu.dot_dimension_numbers<[1], [0], [0], [1], [0, 0, 1, 1], [], []>} : vector<18x16xf32>, vector<16x32xf32>, vector<18x32xf32> -> vector<18x32xf32>
    %106 = arith.addf %99, %105 : vector<18x32xf32>
    %c1_92 = arith.constant 1 : index
    %c0_93 = arith.constant 0 : index
    %c0_94 = arith.constant 0 : index
    %107 = vector.load %arg9[%c1_92, %c0_93, %c0_94] : memref<9x18x98xf32, #tpu.memory_space<vmem>>, vector<1x18x98xf32>
    %108 = vector.shape_cast %107 : vector<1x18x98xf32> to vector<18x98xf32>
    %cst_95 = arith.constant dense<0.000000e+00> : vector<18x16xf32>
    %109 = tpu.matmul %108, %98, %cst_95 {dimension_numbers = #tpu.dot_dimension_numbers<[1], [0], [0], [1], [0, 0, 1, 1], [], []>} : vector<18x98xf32>, vector<98x16xf32>, vector<18x16xf32> -> vector<18x16xf32>
    %c1_96 = arith.constant 1 : index
    %c0_97 = arith.constant 0 : index
    %c0_98 = arith.constant 0 : index
    %110 = vector.load %arg10[%c1_96, %c0_97, %c0_98] : memref<9x16x32xf32, #tpu.memory_space<vmem>>, vector<1x16x32xf32>
    %111 = vector.shape_cast %110 : vector<1x16x32xf32> to vector<16x32xf32>
    %cst_99 = arith.constant dense<0.000000e+00> : vector<18x32xf32>
    %112 = tpu.matmul %109, %111, %cst_99 {dimension_numbers = #tpu.dot_dimension_numbers<[1], [0], [0], [1], [0, 0, 1, 1], [], []>} : vector<18x16xf32>, vector<16x32xf32>, vector<18x32xf32> -> vector<18x32xf32>
    %113 = arith.addf %106, %112 : vector<18x32xf32>
    %c2_100 = arith.constant 2 : index
    %c0_101 = arith.constant 0 : index
    %c0_102 = arith.constant 0 : index
    %114 = vector.load %arg9[%c2_100, %c0_101, %c0_102] : memref<9x18x98xf32, #tpu.memory_space<vmem>>, vector<1x18x98xf32>
    %115 = vector.shape_cast %114 : vector<1x18x98xf32> to vector<18x98xf32>
    %cst_103 = arith.constant dense<0.000000e+00> : vector<18x16xf32>
    %116 = tpu.matmul %115, %98, %cst_103 {dimension_numbers = #tpu.dot_dimension_numbers<[1], [0], [0], [1], [0, 0, 1, 1], [], []>} : vector<18x98xf32>, vector<98x16xf32>, vector<18x16xf32> -> vector<18x16xf32>
    %c2_104 = arith.constant 2 : index
    %c0_105 = arith.constant 0 : index
    %c0_106 = arith.constant 0 : index
    %117 = vector.load %arg10[%c2_104, %c0_105, %c0_106] : memref<9x16x32xf32, #tpu.memory_space<vmem>>, vector<1x16x32xf32>
    %118 = vector.shape_cast %117 : vector<1x16x32xf32> to vector<16x32xf32>
    %cst_107 = arith.constant dense<0.000000e+00> : vector<18x32xf32>
    %119 = tpu.matmul %116, %118, %cst_107 {dimension_numbers = #tpu.dot_dimension_numbers<[1], [0], [0], [1], [0, 0, 1, 1], [], []>} : vector<18x16xf32>, vector<16x32xf32>, vector<18x32xf32> -> vector<18x32xf32>
    %120 = arith.addf %113, %119 : vector<18x32xf32>
    %c3_108 = arith.constant 3 : index
    %c0_109 = arith.constant 0 : index
    %c0_110 = arith.constant 0 : index
    %121 = vector.load %arg9[%c3_108, %c0_109, %c0_110] : memref<9x18x98xf32, #tpu.memory_space<vmem>>, vector<1x18x98xf32>
    %122 = vector.shape_cast %121 : vector<1x18x98xf32> to vector<18x98xf32>
    %cst_111 = arith.constant dense<0.000000e+00> : vector<18x16xf32>
    %123 = tpu.matmul %122, %98, %cst_111 {dimension_numbers = #tpu.dot_dimension_numbers<[1], [0], [0], [1], [0, 0, 1, 1], [], []>} : vector<18x98xf32>, vector<98x16xf32>, vector<18x16xf32> -> vector<18x16xf32>
    %c3_112 = arith.constant 3 : index
    %c0_113 = arith.constant 0 : index
    %c0_114 = arith.constant 0 : index
    %124 = vector.load %arg10[%c3_112, %c0_113, %c0_114] : memref<9x16x32xf32, #tpu.memory_space<vmem>>, vector<1x16x32xf32>
    %125 = vector.shape_cast %124 : vector<1x16x32xf32> to vector<16x32xf32>
    %cst_115 = arith.constant dense<0.000000e+00> : vector<18x32xf32>
    %126 = tpu.matmul %123, %125, %cst_115 {dimension_numbers = #tpu.dot_dimension_numbers<[1], [0], [0], [1], [0, 0, 1, 1], [], []>} : vector<18x16xf32>, vector<16x32xf32>, vector<18x32xf32> -> vector<18x32xf32>
    %127 = arith.addf %120, %126 : vector<18x32xf32>
    %c4_116 = arith.constant 4 : index
    %c0_117 = arith.constant 0 : index
    %c0_118 = arith.constant 0 : index
    %128 = vector.load %arg9[%c4_116, %c0_117, %c0_118] : memref<9x18x98xf32, #tpu.memory_space<vmem>>, vector<1x18x98xf32>
    %129 = vector.shape_cast %128 : vector<1x18x98xf32> to vector<18x98xf32>
    %cst_119 = arith.constant dense<0.000000e+00> : vector<18x16xf32>
    %130 = tpu.matmul %129, %98, %cst_119 {dimension_numbers = #tpu.dot_dimension_numbers<[1], [0], [0], [1], [0, 0, 1, 1], [], []>} : vector<18x98xf32>, vector<98x16xf32>, vector<18x16xf32> -> vector<18x16xf32>
    %c4_120 = arith.constant 4 : index
    %c0_121 = arith.constant 0 : index
    %c0_122 = arith.constant 0 : index
    %131 = vector.load %arg10[%c4_120, %c0_121, %c0_122] : memref<9x16x32xf32, #tpu.memory_space<vmem>>, vector<1x16x32xf32>
    %132 = vector.shape_cast %131 : vector<1x16x32xf32> to vector<16x32xf32>
    %cst_123 = arith.constant dense<0.000000e+00> : vector<18x32xf32>
    %133 = tpu.matmul %130, %132, %cst_123 {dimension_numbers = #tpu.dot_dimension_numbers<[1], [0], [0], [1], [0, 0, 1, 1], [], []>} : vector<18x16xf32>, vector<16x32xf32>, vector<18x32xf32> -> vector<18x32xf32>
    %134 = arith.addf %127, %133 : vector<18x32xf32>
    %c5_124 = arith.constant 5 : index
    %c0_125 = arith.constant 0 : index
    %c0_126 = arith.constant 0 : index
    %135 = vector.load %arg9[%c5_124, %c0_125, %c0_126] : memref<9x18x98xf32, #tpu.memory_space<vmem>>, vector<1x18x98xf32>
    %136 = vector.shape_cast %135 : vector<1x18x98xf32> to vector<18x98xf32>
    %cst_127 = arith.constant dense<0.000000e+00> : vector<18x16xf32>
    %137 = tpu.matmul %136, %98, %cst_127 {dimension_numbers = #tpu.dot_dimension_numbers<[1], [0], [0], [1], [0, 0, 1, 1], [], []>} : vector<18x98xf32>, vector<98x16xf32>, vector<18x16xf32> -> vector<18x16xf32>
    %c5_128 = arith.constant 5 : index
    %c0_129 = arith.constant 0 : index
    %c0_130 = arith.constant 0 : index
    %138 = vector.load %arg10[%c5_128, %c0_129, %c0_130] : memref<9x16x32xf32, #tpu.memory_space<vmem>>, vector<1x16x32xf32>
    %139 = vector.shape_cast %138 : vector<1x16x32xf32> to vector<16x32xf32>
    %cst_131 = arith.constant dense<0.000000e+00> : vector<18x32xf32>
    %140 = tpu.matmul %137, %139, %cst_131 {dimension_numbers = #tpu.dot_dimension_numbers<[1], [0], [0], [1], [0, 0, 1, 1], [], []>} : vector<18x16xf32>, vector<16x32xf32>, vector<18x32xf32> -> vector<18x32xf32>
    %141 = arith.addf %134, %140 : vector<18x32xf32>
    %c6_132 = arith.constant 6 : index
    %c0_133 = arith.constant 0 : index
    %c0_134 = arith.constant 0 : index
    %142 = vector.load %arg9[%c6_132, %c0_133, %c0_134] : memref<9x18x98xf32, #tpu.memory_space<vmem>>, vector<1x18x98xf32>
    %143 = vector.shape_cast %142 : vector<1x18x98xf32> to vector<18x98xf32>
    %cst_135 = arith.constant dense<0.000000e+00> : vector<18x16xf32>
    %144 = tpu.matmul %143, %98, %cst_135 {dimension_numbers = #tpu.dot_dimension_numbers<[1], [0], [0], [1], [0, 0, 1, 1], [], []>} : vector<18x98xf32>, vector<98x16xf32>, vector<18x16xf32> -> vector<18x16xf32>
    %c6_136 = arith.constant 6 : index
    %c0_137 = arith.constant 0 : index
    %c0_138 = arith.constant 0 : index
    %145 = vector.load %arg10[%c6_136, %c0_137, %c0_138] : memref<9x16x32xf32, #tpu.memory_space<vmem>>, vector<1x16x32xf32>
    %146 = vector.shape_cast %145 : vector<1x16x32xf32> to vector<16x32xf32>
    %cst_139 = arith.constant dense<0.000000e+00> : vector<18x32xf32>
    %147 = tpu.matmul %144, %146, %cst_139 {dimension_numbers = #tpu.dot_dimension_numbers<[1], [0], [0], [1], [0, 0, 1, 1], [], []>} : vector<18x16xf32>, vector<16x32xf32>, vector<18x32xf32> -> vector<18x32xf32>
    %148 = arith.addf %141, %147 : vector<18x32xf32>
    %c7_140 = arith.constant 7 : index
    %c0_141 = arith.constant 0 : index
    %c0_142 = arith.constant 0 : index
    %149 = vector.load %arg9[%c7_140, %c0_141, %c0_142] : memref<9x18x98xf32, #tpu.memory_space<vmem>>, vector<1x18x98xf32>
    %150 = vector.shape_cast %149 : vector<1x18x98xf32> to vector<18x98xf32>
    %cst_143 = arith.constant dense<0.000000e+00> : vector<18x16xf32>
    %151 = tpu.matmul %150, %98, %cst_143 {dimension_numbers = #tpu.dot_dimension_numbers<[1], [0], [0], [1], [0, 0, 1, 1], [], []>} : vector<18x98xf32>, vector<98x16xf32>, vector<18x16xf32> -> vector<18x16xf32>
    %c7_144 = arith.constant 7 : index
    %c0_145 = arith.constant 0 : index
    %c0_146 = arith.constant 0 : index
    %152 = vector.load %arg10[%c7_144, %c0_145, %c0_146] : memref<9x16x32xf32, #tpu.memory_space<vmem>>, vector<1x16x32xf32>
    %153 = vector.shape_cast %152 : vector<1x16x32xf32> to vector<16x32xf32>
    %cst_147 = arith.constant dense<0.000000e+00> : vector<18x32xf32>
    %154 = tpu.matmul %151, %153, %cst_147 {dimension_numbers = #tpu.dot_dimension_numbers<[1], [0], [0], [1], [0, 0, 1, 1], [], []>} : vector<18x16xf32>, vector<16x32xf32>, vector<18x32xf32> -> vector<18x32xf32>
    %155 = arith.addf %148, %154 : vector<18x32xf32>
    %c8_148 = arith.constant 8 : index
    %c0_149 = arith.constant 0 : index
    %c0_150 = arith.constant 0 : index
    %156 = vector.load %arg9[%c8_148, %c0_149, %c0_150] : memref<9x18x98xf32, #tpu.memory_space<vmem>>, vector<1x18x98xf32>
    %157 = vector.shape_cast %156 : vector<1x18x98xf32> to vector<18x98xf32>
    %cst_151 = arith.constant dense<0.000000e+00> : vector<18x16xf32>
    %158 = tpu.matmul %157, %98, %cst_151 {dimension_numbers = #tpu.dot_dimension_numbers<[1], [0], [0], [1], [0, 0, 1, 1], [], []>} : vector<18x98xf32>, vector<98x16xf32>, vector<18x16xf32> -> vector<18x16xf32>
    %c8_152 = arith.constant 8 : index
    %c0_153 = arith.constant 0 : index
    %c0_154 = arith.constant 0 : index
    %159 = vector.load %arg10[%c8_152, %c0_153, %c0_154] : memref<9x16x32xf32, #tpu.memory_space<vmem>>, vector<1x16x32xf32>
    %160 = vector.shape_cast %159 : vector<1x16x32xf32> to vector<16x32xf32>
    %cst_155 = arith.constant dense<0.000000e+00> : vector<18x32xf32>
    %161 = tpu.matmul %158, %160, %cst_155 {dimension_numbers = #tpu.dot_dimension_numbers<[1], [0], [0], [1], [0, 0, 1, 1], [], []>} : vector<18x16xf32>, vector<16x32xf32>, vector<18x32xf32> -> vector<18x32xf32>
    %162 = arith.addf %155, %161 : vector<18x32xf32>
    %c0_156 = arith.constant 0 : index
    %c0_157 = arith.constant 0 : index
    %163 = vector.load %arg11[%c0_156, %c0_157] : memref<1x32xf32, #tpu.memory_space<vmem>>, vector<1x32xf32>
    %164 = vector.broadcast %163 : vector<1x32xf32> to vector<18x32xf32>
    %165 = arith.addf %162, %164 : vector<18x32xf32>
    %cst_158 = arith.constant 0.000000e+00 : f32
    %166 = vector.broadcast %cst_158 : f32 to vector<18x32xf32>
    %167 = arith.maximumf %165, %166 : vector<18x32xf32>
    %cst_159 = arith.constant 0.000000e+00 : f32
    %168 = vector.broadcast %cst_159 : f32 to vector<2x32xf32>
    %c0_160 = arith.constant 0 : index
    %c0_161 = arith.constant 0 : index
    %c0_162 = arith.constant 0 : index
    %169 = vector.load %arg12[%c0_160, %c0_161, %c0_162] : memref<9x2x18xf32, #tpu.memory_space<vmem>>, vector<1x2x18xf32>
    %170 = vector.shape_cast %169 : vector<1x2x18xf32> to vector<2x18xf32>
    %cst_163 = arith.constant dense<0.000000e+00> : vector<2x32xf32>
    %171 = tpu.matmul %170, %167, %cst_163 {dimension_numbers = #tpu.dot_dimension_numbers<[1], [0], [0], [1], [0, 0, 1, 1], [], []>} : vector<2x18xf32>, vector<18x32xf32>, vector<2x32xf32> -> vector<2x32xf32>
    %c0_164 = arith.constant 0 : index
    %c0_165 = arith.constant 0 : index
    %c0_166 = arith.constant 0 : index
    %172 = vector.load %arg13[%c0_164, %c0_165, %c0_166] : memref<9x32x32xf32, #tpu.memory_space<vmem>>, vector<1x32x32xf32>
    %173 = vector.shape_cast %172 : vector<1x32x32xf32> to vector<32x32xf32>
    %cst_167 = arith.constant dense<0.000000e+00> : vector<2x32xf32>
    %174 = tpu.matmul %171, %173, %cst_167 {dimension_numbers = #tpu.dot_dimension_numbers<[1], [0], [0], [1], [0, 0, 1, 1], [], []>} : vector<2x32xf32>, vector<32x32xf32>, vector<2x32xf32> -> vector<2x32xf32>
    %175 = arith.addf %168, %174 : vector<2x32xf32>
    %c1_168 = arith.constant 1 : index
    %c0_169 = arith.constant 0 : index
    %c0_170 = arith.constant 0 : index
    %176 = vector.load %arg12[%c1_168, %c0_169, %c0_170] : memref<9x2x18xf32, #tpu.memory_space<vmem>>, vector<1x2x18xf32>
    %177 = vector.shape_cast %176 : vector<1x2x18xf32> to vector<2x18xf32>
    %cst_171 = arith.constant dense<0.000000e+00> : vector<2x32xf32>
    %178 = tpu.matmul %177, %167, %cst_171 {dimension_numbers = #tpu.dot_dimension_numbers<[1], [0], [0], [1], [0, 0, 1, 1], [], []>} : vector<2x18xf32>, vector<18x32xf32>, vector<2x32xf32> -> vector<2x32xf32>
    %c1_172 = arith.constant 1 : index
    %c0_173 = arith.constant 0 : index
    %c0_174 = arith.constant 0 : index
    %179 = vector.load %arg13[%c1_172, %c0_173, %c0_174] : memref<9x32x32xf32, #tpu.memory_space<vmem>>, vector<1x32x32xf32>
    %180 = vector.shape_cast %179 : vector<1x32x32xf32> to vector<32x32xf32>
    %cst_175 = arith.constant dense<0.000000e+00> : vector<2x32xf32>
    %181 = tpu.matmul %178, %180, %cst_175 {dimension_numbers = #tpu.dot_dimension_numbers<[1], [0], [0], [1], [0, 0, 1, 1], [], []>} : vector<2x32xf32>, vector<32x32xf32>, vector<2x32xf32> -> vector<2x32xf32>
    %182 = arith.addf %175, %181 : vector<2x32xf32>
    %c2_176 = arith.constant 2 : index
    %c0_177 = arith.constant 0 : index
    %c0_178 = arith.constant 0 : index
    %183 = vector.load %arg12[%c2_176, %c0_177, %c0_178] : memref<9x2x18xf32, #tpu.memory_space<vmem>>, vector<1x2x18xf32>
    %184 = vector.shape_cast %183 : vector<1x2x18xf32> to vector<2x18xf32>
    %cst_179 = arith.constant dense<0.000000e+00> : vector<2x32xf32>
    %185 = tpu.matmul %184, %167, %cst_179 {dimension_numbers = #tpu.dot_dimension_numbers<[1], [0], [0], [1], [0, 0, 1, 1], [], []>} : vector<2x18xf32>, vector<18x32xf32>, vector<2x32xf32> -> vector<2x32xf32>
    %c2_180 = arith.constant 2 : index
    %c0_181 = arith.constant 0 : index
    %c0_182 = arith.constant 0 : index
    %186 = vector.load %arg13[%c2_180, %c0_181, %c0_182] : memref<9x32x32xf32, #tpu.memory_space<vmem>>, vector<1x32x32xf32>
    %187 = vector.shape_cast %186 : vector<1x32x32xf32> to vector<32x32xf32>
    %cst_183 = arith.constant dense<0.000000e+00> : vector<2x32xf32>
    %188 = tpu.matmul %185, %187, %cst_183 {dimension_numbers = #tpu.dot_dimension_numbers<[1], [0], [0], [1], [0, 0, 1, 1], [], []>} : vector<2x32xf32>, vector<32x32xf32>, vector<2x32xf32> -> vector<2x32xf32>
    %189 = arith.addf %182, %188 : vector<2x32xf32>
    %c3_184 = arith.constant 3 : index
    %c0_185 = arith.constant 0 : index
    %c0_186 = arith.constant 0 : index
    %190 = vector.load %arg12[%c3_184, %c0_185, %c0_186] : memref<9x2x18xf32, #tpu.memory_space<vmem>>, vector<1x2x18xf32>
    %191 = vector.shape_cast %190 : vector<1x2x18xf32> to vector<2x18xf32>
    %cst_187 = arith.constant dense<0.000000e+00> : vector<2x32xf32>
    %192 = tpu.matmul %191, %167, %cst_187 {dimension_numbers = #tpu.dot_dimension_numbers<[1], [0], [0], [1], [0, 0, 1, 1], [], []>} : vector<2x18xf32>, vector<18x32xf32>, vector<2x32xf32> -> vector<2x32xf32>
    %c3_188 = arith.constant 3 : index
    %c0_189 = arith.constant 0 : index
    %c0_190 = arith.constant 0 : index
    %193 = vector.load %arg13[%c3_188, %c0_189, %c0_190] : memref<9x32x32xf32, #tpu.memory_space<vmem>>, vector<1x32x32xf32>
    %194 = vector.shape_cast %193 : vector<1x32x32xf32> to vector<32x32xf32>
    %cst_191 = arith.constant dense<0.000000e+00> : vector<2x32xf32>
    %195 = tpu.matmul %192, %194, %cst_191 {dimension_numbers = #tpu.dot_dimension_numbers<[1], [0], [0], [1], [0, 0, 1, 1], [], []>} : vector<2x32xf32>, vector<32x32xf32>, vector<2x32xf32> -> vector<2x32xf32>
    %196 = arith.addf %189, %195 : vector<2x32xf32>
    %c4_192 = arith.constant 4 : index
    %c0_193 = arith.constant 0 : index
    %c0_194 = arith.constant 0 : index
    %197 = vector.load %arg12[%c4_192, %c0_193, %c0_194] : memref<9x2x18xf32, #tpu.memory_space<vmem>>, vector<1x2x18xf32>
    %198 = vector.shape_cast %197 : vector<1x2x18xf32> to vector<2x18xf32>
    %cst_195 = arith.constant dense<0.000000e+00> : vector<2x32xf32>
    %199 = tpu.matmul %198, %167, %cst_195 {dimension_numbers = #tpu.dot_dimension_numbers<[1], [0], [0], [1], [0, 0, 1, 1], [], []>} : vector<2x18xf32>, vector<18x32xf32>, vector<2x32xf32> -> vector<2x32xf32>
    %c4_196 = arith.constant 4 : index
    %c0_197 = arith.constant 0 : index
    %c0_198 = arith.constant 0 : index
    %200 = vector.load %arg13[%c4_196, %c0_197, %c0_198] : memref<9x32x32xf32, #tpu.memory_space<vmem>>, vector<1x32x32xf32>
    %201 = vector.shape_cast %200 : vector<1x32x32xf32> to vector<32x32xf32>
    %cst_199 = arith.constant dense<0.000000e+00> : vector<2x32xf32>
    %202 = tpu.matmul %199, %201, %cst_199 {dimension_numbers = #tpu.dot_dimension_numbers<[1], [0], [0], [1], [0, 0, 1, 1], [], []>} : vector<2x32xf32>, vector<32x32xf32>, vector<2x32xf32> -> vector<2x32xf32>
    %203 = arith.addf %196, %202 : vector<2x32xf32>
    %c5_200 = arith.constant 5 : index
    %c0_201 = arith.constant 0 : index
    %c0_202 = arith.constant 0 : index
    %204 = vector.load %arg12[%c5_200, %c0_201, %c0_202] : memref<9x2x18xf32, #tpu.memory_space<vmem>>, vector<1x2x18xf32>
    %205 = vector.shape_cast %204 : vector<1x2x18xf32> to vector<2x18xf32>
    %cst_203 = arith.constant dense<0.000000e+00> : vector<2x32xf32>
    %206 = tpu.matmul %205, %167, %cst_203 {dimension_numbers = #tpu.dot_dimension_numbers<[1], [0], [0], [1], [0, 0, 1, 1], [], []>} : vector<2x18xf32>, vector<18x32xf32>, vector<2x32xf32> -> vector<2x32xf32>
    %c5_204 = arith.constant 5 : index
    %c0_205 = arith.constant 0 : index
    %c0_206 = arith.constant 0 : index
    %207 = vector.load %arg13[%c5_204, %c0_205, %c0_206] : memref<9x32x32xf32, #tpu.memory_space<vmem>>, vector<1x32x32xf32>
    %208 = vector.shape_cast %207 : vector<1x32x32xf32> to vector<32x32xf32>
    %cst_207 = arith.constant dense<0.000000e+00> : vector<2x32xf32>
    %209 = tpu.matmul %206, %208, %cst_207 {dimension_numbers = #tpu.dot_dimension_numbers<[1], [0], [0], [1], [0, 0, 1, 1], [], []>} : vector<2x32xf32>, vector<32x32xf32>, vector<2x32xf32> -> vector<2x32xf32>
    %210 = arith.addf %203, %209 : vector<2x32xf32>
    %c6_208 = arith.constant 6 : index
    %c0_209 = arith.constant 0 : index
    %c0_210 = arith.constant 0 : index
    %211 = vector.load %arg12[%c6_208, %c0_209, %c0_210] : memref<9x2x18xf32, #tpu.memory_space<vmem>>, vector<1x2x18xf32>
    %212 = vector.shape_cast %211 : vector<1x2x18xf32> to vector<2x18xf32>
    %cst_211 = arith.constant dense<0.000000e+00> : vector<2x32xf32>
    %213 = tpu.matmul %212, %167, %cst_211 {dimension_numbers = #tpu.dot_dimension_numbers<[1], [0], [0], [1], [0, 0, 1, 1], [], []>} : vector<2x18xf32>, vector<18x32xf32>, vector<2x32xf32> -> vector<2x32xf32>
    %c6_212 = arith.constant 6 : index
    %c0_213 = arith.constant 0 : index
    %c0_214 = arith.constant 0 : index
    %214 = vector.load %arg13[%c6_212, %c0_213, %c0_214] : memref<9x32x32xf32, #tpu.memory_space<vmem>>, vector<1x32x32xf32>
    %215 = vector.shape_cast %214 : vector<1x32x32xf32> to vector<32x32xf32>
    %cst_215 = arith.constant dense<0.000000e+00> : vector<2x32xf32>
    %216 = tpu.matmul %213, %215, %cst_215 {dimension_numbers = #tpu.dot_dimension_numbers<[1], [0], [0], [1], [0, 0, 1, 1], [], []>} : vector<2x32xf32>, vector<32x32xf32>, vector<2x32xf32> -> vector<2x32xf32>
    %217 = arith.addf %210, %216 : vector<2x32xf32>
    %c7_216 = arith.constant 7 : index
    %c0_217 = arith.constant 0 : index
    %c0_218 = arith.constant 0 : index
    %218 = vector.load %arg12[%c7_216, %c0_217, %c0_218] : memref<9x2x18xf32, #tpu.memory_space<vmem>>, vector<1x2x18xf32>
    %219 = vector.shape_cast %218 : vector<1x2x18xf32> to vector<2x18xf32>
    %cst_219 = arith.constant dense<0.000000e+00> : vector<2x32xf32>
    %220 = tpu.matmul %219, %167, %cst_219 {dimension_numbers = #tpu.dot_dimension_numbers<[1], [0], [0], [1], [0, 0, 1, 1], [], []>} : vector<2x18xf32>, vector<18x32xf32>, vector<2x32xf32> -> vector<2x32xf32>
    %c7_220 = arith.constant 7 : index
    %c0_221 = arith.constant 0 : index
    %c0_222 = arith.constant 0 : index
    %221 = vector.load %arg13[%c7_220, %c0_221, %c0_222] : memref<9x32x32xf32, #tpu.memory_space<vmem>>, vector<1x32x32xf32>
    %222 = vector.shape_cast %221 : vector<1x32x32xf32> to vector<32x32xf32>
    %cst_223 = arith.constant dense<0.000000e+00> : vector<2x32xf32>
    %223 = tpu.matmul %220, %222, %cst_223 {dimension_numbers = #tpu.dot_dimension_numbers<[1], [0], [0], [1], [0, 0, 1, 1], [], []>} : vector<2x32xf32>, vector<32x32xf32>, vector<2x32xf32> -> vector<2x32xf32>
    %224 = arith.addf %217, %223 : vector<2x32xf32>
    %c8_224 = arith.constant 8 : index
    %c0_225 = arith.constant 0 : index
    %c0_226 = arith.constant 0 : index
    %225 = vector.load %arg12[%c8_224, %c0_225, %c0_226] : memref<9x2x18xf32, #tpu.memory_space<vmem>>, vector<1x2x18xf32>
    %226 = vector.shape_cast %225 : vector<1x2x18xf32> to vector<2x18xf32>
    %cst_227 = arith.constant dense<0.000000e+00> : vector<2x32xf32>
    %227 = tpu.matmul %226, %167, %cst_227 {dimension_numbers = #tpu.dot_dimension_numbers<[1], [0], [0], [1], [0, 0, 1, 1], [], []>} : vector<2x18xf32>, vector<18x32xf32>, vector<2x32xf32> -> vector<2x32xf32>
    %c8_228 = arith.constant 8 : index
    %c0_229 = arith.constant 0 : index
    %c0_230 = arith.constant 0 : index
    %228 = vector.load %arg13[%c8_228, %c0_229, %c0_230] : memref<9x32x32xf32, #tpu.memory_space<vmem>>, vector<1x32x32xf32>
    %229 = vector.shape_cast %228 : vector<1x32x32xf32> to vector<32x32xf32>
    %cst_231 = arith.constant dense<0.000000e+00> : vector<2x32xf32>
    %230 = tpu.matmul %227, %229, %cst_231 {dimension_numbers = #tpu.dot_dimension_numbers<[1], [0], [0], [1], [0, 0, 1, 1], [], []>} : vector<2x32xf32>, vector<32x32xf32>, vector<2x32xf32> -> vector<2x32xf32>
    %231 = arith.addf %224, %230 : vector<2x32xf32>
    %c0_232 = arith.constant 0 : index
    %c0_233 = arith.constant 0 : index
    %232 = vector.load %arg14[%c0_232, %c0_233] : memref<1x32xf32, #tpu.memory_space<vmem>>, vector<1x32xf32>
    %233 = vector.broadcast %232 : vector<1x32xf32> to vector<2x32xf32>
    %234 = arith.addf %231, %233 : vector<2x32xf32>
    %cst_234 = arith.constant 0.000000e+00 : f32
    %235 = vector.broadcast %cst_234 : f32 to vector<2x32xf32>
    %236 = arith.maximumf %234, %235 : vector<2x32xf32>
    %c0_235 = arith.constant 0 : index
    %c0_236 = arith.constant 0 : index
    %237 = vector.load %arg15[%c0_235, %c0_236] : memref<32x8xf32, #tpu.memory_space<vmem>>, vector<32x8xf32>
    %cst_237 = arith.constant dense<0.000000e+00> : vector<2x8xf32>
    %238 = tpu.matmul %236, %237, %cst_237 {dimension_numbers = #tpu.dot_dimension_numbers<[1], [0], [0], [1], [0, 0, 1, 1], [], []>} : vector<2x32xf32>, vector<32x8xf32>, vector<2x8xf32> -> vector<2x8xf32>
    %c0_238 = arith.constant 0 : index
    %c0_239 = arith.constant 0 : index
    %239 = vector.load %arg16[%c0_238, %c0_239] : memref<1x8xf32, #tpu.memory_space<vmem>>, vector<1x8xf32>
    %240 = vector.broadcast %239 : vector<1x8xf32> to vector<2x8xf32>
    %241 = arith.addf %238, %240 : vector<2x8xf32>
    %c0_240 = arith.constant 0 : index
    %c0_241 = arith.constant 0 : index
    %242 = vector.load %arg17[%c0_240, %c0_241] : memref<2x8xf32, #tpu.memory_space<vmem>>, vector<2x8xf32>
    tpu.vector_store %arg17[%c0_240, %c0_241], %241 {strides = array<i32>} : memref<2x8xf32, #tpu.memory_space<vmem>>, vector<2x8xf32>,
    return
  }
  func.func @transform_0(%arg0: i32) -> (i32, i32) {
    %c0_i32 = arith.constant 0 : i32
    %c0_i32_0 = arith.constant 0 : i32
    %c0_i32_1 = arith.constant 0 : i32
    return %c0_i32, %c0_i32_0 : i32, i32
  }
  func.func @transform_1(%arg0: i32) -> (i32, i32) {
    %c0_i32 = arith.constant 0 : i32
    %c0_i32_0 = arith.constant 0 : i32
    %c0_i32_1 = arith.constant 0 : i32
    return %c0_i32, %c0_i32_0 : i32, i32
  }
  func.func @transform_2(%arg0: i32) -> (i32, i32) {
    %c0_i32 = arith.constant 0 : i32
    %c0_i32_0 = arith.constant 0 : i32
    %c0_i32_1 = arith.constant 0 : i32
    return %c0_i32, %c0_i32_0 : i32, i32
  }
  func.func @transform_3(%arg0: i32) -> (i32, i32, i32) {
    %c0_i32 = arith.constant 0 : i32
    %c0_i32_0 = arith.constant 0 : i32
    %c0_i32_1 = arith.constant 0 : i32
    %c0_i32_2 = arith.constant 0 : i32
    return %c0_i32, %c0_i32_0, %c0_i32_1 : i32, i32, i32
  }
  func.func @transform_4(%arg0: i32) -> (i32, i32, i32) {
    %c0_i32 = arith.constant 0 : i32
    %c0_i32_0 = arith.constant 0 : i32
    %c0_i32_1 = arith.constant 0 : i32
    %c0_i32_2 = arith.constant 0 : i32
    return %c0_i32, %c0_i32_0, %c0_i32_1 : i32, i32, i32
  }
  func.func @transform_5(%arg0: i32) -> (i32, i32) {
    %c0_i32 = arith.constant 0 : i32
    %c0_i32_0 = arith.constant 0 : i32
    %c0_i32_1 = arith.constant 0 : i32
    return %c0_i32, %c0_i32_0 : i32, i32
  }
  func.func @transform_6(%arg0: i32) -> (i32, i32) {
    %c0_i32 = arith.constant 0 : i32
    %c0_i32_0 = arith.constant 0 : i32
    %c0_i32_1 = arith.constant 0 : i32
    return %c0_i32, %c0_i32_0 : i32, i32
  }
  func.func @transform_7(%arg0: i32) -> (i32, i32) {
    %c0_i32 = arith.constant 0 : i32
    %c0_i32_0 = arith.constant 0 : i32
    %c0_i32_1 = arith.constant 0 : i32
    return %c0_i32, %c0_i32_0 : i32, i32
  }
  func.func @transform_8(%arg0: i32) -> (i32, i32, i32) {
    %c0_i32 = arith.constant 0 : i32
    %c0_i32_0 = arith.constant 0 : i32
    %c0_i32_1 = arith.constant 0 : i32
    %c0_i32_2 = arith.constant 0 : i32
    return %c0_i32, %c0_i32_0, %c0_i32_1 : i32, i32, i32
  }
  func.func @transform_9(%arg0: i32) -> (i32, i32, i32) {
    %c0_i32 = arith.constant 0 : i32
    %c0_i32_0 = arith.constant 0 : i32
    %c0_i32_1 = arith.constant 0 : i32
    %c0_i32_2 = arith.constant 0 : i32
    return %c0_i32, %c0_i32_0, %c0_i32_1 : i32, i32, i32
  }
  func.func @transform_10(%arg0: i32) -> (i32, i32) {
    %c0_i32 = arith.constant 0 : i32
    %c0_i32_0 = arith.constant 0 : i32
    %c0_i32_1 = arith.constant 0 : i32
    return %c0_i32, %c0_i32_0 : i32, i32
  }
  func.func @transform_11(%arg0: i32) -> (i32, i32, i32) {
    %c0_i32 = arith.constant 0 : i32
    %c0_i32_0 = arith.constant 0 : i32
    %c0_i32_1 = arith.constant 0 : i32
    %c0_i32_2 = arith.constant 0 : i32
    return %c0_i32, %c0_i32_0, %c0_i32_1 : i32, i32, i32
  }
  func.func @transform_12(%arg0: i32) -> (i32, i32, i32) {
    %c0_i32 = arith.constant 0 : i32
    %c0_i32_0 = arith.constant 0 : i32
    %c0_i32_1 = arith.constant 0 : i32
    %c0_i32_2 = arith.constant 0 : i32
    return %c0_i32, %c0_i32_0, %c0_i32_1 : i32, i32, i32
  }
  func.func @transform_13(%arg0: i32) -> (i32, i32) {
    %c0_i32 = arith.constant 0 : i32
    %c0_i32_0 = arith.constant 0 : i32
    %c0_i32_1 = arith.constant 0 : i32
    return %c0_i32, %c0_i32_0 : i32, i32
  }
  func.func @transform_14(%arg0: i32) -> (i32, i32) {
    %c0_i32 = arith.constant 0 : i32
    %c0_i32_0 = arith.constant 0 : i32
    %c0_i32_1 = arith.constant 0 : i32
    return %c0_i32, %c0_i32_0 : i32, i32
  }
  func.func @transform_15(%arg0: i32) -> (i32, i32) {
    %c0_i32 = arith.constant 0 : i32
    %c0_i32_0 = arith.constant 0 : i32
    %c0_i32_1 = arith.constant 0 : i32
    return %c0_i32, %c0_i32_0 : i32, i32
  }
  func.func @transform_16(%arg0: i32) -> (i32, i32) {
    %c0_i32 = arith.constant 0 : i32
    %c0_i32_0 = arith.constant 0 : i32
    %c0_i32_1 = arith.constant 0 : i32
    return %c0_i32, %c0_i32_0 : i32, i32
  }
}

</mosaic_0001>

<llo_original>
// kernel: encoder_forward.1
$region0: #{encoder_forward.1}
  #allocation0 [shape = 'u32[]', space=smem, size = 0x4, offset = 0x4, fixed_abs, tag = 'smem constant byte address 0x4 - core index']
  #allocation1 [shape = 'u32[144,128]{1,0:T(1,128)}', space=vmem, size = 0x12000, scoped, tag = 'internal scratch']
  %s0 = inlined_call_operand.vmem [shape: f32[392,9], index: 0, kind: input, shape index: {}]
  %s1 = inlined_call_operand.vmem [shape: f32[9,8], index: 1, kind: input, shape index: {}]
  %s2 = inlined_call_operand.vmem [shape: f32[1,8], index: 2, kind: input, shape index: {}]
  %s3 = inlined_call_operand.vmem [shape: f32[9,98,392], index: 3, kind: input, shape index: {}]
  %s4 = inlined_call_operand.vmem [shape: f32[9,8,16], index: 4, kind: input, shape index: {}]
  %s5 = inlined_call_operand.vmem [shape: f32[1,16], index: 5, kind: input, shape index: {}]
  %s6 = inlined_call_operand.vmem [shape: f32[1,16], index: 6, kind: input, shape index: {}]
  %s7 = inlined_call_operand.vmem [shape: f32[1,16], index: 7, kind: input, shape index: {}]
  %s8 = inlined_call_operand.vmem [shape: f32[9,18,98], index: 8, kind: input, shape index: {}]
  %s9 = inlined_call_operand.vmem [shape: f32[9,16,32], index: 9, kind: input, shape index: {}]
  %s10 = inlined_call_operand.vmem [shape: f32[1,32], index: 10, kind: input, shape index: {}]
  %s11 = inlined_call_operand.vmem [shape: f32[9,2,18], index: 11, kind: input, shape index: {}]
  %s12 = inlined_call_operand.vmem [shape: f32[9,32,32], index: 12, kind: input, shape index: {}]
  %s13 = inlined_call_operand.vmem [shape: f32[1,32], index: 13, kind: input, shape index: {}]
  %s14 = inlined_call_operand.vmem [shape: f32[32,8], index: 14, kind: input, shape index: {}]
  %s15 = inlined_call_operand.vmem [shape: f32[1,8], index: 15, kind: input, shape index: {}]
  %s16 = inlined_call_operand.hbm [shape: f32[2,8], index: 16, kind: output, shape index: {}]
  %s17 = sld [smem:[#allocation0]]
  $region74: #{encoder_forward.1} parent=0
    _
  %s19 = ssub.s32 1, %s17
  %s20 = scalar_select 0, %s19, %s17
  $region1: #{encoder_forward.1} parent=0
    #allocation2 [shape = 'u8[1024]{0}', space=vmem, size = 0x400, scoped, tag = 'output window, operand 0, single buffered']
    #allocation3 [shape = 's32[1]{0}', space=sflag, size = 0x4, scoped, tag = 'scoped memory for encoder_forward.1']
    %21 = vsyncpa [#allocation3], 0
    // Predicated region
    $region2: #{encoder_forward.1} parent=1 // pred_check
      _
    $region3: #{encoder_forward.1} parent=1 // pred_check_branch
      %23 = sbr.rel (0) target = $region5
    $region4: #{encoder_forward.1} parent=1 // pred_region
      _
    $region5: #{encoder_forward.1} parent=1 // pred_fallthru
      _
    // Predicated region
    $region6: #{encoder_forward.1} parent=1 // pred_check
      _
    $region7: #{encoder_forward.1} parent=1 // pred_check_branch
      %25 = sbr.rel (0) target = $region9
    $region8: #{encoder_forward.1} parent=1 // pred_region
      _
    $region9: #{encoder_forward.1} parent=1 // pred_fallthru
      _
    // Predicated region
    $region10: #{encoder_forward.1} parent=1 // pred_check
      _
    $region11: #{encoder_forward.1} parent=1 // pred_check_branch
      %27 = sbr.rel (0) target = $region13
    $region12: #{encoder_forward.1} parent=1 // pred_region
      _
    $region13: #{encoder_forward.1} parent=1 // pred_fallthru
      _
    // Predicated region
    $region14: #{encoder_forward.1} parent=1 // pred_check
      _
    $region15: #{encoder_forward.1} parent=1 // pred_check_branch
      %29 = sbr.rel (0) target = $region17
    $region16: #{encoder_forward.1} parent=1 // pred_region
      _
    $region17: #{encoder_forward.1} parent=1 // pred_fallthru
      _
    // Predicated region
    $region18: #{encoder_forward.1} parent=1 // pred_check
      _
    $region19: #{encoder_forward.1} parent=1 // pred_check_branch
      %31 = sbr.rel (0) target = $region21
    $region20: #{encoder_forward.1} parent=1 // pred_region
      _
    $region21: #{encoder_forward.1} parent=1 // pred_fallthru
      _
    // Predicated region
    $region22: #{encoder_forward.1} parent=1 // pred_check
      _
    $region23: #{encoder_forward.1} parent=1 // pred_check_branch
      %33 = sbr.rel (0) target = $region25
    $region24: #{encoder_forward.1} parent=1 // pred_region
      _
    $region25: #{encoder_forward.1} parent=1 // pred_fallthru
      _
    // Predicated region
    $region26: #{encoder_forward.1} parent=1 // pred_check
      _
    $region27: #{encoder_forward.1} parent=1 // pred_check_branch
      %35 = sbr.rel (0) target = $region29
    $region28: #{encoder_forward.1} parent=1 // pred_region
      _
    $region29: #{encoder_forward.1} parent=1 // pred_fallthru
      _
    // Predicated region
    $region30: #{encoder_forward.1} parent=1 // pred_check
      _
    $region31: #{encoder_forward.1} parent=1 // pred_check_branch
      %37 = sbr.rel (0) target = $region33
    $region32: #{encoder_forward.1} parent=1 // pred_region
      _
    $region33: #{encoder_forward.1} parent=1 // pred_fallthru
      _
    // Predicated region
    $region34: #{encoder_forward.1} parent=1 // pred_check
      _
    $region35: #{encoder_forward.1} parent=1 // pred_check_branch
      %39 = sbr.rel (0) target = $region37
    $region36: #{encoder_forward.1} parent=1 // pred_region
      _
    $region37: #{encoder_forward.1} parent=1 // pred_fallthru
      _
    // Predicated region
    $region38: #{encoder_forward.1} parent=1 // pred_check
      _
    $region39: #{encoder_forward.1} parent=1 // pred_check_branch
      %41 = sbr.rel (0) target = $region41
    $region40: #{encoder_forward.1} parent=1 // pred_region
      _
    $region41: #{encoder_forward.1} parent=1 // pred_fallthru
      _
    // Predicated region
    $region42: #{encoder_forward.1} parent=1 // pred_check
      _
    $region43: #{encoder_forward.1} parent=1 // pred_check_branch
      %43 = sbr.rel (0) target = $region45
    $region44: #{encoder_forward.1} parent=1 // pred_region
      _
    $region45: #{encoder_forward.1} parent=1 // pred_fallthru
      _
    // Predicated region
    $region46: #{encoder_forward.1} parent=1 // pred_check
      _
    $region47: #{encoder_forward.1} parent=1 // pred_check_branch
      %45 = sbr.rel (0) target = $region49
    $region48: #{encoder_forward.1} parent=1 // pred_region
      _
    $region49: #{encoder_forward.1} parent=1 // pred_fallthru
      _
    // Predicated region
    $region50: #{encoder_forward.1} parent=1 // pred_check
      _
    $region51: #{encoder_forward.1} parent=1 // pred_check_branch
      %47 = sbr.rel (0) target = $region53
    $region52: #{encoder_forward.1} parent=1 // pred_region
      _
    $region53: #{encoder_forward.1} parent=1 // pred_fallthru
      _
    // Predicated region
    $region54: #{encoder_forward.1} parent=1 // pred_check
      _
    $region55: #{encoder_forward.1} parent=1 // pred_check_branch
      %49 = sbr.rel (0) target = $region57
    $region56: #{encoder_forward.1} parent=1 // pred_region
      _
    $region57: #{encoder_forward.1} parent=1 // pred_fallthru
      _
    // Predicated region
    $region58: #{encoder_forward.1} parent=1 // pred_check
      _
    $region59: #{encoder_forward.1} parent=1 // pred_check_branch
      %51 = sbr.rel (0) target = $region61
    $region60: #{encoder_forward.1} parent=1 // pred_region
      _
    $region61: #{encoder_forward.1} parent=1 // pred_fallthru
      _
    // Predicated region
    $region62: #{encoder_forward.1} parent=1 // pred_check
      _
    $region63: #{encoder_forward.1} parent=1 // pred_check_branch
      %53 = sbr.rel (0) target = $region65
    $region64: #{encoder_forward.1} parent=1 // pred_region
      _
    $region65: #{encoder_forward.1} parent=1 // pred_fallthru
      _
    %v54 = vld [vmem:[%s0] sm:$0xff]
    %v55 = vld [vmem:[%s0 + $0x8] sm:$0xff]
    %v56 = vld [vmem:[%s0 + $0x10] sm:$0xff]
    %v57 = vld [vmem:[%s0 + $0x18] sm:$0xff]
    %v58 = vld [vmem:[%s0 + $0x20] sm:$0xff]
    %v59 = vld [vmem:[%s0 + $0x28] sm:$0xff]
    %v60 = vld [vmem:[%s0 + $0x30] sm:$0xff]
    %v61 = vld [vmem:[%s0 + $0x38] sm:$0xff]
    %v62 = vld [vmem:[%s0 + $0x40] sm:$0xff]
    %v63 = vld [vmem:[%s0 + $0x48] sm:$0xff]
    %v64 = vld [vmem:[%s0 + $0x50] sm:$0xff]
    %v65 = vld [vmem:[%s0 + $0x58] sm:$0xff]
    %v66 = vld [vmem:[%s0 + $0x60] sm:$0xff]
    %v67 = vld [vmem:[%s0 + $0x68] sm:$0xff]
    %v68 = vld [vmem:[%s0 + $0x70] sm:$0xff]
    %v69 = vld [vmem:[%s0 + $0x78] sm:$0xff]
    %v70 = vld [vmem:[%s0 + $0x80] sm:$0xff]
    %v71 = vld [vmem:[%s0 + $0x88] sm:$0xff]
    %v72 = vld [vmem:[%s0 + $0x90] sm:$0xff]
    %v73 = vld [vmem:[%s0 + $0x98] sm:$0xff]
    %v74 = vld [vmem:[%s0 + $0xa0] sm:$0xff]
    %v75 = vld [vmem:[%s0 + $0xa8] sm:$0xff]
    %v76 = vld [vmem:[%s0 + $0xb0] sm:$0xff]
    %v77 = vld [vmem:[%s0 + $0xb8] sm:$0xff]
    %v78 = vld [vmem:[%s0 + $0xc0] sm:$0xff]
    %v79 = vld [vmem:[%s0 + $0xc8] sm:$0xff]
    %v80 = vld [vmem:[%s0 + $0xd0] sm:$0xff]
    %v81 = vld [vmem:[%s0 + $0xd8] sm:$0xff]
    %v82 = vld [vmem:[%s0 + $0xe0] sm:$0xff]
    %v83 = vld [vmem:[%s0 + $0xe8] sm:$0xff]
    %v84 = vld [vmem:[%s0 + $0xf0] sm:$0xff]
    %v85 = vld [vmem:[%s0 + $0xf8] sm:$0xff]
    %v86 = vld [vmem:[%s0 + $0x100] sm:$0xff]
    %v87 = vld [vmem:[%s0 + $0x108] sm:$0xff]
    %v88 = vld [vmem:[%s0 + $0x110] sm:$0xff]
    %v89 = vld [vmem:[%s0 + $0x118] sm:$0xff]
    %v90 = vld [vmem:[%s0 + $0x120] sm:$0xff]
    %v91 = vld [vmem:[%s0 + $0x128] sm:$0xff]
    %v92 = vld [vmem:[%s0 + $0x130] sm:$0xff]
    %v93 = vld [vmem:[%s0 + $0x138] sm:$0xff]
    %v94 = vld [vmem:[%s0 + $0x140] sm:$0xff]
    %v95 = vld [vmem:[%s0 + $0x148] sm:$0xff]
    %v96 = vld [vmem:[%s0 + $0x150] sm:$0xff]
    %v97 = vld [vmem:[%s0 + $0x158] sm:$0xff]
    %v98 = vld [vmem:[%s0 + $0x160] sm:$0xff]
    %v99 = vld [vmem:[%s0 + $0x168] sm:$0xff]
    %v100 = vld [vmem:[%s0 + $0x170] sm:$0xff]
    %v101 = vld [vmem:[%s0 + $0x178] sm:$0xff]
    %v102 = vld [vmem:[%s0 + $0x180] sm:$0xff]
    %v103 = vld [vmem:[%s1] sm:$0xff]
    %v104 = vld [vmem:[%s1 + $0x8] sm:$0x1]
    %v105 = vld [vmem:[%s2] sm:$0x1]
    %v107 = vlaneseq
    %v108 = vshrl.u32 %v107, 7
    %v109 = vsub.s32 0, %v108
    %v110 = vrot.slane %v105, %v109
    %vm112 = vcmask 72704
    %v114 = vsel %vm112, %v54, 0
    %v117 = vsel %vm112, %v55, 0
    %v120 = vsel %vm112, %v56, 0
    %v123 = vsel %vm112, %v57, 0
    %v126 = vsel %vm112, %v58, 0
    %v129 = vsel %vm112, %v59, 0
    %v132 = vsel %vm112, %v60, 0
    %v135 = vsel %vm112, %v61, 0
    %v138 = vsel %vm112, %v62, 0
    %v141 = vsel %vm112, %v63, 0
    %v144 = vsel %vm112, %v64, 0
    %v147 = vsel %vm112, %v65, 0
    %v150 = vsel %vm112, %v66, 0
    %v153 = vsel %vm112, %v67, 0
    %v156 = vsel %vm112, %v68, 0
    %v159 = vsel %vm112, %v69, 0
    %v162 = vsel %vm112, %v70, 0
    %v165 = vsel %vm112, %v71, 0
    %v168 = vsel %vm112, %v72, 0
    %v171 = vsel %vm112, %v73, 0
    %v174 = vsel %vm112, %v74, 0
    %v177 = vsel %vm112, %v75, 0
    %v180 = vsel %vm112, %v76, 0
    %v183 = vsel %vm112, %v77, 0
    %v186 = vsel %vm112, %v78, 0
    %v189 = vsel %vm112, %v79, 0
    %v192 = vsel %vm112, %v80, 0
    %v195 = vsel %vm112, %v81, 0
    %v198 = vsel %vm112, %v82, 0
    %v201 = vsel %vm112, %v83, 0
    %v204 = vsel %vm112, %v84, 0
    %v207 = vsel %vm112, %v85, 0
    %v210 = vsel %vm112, %v86, 0
    %v213 = vsel %vm112, %v87, 0
    %v216 = vsel %vm112, %v88, 0
    %v219 = vsel %vm112, %v89, 0
    %v222 = vsel %vm112, %v90, 0
    %v225 = vsel %vm112, %v91, 0
    %v228 = vsel %vm112, %v92, 0
    %v231 = vsel %vm112, %v93, 0
    %v234 = vsel %vm112, %v94, 0
    %v237 = vsel %vm112, %v95, 0
    %v240 = vsel %vm112, %v96, 0
    %v243 = vsel %vm112, %v97, 0
    %v246 = vsel %vm112, %v98, 0
    %v249 = vsel %vm112, %v99, 0
    %v252 = vsel %vm112, %v100, 0
    %v255 = vsel %vm112, %v101, 0
    %v258 = vsel %vm112, %v102, 0
    %vm260 = vcmask 1040384
    %v262 = vsel %vm260, %v104, 0
    %264 = vmatprep.subr.mxu0 0.0
    %265 = vmatpush1.msra.mxu0 %v103
    %266 = vmatprep.subr.mxu0 0.0
    %267 = vmatpush1.msra.mxu0 %v262
    %268 = vmatprep.subr.mxu0 0.0
    %269 = vmatpush1.msra.mxu0 0.0
    %270 = vmatprep.subr.mxu0 0.0
    %271 = vmatpush1.msra.mxu0 0.0
    %272 = vmatprep.subr.mxu0 0.0
    %273 = vmatpush1.msra.mxu0 0.0
    %274 = vmatprep.subr.mxu0 0.0
    %275 = vmatpush1.msra.mxu0 0.0
    %276 = vmatprep.subr.mxu0 0.0
    %277 = vmatpush1.msra.mxu0 0.0
    %278 = vmatprep.subr.mxu0 0.0
    %279 = vmatpush1.msra.mxu0 0.0
    %280 = vmatprep.subr.mxu0 0.0
    %281 = vmatpush1.msra.mxu0 0.0
    %282 = vmatprep.subr.mxu0 0.0
    %283 = vmatpush1.msra.mxu0 0.0
    %284 = vmatprep.subr.mxu0 0.0
    %285 = vmatpush1.msra.mxu0 0.0
    %286 = vmatprep.subr.mxu0 0.0
    %287 = vmatpush1.msra.mxu0 0.0
    %288 = vmatprep.subr.mxu0 0.0
    %289 = vmatpush1.msra.mxu0 0.0
    %290 = vmatprep.subr.mxu0 0.0
    %291 = vmatpush1.msra.mxu0 0.0
    %292 = vmatprep.subr.mxu0 0.0
    %293 = vmatpush1.msra.mxu0 0.0
    %294 = vmatprep.subr.mxu0 0.0
    %295 = vmatpush1.msra.mxu0 0.0
    %296 = vmatprep.subr.mxu0 0.0
    %297 = vmatpush1.msra.mxu0 0.0
    %298 = vmatprep.subr.mxu0 0.0
    %299 = vmatpush1.msra.mxu0 0.0
    %300 = vmatprep.subr.mxu0 0.0
    %301 = vmatpush1.msra.mxu0 0.0
    %302 = vmatprep.subr.mxu0 0.0
    %303 = vmatpush1.msra.mxu0 0.0
    %304 = vmatprep.subr.mxu0 0.0
    %305 = vmatpush1.msra.mxu0 0.0
    %306 = vmatprep.subr.mxu0 0.0
    %307 = vmatpush1.msra.mxu0 0.0
    %308 = vmatprep.subr.mxu0 0.0
    %309 = vmatpush1.msra.mxu0 0.0
    %310 = vmatprep.subr.mxu0 0.0
    %311 = vmatpush1.msra.mxu0 0.0
    %312 = vmatprep.subr.mxu0 0.0
    %313 = vmatpush1.msra.mxu0 0.0
    %314 = vmatprep.subr.mxu0 0.0
    %315 = vmatpush1.msra.mxu0 0.0
    %316 = vmatprep.subr.mxu0 0.0
    %317 = vmatpush1.msra.mxu0 0.0
    %318 = vmatprep.subr.mxu0 0.0
    %319 = vmatpush1.msra.mxu0 0.0
    %320 = vmatprep.subr.mxu0 0.0
    %321 = vmatpush1.msra.mxu0 0.0
    %322 = vmatprep.subr.mxu0 0.0
    %323 = vmatpush1.msra.mxu0 0.0
    %324 = vmatprep.subr.mxu0 0.0
    %325 = vmatpush1.msra.mxu0 0.0
    %326 = vmatprep.subr.mxu0 0.0
    %327 = vmatpush1.msra.mxu0 0.0
    %328 = vmatprep.mubr.f32.mxu0 0.0
    %329 = vmatmul.mubr.f32.gmra.mrb[0].mxu0 %v114
    %v330 = vpop.f32.mrb[0].mxu0
    %v331 = vadd.f32 %v110, %v330
    %v332 = vpop.f32.mrb[0].mxu0
    %333 = vmatprep.mubr.f32.mxu0 0.0
    %334 = vmatmul.mubr.f32.gmra.mrb[0].mxu0 %v117
    %v335 = vpop.f32.mrb[0].mxu0
    %v336 = vadd.f32 %v110, %v335
    %v337 = vpop.f32.mrb[0].mxu0
    %338 = vmatprep.mubr.f32.mxu0 0.0
    %339 = vmatmul.mubr.f32.gmra.mrb[0].mxu0 %v120
    %v340 = vpop.f32.mrb[0].mxu0
    %v341 = vadd.f32 %v110, %v340
    %v342 = vpop.f32.mrb[0].mxu0
    %343 = vmatprep.mubr.f32.mxu0 0.0
    %344 = vmatmul.mubr.f32.gmra.mrb[0].mxu0 %v123
    %v345 = vpop.f32.mrb[0].mxu0
    %v346 = vadd.f32 %v110, %v345
    %v347 = vpop.f32.mrb[0].mxu0
    %348 = vmatprep.mubr.f32.mxu0 0.0
    %349 = vmatmul.mubr.f32.gmra.mrb[0].mxu0 %v126
    %v350 = vpop.f32.mrb[0].mxu0
    %v351 = vadd.f32 %v110, %v350
    %v352 = vpop.f32.mrb[0].mxu0
    %353 = vmatprep.mubr.f32.mxu0 0.0
    %354 = vmatmul.mubr.f32.gmra.mrb[0].mxu0 %v129
    %v355 = vpop.f32.mrb[0].mxu0
    %v356 = vadd.f32 %v110, %v355
    %v357 = vpop.f32.mrb[0].mxu0
    %358 = vmatprep.mubr.f32.mxu0 0.0
    %359 = vmatmul.mubr.f32.gmra.mrb[0].mxu0 %v132
    %v360 = vpop.f32.mrb[0].mxu0
    %v361 = vadd.f32 %v110, %v360
    %v362 = vpop.f32.mrb[0].mxu0
    %363 = vmatprep.mubr.f32.mxu0 0.0
    %364 = vmatmul.mubr.f32.gmra.mrb[0].mxu0 %v135
    %v365 = vpop.f32.mrb[0].mxu0
    %v366 = vadd.f32 %v110, %v365
    %v367 = vpop.f32.mrb[0].mxu0
    %368 = vmatprep.mubr.f32.mxu0 0.0
    %369 = vmatmul.mubr.f32.gmra.mrb[0].mxu0 %v138
    %v370 = vpop.f32.mrb[0].mxu0
    %v371 = vadd.f32 %v110, %v370
    %v372 = vpop.f32.mrb[0].mxu0
    %373 = vmatprep.mubr.f32.mxu0 0.0
    %374 = vmatmul.mubr.f32.gmra.mrb[0].mxu0 %v141
    %v375 = vpop.f32.mrb[0].mxu0
    %v376 = vadd.f32 %v110, %v375
    %v377 = vpop.f32.mrb[0].mxu0
    %378 = vmatprep.mubr.f32.mxu0 0.0
    %379 = vmatmul.mubr.f32.gmra.mrb[0].mxu0 %v144
    %v380 = vpop.f32.mrb[0].mxu0
    %v381 = vadd.f32 %v110, %v380
    %v382 = vpop.f32.mrb[0].mxu0
    %383 = vmatprep.mubr.f32.mxu0 0.0
    %384 = vmatmul.mubr.f32.gmra.mrb[0].mxu0 %v147
    %v385 = vpop.f32.mrb[0].mxu0
    %v386 = vadd.f32 %v110, %v385
    %v387 = vpop.f32.mrb[0].mxu0
    %388 = vmatprep.mubr.f32.mxu0 0.0
    %389 = vmatmul.mubr.f32.gmra.mrb[0].mxu0 %v150
    %v390 = vpop.f32.mrb[0].mxu0
    %v391 = vadd.f32 %v110, %v390
    %v392 = vpop.f32.mrb[0].mxu0
    %393 = vmatprep.mubr.f32.mxu0 0.0
    %394 = vmatmul.mubr.f32.gmra.mrb[0].mxu0 %v153
    %v395 = vpop.f32.mrb[0].mxu0
    %v396 = vadd.f32 %v110, %v395
    %v397 = vpop.f32.mrb[0].mxu0
    %398 = vmatprep.mubr.f32.mxu0 0.0
    %399 = vmatmul.mubr.f32.gmra.mrb[0].mxu0 %v156
    %v400 = vpop.f32.mrb[0].mxu0
    %v401 = vadd.f32 %v110, %v400
    %v402 = vpop.f32.mrb[0].mxu0
    %403 = vmatprep.mubr.f32.mxu0 0.0
    %404 = vmatmul.mubr.f32.gmra.mrb[0].mxu0 %v159
    %v405 = vpop.f32.mrb[0].mxu0
    %v406 = vadd.f32 %v110, %v405
    %v407 = vpop.f32.mrb[0].mxu0
    %408 = vmatprep.mubr.f32.mxu0 0.0
    %409 = vmatmul.mubr.f32.gmra.mrb[0].mxu0 %v162
    %v410 = vpop.f32.mrb[0].mxu0
    %v411 = vadd.f32 %v110, %v410
    %v412 = vpop.f32.mrb[0].mxu0
    %413 = vmatprep.mubr.f32.mxu0 0.0
    %414 = vmatmul.mubr.f32.gmra.mrb[0].mxu0 %v165
    %v415 = vpop.f32.mrb[0].mxu0
    %v416 = vadd.f32 %v110, %v415
    %v417 = vpop.f32.mrb[0].mxu0
    %418 = vmatprep.mubr.f32.mxu0 0.0
    %419 = vmatmul.mubr.f32.gmra.mrb[0].mxu0 %v168
    %v420 = vpop.f32.mrb[0].mxu0
    %v421 = vadd.f32 %v110, %v420
    %v422 = vpop.f32.mrb[0].mxu0
    %423 = vmatprep.mubr.f32.mxu0 0.0
    %424 = vmatmul.mubr.f32.gmra.mrb[0].mxu0 %v171
    %v425 = vpop.f32.mrb[0].mxu0
    %v426 = vadd.f32 %v110, %v425
    %v427 = vpop.f32.mrb[0].mxu0
    %428 = vmatprep.mubr.f32.mxu0 0.0
    %429 = vmatmul.mubr.f32.gmra.mrb[0].mxu0 %v174
    %v430 = vpop.f32.mrb[0].mxu0
    %v431 = vadd.f32 %v110, %v430
    %v432 = vpop.f32.mrb[0].mxu0
    %433 = vmatprep.mubr.f32.mxu0 0.0
    %434 = vmatmul.mubr.f32.gmra.mrb[0].mxu0 %v177
    %v435 = vpop.f32.mrb[0].mxu0
    %v436 = vadd.f32 %v110, %v435
    %v437 = vpop.f32.mrb[0].mxu0
    %438 = vmatprep.mubr.f32.mxu0 0.0
    %439 = vmatmul.mubr.f32.gmra.mrb[0].mxu0 %v180
    %v440 = vpop.f32.mrb[0].mxu0
    %v441 = vadd.f32 %v110, %v440
    %v442 = vpop.f32.mrb[0].mxu0
    %443 = vmatprep.mubr.f32.mxu0 0.0
    %444 = vmatmul.mubr.f32.gmra.mrb[0].mxu0 %v183
    %v445 = vpop.f32.mrb[0].mxu0
    %v446 = vadd.f32 %v110, %v445
    %v447 = vpop.f32.mrb[0].mxu0
    %448 = vmatprep.mubr.f32.mxu0 0.0
    %449 = vmatmul.mubr.f32.gmra.mrb[0].mxu0 %v186
    %v450 = vpop.f32.mrb[0].mxu0
    %v451 = vadd.f32 %v110, %v450
    %v452 = vpop.f32.mrb[0].mxu0
    %453 = vmatprep.mubr.f32.mxu0 0.0
    %454 = vmatmul.mubr.f32.gmra.mrb[0].mxu0 %v189
    %v455 = vpop.f32.mrb[0].mxu0
    %v456 = vadd.f32 %v110, %v455
    %v457 = vpop.f32.mrb[0].mxu0
    %458 = vmatprep.mubr.f32.mxu0 0.0
    %459 = vmatmul.mubr.f32.gmra.mrb[0].mxu0 %v192
    %v460 = vpop.f32.mrb[0].mxu0
    %v461 = vadd.f32 %v110, %v460
    %v462 = vpop.f32.mrb[0].mxu0
    %463 = vmatprep.mubr.f32.mxu0 0.0
    %464 = vmatmul.mubr.f32.gmra.mrb[0].mxu0 %v195
    %v465 = vpop.f32.mrb[0].mxu0
    %v466 = vadd.f32 %v110, %v465
    %v467 = vpop.f32.mrb[0].mxu0
    %468 = vmatprep.mubr.f32.mxu0 0.0
    %469 = vmatmul.mubr.f32.gmra.mrb[0].mxu0 %v198
    %v470 = vpop.f32.mrb[0].mxu0
    %v471 = vadd.f32 %v110, %v470
    %v472 = vpop.f32.mrb[0].mxu0
    %473 = vmatprep.mubr.f32.mxu0 0.0
    %474 = vmatmul.mubr.f32.gmra.mrb[0].mxu0 %v201
    %v475 = vpop.f32.mrb[0].mxu0
    %v476 = vadd.f32 %v110, %v475
    %v477 = vpop.f32.mrb[0].mxu0
    %478 = vmatprep.mubr.f32.mxu0 0.0
    %479 = vmatmul.mubr.f32.gmra.mrb[0].mxu0 %v204
    %v480 = vpop.f32.mrb[0].mxu0
    %v481 = vadd.f32 %v110, %v480
    %v482 = vpop.f32.mrb[0].mxu0
    %483 = vmatprep.mubr.f32.mxu0 0.0
    %484 = vmatmul.mubr.f32.gmra.mrb[0].mxu0 %v207
    %v485 = vpop.f32.mrb[0].mxu0
    %v486 = vadd.f32 %v110, %v485
    %v487 = vpop.f32.mrb[0].mxu0
    %488 = vmatprep.mubr.f32.mxu0 0.0
    %489 = vmatmul.mubr.f32.gmra.mrb[0].mxu0 %v210
    %v490 = vpop.f32.mrb[0].mxu0
    %v491 = vadd.f32 %v110, %v490
    %v492 = vpop.f32.mrb[0].mxu0
    %493 = vmatprep.mubr.f32.mxu0 0.0
    %494 = vmatmul.mubr.f32.gmra.mrb[0].mxu0 %v213
    %v495 = vpop.f32.mrb[0].mxu0
    %v496 = vadd.f32 %v110, %v495
    %v497 = vpop.f32.mrb[0].mxu0
    %498 = vmatprep.mubr.f32.mxu0 0.0
    %499 = vmatmul.mubr.f32.gmra.mrb[0].mxu0 %v216
    %v500 = vpop.f32.mrb[0].mxu0
    %v501 = vadd.f32 %v110, %v500
    %v502 = vpop.f32.mrb[0].mxu0
    %503 = vmatprep.mubr.f32.mxu0 0.0
    %504 = vmatmul.mubr.f32.gmra.mrb[0].mxu0 %v219
    %v505 = vpop.f32.mrb[0].mxu0
    %v506 = vadd.f32 %v110, %v505
    %v507 = vpop.f32.mrb[0].mxu0
    %508 = vmatprep.mubr.f32.mxu0 0.0
    %509 = vmatmul.mubr.f32.gmra.mrb[0].mxu0 %v222
    %v510 = vpop.f32.mrb[0].mxu0
    %v511 = vadd.f32 %v110, %v510
    %v512 = vpop.f32.mrb[0].mxu0
    %513 = vmatprep.mubr.f32.mxu0 0.0
    %514 = vmatmul.mubr.f32.gmra.mrb[0].mxu0 %v225
    %v515 = vpop.f32.mrb[0].mxu0
    %v516 = vadd.f32 %v110, %v515
    %v517 = vpop.f32.mrb[0].mxu0
    %518 = vmatprep.mubr.f32.mxu0 0.0
    %519 = vmatmul.mubr.f32.gmra.mrb[0].mxu0 %v228
    %v520 = vpop.f32.mrb[0].mxu0
    %v521 = vadd.f32 %v110, %v520
    %v522 = vpop.f32.mrb[0].mxu0
    %523 = vmatprep.mubr.f32.mxu0 0.0
    %524 = vmatmul.mubr.f32.gmra.mrb[0].mxu0 %v231
    %v525 = vpop.f32.mrb[0].mxu0
    %v526 = vadd.f32 %v110, %v525
    %v527 = vpop.f32.mrb[0].mxu0
    %528 = vmatprep.mubr.f32.mxu0 0.0
    %529 = vmatmul.mubr.f32.gmra.mrb[0].mxu0 %v234
    %v530 = vpop.f32.mrb[0].mxu0
    %v531 = vadd.f32 %v110, %v530
    %v532 = vpop.f32.mrb[0].mxu0
    %533 = vmatprep.mubr.f32.mxu0 0.0
    %534 = vmatmul.mubr.f32.gmra.mrb[0].mxu0 %v237
    %v535 = vpop.f32.mrb[0].mxu0
    %v536 = vadd.f32 %v110, %v535
    %v537 = vpop.f32.mrb[0].mxu0
    %538 = vmatprep.mubr.f32.mxu0 0.0
    %539 = vmatmul.mubr.f32.gmra.mrb[0].mxu0 %v240
    %v540 = vpop.f32.mrb[0].mxu0
    %v541 = vadd.f32 %v110, %v540
    %v542 = vpop.f32.mrb[0].mxu0
    %543 = vmatprep.mubr.f32.mxu0 0.0
    %544 = vmatmul.mubr.f32.gmra.mrb[0].mxu0 %v243
    %v545 = vpop.f32.mrb[0].mxu0
    %v546 = vadd.f32 %v110, %v545
    %v547 = vpop.f32.mrb[0].mxu0
    %548 = vmatprep.mubr.f32.mxu0 0.0
    %549 = vmatmul.mubr.f32.gmra.mrb[0].mxu0 %v246
    %v550 = vpop.f32.mrb[0].mxu0
    %v551 = vadd.f32 %v110, %v550
    %v552 = vpop.f32.mrb[0].mxu0
    %553 = vmatprep.mubr.f32.mxu0 0.0
    %554 = vmatmul.mubr.f32.gmra.mrb[0].mxu0 %v249
    %v555 = vpop.f32.mrb[0].mxu0
    %v556 = vadd.f32 %v110, %v555
    %v557 = vpop.f32.mrb[0].mxu0
    %558 = vmatprep.mubr.f32.mxu0 0.0
    %559 = vmatmul.mubr.f32.gmra.mrb[0].mxu0 %v252
    %v560 = vpop.f32.mrb[0].mxu0
    %v561 = vadd.f32 %v110, %v560
    %v562 = vpop.f32.mrb[0].mxu0
    %563 = vmatprep.mubr.f32.mxu0 0.0
    %564 = vmatmul.mubr.f32.gmra.mrb[0].mxu0 %v255
    %v565 = vpop.f32.mrb[0].mxu0
    %v566 = vadd.f32 %v110, %v565
    %v567 = vpop.f32.mrb[0].mxu0
    %568 = vmatprep.mubr.f32.mxu0 0.0
    %569 = vmatmul.mubr.f32.gmra.mrb[0].mxu0 %v258
    %v570 = vpop.f32.mrb[0].mxu0
    %v571 = vadd.f32 %v110, %v570
    %v572 = vpop.f32.mrb[0].mxu0
    %573 = vdwg.mxu0
    %v574 = vmax.f32 %v331, 0.0
    %v575 = vmax.f32 %v336, 0.0
    %v576 = vmax.f32 %v341, 0.0
    %v577 = vmax.f32 %v346, 0.0
    %v578 = vmax.f32 %v351, 0.0
    %v579 = vmax.f32 %v356, 0.0
    %v580 = vmax.f32 %v361, 0.0
    %v581 = vmax.f32 %v366, 0.0
    %v582 = vmax.f32 %v371, 0.0
    %v583 = vmax.f32 %v376, 0.0
    %v584 = vmax.f32 %v381, 0.0
    %v585 = vmax.f32 %v386, 0.0
    %v586 = vmax.f32 %v391, 0.0
    %v587 = vmax.f32 %v396, 0.0
    %v588 = vmax.f32 %v401, 0.0
    %v589 = vmax.f32 %v406, 0.0
    %v590 = vmax.f32 %v411, 0.0
    %v591 = vmax.f32 %v416, 0.0
    %v592 = vmax.f32 %v421, 0.0
    %v593 = vmax.f32 %v426, 0.0
    %v594 = vmax.f32 %v431, 0.0
    %v595 = vmax.f32 %v436, 0.0
    %v596 = vmax.f32 %v441, 0.0
    %v597 = vmax.f32 %v446, 0.0
    %v598 = vmax.f32 %v451, 0.0
    %v599 = vmax.f32 %v456, 0.0
    %v600 = vmax.f32 %v461, 0.0
    %v601 = vmax.f32 %v466, 0.0
    %v602 = vmax.f32 %v471, 0.0
    %v603 = vmax.f32 %v476, 0.0
    %v604 = vmax.f32 %v481, 0.0
    %v605 = vmax.f32 %v486, 0.0
    %v606 = vmax.f32 %v491, 0.0
    %v607 = vmax.f32 %v496, 0.0
    %v608 = vmax.f32 %v501, 0.0
    %v609 = vmax.f32 %v506, 0.0
    %v610 = vmax.f32 %v511, 0.0
    %v611 = vmax.f32 %v516, 0.0
    %v612 = vmax.f32 %v521, 0.0
    %v613 = vmax.f32 %v526, 0.0
    %v614 = vmax.f32 %v531, 0.0
    %v615 = vmax.f32 %v536, 0.0
    %v616 = vmax.f32 %v541, 0.0
    %v617 = vmax.f32 %v546, 0.0
    %v618 = vmax.f32 %v551, 0.0
    %v619 = vmax.f32 %v556, 0.0
    %v620 = vmax.f32 %v561, 0.0
    %v621 = vmax.f32 %v566, 0.0
    %v622 = vmax.f32 %v571, 0.0
    %v623 = vld [vmem:[%s3] sm:$0xff]
    %v624 = vld [vmem:[%s3 + $0x8] sm:$0xff]
    %v625 = vld [vmem:[%s3 + $0x10] sm:$0xff]
    %v626 = vld [vmem:[%s3 + $0x18] sm:$0xff]
    %v627 = vld [vmem:[%s3 + $0x20] sm:$0xff]
    %v628 = vld [vmem:[%s3 + $0x28] sm:$0xff]
    %v629 = vld [vmem:[%s3 + $0x30] sm:$0xff]
    %v630 = vld [vmem:[%s3 + $0x38] sm:$0xff]
    %v631 = vld [vmem:[%s3 + $0x40] sm:$0xff]
    %v632 = vld [vmem:[%s3 + $0x48] sm:$0xff]
    %v633 = vld [vmem:[%s3 + $0x50] sm:$0xff]
    %v634 = vld [vmem:[%s3 + $0x58] sm:$0xff]
    %v635 = vld [vmem:[%s3 + $0x60] sm:$0xff]
    %v636 = vld [vmem:[%s3 + $0x68] sm:$0xff]
    %v637 = vld [vmem:[%s3 + $0x70] sm:$0xff]
    %v638 = vld [vmem:[%s3 + $0x78] sm:$0xff]
    %v639 = vld [vmem:[%s3 + $0x80] sm:$0xff]
    %v640 = vld [vmem:[%s3 + $0x88] sm:$0xff]
    %v641 = vld [vmem:[%s3 + $0x90] sm:$0xff]
    %v642 = vld [vmem:[%s3 + $0x98] sm:$0xff]
    %v643 = vld [vmem:[%s3 + $0xa0] sm:$0xff]
    %v644 = vld [vmem:[%s3 + $0xa8] sm:$0xff]
    %v645 = vld [vmem:[%s3 + $0xb0] sm:$0xff]
    %v646 = vld [vmem:[%s3 + $0xb8] sm:$0xff]
    %v647 = vld [vmem:[%s3 + $0xc0] sm:$0xff]
    %v648 = vld [vmem:[%s3 + $0xc8] sm:$0xff]
    %v649 = vld [vmem:[%s3 + $0xd0] sm:$0xff]
    %v650 = vld [vmem:[%s3 + $0xd8] sm:$0xff]
    %v651 = vld [vmem:[%s3 + $0xe0] sm:$0xff]
    %v652 = vld [vmem:[%s3 + $0xe8] sm:$0xff]
    %v653 = vld [vmem:[%s3 + $0xf0] sm:$0xff]
    %v654 = vld [vmem:[%s3 + $0xf8] sm:$0xff]
    %v655 = vld [vmem:[%s3 + $0x100] sm:$0xff]
    %v656 = vld [vmem:[%s3 + $0x108] sm:$0xff]
    %v657 = vld [vmem:[%s3 + $0x110] sm:$0xff]
    %v658 = vld [vmem:[%s3 + $0x118] sm:$0xff]
    %v659 = vld [vmem:[%s3 + $0x120] sm:$0xff]
    %v660 = vld [vmem:[%s3 + $0x128] sm:$0xff]
    %v661 = vld [vmem:[%s3 + $0x130] sm:$0xff]
    %v662 = vld [vmem:[%s3 + $0x138] sm:$0xff]
    %v663 = vld [vmem:[%s3 + $0x140] sm:$0xff]
    %v664 = vld [vmem:[%s3 + $0x148] sm:$0xff]
    %v665 = vld [vmem:[%s3 + $0x150] sm:$0xff]
    %v666 = vld [vmem:[%s3 + $0x158] sm:$0xff]
    %v667 = vld [vmem:[%s3 + $0x160] sm:$0xff]
    %v668 = vld [vmem:[%s3 + $0x168] sm:$0xff]
    %v669 = vld [vmem:[%s3 + $0x170] sm:$0xff]
    %v670 = vld [vmem:[%s3 + $0x178] sm:$0xff]
    %v671 = vld [vmem:[%s3 + $0x180] sm:$0x3]
    %v672 = vld [vmem:[%s3 + $0x188] sm:$0x3]
    %v673 = vld [vmem:[%s3 + $0x190] sm:$0x3]
    %v674 = vld [vmem:[%s3 + $0x198] sm:$0x3]
    %vm675 = vcmask 64512
    %v677 = vsel %vm675, %v626, 0
    %v680 = vsel %vm675, %v630, 0
    %v683 = vsel %vm675, %v634, 0
    %v686 = vsel %vm675, %v638, 0
    %v689 = vsel %vm675, %v642, 0
    %v692 = vsel %vm675, %v646, 0
    %v695 = vsel %vm675, %v650, 0
    %v698 = vsel %vm675, %v654, 0
    %v701 = vsel %vm675, %v658, 0
    %v704 = vsel %vm675, %v662, 0
    %v707 = vsel %vm675, %v666, 0
    %v710 = vsel %vm675, %v670, 0
    %v713 = vsel %vm675, %v674, 0
    %715 = vmatprep.subr.mxu0 0.0
    %716 = vmatpush1.msra.mxu0 %v574
    %717 = vmatprep.subr.mxu0 0.0
    %718 = vmatpush1.msra.mxu0 %v575
    %719 = vmatprep.subr.mxu0 0.0
    %720 = vmatpush1.msra.mxu0 %v576
    %721 = vmatprep.subr.mxu0 0.0
    %722 = vmatpush1.msra.mxu0 %v577
    %723 = vmatprep.subr.mxu0 0.0
    %724 = vmatpush1.msra.mxu0 %v578
    %725 = vmatprep.subr.mxu0 0.0
    %726 = vmatpush1.msra.mxu0 %v579
    %727 = vmatprep.subr.mxu0 0.0
    %728 = vmatpush1.msra.mxu0 %v580
    %729 = vmatprep.subr.mxu0 0.0
    %730 = vmatpush1.msra.mxu0 %v581
    %731 = vmatprep.subr.mxu0 0.0
    %732 = vmatpush1.msra.mxu0 %v582
    %733 = vmatprep.subr.mxu0 0.0
    %734 = vmatpush1.msra.mxu0 %v583
    %735 = vmatprep.subr.mxu0 0.0
    %736 = vmatpush1.msra.mxu0 %v584
    %737 = vmatprep.subr.mxu0 0.0
    %738 = vmatpush1.msra.mxu0 %v585
    %739 = vmatprep.subr.mxu0 0.0
    %740 = vmatpush1.msra.mxu0 %v586
    %741 = vmatprep.subr.mxu0 0.0
    %742 = vmatpush1.msra.mxu0 %v587
    %743 = vmatprep.subr.mxu0 0.0
    %744 = vmatpush1.msra.mxu0 %v588
    %745 = vmatprep.subr.mxu0 0.0
    %746 = vmatpush1.msra.mxu0 %v589
    %747 = vmatprep.subr.mxu0 0.0
    %748 = vmatpush1.msra.mxu0 %v590
    %749 = vmatprep.subr.mxu0 0.0
    %750 = vmatpush1.msra.mxu0 %v591
    %751 = vmatprep.subr.mxu0 0.0
    %752 = vmatpush1.msra.mxu0 %v592
    %753 = vmatprep.subr.mxu0 0.0
    %754 = vmatpush1.msra.mxu0 %v593
    %755 = vmatprep.subr.mxu0 0.0
    %756 = vmatpush1.msra.mxu0 %v594
    %757 = vmatprep.subr.mxu0 0.0
    %758 = vmatpush1.msra.mxu0 %v595
    %759 = vmatprep.subr.mxu0 0.0
    %760 = vmatpush1.msra.mxu0 %v596
    %761 = vmatprep.subr.mxu0 0.0
    %762 = vmatpush1.msra.mxu0 %v597
    %763 = vmatprep.subr.mxu0 0.0
    %764 = vmatpush1.msra.mxu0 %v598
    %765 = vmatprep.subr.mxu0 0.0
    %766 = vmatpush1.msra.mxu0 %v599
    %767 = vmatprep.subr.mxu0 0.0
    %768 = vmatpush1.msra.mxu0 %v600
    %769 = vmatprep.subr.mxu0 0.0
    %770 = vmatpush1.msra.mxu0 %v601
    %771 = vmatprep.subr.mxu0 0.0
    %772 = vmatpush1.msra.mxu0 %v602
    %773 = vmatprep.subr.mxu0 0.0
    %774 = vmatpush1.msra.mxu0 %v603
    %775 = vmatprep.subr.mxu0 0.0
    %776 = vmatpush1.msra.mxu0 %v604
    %777 = vmatprep.subr.mxu0 0.0
    %778 = vmatpush1.msra.mxu0 %v605
    %779 = vmatprep.mubr.f32.mxu0 %v624
    %780 = vmatmul.mubr.f32.gmra.mrb[0].mxu0 %v623
    %v781 = vpop.f32.mrb[0].mxu0
    %v782 = vadd.f32 0.0, %v781
    %v783 = vpop.f32.mrb[0].mxu0
    %784 = vmatprep.mubr.f32.mxu0 %v628
    %785 = vmatmul.mubr.f32.gmra.mrb[0].mxu0 %v627
    %v786 = vpop.f32.mrb[0].mxu0
    %v787 = vadd.f32 0.0, %v786
    %v788 = vpop.f32.mrb[0].mxu0
    %789 = vmatprep.mubr.f32.mxu0 %v632
    %790 = vmatmul.mubr.f32.gmra.mrb[0].mxu0 %v631
    %v791 = vpop.f32.mrb[0].mxu0
    %v792 = vadd.f32 0.0, %v791
    %v793 = vpop.f32.mrb[0].mxu0
    %794 = vmatprep.mubr.f32.mxu0 %v636
    %795 = vmatmul.mubr.f32.gmra.mrb[0].mxu0 %v635
    %v796 = vpop.f32.mrb[0].mxu0
    %v797 = vadd.f32 0.0, %v796
    %v798 = vpop.f32.mrb[0].mxu0
    %799 = vmatprep.mubr.f32.mxu0 %v640
    %800 = vmatmul.mubr.f32.gmra.mrb[0].mxu0 %v639
    %v801 = vpop.f32.mrb[0].mxu0
    %v802 = vadd.f32 0.0, %v801
    %v803 = vpop.f32.mrb[0].mxu0
    %804 = vmatprep.mubr.f32.mxu0 %v644
    %805 = vmatmul.mubr.f32.gmra.mrb[0].mxu0 %v643
    %v806 = vpop.f32.mrb[0].mxu0
    %v807 = vadd.f32 0.0, %v806
    %v808 = vpop.f32.mrb[0].mxu0
    %809 = vmatprep.mubr.f32.mxu0 %v648
    %810 = vmatmul.mubr.f32.gmra.mrb[0].mxu0 %v647
    %v811 = vpop.f32.mrb[0].mxu0
    %v812 = vadd.f32 0.0, %v811
    %v813 = vpop.f32.mrb[0].mxu0
    %814 = vmatprep.mubr.f32.mxu0 %v652
    %815 = vmatmul.mubr.f32.gmra.mrb[0].mxu0 %v651
    %v816 = vpop.f32.mrb[0].mxu0
    %v817 = vadd.f32 0.0, %v816
    %v818 = vpop.f32.mrb[0].mxu0
    %819 = vmatprep.mubr.f32.mxu0 %v656
    %820 = vmatmul.mubr.f32.gmra.mrb[0].mxu0 %v655
    %v821 = vpop.f32.mrb[0].mxu0
    %v822 = vadd.f32 0.0, %v821
    %v823 = vpop.f32.mrb[0].mxu0
    %824 = vmatprep.mubr.f32.mxu0 %v660
    %825 = vmatmul.mubr.f32.gmra.mrb[0].mxu0 %v659
    %v826 = vpop.f32.mrb[0].mxu0
    %v827 = vadd.f32 0.0, %v826
    %v828 = vpop.f32.mrb[0].mxu0
    %829 = vmatprep.mubr.f32.mxu0 %v664
    %830 = vmatmul.mubr.f32.gmra.mrb[0].mxu0 %v663
    %v831 = vpop.f32.mrb[0].mxu0
    %v832 = vadd.f32 0.0, %v831
    %v833 = vpop.f32.mrb[0].mxu0
    %834 = vmatprep.mubr.f32.mxu0 %v668
    %835 = vmatmul.mubr.f32.gmra.mrb[0].mxu0 %v667
    %v836 = vpop.f32.mrb[0].mxu0
    %v837 = vadd.f32 0.0, %v836
    %v838 = vpop.f32.mrb[0].mxu0
    %839 = vmatprep.mubr.f32.mxu0 %v672
    %840 = vmatmul.mubr.f32.gmra.mrb[0].mxu0 %v671
    %v841 = vpop.f32.mrb[0].mxu0
    %v842 = vadd.f32 0.0, %v841
    %v843 = vpop.f32.mrb[0].mxu0
    %844 = vdwg.mxu0
    %845 = vmatprep.subr.mxu0 0.0
    %846 = vmatpush1.msra.mxu0 %v606
    %847 = vmatprep.subr.mxu0 0.0
    %848 = vmatpush1.msra.mxu0 %v607
    %849 = vmatprep.subr.mxu0 0.0
    %850 = vmatpush1.msra.mxu0 %v608
    %851 = vmatprep.subr.mxu0 0.0
    %852 = vmatpush1.msra.mxu0 %v609
    %853 = vmatprep.subr.mxu0 0.0
    %854 = vmatpush1.msra.mxu0 %v610
    %855 = vmatprep.subr.mxu0 0.0
    %856 = vmatpush1.msra.mxu0 %v611
    %857 = vmatprep.subr.mxu0 0.0
    %858 = vmatpush1.msra.mxu0 %v612
    %859 = vmatprep.subr.mxu0 0.0
    %860 = vmatpush1.msra.mxu0 %v613
    %861 = vmatprep.subr.mxu0 0.0
    %862 = vmatpush1.msra.mxu0 %v614
    %863 = vmatprep.subr.mxu0 0.0
    %864 = vmatpush1.msra.mxu0 %v615
    %865 = vmatprep.subr.mxu0 0.0
    %866 = vmatpush1.msra.mxu0 %v616
    %867 = vmatprep.subr.mxu0 0.0
    %868 = vmatpush1.msra.mxu0 %v617
    %869 = vmatprep.subr.mxu0 0.0
    %870 = vmatpush1.msra.mxu0 %v618
    %871 = vmatprep.subr.mxu0 0.0
    %872 = vmatpush1.msra.mxu0 %v619
    %873 = vmatprep.subr.mxu0 0.0
    %874 = vmatpush1.msra.mxu0 %v620
    %875 = vmatprep.subr.mxu0 0.0
    %876 = vmatpush1.msra.mxu0 %v621
    %877 = vmatprep.subr.mxu0 0.0
    %878 = vmatpush1.msra.mxu0 %v622
    %879 = vmatprep.subr.mxu0 0.0
    %880 = vmatpush1.msra.mxu0 0.0
    %881 = vmatprep.subr.mxu0 0.0
    %882 = vmatpush1.msra.mxu0 0.0
    %883 = vmatprep.subr.mxu0 0.0
    %884 = vmatpush1.msra.mxu0 0.0
    %885 = vmatprep.subr.mxu0 0.0
    %886 = vmatpush1.msra.mxu0 0.0
    %887 = vmatprep.subr.mxu0 0.0
    %888 = vmatpush1.msra.mxu0 0.0
    %889 = vmatprep.subr.mxu0 0.0
    %890 = vmatpush1.msra.mxu0 0.0
    %891 = vmatprep.subr.mxu0 0.0
    %892 = vmatpush1.msra.mxu0 0.0
    %893 = vmatprep.subr.mxu0 0.0
    %894 = vmatpush1.msra.mxu0 0.0
    %895 = vmatprep.subr.mxu0 0.0
    %896 = vmatpush1.msra.mxu0 0.0
    %897 = vmatprep.subr.mxu0 0.0
    %898 = vmatpush1.msra.mxu0 0.0
    %899 = vmatprep.subr.mxu0 0.0
    %900 = vmatpush1.msra.mxu0 0.0
    %901 = vmatprep.subr.mxu0 0.0
    %902 = vmatpush1.msra.mxu0 0.0
    %903 = vmatprep.subr.mxu0 0.0
    %904 = vmatpush1.msra.mxu0 0.0
    %905 = vmatprep.subr.mxu0 0.0
    %906 = vmatpush1.msra.mxu0 0.0
    %907 = vmatprep.subr.mxu0 0.0
    %908 = vmatpush1.msra.mxu0 0.0
    %909 = vmatprep.mubr.f32.mxu0 %v677
    %910 = vmatmul.mubr.f32.gmra.mrb[0].mxu0 %v625
    %v911 = vpop.f32.mrb[0].mxu0
    %v912 = vadd.f32 %v782, %v911
    %v913 = vpop.f32.mrb[0].mxu0
    %914 = vmatprep.mubr.f32.mxu0 %v680
    %915 = vmatmul.mubr.f32.gmra.mrb[0].mxu0 %v629
    %v916 = vpop.f32.mrb[0].mxu0
    %v917 = vadd.f32 %v787, %v916
    %v918 = vpop.f32.mrb[0].mxu0
    %919 = vmatprep.mubr.f32.mxu0 %v683
    %920 = vmatmul.mubr.f32.gmra.mrb[0].mxu0 %v633
    %v921 = vpop.f32.mrb[0].mxu0
    %v922 = vadd.f32 %v792, %v921
    %v923 = vpop.f32.mrb[0].mxu0
    %924 = vmatprep.mubr.f32.mxu0 %v686
    %925 = vmatmul.mubr.f32.gmra.mrb[0].mxu0 %v637
    %v926 = vpop.f32.mrb[0].mxu0
    %v927 = vadd.f32 %v797, %v926
    %v928 = vpop.f32.mrb[0].mxu0
    %929 = vmatprep.mubr.f32.mxu0 %v689
    %930 = vmatmul.mubr.f32.gmra.mrb[0].mxu0 %v641
    %v931 = vpop.f32.mrb[0].mxu0
    %v932 = vadd.f32 %v802, %v931
    %v933 = vpop.f32.mrb[0].mxu0
    %934 = vmatprep.mubr.f32.mxu0 %v692
    %935 = vmatmul.mubr.f32.gmra.mrb[0].mxu0 %v645
    %v936 = vpop.f32.mrb[0].mxu0
    %v937 = vadd.f32 %v807, %v936
    %v938 = vpop.f32.mrb[0].mxu0
    %939 = vmatprep.mubr.f32.mxu0 %v695
    %940 = vmatmul.mubr.f32.gmra.mrb[0].mxu0 %v649
    %v941 = vpop.f32.mrb[0].mxu0
    %v942 = vadd.f32 %v812, %v941
    %v943 = vpop.f32.mrb[0].mxu0
    %944 = vmatprep.mubr.f32.mxu0 %v698
    %945 = vmatmul.mubr.f32.gmra.mrb[0].mxu0 %v653
    %v946 = vpop.f32.mrb[0].mxu0
    %v947 = vadd.f32 %v817, %v946
    %v948 = vpop.f32.mrb[0].mxu0
    %949 = vmatprep.mubr.f32.mxu0 %v701
    %950 = vmatmul.mubr.f32.gmra.mrb[0].mxu0 %v657
    %v951 = vpop.f32.mrb[0].mxu0
    %v952 = vadd.f32 %v822, %v951
    %v953 = vpop.f32.mrb[0].mxu0
    %954 = vmatprep.mubr.f32.mxu0 %v704
    %955 = vmatmul.mubr.f32.gmra.mrb[0].mxu0 %v661
    %v956 = vpop.f32.mrb[0].mxu0
    %v957 = vadd.f32 %v827, %v956
    %v958 = vpop.f32.mrb[0].mxu0
    %959 = vmatprep.mubr.f32.mxu0 %v707
    %960 = vmatmul.mubr.f32.gmra.mrb[0].mxu0 %v665
    %v961 = vpop.f32.mrb[0].mxu0
    %v962 = vadd.f32 %v832, %v961
    %v963 = vpop.f32.mrb[0].mxu0
    %964 = vmatprep.mubr.f32.mxu0 %v710
    %965 = vmatmul.mubr.f32.gmra.mrb[0].mxu0 %v669
    %v966 = vpop.f32.mrb[0].mxu0
    %v967 = vadd.f32 %v837, %v966
    %v968 = vpop.f32.mrb[0].mxu0
    %969 = vmatprep.mubr.f32.mxu0 %v713
    %970 = vmatmul.mubr.f32.gmra.mrb[0].mxu0 %v673
    %v971 = vpop.f32.mrb[0].mxu0
    %v972 = vadd.f32 %v842, %v971
    %v973 = vpop.f32.mrb[0].mxu0
    %974 = vdwg.mxu0
    %v975 = vld [vmem:[%s4] sm:$0xff]
    %s976 = scalar_lea.vmem %s3, 416
    %v977 = vld [vmem:[%s976] sm:$0xff]
    %v978 = vld [vmem:[%s976 + $0x8] sm:$0xff]
    %v979 = vld [vmem:[%s976 + $0x10] sm:$0xff]
    %v980 = vld [vmem:[%s976 + $0x18] sm:$0xff]
    %v981 = vld [vmem:[%s976 + $0x20] sm:$0xff]
    %v982 = vld [vmem:[%s976 + $0x28] sm:$0xff]
    %v983 = vld [vmem:[%s976 + $0x30] sm:$0xff]
    %v984 = vld [vmem:[%s976 + $0x38] sm:$0xff]
    %v985 = vld [vmem:[%s976 + $0x40] sm:$0xff]
    %v986 = vld [vmem:[%s976 + $0x48] sm:$0xff]
    %v987 = vld [vmem:[%s976 + $0x50] sm:$0xff]
    %v988 = vld [vmem:[%s976 + $0x58] sm:$0xff]
    %v989 = vld [vmem:[%s976 + $0x60] sm:$0xff]
    %v990 = vld [vmem:[%s976 + $0x68] sm:$0xff]
    %v991 = vld [vmem:[%s976 + $0x70] sm:$0xff]
    %v992 = vld [vmem:[%s976 + $0x78] sm:$0xff]
    %v993 = vld [vmem:[%s976 + $0x80] sm:$0xff]
    %v994 = vld [vmem:[%s976 + $0x88] sm:$0xff]
    %v995 = vld [vmem:[%s976 + $0x90] sm:$0xff]
    %v996 = vld [vmem:[%s976 + $0x98] sm:$0xff]
    %v997 = vld [vmem:[%s976 + $0xa0] sm:$0xff]
    %v998 = vld [vmem:[%s976 + $0xa8] sm:$0xff]
    %v999 = vld [vmem:[%s976 + $0xb0] sm:$0xff]
    %v1000 = vld [vmem:[%s976 + $0xb8] sm:$0xff]
    %v1001 = vld [vmem:[%s976 + $0xc0] sm:$0xff]
    %v1002 = vld [vmem:[%s976 + $0xc8] sm:$0xff]
    %v1003 = vld [vmem:[%s976 + $0xd0] sm:$0xff]
    %v1004 = vld [vmem:[%s976 + $0xd8] sm:$0xff]
    %v1005 = vld [vmem:[%s976 + $0xe0] sm:$0xff]
    %v1006 = vld [vmem:[%s976 + $0xe8] sm:$0xff]
    %v1007 = vld [vmem:[%s976 + $0xf0] sm:$0xff]
    %v1008 = vld [vmem:[%s976 + $0xf8] sm:$0xff]
    %v1009 = vld [vmem:[%s976 + $0x100] sm:$0xff]
    %v1010 = vld [vmem:[%s976 + $0x108] sm:$0xff]
    %v1011 = vld [vmem:[%s976 + $0x110] sm:$0xff]
    %v1012 = vld [vmem:[%s976 + $0x118] sm:$0xff]
    %v1013 = vld [vmem:[%s976 + $0x120] sm:$0xff]
    %v1014 = vld [vmem:[%s976 + $0x128] sm:$0xff]
    %v1015 = vld [vmem:[%s976 + $0x130] sm:$0xff]
    %v1016 = vld [vmem:[%s976 + $0x138] sm:$0xff]
    %v1017 = vld [vmem:[%s976 + $0x140] sm:$0xff]
    %v1018 = vld [vmem:[%s976 + $0x148] sm:$0xff]
    %v1019 = vld [vmem:[%s976 + $0x150] sm:$0xff]
    %v1020 = vld [vmem:[%s976 + $0x158] sm:$0xff]
    %v1021 = vld [vmem:[%s976 + $0x160] sm:$0xff]
    %v1022 = vld [vmem:[%s976 + $0x168] sm:$0xff]
    %v1023 = vld [vmem:[%s976 + $0x170] sm:$0xff]
    %v1024 = vld [vmem:[%s976 + $0x178] sm:$0xff]
    %v1025 = vld [vmem:[%s976 + $0x180] sm:$0x3]
    %v1026 = vld [vmem:[%s976 + $0x188] sm:$0x3]
    %v1027 = vld [vmem:[%s976 + $0x190] sm:$0x3]
    %v1028 = vld [vmem:[%s976 + $0x198] sm:$0x3]
    %v1030 = vsel %vm675, %v980, 0
    %v1033 = vsel %vm675, %v984, 0
    %v1036 = vsel %vm675, %v988, 0
    %v1039 = vsel %vm675, %v992, 0
    %v1042 = vsel %vm675, %v996, 0
    %v1045 = vsel %vm675, %v1000, 0
    %v1048 = vsel %vm675, %v1004, 0
    %v1051 = vsel %vm675, %v1008, 0
    %v1054 = vsel %vm675, %v1012, 0
    %v1057 = vsel %vm675, %v1016, 0
    %v1060 = vsel %vm675, %v1020, 0
    %v1063 = vsel %vm675, %v1024, 0
    %v1066 = vsel %vm675, %v1028, 0
    %1068 = vmatprep.subr.mxu0 0.0
    %1069 = vmatpush1.msra.mxu0 %v574
    %1070 = vmatprep.subr.mxu0 0.0
    %1071 = vmatpush1.msra.mxu0 %v575
    %1072 = vmatprep.subr.mxu0 0.0
    %1073 = vmatpush1.msra.mxu0 %v576
    %1074 = vmatprep.subr.mxu0 0.0
    %1075 = vmatpush1.msra.mxu0 %v577
    %1076 = vmatprep.subr.mxu0 0.0
    %1077 = vmatpush1.msra.mxu0 %v578
    %1078 = vmatprep.subr.mxu0 0.0
    %1079 = vmatpush1.msra.mxu0 %v579
    %1080 = vmatprep.subr.mxu0 0.0
    %1081 = vmatpush1.msra.mxu0 %v580
    %1082 = vmatprep.subr.mxu0 0.0
    %1083 = vmatpush1.msra.mxu0 %v581
    %1084 = vmatprep.subr.mxu0 0.0
    %1085 = vmatpush1.msra.mxu0 %v582
    %1086 = vmatprep.subr.mxu0 0.0
    %1087 = vmatpush1.msra.mxu0 %v583
    %1088 = vmatprep.subr.mxu0 0.0
    %1089 = vmatpush1.msra.mxu0 %v584
    %1090 = vmatprep.subr.mxu0 0.0
    %1091 = vmatpush1.msra.mxu0 %v585
    %1092 = vmatprep.subr.mxu0 0.0
    %1093 = vmatpush1.msra.mxu0 %v586
    %1094 = vmatprep.subr.mxu0 0.0
    %1095 = vmatpush1.msra.mxu0 %v587
    %1096 = vmatprep.subr.mxu0 0.0
    %1097 = vmatpush1.msra.mxu0 %v588
    %1098 = vmatprep.subr.mxu0 0.0
    %1099 = vmatpush1.msra.mxu0 %v589
    %1100 = vmatprep.subr.mxu0 0.0
    %1101 = vmatpush1.msra.mxu0 %v590
    %1102 = vmatprep.subr.mxu0 0.0
    %1103 = vmatpush1.msra.mxu0 %v591
    %1104 = vmatprep.subr.mxu0 0.0
    %1105 = vmatpush1.msra.mxu0 %v592
    %1106 = vmatprep.subr.mxu0 0.0
    %1107 = vmatpush1.msra.mxu0 %v593
    %1108 = vmatprep.subr.mxu0 0.0
    %1109 = vmatpush1.msra.mxu0 %v594
    %1110 = vmatprep.subr.mxu0 0.0
    %1111 = vmatpush1.msra.mxu0 %v595
    %1112 = vmatprep.subr.mxu0 0.0
    %1113 = vmatpush1.msra.mxu0 %v596
    %1114 = vmatprep.subr.mxu0 0.0
    %1115 = vmatpush1.msra.mxu0 %v597
    %1116 = vmatprep.subr.mxu0 0.0
    %1117 = vmatpush1.msra.mxu0 %v598
    %1118 = vmatprep.subr.mxu0 0.0
    %1119 = vmatpush1.msra.mxu0 %v599
    %1120 = vmatprep.subr.mxu0 0.0
    %1121 = vmatpush1.msra.mxu0 %v600
    %1122 = vmatprep.subr.mxu0 0.0
    %1123 = vmatpush1.msra.mxu0 %v601
    %1124 = vmatprep.subr.mxu0 0.0
    %1125 = vmatpush1.msra.mxu0 %v602
    %1126 = vmatprep.subr.mxu0 0.0
    %1127 = vmatpush1.msra.mxu0 %v603
    %1128 = vmatprep.subr.mxu0 0.0
    %1129 = vmatpush1.msra.mxu0 %v604
    %1130 = vmatprep.subr.mxu0 0.0
    %1131 = vmatpush1.msra.mxu0 %v605
    %1132 = vmatprep.mubr.f32.mxu0 %v978
    %1133 = vmatmul.mubr.f32.gmra.mrb[0].mxu0 %v977
    %v1134 = vpop.f32.mrb[0].mxu0
    %v1135 = vadd.f32 0.0, %v1134
    %v1136 = vpop.f32.mrb[0].mxu0
    %1137 = vmatprep.mubr.f32.mxu0 %v982
    %1138 = vmatmul.mubr.f32.gmra.mrb[0].mxu0 %v981
    %v1139 = vpop.f32.mrb[0].mxu0
    %v1140 = vadd.f32 0.0, %v1139
    %v1141 = vpop.f32.mrb[0].mxu0
    %1142 = vmatprep.mubr.f32.mxu0 %v986
    %1143 = vmatmul.mubr.f32.gmra.mrb[0].mxu0 %v985
    %v1144 = vpop.f32.mrb[0].mxu0
    %v1145 = vadd.f32 0.0, %v1144
    %v1146 = vpop.f32.mrb[0].mxu0
    %1147 = vmatprep.mubr.f32.mxu0 %v990
    %1148 = vmatmul.mubr.f32.gmra.mrb[0].mxu0 %v989
    %v1149 = vpop.f32.mrb[0].mxu0
    %v1150 = vadd.f32 0.0, %v1149
    %v1151 = vpop.f32.mrb[0].mxu0
    %1152 = vmatprep.mubr.f32.mxu0 %v994
    %1153 = vmatmul.mubr.f32.gmra.mrb[0].mxu0 %v993
    %v1154 = vpop.f32.mrb[0].mxu0
    %v1155 = vadd.f32 0.0, %v1154
    %v1156 = vpop.f32.mrb[0].mxu0
    %1157 = vmatprep.mubr.f32.mxu0 %v998
    %1158 = vmatmul.mubr.f32.gmra.mrb[0].mxu0 %v997
    %v1159 = vpop.f32.mrb[0].mxu0
    %v1160 = vadd.f32 0.0, %v1159
    %v1161 = vpop.f32.mrb[0].mxu0
    %1162 = vmatprep.mubr.f32.mxu0 %v1002
    %1163 = vmatmul.mubr.f32.gmra.mrb[0].mxu0 %v1001
    %v1164 = vpop.f32.mrb[0].mxu0
    %v1165 = vadd.f32 0.0, %v1164
    %v1166 = vpop.f32.mrb[0].mxu0
    %1167 = vmatprep.mubr.f32.mxu0 %v1006
    %1168 = vmatmul.mubr.f32.gmra.mrb[0].mxu0 %v1005
    %v1169 = vpop.f32.mrb[0].mxu0
    %v1170 = vadd.f32 0.0, %v1169
    %v1171 = vpop.f32.mrb[0].mxu0
    %1172 = vmatprep.mubr.f32.mxu0 %v1010
    %1173 = vmatmul.mubr.f32.gmra.mrb[0].mxu0 %v1009
    %v1174 = vpop.f32.mrb[0].mxu0
    %v1175 = vadd.f32 0.0, %v1174
    %v1176 = vpop.f32.mrb[0].mxu0
    %1177 = vmatprep.mubr.f32.mxu0 %v1014
    %1178 = vmatmul.mubr.f32.gmra.mrb[0].mxu0 %v1013
    %v1179 = vpop.f32.mrb[0].mxu0
    %v1180 = vadd.f32 0.0, %v1179
    %v1181 = vpop.f32.mrb[0].mxu0
    %1182 = vmatprep.mubr.f32.mxu0 %v1018
    %1183 = vmatmul.mubr.f32.gmra.mrb[0].mxu0 %v1017
    %v1184 = vpop.f32.mrb[0].mxu0
    %v1185 = vadd.f32 0.0, %v1184
    %v1186 = vpop.f32.mrb[0].mxu0
    %1187 = vmatprep.mubr.f32.mxu0 %v1022
    %1188 = vmatmul.mubr.f32.gmra.mrb[0].mxu0 %v1021
    %v1189 = vpop.f32.mrb[0].mxu0
    %v1190 = vadd.f32 0.0, %v1189
    %v1191 = vpop.f32.mrb[0].mxu0
    %1192 = vmatprep.mubr.f32.mxu0 %v1026
    %1193 = vmatmul.mubr.f32.gmra.mrb[0].mxu0 %v1025
    %v1194 = vpop.f32.mrb[0].mxu0
    %v1195 = vadd.f32 0.0, %v1194
    %v1196 = vpop.f32.mrb[0].mxu0
    %1197 = vdwg.mxu0
    %1198 = vmatprep.subr.mxu0 0.0
    %1199 = vmatpush1.msra.mxu0 %v606
    %1200 = vmatprep.subr.mxu0 0.0
    %1201 = vmatpush1.msra.mxu0 %v607
    %1202 = vmatprep.subr.mxu0 0.0
    %1203 = vmatpush1.msra.mxu0 %v608
    %1204 = vmatprep.subr.mxu0 0.0
    %1205 = vmatpush1.msra.mxu0 %v609
    %1206 = vmatprep.subr.mxu0 0.0
    %1207 = vmatpush1.msra.mxu0 %v610
    %1208 = vmatprep.subr.mxu0 0.0
    %1209 = vmatpush1.msra.mxu0 %v611
    %1210 = vmatprep.subr.mxu0 0.0
    %1211 = vmatpush1.msra.mxu0 %v612
    %1212 = vmatprep.subr.mxu0 0.0
    %1213 = vmatpush1.msra.mxu0 %v613
    %1214 = vmatprep.subr.mxu0 0.0
    %1215 = vmatpush1.msra.mxu0 %v614
    %1216 = vmatprep.subr.mxu0 0.0
    %1217 = vmatpush1.msra.mxu0 %v615
    %1218 = vmatprep.subr.mxu0 0.0
    %1219 = vmatpush1.msra.mxu0 %v616
    %1220 = vmatprep.subr.mxu0 0.0
    %1221 = vmatpush1.msra.mxu0 %v617
    %1222 = vmatprep.subr.mxu0 0.0
    %1223 = vmatpush1.msra.mxu0 %v618
    %1224 = vmatprep.subr.mxu0 0.0
    %1225 = vmatpush1.msra.mxu0 %v619
    %1226 = vmatprep.subr.mxu0 0.0
    %1227 = vmatpush1.msra.mxu0 %v620
    %1228 = vmatprep.subr.mxu0 0.0
    %1229 = vmatpush1.msra.mxu0 %v621
    %1230 = vmatprep.subr.mxu0 0.0
    %1231 = vmatpush1.msra.mxu0 %v622
    %1232 = vmatprep.subr.mxu0 0.0
    %1233 = vmatpush1.msra.mxu0 0.0
    %1234 = vmatprep.subr.mxu0 0.0
    %1235 = vmatpush1.msra.mxu0 0.0
    %1236 = vmatprep.subr.mxu0 0.0
    %1237 = vmatpush1.msra.mxu0 0.0
    %1238 = vmatprep.subr.mxu0 0.0
    %1239 = vmatpush1.msra.mxu0 0.0
    %1240 = vmatprep.subr.mxu0 0.0
    %1241 = vmatpush1.msra.mxu0 0.0
    %1242 = vmatprep.subr.mxu0 0.0
    %1243 = vmatpush1.msra.mxu0 0.0
    %1244 = vmatprep.subr.mxu0 0.0
    %1245 = vmatpush1.msra.mxu0 0.0
    %1246 = vmatprep.subr.mxu0 0.0
    %1247 = vmatpush1.msra.mxu0 0.0
    %1248 = vmatprep.subr.mxu0 0.0
    %1249 = vmatpush1.msra.mxu0 0.0
    %1250 = vmatprep.subr.mxu0 0.0
    %1251 = vmatpush1.msra.mxu0 0.0
    %1252 = vmatprep.subr.mxu0 0.0
    %1253 = vmatpush1.msra.mxu0 0.0
    %1254 = vmatprep.subr.mxu0 0.0
    %1255 = vmatpush1.msra.mxu0 0.0
    %1256 = vmatprep.subr.mxu0 0.0
    %1257 = vmatpush1.msra.mxu0 0.0
    %1258 = vmatprep.subr.mxu0 0.0
    %1259 = vmatpush1.msra.mxu0 0.0
    %1260 = vmatprep.subr.mxu0 0.0
    %1261 = vmatpush1.msra.mxu0 0.0
    %1262 = vmatprep.mubr.f32.mxu0 %v1030
    %1263 = vmatmul.mubr.f32.gmra.mrb[0].mxu0 %v979
    %v1264 = vpop.f32.mrb[0].mxu0
    %v1265 = vadd.f32 %v1135, %v1264
    %v1266 = vpop.f32.mrb[0].mxu0
    %1267 = vmatprep.mubr.f32.mxu0 %v1033
    %1268 = vmatmul.mubr.f32.gmra.mrb[0].mxu0 %v983
    %v1269 = vpop.f32.mrb[0].mxu0
    %v1270 = vadd.f32 %v1140, %v1269
    %v1271 = vpop.f32.mrb[0].mxu0
    %1272 = vmatprep.mubr.f32.mxu0 %v1036
    %1273 = vmatmul.mubr.f32.gmra.mrb[0].mxu0 %v987
    %v1274 = vpop.f32.mrb[0].mxu0
    %v1275 = vadd.f32 %v1145, %v1274
    %v1276 = vpop.f32.mrb[0].mxu0
    %1277 = vmatprep.mubr.f32.mxu0 %v1039
    %1278 = vmatmul.mubr.f32.gmra.mrb[0].mxu0 %v991
    %v1279 = vpop.f32.mrb[0].mxu0
    %v1280 = vadd.f32 %v1150, %v1279
    %v1281 = vpop.f32.mrb[0].mxu0
    %1282 = vmatprep.mubr.f32.mxu0 %v1042
    %1283 = vmatmul.mubr.f32.gmra.mrb[0].mxu0 %v995
    %v1284 = vpop.f32.mrb[0].mxu0
    %v1285 = vadd.f32 %v1155, %v1284
    %v1286 = vpop.f32.mrb[0].mxu0
    %1287 = vmatprep.mubr.f32.mxu0 %v1045
    %1288 = vmatmul.mubr.f32.gmra.mrb[0].mxu0 %v999
    %v1289 = vpop.f32.mrb[0].mxu0
    %v1290 = vadd.f32 %v1160, %v1289
    %v1291 = vpop.f32.mrb[0].mxu0
    %1292 = vmatprep.mubr.f32.mxu0 %v1048
    %1293 = vmatmul.mubr.f32.gmra.mrb[0].mxu0 %v1003
    %v1294 = vpop.f32.mrb[0].mxu0
    %v1295 = vadd.f32 %v1165, %v1294
    %v1296 = vpop.f32.mrb[0].mxu0
    %1297 = vmatprep.mubr.f32.mxu0 %v1051
    %1298 = vmatmul.mubr.f32.gmra.mrb[0].mxu0 %v1007
    %v1299 = vpop.f32.mrb[0].mxu0
    %v1300 = vadd.f32 %v1170, %v1299
    %v1301 = vpop.f32.mrb[0].mxu0
    %1302 = vmatprep.mubr.f32.mxu0 %v1054
    %1303 = vmatmul.mubr.f32.gmra.mrb[0].mxu0 %v1011
    %v1304 = vpop.f32.mrb[0].mxu0
    %v1305 = vadd.f32 %v1175, %v1304
    %v1306 = vpop.f32.mrb[0].mxu0
    %1307 = vmatprep.mubr.f32.mxu0 %v1057
    %1308 = vmatmul.mubr.f32.gmra.mrb[0].mxu0 %v1015
    %v1309 = vpop.f32.mrb[0].mxu0
    %v1310 = vadd.f32 %v1180, %v1309
    %v1311 = vpop.f32.mrb[0].mxu0
    %1312 = vmatprep.mubr.f32.mxu0 %v1060
    %1313 = vmatmul.mubr.f32.gmra.mrb[0].mxu0 %v1019
    %v1314 = vpop.f32.mrb[0].mxu0
    %v1315 = vadd.f32 %v1185, %v1314
    %v1316 = vpop.f32.mrb[0].mxu0
    %1317 = vmatprep.mubr.f32.mxu0 %v1063
    %1318 = vmatmul.mubr.f32.gmra.mrb[0].mxu0 %v1023
    %v1319 = vpop.f32.mrb[0].mxu0
    %v1320 = vadd.f32 %v1190, %v1319
    %v1321 = vpop.f32.mrb[0].mxu0
    %1322 = vmatprep.mubr.f32.mxu0 %v1066
    %1323 = vmatmul.mubr.f32.gmra.mrb[0].mxu0 %v1027
    %v1324 = vpop.f32.mrb[0].mxu0
    %v1325 = vadd.f32 %v1195, %v1324
    %v1326 = vpop.f32.mrb[0].mxu0
    %1327 = vdwg.mxu0
    %s1328 = scalar_lea.vmem %s4, 8
    %v1329 = vld [vmem:[%s1328] sm:$0xff]
    %v1331 = vsel %vm675, %v1265, 0
    %v1334 = vsel %vm675, %v1270, 0
    %v1337 = vsel %vm675, %v1275, 0
    %v1340 = vsel %vm675, %v1280, 0
    %v1343 = vsel %vm675, %v1285, 0
    %v1346 = vsel %vm675, %v1290, 0
    %v1349 = vsel %vm675, %v1295, 0
    %v1352 = vsel %vm675, %v1300, 0
    %v1355 = vsel %vm675, %v1305, 0
    %v1358 = vsel %vm675, %v1310, 0
    %v1361 = vsel %vm675, %v1315, 0
    %v1364 = vsel %vm675, %v1320, 0
    %v1367 = vsel %vm675, %v1325, 0
    %1369 = vmatprep.subr.mxu0 0.0
    %1370 = vmatpush1.msra.mxu0 %v1329
    %1371 = vmatprep.subr.mxu0 0.0
    %1372 = vmatpush1.msra.mxu0 0.0
    %1373 = vmatprep.subr.mxu0 0.0
    %1374 = vmatpush1.msra.mxu0 0.0
    %1375 = vmatprep.subr.mxu0 0.0
    %1376 = vmatpush1.msra.mxu0 0.0
    %1377 = vmatprep.subr.mxu0 0.0
    %1378 = vmatpush1.msra.mxu0 0.0
    %1379 = vmatprep.subr.mxu0 0.0
    %1380 = vmatpush1.msra.mxu0 0.0
    %1381 = vmatprep.subr.mxu0 0.0
    %1382 = vmatpush1.msra.mxu0 0.0
    %1383 = vmatprep.subr.mxu0 0.0
    %1384 = vmatpush1.msra.mxu0 0.0
    %1385 = vmatprep.subr.mxu0 0.0
    %1386 = vmatpush1.msra.mxu0 0.0
    %1387 = vmatprep.subr.mxu0 0.0
    %1388 = vmatpush1.msra.mxu0 0.0
    %1389 = vmatprep.subr.mxu0 0.0
    %1390 = vmatpush1.msra.mxu0 0.0
    %1391 = vmatprep.subr.mxu0 0.0
    %1392 = vmatpush1.msra.mxu0 0.0
    %1393 = vmatprep.subr.mxu0 0.0
    %1394 = vmatpush1.msra.mxu0 0.0
    %1395 = vmatprep.subr.mxu0 0.0
    %1396 = vmatpush1.msra.mxu0 0.0
    %1397 = vmatprep.subr.mxu0 0.0
    %1398 = vmatpush1.msra.mxu0 0.0
    %1399 = vmatprep.subr.mxu0 0.0
    %1400 = vmatpush1.msra.mxu0 0.0
    %1401 = vmatprep.subr.mxu0 0.0
    %1402 = vmatpush1.msra.mxu0 0.0
    %1403 = vmatprep.subr.mxu0 0.0
    %1404 = vmatpush1.msra.mxu0 0.0
    %1405 = vmatprep.subr.mxu0 0.0
    %1406 = vmatpush1.msra.mxu0 0.0
    %1407 = vmatprep.subr.mxu0 0.0
    %1408 = vmatpush1.msra.mxu0 0.0
    %1409 = vmatprep.subr.mxu0 0.0
    %1410 = vmatpush1.msra.mxu0 0.0
    %1411 = vmatprep.subr.mxu0 0.0
    %1412 = vmatpush1.msra.mxu0 0.0
    %1413 = vmatprep.subr.mxu0 0.0
    %1414 = vmatpush1.msra.mxu0 0.0
    %1415 = vmatprep.subr.mxu0 0.0
    %1416 = vmatpush1.msra.mxu0 0.0
    %1417 = vmatprep.subr.mxu0 0.0
    %1418 = vmatpush1.msra.mxu0 0.0
    %1419 = vmatprep.subr.mxu0 0.0
    %1420 = vmatpush1.msra.mxu0 0.0
    %1421 = vmatprep.subr.mxu0 0.0
    %1422 = vmatpush1.msra.mxu0 0.0
    %1423 = vmatprep.subr.mxu0 0.0
    %1424 = vmatpush1.msra.mxu0 0.0
    %1425 = vmatprep.subr.mxu0 0.0
    %1426 = vmatpush1.msra.mxu0 0.0
    %1427 = vmatprep.subr.mxu0 0.0
    %1428 = vmatpush1.msra.mxu0 0.0
    %1429 = vmatprep.subr.mxu0 0.0
    %1430 = vmatpush1.msra.mxu0 0.0
    %1431 = vmatprep.subr.mxu0 0.0
    %1432 = vmatpush1.msra.mxu0 0.0
    %1433 = vmatprep.mubr.f32.mxu0 0.0
    %1434 = vmatmul.mubr.f32.gmra.mrb[0].mxu0 %v1331
    %v1435 = vpop.f32.mrb[0].mxu0
    %v1436 = vadd.f32 0.0, %v1435
    %v1437 = vpop.f32.mrb[0].mxu0
    %1438 = vmatprep.mubr.f32.mxu0 0.0
    %1439 = vmatmul.mubr.f32.gmra.mrb[0].mxu0 %v1334
    %v1440 = vpop.f32.mrb[0].mxu0
    %v1441 = vadd.f32 0.0, %v1440
    %v1442 = vpop.f32.mrb[0].mxu0
    %1443 = vmatprep.mubr.f32.mxu0 0.0
    %1444 = vmatmul.mubr.f32.gmra.mrb[0].mxu0 %v1337
    %v1445 = vpop.f32.mrb[0].mxu0
    %v1446 = vadd.f32 0.0, %v1445
    %v1447 = vpop.f32.mrb[0].mxu0
    %1448 = vmatprep.mubr.f32.mxu0 0.0
    %1449 = vmatmul.mubr.f32.gmra.mrb[0].mxu0 %v1340
    %v1450 = vpop.f32.mrb[0].mxu0
    %v1451 = vadd.f32 0.0, %v1450
    %v1452 = vpop.f32.mrb[0].mxu0
    %1453 = vmatprep.mubr.f32.mxu0 0.0
    %1454 = vmatmul.mubr.f32.gmra.mrb[0].mxu0 %v1343
    %v1455 = vpop.f32.mrb[0].mxu0
    %v1456 = vadd.f32 0.0, %v1455
    %v1457 = vpop.f32.mrb[0].mxu0
    %1458 = vmatprep.mubr.f32.mxu0 0.0
    %1459 = vmatmul.mubr.f32.gmra.mrb[0].mxu0 %v1346
    %v1460 = vpop.f32.mrb[0].mxu0
    %v1461 = vadd.f32 0.0, %v1460
    %v1462 = vpop.f32.mrb[0].mxu0
    %1463 = vmatprep.mubr.f32.mxu0 0.0
    %1464 = vmatmul.mubr.f32.gmra.mrb[0].mxu0 %v1349
    %v1465 = vpop.f32.mrb[0].mxu0
    %v1466 = vadd.f32 0.0, %v1465
    %v1467 = vpop.f32.mrb[0].mxu0
    %1468 = vmatprep.mubr.f32.mxu0 0.0
    %1469 = vmatmul.mubr.f32.gmra.mrb[0].mxu0 %v1352
    %v1470 = vpop.f32.mrb[0].mxu0
    %v1471 = vadd.f32 0.0, %v1470
    %v1472 = vpop.f32.mrb[0].mxu0
    %1473 = vmatprep.mubr.f32.mxu0 0.0
    %1474 = vmatmul.mubr.f32.gmra.mrb[0].mxu0 %v1355
    %v1475 = vpop.f32.mrb[0].mxu0
    %v1476 = vadd.f32 0.0, %v1475
    %v1477 = vpop.f32.mrb[0].mxu0
    %1478 = vmatprep.mubr.f32.mxu0 0.0
    %1479 = vmatmul.mubr.f32.gmra.mrb[0].mxu0 %v1358
    %v1480 = vpop.f32.mrb[0].mxu0
    %v1481 = vadd.f32 0.0, %v1480
    %v1482 = vpop.f32.mrb[0].mxu0
    %1483 = vmatprep.mubr.f32.mxu0 0.0
    %1484 = vmatmul.mubr.f32.gmra.mrb[0].mxu0 %v1361
    %v1485 = vpop.f32.mrb[0].mxu0
    %v1486 = vadd.f32 0.0, %v1485
    %v1487 = vpop.f32.mrb[0].mxu0
    %1488 = vmatprep.mubr.f32.mxu0 0.0
    %1489 = vmatmul.mubr.f32.gmra.mrb[0].mxu0 %v1364
    %v1490 = vpop.f32.mrb[0].mxu0
    %v1491 = vadd.f32 0.0, %v1490
    %v1492 = vpop.f32.mrb[0].mxu0
    %1493 = vmatprep.mubr.f32.mxu0 0.0
    %1494 = vmatmul.mubr.f32.gmra.mrb[0].mxu0 %v1367
    %v1495 = vpop.f32.mrb[0].mxu0
    %v1496 = vadd.f32 0.0, %v1495
    %v1497 = vpop.f32.mrb[0].mxu0
    %1498 = vdwg.mxu0
    %v1500 = vsel %vm675, %v912, 0
    %v1503 = vsel %vm675, %v917, 0
    %v1506 = vsel %vm675, %v922, 0
    %v1509 = vsel %vm675, %v927, 0
    %v1512 = vsel %vm675, %v932, 0
    %v1515 = vsel %vm675, %v937, 0
    %v1518 = vsel %vm675, %v942, 0
    %v1521 = vsel %vm675, %v947, 0
    %v1524 = vsel %vm675, %v952, 0
    %v1527 = vsel %vm675, %v957, 0
    %v1530 = vsel %vm675, %v962, 0
    %v1533 = vsel %vm675, %v967, 0
    %v1536 = vsel %vm675, %v972, 0
    %1538 = vmatprep.subr.mxu0 0.0
    %1539 = vmatpush1.msra.mxu0 %v975
    %1540 = vmatprep.subr.mxu0 0.0
    %1541 = vmatpush1.msra.mxu0 0.0
    %1542 = vmatprep.subr.mxu0 0.0
    %1543 = vmatpush1.msra.mxu0 0.0
    %1544 = vmatprep.subr.mxu0 0.0
    %1545 = vmatpush1.msra.mxu0 0.0
    %1546 = vmatprep.subr.mxu0 0.0
    %1547 = vmatpush1.msra.mxu0 0.0
    %1548 = vmatprep.subr.mxu0 0.0
    %1549 = vmatpush1.msra.mxu0 0.0
    %1550 = vmatprep.subr.mxu0 0.0
    %1551 = vmatpush1.msra.mxu0 0.0
    %1552 = vmatprep.subr.mxu0 0.0
    %1553 = vmatpush1.msra.mxu0 0.0
    %1554 = vmatprep.subr.mxu0 0.0
    %1555 = vmatpush1.msra.mxu0 0.0
    %1556 = vmatprep.subr.mxu0 0.0
    %1557 = vmatpush1.msra.mxu0 0.0
    %1558 = vmatprep.subr.mxu0 0.0
    %1559 = vmatpush1.msra.mxu0 0.0
    %1560 = vmatprep.subr.mxu0 0.0
    %1561 = vmatpush1.msra.mxu0 0.0
    %1562 = vmatprep.subr.mxu0 0.0
    %1563 = vmatpush1.msra.mxu0 0.0
    %1564 = vmatprep.subr.mxu0 0.0
    %1565 = vmatpush1.msra.mxu0 0.0
    %1566 = vmatprep.subr.mxu0 0.0
    %1567 = vmatpush1.msra.mxu0 0.0
    %1568 = vmatprep.subr.mxu0 0.0
    %1569 = vmatpush1.msra.mxu0 0.0
    %1570 = vmatprep.subr.mxu0 0.0
    %1571 = vmatpush1.msra.mxu0 0.0
    %1572 = vmatprep.subr.mxu0 0.0
    %1573 = vmatpush1.msra.mxu0 0.0
    %1574 = vmatprep.subr.mxu0 0.0
    %1575 = vmatpush1.msra.mxu0 0.0
    %1576 = vmatprep.subr.mxu0 0.0
    %1577 = vmatpush1.msra.mxu0 0.0
    %1578 = vmatprep.subr.mxu0 0.0
    %1579 = vmatpush1.msra.mxu0 0.0
    %1580 = vmatprep.subr.mxu0 0.0
    %1581 = vmatpush1.msra.mxu0 0.0
    %1582 = vmatprep.subr.mxu0 0.0
    %1583 = vmatpush1.msra.mxu0 0.0
    %1584 = vmatprep.subr.mxu0 0.0
    %1585 = vmatpush1.msra.mxu0 0.0
    %1586 = vmatprep.subr.mxu0 0.0
    %1587 = vmatpush1.msra.mxu0 0.0
    %1588 = vmatprep.subr.mxu0 0.0
    %1589 = vmatpush1.msra.mxu0 0.0
    %1590 = vmatprep.subr.mxu0 0.0
    %1591 = vmatpush1.msra.mxu0 0.0
    %1592 = vmatprep.subr.mxu0 0.0
    %1593 = vmatpush1.msra.mxu0 0.0
    %1594 = vmatprep.subr.mxu0 0.0
    %1595 = vmatpush1.msra.mxu0 0.0
    %1596 = vmatprep.subr.mxu0 0.0
    %1597 = vmatpush1.msra.mxu0 0.0
    %1598 = vmatprep.subr.mxu0 0.0
    %1599 = vmatpush1.msra.mxu0 0.0
    %1600 = vmatprep.subr.mxu0 0.0
    %1601 = vmatpush1.msra.mxu0 0.0
    %1602 = vmatprep.mubr.f32.mxu0 0.0
    %1603 = vmatmul.mubr.f32.gmra.mrb[0].mxu0 %v1500
    %v1604 = vpop.f32.mrb[0].mxu0
    %v1605 = vadd.f32 %v1436, %v1604
    %v1606 = vpop.f32.mrb[0].mxu0
    %1607 = vmatprep.mubr.f32.mxu0 0.0
    %1608 = vmatmul.mubr.f32.gmra.mrb[0].mxu0 %v1503
    %v1609 = vpop.f32.mrb[0].mxu0
    %v1610 = vadd.f32 %v1441, %v1609
    %v1611 = vpop.f32.mrb[0].mxu0
    %1612 = vmatprep.mubr.f32.mxu0 0.0
    %1613 = vmatmul.mubr.f32.gmra.mrb[0].mxu0 %v1506
    %v1614 = vpop.f32.mrb[0].mxu0
    %v1615 = vadd.f32 %v1446, %v1614
    %v1616 = vpop.f32.mrb[0].mxu0
    %1617 = vmatprep.mubr.f32.mxu0 0.0
    %1618 = vmatmul.mubr.f32.gmra.mrb[0].mxu0 %v1509
    %v1619 = vpop.f32.mrb[0].mxu0
    %v1620 = vadd.f32 %v1451, %v1619
    %v1621 = vpop.f32.mrb[0].mxu0
    %1622 = vmatprep.mubr.f32.mxu0 0.0
    %1623 = vmatmul.mubr.f32.gmra.mrb[0].mxu0 %v1512
    %v1624 = vpop.f32.mrb[0].mxu0
    %v1625 = vadd.f32 %v1456, %v1624
    %v1626 = vpop.f32.mrb[0].mxu0
    %1627 = vmatprep.mubr.f32.mxu0 0.0
    %1628 = vmatmul.mubr.f32.gmra.mrb[0].mxu0 %v1515
    %v1629 = vpop.f32.mrb[0].mxu0
    %v1630 = vadd.f32 %v1461, %v1629
    %v1631 = vpop.f32.mrb[0].mxu0
    %1632 = vmatprep.mubr.f32.mxu0 0.0
    %1633 = vmatmul.mubr.f32.gmra.mrb[0].mxu0 %v1518
    %v1634 = vpop.f32.mrb[0].mxu0
    %v1635 = vadd.f32 %v1466, %v1634
    %v1636 = vpop.f32.mrb[0].mxu0
    %1637 = vmatprep.mubr.f32.mxu0 0.0
    %1638 = vmatmul.mubr.f32.gmra.mrb[0].mxu0 %v1521
    %v1639 = vpop.f32.mrb[0].mxu0
    %v1640 = vadd.f32 %v1471, %v1639
    %v1641 = vpop.f32.mrb[0].mxu0
    %1642 = vmatprep.mubr.f32.mxu0 0.0
    %1643 = vmatmul.mubr.f32.gmra.mrb[0].mxu0 %v1524
    %v1644 = vpop.f32.mrb[0].mxu0
    %v1645 = vadd.f32 %v1476, %v1644
    %v1646 = vpop.f32.mrb[0].mxu0
    %1647 = vmatprep.mubr.f32.mxu0 0.0
    %1648 = vmatmul.mubr.f32.gmra.mrb[0].mxu0 %v1527
    %v1649 = vpop.f32.mrb[0].mxu0
    %v1650 = vadd.f32 %v1481, %v1649
    %v1651 = vpop.f32.mrb[0].mxu0
    %1652 = vmatprep.mubr.f32.mxu0 0.0
    %1653 = vmatmul.mubr.f32.gmra.mrb[0].mxu0 %v1530
    %v1654 = vpop.f32.mrb[0].mxu0
    %v1655 = vadd.f32 %v1486, %v1654
    %v1656 = vpop.f32.mrb[0].mxu0
    %1657 = vmatprep.mubr.f32.mxu0 0.0
    %1658 = vmatmul.mubr.f32.gmra.mrb[0].mxu0 %v1533
    %v1659 = vpop.f32.mrb[0].mxu0
    %v1660 = vadd.f32 %v1491, %v1659
    %v1661 = vpop.f32.mrb[0].mxu0
    %1662 = vmatprep.mubr.f32.mxu0 0.0
    %1663 = vmatmul.mubr.f32.gmra.mrb[0].mxu0 %v1536
    %v1664 = vpop.f32.mrb[0].mxu0
    %v1665 = vadd.f32 %v1496, %v1664
    %v1666 = vpop.f32.mrb[0].mxu0
    %1667 = vdwg.mxu0
    %s1668 = scalar_lea.vmem %s3, 832
    %v1669 = vld [vmem:[%s1668] sm:$0xff]
    %v1670 = vld [vmem:[%s1668 + $0x8] sm:$0xff]
    %v1671 = vld [vmem:[%s1668 + $0x10] sm:$0xff]
    %v1672 = vld [vmem:[%s1668 + $0x18] sm:$0xff]
    %v1673 = vld [vmem:[%s1668 + $0x20] sm:$0xff]
    %v1674 = vld [vmem:[%s1668 + $0x28] sm:$0xff]
    %v1675 = vld [vmem:[%s1668 + $0x30] sm:$0xff]
    %v1676 = vld [vmem:[%s1668 + $0x38] sm:$0xff]
    %v1677 = vld [vmem:[%s1668 + $0x40] sm:$0xff]
    %v1678 = vld [vmem:[%s1668 + $0x48] sm:$0xff]
    %v1679 = vld [vmem:[%s1668 + $0x50] sm:$0xff]
    %v1680 = vld [vmem:[%s1668 + $0x58] sm:$0xff]
    %v1681 = vld [vmem:[%s1668 + $0x60] sm:$0xff]
    %v1682 = vld [vmem:[%s1668 + $0x68] sm:$0xff]
    %v1683 = vld [vmem:[%s1668 + $0x70] sm:$0xff]
    %v1684 = vld [vmem:[%s1668 + $0x78] sm:$0xff]
    %v1685 = vld [vmem:[%s1668 + $0x80] sm:$0xff]
    %v1686 = vld [vmem:[%s1668 + $0x88] sm:$0xff]
    %v1687 = vld [vmem:[%s1668 + $0x90] sm:$0xff]
    %v1688 = vld [vmem:[%s1668 + $0x98] sm:$0xff]
    %v1689 = vld [vmem:[%s1668 + $0xa0] sm:$0xff]
    %v1690 = vld [vmem:[%s1668 + $0xa8] sm:$0xff]
    %v1691 = vld [vmem:[%s1668 + $0xb0] sm:$0xff]
    %v1692 = vld [vmem:[%s1668 + $0xb8] sm:$0xff]
    %v1693 = vld [vmem:[%s1668 + $0xc0] sm:$0xff]
    %v1694 = vld [vmem:[%s1668 + $0xc8] sm:$0xff]
    %v1695 = vld [vmem:[%s1668 + $0xd0] sm:$0xff]
    %v1696 = vld [vmem:[%s1668 + $0xd8] sm:$0xff]
    %v1697 = vld [vmem:[%s1668 + $0xe0] sm:$0xff]
    %v1698 = vld [vmem:[%s1668 + $0xe8] sm:$0xff]
    %v1699 = vld [vmem:[%s1668 + $0xf0] sm:$0xff]
    %v1700 = vld [vmem:[%s1668 + $0xf8] sm:$0xff]
    %v1701 = vld [vmem:[%s1668 + $0x100] sm:$0xff]
    %v1702 = vld [vmem:[%s1668 + $0x108] sm:$0xff]
    %v1703 = vld [vmem:[%s1668 + $0x110] sm:$0xff]
    %v1704 = vld [vmem:[%s1668 + $0x118] sm:$0xff]
    %v1705 = vld [vmem:[%s1668 + $0x120] sm:$0xff]
    %v1706 = vld [vmem:[%s1668 + $0x128] sm:$0xff]
    %v1707 = vld [vmem:[%s1668 + $0x130] sm:$0xff]
    %v1708 = vld [vmem:[%s1668 + $0x138] sm:$0xff]
    %v1709 = vld [vmem:[%s1668 + $0x140] sm:$0xff]
    %v1710 = vld [vmem:[%s1668 + $0x148] sm:$0xff]
    %v1711 = vld [vmem:[%s1668 + $0x150] sm:$0xff]
    %v1712 = vld [vmem:[%s1668 + $0x158] sm:$0xff]
    %v1713 = vld [vmem:[%s1668 + $0x160] sm:$0xff]
    %v1714 = vld [vmem:[%s1668 + $0x168] sm:$0xff]
    %v1715 = vld [vmem:[%s1668 + $0x170] sm:$0xff]
    %v1716 = vld [vmem:[%s1668 + $0x178] sm:$0xff]
    %v1717 = vld [vmem:[%s1668 + $0x180] sm:$0x3]
    %v1718 = vld [vmem:[%s1668 + $0x188] sm:$0x3]
    %v1719 = vld [vmem:[%s1668 + $0x190] sm:$0x3]
    %v1720 = vld [vmem:[%s1668 + $0x198] sm:$0x3]
    %v1722 = vsel %vm675, %v1672, 0
    %v1725 = vsel %vm675, %v1676, 0
    %v1728 = vsel %vm675, %v1680, 0
    %v1731 = vsel %vm675, %v1684, 0
    %v1734 = vsel %vm675, %v1688, 0
    %v1737 = vsel %vm675, %v1692, 0
    %v1740 = vsel %vm675, %v1696, 0
    %v1743 = vsel %vm675, %v1700, 0
    %v1746 = vsel %vm675, %v1704, 0
    %v1749 = vsel %vm675, %v1708, 0
    %v1752 = vsel %vm675, %v1712, 0
    %v1755 = vsel %vm675, %v1716, 0
    %v1758 = vsel %vm675, %v1720, 0
    %1760 = vmatprep.subr.mxu0 0.0
    %1761 = vmatpush1.msra.mxu0 %v574
    %1762 = vmatprep.subr.mxu0 0.0
    %1763 = vmatpush1.msra.mxu0 %v575
    %1764 = vmatprep.subr.mxu0 0.0
    %1765 = vmatpush1.msra.mxu0 %v576
    %1766 = vmatprep.subr.mxu0 0.0
    %1767 = vmatpush1.msra.mxu0 %v577
    %1768 = vmatprep.subr.mxu0 0.0
    %1769 = vmatpush1.msra.mxu0 %v578
    %1770 = vmatprep.subr.mxu0 0.0
    %1771 = vmatpush1.msra.mxu0 %v579
    %1772 = vmatprep.subr.mxu0 0.0
    %1773 = vmatpush1.msra.mxu0 %v580
    %1774 = vmatprep.subr.mxu0 0.0
    %1775 = vmatpush1.msra.mxu0 %v581
    %1776 = vmatprep.subr.mxu0 0.0
    %1777 = vmatpush1.msra.mxu0 %v582
    %1778 = vmatprep.subr.mxu0 0.0
    %1779 = vmatpush1.msra.mxu0 %v583
    %1780 = vmatprep.subr.mxu0 0.0
    %1781 = vmatpush1.msra.mxu0 %v584
    %1782 = vmatprep.subr.mxu0 0.0
    %1783 = vmatpush1.msra.mxu0 %v585
    %1784 = vmatprep.subr.mxu0 0.0
    %1785 = vmatpush1.msra.mxu0 %v586
    %1786 = vmatprep.subr.mxu0 0.0
    %1787 = vmatpush1.msra.mxu0 %v587
    %1788 = vmatprep.subr.mxu0 0.0
    %1789 = vmatpush1.msra.mxu0 %v588
    %1790 = vmatprep.subr.mxu0 0.0
    %1791 = vmatpush1.msra.mxu0 %v589
    %1792 = vmatprep.subr.mxu0 0.0
    %1793 = vmatpush1.msra.mxu0 %v590
    %1794 = vmatprep.subr.mxu0 0.0
    %1795 = vmatpush1.msra.mxu0 %v591
    %1796 = vmatprep.subr.mxu0 0.0
    %1797 = vmatpush1.msra.mxu0 %v592
    %1798 = vmatprep.subr.mxu0 0.0
    %1799 = vmatpush1.msra.mxu0 %v593
    %1800 = vmatprep.subr.mxu0 0.0
    %1801 = vmatpush1.msra.mxu0 %v594
    %1802 = vmatprep.subr.mxu0 0.0
    %1803 = vmatpush1.msra.mxu0 %v595
    %1804 = vmatprep.subr.mxu0 0.0
    %1805 = vmatpush1.msra.mxu0 %v596
    %1806 = vmatprep.subr.mxu0 0.0
    %1807 = vmatpush1.msra.mxu0 %v597
    %1808 = vmatprep.subr.mxu0 0.0
    %1809 = vmatpush1.msra.mxu0 %v598
    %1810 = vmatprep.subr.mxu0 0.0
    %1811 = vmatpush1.msra.mxu0 %v599
    %1812 = vmatprep.subr.mxu0 0.0
    %1813 = vmatpush1.msra.mxu0 %v600
    %1814 = vmatprep.subr.mxu0 0.0
    %1815 = vmatpush1.msra.mxu0 %v601
    %1816 = vmatprep.subr.mxu0 0.0
    %1817 = vmatpush1.msra.mxu0 %v602
    %1818 = vmatprep.subr.mxu0 0.0
    %1819 = vmatpush1.msra.mxu0 %v603
    %1820 = vmatprep.subr.mxu0 0.0
    %1821 = vmatpush1.msra.mxu0 %v604
    %1822 = vmatprep.subr.mxu0 0.0
    %1823 = vmatpush1.msra.mxu0 %v605
    %1824 = vmatprep.mubr.f32.mxu0 %v1670
    %1825 = vmatmul.mubr.f32.gmra.mrb[0].mxu0 %v1669
    %v1826 = vpop.f32.mrb[0].mxu0
    %v1827 = vadd.f32 0.0, %v1826
    %v1828 = vpop.f32.mrb[0].mxu0
    %1829 = vmatprep.mubr.f32.mxu0 %v1674
    %1830 = vmatmul.mubr.f32.gmra.mrb[0].mxu0 %v1673
    %v1831 = vpop.f32.mrb[0].mxu0
    %v1832 = vadd.f32 0.0, %v1831
    %v1833 = vpop.f32.mrb[0].mxu0
    %1834 = vmatprep.mubr.f32.mxu0 %v1678
    %1835 = vmatmul.mubr.f32.gmra.mrb[0].mxu0 %v1677
    %v1836 = vpop.f32.mrb[0].mxu0
    %v1837 = vadd.f32 0.0, %v1836
    %v1838 = vpop.f32.mrb[0].mxu0
    %1839 = vmatprep.mubr.f32.mxu0 %v1682
    %1840 = vmatmul.mubr.f32.gmra.mrb[0].mxu0 %v1681
    %v1841 = vpop.f32.mrb[0].mxu0
    %v1842 = vadd.f32 0.0, %v1841
    %v1843 = vpop.f32.mrb[0].mxu0
    %1844 = vmatprep.mubr.f32.mxu0 %v1686
    %1845 = vmatmul.mubr.f32.gmra.mrb[0].mxu0 %v1685
    %v1846 = vpop.f32.mrb[0].mxu0
    %v1847 = vadd.f32 0.0, %v1846
    %v1848 = vpop.f32.mrb[0].mxu0
    %1849 = vmatprep.mubr.f32.mxu0 %v1690
    %1850 = vmatmul.mubr.f32.gmra.mrb[0].mxu0 %v1689
    %v1851 = vpop.f32.mrb[0].mxu0
    %v1852 = vadd.f32 0.0, %v1851
    %v1853 = vpop.f32.mrb[0].mxu0
    %1854 = vmatprep.mubr.f32.mxu0 %v1694
    %1855 = vmatmul.mubr.f32.gmra.mrb[0].mxu0 %v1693
    %v1856 = vpop.f32.mrb[0].mxu0
    %v1857 = vadd.f32 0.0, %v1856
    %v1858 = vpop.f32.mrb[0].mxu0
    %1859 = vmatprep.mubr.f32.mxu0 %v1698
    %1860 = vmatmul.mubr.f32.gmra.mrb[0].mxu0 %v1697
    %v1861 = vpop.f32.mrb[0].mxu0
    %v1862 = vadd.f32 0.0, %v1861
    %v1863 = vpop.f32.mrb[0].mxu0
    %1864 = vmatprep.mubr.f32.mxu0 %v1702
    %1865 = vmatmul.mubr.f32.gmra.mrb[0].mxu0 %v1701
    %v1866 = vpop.f32.mrb[0].mxu0
    %v1867 = vadd.f32 0.0, %v1866
    %v1868 = vpop.f32.mrb[0].mxu0
    %1869 = vmatprep.mubr.f32.mxu0 %v1706
    %1870 = vmatmul.mubr.f32.gmra.mrb[0].mxu0 %v1705
    %v1871 = vpop.f32.mrb[0].mxu0
    %v1872 = vadd.f32 0.0, %v1871
    %v1873 = vpop.f32.mrb[0].mxu0
    %1874 = vmatprep.mubr.f32.mxu0 %v1710
    %1875 = vmatmul.mubr.f32.gmra.mrb[0].mxu0 %v1709
    %v1876 = vpop.f32.mrb[0].mxu0
    %v1877 = vadd.f32 0.0, %v1876
    %v1878 = vpop.f32.mrb[0].mxu0
    %1879 = vmatprep.mubr.f32.mxu0 %v1714
    %1880 = vmatmul.mubr.f32.gmra.mrb[0].mxu0 %v1713
    %v1881 = vpop.f32.mrb[0].mxu0
    %v1882 = vadd.f32 0.0, %v1881
    %v1883 = vpop.f32.mrb[0].mxu0
    %1884 = vmatprep.mubr.f32.mxu0 %v1718
    %1885 = vmatmul.mubr.f32.gmra.mrb[0].mxu0 %v1717
    %v1886 = vpop.f32.mrb[0].mxu0
    %v1887 = vadd.f32 0.0, %v1886
    %v1888 = vpop.f32.mrb[0].mxu0
    %1889 = vdwg.mxu0
    %1890 = vmatprep.subr.mxu0 0.0
    %1891 = vmatpush1.msra.mxu0 %v606
    %1892 = vmatprep.subr.mxu0 0.0
    %1893 = vmatpush1.msra.mxu0 %v607
    %1894 = vmatprep.subr.mxu0 0.0
    %1895 = vmatpush1.msra.mxu0 %v608
    %1896 = vmatprep.subr.mxu0 0.0
    %1897 = vmatpush1.msra.mxu0 %v609
    %1898 = vmatprep.subr.mxu0 0.0
    %1899 = vmatpush1.msra.mxu0 %v610
    %1900 = vmatprep.subr.mxu0 0.0
    %1901 = vmatpush1.msra.mxu0 %v611
    %1902 = vmatprep.subr.mxu0 0.0
    %1903 = vmatpush1.msra.mxu0 %v612
    %1904 = vmatprep.subr.mxu0 0.0
    %1905 = vmatpush1.msra.mxu0 %v613
    %1906 = vmatprep.subr.mxu0 0.0
    %1907 = vmatpush1.msra.mxu0 %v614
    %1908 = vmatprep.subr.mxu0 0.0
    %1909 = vmatpush1.msra.mxu0 %v615
    %1910 = vmatprep.subr.mxu0 0.0
    %1911 = vmatpush1.msra.mxu0 %v616
    %1912 = vmatprep.subr.mxu0 0.0
    %1913 = vmatpush1.msra.mxu0 %v617
    %1914 = vmatprep.subr.mxu0 0.0
    %1915 = vmatpush1.msra.mxu0 %v618
    %1916 = vmatprep.subr.mxu0 0.0
    %1917 = vmatpush1.msra.mxu0 %v619
    %1918 = vmatprep.subr.mxu0 0.0
    %1919 = vmatpush1.msra.mxu0 %v620
    %1920 = vmatprep.subr.mxu0 0.0
    %1921 = vmatpush1.msra.mxu0 %v621
    %1922 = vmatprep.subr.mxu0 0.0
    %1923 = vmatpush1.msra.mxu0 %v622
    %1924 = vmatprep.subr.mxu0 0.0
    %1925 = vmatpush1.msra.mxu0 0.0
    %1926 = vmatprep.subr.mxu0 0.0
    %1927 = vmatpush1.msra.mxu0 0.0
    %1928 = vmatprep.subr.mxu0 0.0
    %1929 = vmatpush1.msra.mxu0 0.0
    %1930 = vmatprep.subr.mxu0 0.0
    %1931 = vmatpush1.msra.mxu0 0.0
    %1932 = vmatprep.subr.mxu0 0.0
    %1933 = vmatpush1.msra.mxu0 0.0
    %1934 = vmatprep.subr.mxu0 0.0
    %1935 = vmatpush1.msra.mxu0 0.0
    %1936 = vmatprep.subr.mxu0 0.0
    %1937 = vmatpush1.msra.mxu0 0.0
    %1938 = vmatprep.subr.mxu0 0.0
    %1939 = vmatpush1.msra.mxu0 0.0
    %1940 = vmatprep.subr.mxu0 0.0
    %1941 = vmatpush1.msra.mxu0 0.0
    %1942 = vmatprep.subr.mxu0 0.0
    %1943 = vmatpush1.msra.mxu0 0.0
    %1944 = vmatprep.subr.mxu0 0.0
    %1945 = vmatpush1.msra.mxu0 0.0
    %1946 = vmatprep.subr.mxu0 0.0
    %1947 = vmatpush1.msra.mxu0 0.0
    %1948 = vmatprep.subr.mxu0 0.0
    %1949 = vmatpush1.msra.mxu0 0.0
    %1950 = vmatprep.subr.mxu0 0.0
    %1951 = vmatpush1.msra.mxu0 0.0
    %1952 = vmatprep.subr.mxu0 0.0
    %1953 = vmatpush1.msra.mxu0 0.0
    %1954 = vmatprep.mubr.f32.mxu0 %v1722
    %1955 = vmatmul.mubr.f32.gmra.mrb[0].mxu0 %v1671
    %v1956 = vpop.f32.mrb[0].mxu0
    %v1957 = vadd.f32 %v1827, %v1956
    %v1958 = vpop.f32.mrb[0].mxu0
    %1959 = vmatprep.mubr.f32.mxu0 %v1725
    %1960 = vmatmul.mubr.f32.gmra.mrb[0].mxu0 %v1675
    %v1961 = vpop.f32.mrb[0].mxu0
    %v1962 = vadd.f32 %v1832, %v1961
    %v1963 = vpop.f32.mrb[0].mxu0
    %1964 = vmatprep.mubr.f32.mxu0 %v1728
    %1965 = vmatmul.mubr.f32.gmra.mrb[0].mxu0 %v1679
    %v1966 = vpop.f32.mrb[0].mxu0
    %v1967 = vadd.f32 %v1837, %v1966
    %v1968 = vpop.f32.mrb[0].mxu0
    %1969 = vmatprep.mubr.f32.mxu0 %v1731
    %1970 = vmatmul.mubr.f32.gmra.mrb[0].mxu0 %v1683
    %v1971 = vpop.f32.mrb[0].mxu0
    %v1972 = vadd.f32 %v1842, %v1971
    %v1973 = vpop.f32.mrb[0].mxu0
    %1974 = vmatprep.mubr.f32.mxu0 %v1734
    %1975 = vmatmul.mubr.f32.gmra.mrb[0].mxu0 %v1687
    %v1976 = vpop.f32.mrb[0].mxu0
    %v1977 = vadd.f32 %v1847, %v1976
    %v1978 = vpop.f32.mrb[0].mxu0
    %1979 = vmatprep.mubr.f32.mxu0 %v1737
    %1980 = vmatmul.mubr.f32.gmra.mrb[0].mxu0 %v1691
    %v1981 = vpop.f32.mrb[0].mxu0
    %v1982 = vadd.f32 %v1852, %v1981
    %v1983 = vpop.f32.mrb[0].mxu0
    %1984 = vmatprep.mubr.f32.mxu0 %v1740
    %1985 = vmatmul.mubr.f32.gmra.mrb[0].mxu0 %v1695
    %v1986 = vpop.f32.mrb[0].mxu0
    %v1987 = vadd.f32 %v1857, %v1986
    %v1988 = vpop.f32.mrb[0].mxu0
    %1989 = vmatprep.mubr.f32.mxu0 %v1743
    %1990 = vmatmul.mubr.f32.gmra.mrb[0].mxu0 %v1699
    %v1991 = vpop.f32.mrb[0].mxu0
    %v1992 = vadd.f32 %v1862, %v1991
    %v1993 = vpop.f32.mrb[0].mxu0
    %1994 = vmatprep.mubr.f32.mxu0 %v1746
    %1995 = vmatmul.mubr.f32.gmra.mrb[0].mxu0 %v1703
    %v1996 = vpop.f32.mrb[0].mxu0
    %v1997 = vadd.f32 %v1867, %v1996
    %v1998 = vpop.f32.mrb[0].mxu0
    %1999 = vmatprep.mubr.f32.mxu0 %v1749
    %2000 = vmatmul.mubr.f32.gmra.mrb[0].mxu0 %v1707
    %v2001 = vpop.f32.mrb[0].mxu0
    %v2002 = vadd.f32 %v1872, %v2001
    %v2003 = vpop.f32.mrb[0].mxu0
    %2004 = vmatprep.mubr.f32.mxu0 %v1752
    %2005 = vmatmul.mubr.f32.gmra.mrb[0].mxu0 %v1711
    %v2006 = vpop.f32.mrb[0].mxu0
    %v2007 = vadd.f32 %v1877, %v2006
    %v2008 = vpop.f32.mrb[0].mxu0
    %2009 = vmatprep.mubr.f32.mxu0 %v1755
    %2010 = vmatmul.mubr.f32.gmra.mrb[0].mxu0 %v1715
    %v2011 = vpop.f32.mrb[0].mxu0
    %v2012 = vadd.f32 %v1882, %v2011
    %v2013 = vpop.f32.mrb[0].mxu0
    %2014 = vmatprep.mubr.f32.mxu0 %v1758
    %2015 = vmatmul.mubr.f32.gmra.mrb[0].mxu0 %v1719
    %v2016 = vpop.f32.mrb[0].mxu0
    %v2017 = vadd.f32 %v1887, %v2016
    %v2018 = vpop.f32.mrb[0].mxu0
    %2019 = vdwg.mxu0
    %s2020 = scalar_lea.vmem %s4, 16
    %v2021 = vld [vmem:[%s2020] sm:$0xff]
    %v2023 = vsel %vm675, %v1957, 0
    %v2026 = vsel %vm675, %v1962, 0
    %v2029 = vsel %vm675, %v1967, 0
    %v2032 = vsel %vm675, %v1972, 0
    %v2035 = vsel %vm675, %v1977, 0
    %v2038 = vsel %vm675, %v1982, 0
    %v2041 = vsel %vm675, %v1987, 0
    %v2044 = vsel %vm675, %v1992, 0
    %v2047 = vsel %vm675, %v1997, 0
    %v2050 = vsel %vm675, %v2002, 0
    %v2053 = vsel %vm675, %v2007, 0
    %v2056 = vsel %vm675, %v2012, 0
    %v2059 = vsel %vm675, %v2017, 0
    %2061 = vmatprep.subr.mxu0 0.0
    %2062 = vmatpush1.msra.mxu0 %v2021
    %2063 = vmatprep.subr.mxu0 0.0
    %2064 = vmatpush1.msra.mxu0 0.0
    %2065 = vmatprep.subr.mxu0 0.0
    %2066 = vmatpush1.msra.mxu0 0.0
    %2067 = vmatprep.subr.mxu0 0.0
    %2068 = vmatpush1.msra.mxu0 0.0
    %2069 = vmatprep.subr.mxu0 0.0
    %2070 = vmatpush1.msra.mxu0 0.0
    %2071 = vmatprep.subr.mxu0 0.0
    %2072 = vmatpush1.msra.mxu0 0.0
    %2073 = vmatprep.subr.mxu0 0.0
    %2074 = vmatpush1.msra.mxu0 0.0
    %2075 = vmatprep.subr.mxu0 0.0
    %2076 = vmatpush1.msra.mxu0 0.0
    %2077 = vmatprep.subr.mxu0 0.0
    %2078 = vmatpush1.msra.mxu0 0.0
    %2079 = vmatprep.subr.mxu0 0.0
    %2080 = vmatpush1.msra.mxu0 0.0
    %2081 = vmatprep.subr.mxu0 0.0
    %2082 = vmatpush1.msra.mxu0 0.0
    %2083 = vmatprep.subr.mxu0 0.0
    %2084 = vmatpush1.msra.mxu0 0.0
    %2085 = vmatprep.subr.mxu0 0.0
    %2086 = vmatpush1.msra.mxu0 0.0
    %2087 = vmatprep.subr.mxu0 0.0
    %2088 = vmatpush1.msra.mxu0 0.0
    %2089 = vmatprep.subr.mxu0 0.0
    %2090 = vmatpush1.msra.mxu0 0.0
    %2091 = vmatprep.subr.mxu0 0.0
    %2092 = vmatpush1.msra.mxu0 0.0
    %2093 = vmatprep.subr.mxu0 0.0
    %2094 = vmatpush1.msra.mxu0 0.0
    %2095 = vmatprep.subr.mxu0 0.0
    %2096 = vmatpush1.msra.mxu0 0.0
    %2097 = vmatprep.subr.mxu0 0.0
    %2098 = vmatpush1.msra.mxu0 0.0
    %2099 = vmatprep.subr.mxu0 0.0
    %2100 = vmatpush1.msra.mxu0 0.0
    %2101 = vmatprep.subr.mxu0 0.0
    %2102 = vmatpush1.msra.mxu0 0.0
    %2103 = vmatprep.subr.mxu0 0.0
    %2104 = vmatpush1.msra.mxu0 0.0
    %2105 = vmatprep.subr.mxu0 0.0
    %2106 = vmatpush1.msra.mxu0 0.0
    %2107 = vmatprep.subr.mxu0 0.0
    %2108 = vmatpush1.msra.mxu0 0.0
    %2109 = vmatprep.subr.mxu0 0.0
    %2110 = vmatpush1.msra.mxu0 0.0
    %2111 = vmatprep.subr.mxu0 0.0
    %2112 = vmatpush1.msra.mxu0 0.0
    %2113 = vmatprep.subr.mxu0 0.0
    %2114 = vmatpush1.msra.mxu0 0.0
    %2115 = vmatprep.subr.mxu0 0.0
    %2116 = vmatpush1.msra.mxu0 0.0
    %2117 = vmatprep.subr.mxu0 0.0
    %2118 = vmatpush1.msra.mxu0 0.0
    %2119 = vmatprep.subr.mxu0 0.0
    %2120 = vmatpush1.msra.mxu0 0.0
    %2121 = vmatprep.subr.mxu0 0.0
    %2122 = vmatpush1.msra.mxu0 0.0
    %2123 = vmatprep.subr.mxu0 0.0
    %2124 = vmatpush1.msra.mxu0 0.0
    %2125 = vmatprep.mubr.f32.mxu0 0.0
    %2126 = vmatmul.mubr.f32.gmra.mrb[0].mxu0 %v2023
    %v2127 = vpop.f32.mrb[0].mxu0
    %v2128 = vadd.f32 0.0, %v2127
    %v2129 = vpop.f32.mrb[0].mxu0
    %2130 = vmatprep.mubr.f32.mxu0 0.0
    %2131 = vmatmul.mubr.f32.gmra.mrb[0].mxu0 %v2026
    %v2132 = vpop.f32.mrb[0].mxu0
    %v2133 = vadd.f32 0.0, %v2132
    %v2134 = vpop.f32.mrb[0].mxu0
    %2135 = vmatprep.mubr.f32.mxu0 0.0
    %2136 = vmatmul.mubr.f32.gmra.mrb[0].mxu0 %v2029
    %v2137 = vpop.f32.mrb[0].mxu0
    %v2138 = vadd.f32 0.0, %v2137
    %v2139 = vpop.f32.mrb[0].mxu0
    %2140 = vmatprep.mubr.f32.mxu0 0.0
    %2141 = vmatmul.mubr.f32.gmra.mrb[0].mxu0 %v2032
    %v2142 = vpop.f32.mrb[0].mxu0
    %v2143 = vadd.f32 0.0, %v2142
    %v2144 = vpop.f32.mrb[0].mxu0
    %2145 = vmatprep.mubr.f32.mxu0 0.0
    %2146 = vmatmul.mubr.f32.gmra.mrb[0].mxu0 %v2035
    %v2147 = vpop.f32.mrb[0].mxu0
    %v2148 = vadd.f32 0.0, %v2147
    %v2149 = vpop.f32.mrb[0].mxu0
    %2150 = vmatprep.mubr.f32.mxu0 0.0
    %2151 = vmatmul.mubr.f32.gmra.mrb[0].mxu0 %v2038
    %v2152 = vpop.f32.mrb[0].mxu0
    %v2153 = vadd.f32 0.0, %v2152
    %v2154 = vpop.f32.mrb[0].mxu0
    %2155 = vmatprep.mubr.f32.mxu0 0.0
    %2156 = vmatmul.mubr.f32.gmra.mrb[0].mxu0 %v2041
    %v2157 = vpop.f32.mrb[0].mxu0
    %v2158 = vadd.f32 0.0, %v2157
    %v2159 = vpop.f32.mrb[0].mxu0
    %2160 = vmatprep.mubr.f32.mxu0 0.0
    %2161 = vmatmul.mubr.f32.gmra.mrb[0].mxu0 %v2044
    %v2162 = vpop.f32.mrb[0].mxu0
    %v2163 = vadd.f32 0.0, %v2162
    %v2164 = vpop.f32.mrb[0].mxu0
    %2165 = vmatprep.mubr.f32.mxu0 0.0
    %2166 = vmatmul.mubr.f32.gmra.mrb[0].mxu0 %v2047
    %v2167 = vpop.f32.mrb[0].mxu0
    %v2168 = vadd.f32 0.0, %v2167
    %v2169 = vpop.f32.mrb[0].mxu0
    %2170 = vmatprep.mubr.f32.mxu0 0.0
    %2171 = vmatmul.mubr.f32.gmra.mrb[0].mxu0 %v2050
    %v2172 = vpop.f32.mrb[0].mxu0
    %v2173 = vadd.f32 0.0, %v2172
    %v2174 = vpop.f32.mrb[0].mxu0
    %2175 = vmatprep.mubr.f32.mxu0 0.0
    %2176 = vmatmul.mubr.f32.gmra.mrb[0].mxu0 %v2053
    %v2177 = vpop.f32.mrb[0].mxu0
    %v2178 = vadd.f32 0.0, %v2177
    %v2179 = vpop.f32.mrb[0].mxu0
    %2180 = vmatprep.mubr.f32.mxu0 0.0
    %2181 = vmatmul.mubr.f32.gmra.mrb[0].mxu0 %v2056
    %v2182 = vpop.f32.mrb[0].mxu0
    %v2183 = vadd.f32 0.0, %v2182
    %v2184 = vpop.f32.mrb[0].mxu0
    %2185 = vmatprep.mubr.f32.mxu0 0.0
    %2186 = vmatmul.mubr.f32.gmra.mrb[0].mxu0 %v2059
    %v2187 = vpop.f32.mrb[0].mxu0
    %v2188 = vadd.f32 0.0, %v2187
    %v2189 = vpop.f32.mrb[0].mxu0
    %2190 = vdwg.mxu0
    %v2191 = vadd.f32 %v1605, %v2128
    %v2192 = vadd.f32 %v1610, %v2133
    %v2193 = vadd.f32 %v1615, %v2138
    %v2194 = vadd.f32 %v1620, %v2143
    %v2195 = vadd.f32 %v1625, %v2148
    %v2196 = vadd.f32 %v1630, %v2153
    %v2197 = vadd.f32 %v1635, %v2158
    %v2198 = vadd.f32 %v1640, %v2163
    %v2199 = vadd.f32 %v1645, %v2168
    %v2200 = vadd.f32 %v1650, %v2173
    %v2201 = vadd.f32 %v1655, %v2178
    %v2202 = vadd.f32 %v1660, %v2183
    %v2203 = vadd.f32 %v1665, %v2188
    %s2204 = scalar_lea.vmem %s3, 1248
    %v2205 = vld [vmem:[%s2204] sm:$0xff]
    %v2206 = vld [vmem:[%s2204 + $0x8] sm:$0xff]
    %v2207 = vld [vmem:[%s2204 + $0x10] sm:$0xff]
    %v2208 = vld [vmem:[%s2204 + $0x18] sm:$0xff]
    %v2209 = vld [vmem:[%s2204 + $0x20] sm:$0xff]
    %v2210 = vld [vmem:[%s2204 + $0x28] sm:$0xff]
    %v2211 = vld [vmem:[%s2204 + $0x30] sm:$0xff]
    %v2212 = vld [vmem:[%s2204 + $0x38] sm:$0xff]
    %v2213 = vld [vmem:[%s2204 + $0x40] sm:$0xff]
    %v2214 = vld [vmem:[%s2204 + $0x48] sm:$0xff]
    %v2215 = vld [vmem:[%s2204 + $0x50] sm:$0xff]
    %v2216 = vld [vmem:[%s2204 + $0x58] sm:$0xff]
    %v2217 = vld [vmem:[%s2204 + $0x60] sm:$0xff]
    %v2218 = vld [vmem:[%s2204 + $0x68] sm:$0xff]
    %v2219 = vld [vmem:[%s2204 + $0x70] sm:$0xff]
    %v2220 = vld [vmem:[%s2204 + $0x78] sm:$0xff]
    %v2221 = vld [vmem:[%s2204 + $0x80] sm:$0xff]
    %v2222 = vld [vmem:[%s2204 + $0x88] sm:$0xff]
    %v2223 = vld [vmem:[%s2204 + $0x90] sm:$0xff]
    %v2224 = vld [vmem:[%s2204 + $0x98] sm:$0xff]
    %v2225 = vld [vmem:[%s2204 + $0xa0] sm:$0xff]
    %v2226 = vld [vmem:[%s2204 + $0xa8] sm:$0xff]
    %v2227 = vld [vmem:[%s2204 + $0xb0] sm:$0xff]
    %v2228 = vld [vmem:[%s2204 + $0xb8] sm:$0xff]
    %v2229 = vld [vmem:[%s2204 + $0xc0] sm:$0xff]
    %v2230 = vld [vmem:[%s2204 + $0xc8] sm:$0xff]
    %v2231 = vld [vmem:[%s2204 + $0xd0] sm:$0xff]
    %v2232 = vld [vmem:[%s2204 + $0xd8] sm:$0xff]
    %v2233 = vld [vmem:[%s2204 + $0xe0] sm:$0xff]
    %v2234 = vld [vmem:[%s2204 + $0xe8] sm:$0xff]
    %v2235 = vld [vmem:[%s2204 + $0xf0] sm:$0xff]
    %v2236 = vld [vmem:[%s2204 + $0xf8] sm:$0xff]
    %v2237 = vld [vmem:[%s2204 + $0x100] sm:$0xff]
    %v2238 = vld [vmem:[%s2204 + $0x108] sm:$0xff]
    %v2239 = vld [vmem:[%s2204 + $0x110] sm:$0xff]
    %v2240 = vld [vmem:[%s2204 + $0x118] sm:$0xff]
    %v2241 = vld [vmem:[%s2204 + $0x120] sm:$0xff]
    %v2242 = vld [vmem:[%s2204 + $0x128] sm:$0xff]
    %v2243 = vld [vmem:[%s2204 + $0x130] sm:$0xff]
    %v2244 = vld [vmem:[%s2204 + $0x138] sm:$0xff]
    %v2245 = vld [vmem:[%s2204 + $0x140] sm:$0xff]
    %v2246 = vld [vmem:[%s2204 + $0x148] sm:$0xff]
    %v2247 = vld [vmem:[%s2204 + $0x150] sm:$0xff]
    %v2248 = vld [vmem:[%s2204 + $0x158] sm:$0xff]
    %v2249 = vld [vmem:[%s2204 + $0x160] sm:$0xff]
    %v2250 = vld [vmem:[%s2204 + $0x168] sm:$0xff]
    %v2251 = vld [vmem:[%s2204 + $0x170] sm:$0xff]
    %v2252 = vld [vmem:[%s2204 + $0x178] sm:$0xff]
    %v2253 = vld [vmem:[%s2204 + $0x180] sm:$0x3]
    %v2254 = vld [vmem:[%s2204 + $0x188] sm:$0x3]
    %v2255 = vld [vmem:[%s2204 + $0x190] sm:$0x3]
    %v2256 = vld [vmem:[%s2204 + $0x198] sm:$0x3]
    %v2258 = vsel %vm675, %v2208, 0
    %v2261 = vsel %vm675, %v2212, 0
    %v2264 = vsel %vm675, %v2216, 0
    %v2267 = vsel %vm675, %v2220, 0
    %v2270 = vsel %vm675, %v2224, 0
    %v2273 = vsel %vm675, %v2228, 0
    %v2276 = vsel %vm675, %v2232, 0
    %v2279 = vsel %vm675, %v2236, 0
    %v2282 = vsel %vm675, %v2240, 0
    %v2285 = vsel %vm675, %v2244, 0
    %v2288 = vsel %vm675, %v2248, 0
    %v2291 = vsel %vm675, %v2252, 0
    %v2294 = vsel %vm675, %v2256, 0
    %2296 = vmatprep.subr.mxu0 0.0
    %2297 = vmatpush1.msra.mxu0 %v574
    %2298 = vmatprep.subr.mxu0 0.0
    %2299 = vmatpush1.msra.mxu0 %v575
    %2300 = vmatprep.subr.mxu0 0.0
    %2301 = vmatpush1.msra.mxu0 %v576
    %2302 = vmatprep.subr.mxu0 0.0
    %2303 = vmatpush1.msra.mxu0 %v577
    %2304 = vmatprep.subr.mxu0 0.0
    %2305 = vmatpush1.msra.mxu0 %v578
    %2306 = vmatprep.subr.mxu0 0.0
    %2307 = vmatpush1.msra.mxu0 %v579
    %2308 = vmatprep.subr.mxu0 0.0
    %2309 = vmatpush1.msra.mxu0 %v580
    %2310 = vmatprep.subr.mxu0 0.0
    %2311 = vmatpush1.msra.mxu0 %v581
    %2312 = vmatprep.subr.mxu0 0.0
    %2313 = vmatpush1.msra.mxu0 %v582
    %2314 = vmatprep.subr.mxu0 0.0
    %2315 = vmatpush1.msra.mxu0 %v583
    %2316 = vmatprep.subr.mxu0 0.0
    %2317 = vmatpush1.msra.mxu0 %v584
    %2318 = vmatprep.subr.mxu0 0.0
    %2319 = vmatpush1.msra.mxu0 %v585
    %2320 = vmatprep.subr.mxu0 0.0
    %2321 = vmatpush1.msra.mxu0 %v586
    %2322 = vmatprep.subr.mxu0 0.0
    %2323 = vmatpush1.msra.mxu0 %v587
    %2324 = vmatprep.subr.mxu0 0.0
    %2325 = vmatpush1.msra.mxu0 %v588
    %2326 = vmatprep.subr.mxu0 0.0
    %2327 = vmatpush1.msra.mxu0 %v589
    %2328 = vmatprep.subr.mxu0 0.0
    %2329 = vmatpush1.msra.mxu0 %v590
    %2330 = vmatprep.subr.mxu0 0.0
    %2331 = vmatpush1.msra.mxu0 %v591
    %2332 = vmatprep.subr.mxu0 0.0
    %2333 = vmatpush1.msra.mxu0 %v592
    %2334 = vmatprep.subr.mxu0 0.0
    %2335 = vmatpush1.msra.mxu0 %v593
    %2336 = vmatprep.subr.mxu0 0.0
    %2337 = vmatpush1.msra.mxu0 %v594
    %2338 = vmatprep.subr.mxu0 0.0
    %2339 = vmatpush1.msra.mxu0 %v595
    %2340 = vmatprep.subr.mxu0 0.0
    %2341 = vmatpush1.msra.mxu0 %v596
    %2342 = vmatprep.subr.mxu0 0.0
    %2343 = vmatpush1.msra.mxu0 %v597
    %2344 = vmatprep.subr.mxu0 0.0
    %2345 = vmatpush1.msra.mxu0 %v598
    %2346 = vmatprep.subr.mxu0 0.0
    %2347 = vmatpush1.msra.mxu0 %v599
    %2348 = vmatprep.subr.mxu0 0.0
    %2349 = vmatpush1.msra.mxu0 %v600
    %2350 = vmatprep.subr.mxu0 0.0
    %2351 = vmatpush1.msra.mxu0 %v601
    %2352 = vmatprep.subr.mxu0 0.0
    %2353 = vmatpush1.msra.mxu0 %v602
    %2354 = vmatprep.subr.mxu0 0.0
    %2355 = vmatpush1.msra.mxu0 %v603
    %2356 = vmatprep.subr.mxu0 0.0
    %2357 = vmatpush1.msra.mxu0 %v604
    %2358 = vmatprep.subr.mxu0 0.0
    %2359 = vmatpush1.msra.mxu0 %v605
    %2360 = vmatprep.mubr.f32.mxu0 %v2206
    %2361 = vmatmul.mubr.f32.gmra.mrb[0].mxu0 %v2205
    %v2362 = vpop.f32.mrb[0].mxu0
    %v2363 = vadd.f32 0.0, %v2362
    %v2364 = vpop.f32.mrb[0].mxu0
    %2365 = vmatprep.mubr.f32.mxu0 %v2210
    %2366 = vmatmul.mubr.f32.gmra.mrb[0].mxu0 %v2209
    %v2367 = vpop.f32.mrb[0].mxu0
    %v2368 = vadd.f32 0.0, %v2367
    %v2369 = vpop.f32.mrb[0].mxu0
    %2370 = vmatprep.mubr.f32.mxu0 %v2214
    %2371 = vmatmul.mubr.f32.gmra.mrb[0].mxu0 %v2213
    %v2372 = vpop.f32.mrb[0].mxu0
    %v2373 = vadd.f32 0.0, %v2372
    %v2374 = vpop.f32.mrb[0].mxu0
    %2375 = vmatprep.mubr.f32.mxu0 %v2218
    %2376 = vmatmul.mubr.f32.gmra.mrb[0].mxu0 %v2217
    %v2377 = vpop.f32.mrb[0].mxu0
    %v2378 = vadd.f32 0.0, %v2377
    %v2379 = vpop.f32.mrb[0].mxu0
    %2380 = vmatprep.mubr.f32.mxu0 %v2222
    %2381 = vmatmul.mubr.f32.gmra.mrb[0].mxu0 %v2221
    %v2382 = vpop.f32.mrb[0].mxu0
    %v2383 = vadd.f32 0.0, %v2382
    %v2384 = vpop.f32.mrb[0].mxu0
    %2385 = vmatprep.mubr.f32.mxu0 %v2226
    %2386 = vmatmul.mubr.f32.gmra.mrb[0].mxu0 %v2225
    %v2387 = vpop.f32.mrb[0].mxu0
    %v2388 = vadd.f32 0.0, %v2387
    %v2389 = vpop.f32.mrb[0].mxu0
    %2390 = vmatprep.mubr.f32.mxu0 %v2230
    %2391 = vmatmul.mubr.f32.gmra.mrb[0].mxu0 %v2229
    %v2392 = vpop.f32.mrb[0].mxu0
    %v2393 = vadd.f32 0.0, %v2392
    %v2394 = vpop.f32.mrb[0].mxu0
    %2395 = vmatprep.mubr.f32.mxu0 %v2234
    %2396 = vmatmul.mubr.f32.gmra.mrb[0].mxu0 %v2233
    %v2397 = vpop.f32.mrb[0].mxu0
    %v2398 = vadd.f32 0.0, %v2397
    %v2399 = vpop.f32.mrb[0].mxu0
    %2400 = vmatprep.mubr.f32.mxu0 %v2238
    %2401 = vmatmul.mubr.f32.gmra.mrb[0].mxu0 %v2237
    %v2402 = vpop.f32.mrb[0].mxu0
    %v2403 = vadd.f32 0.0, %v2402
    %v2404 = vpop.f32.mrb[0].mxu0
    %2405 = vmatprep.mubr.f32.mxu0 %v2242
    %2406 = vmatmul.mubr.f32.gmra.mrb[0].mxu0 %v2241
    %v2407 = vpop.f32.mrb[0].mxu0
    %v2408 = vadd.f32 0.0, %v2407
    %v2409 = vpop.f32.mrb[0].mxu0
    %2410 = vmatprep.mubr.f32.mxu0 %v2246
    %2411 = vmatmul.mubr.f32.gmra.mrb[0].mxu0 %v2245
    %v2412 = vpop.f32.mrb[0].mxu0
    %v2413 = vadd.f32 0.0, %v2412
    %v2414 = vpop.f32.mrb[0].mxu0
    %2415 = vmatprep.mubr.f32.mxu0 %v2250
    %2416 = vmatmul.mubr.f32.gmra.mrb[0].mxu0 %v2249
    %v2417 = vpop.f32.mrb[0].mxu0
    %v2418 = vadd.f32 0.0, %v2417
    %v2419 = vpop.f32.mrb[0].mxu0
    %2420 = vmatprep.mubr.f32.mxu0 %v2254
    %2421 = vmatmul.mubr.f32.gmra.mrb[0].mxu0 %v2253
    %v2422 = vpop.f32.mrb[0].mxu0
    %v2423 = vadd.f32 0.0, %v2422
    %v2424 = vpop.f32.mrb[0].mxu0
    %2425 = vdwg.mxu0
    %2426 = vmatprep.subr.mxu0 0.0
    %2427 = vmatpush1.msra.mxu0 %v606
    %2428 = vmatprep.subr.mxu0 0.0
    %2429 = vmatpush1.msra.mxu0 %v607
    %2430 = vmatprep.subr.mxu0 0.0
    %2431 = vmatpush1.msra.mxu0 %v608
    %2432 = vmatprep.subr.mxu0 0.0
    %2433 = vmatpush1.msra.mxu0 %v609
    %2434 = vmatprep.subr.mxu0 0.0
    %2435 = vmatpush1.msra.mxu0 %v610
    %2436 = vmatprep.subr.mxu0 0.0
    %2437 = vmatpush1.msra.mxu0 %v611
    %2438 = vmatprep.subr.mxu0 0.0
    %2439 = vmatpush1.msra.mxu0 %v612
    %2440 = vmatprep.subr.mxu0 0.0
    %2441 = vmatpush1.msra.mxu0 %v613
    %2442 = vmatprep.subr.mxu0 0.0
    %2443 = vmatpush1.msra.mxu0 %v614
    %2444 = vmatprep.subr.mxu0 0.0
    %2445 = vmatpush1.msra.mxu0 %v615
    %2446 = vmatprep.subr.mxu0 0.0
    %2447 = vmatpush1.msra.mxu0 %v616
    %2448 = vmatprep.subr.mxu0 0.0
    %2449 = vmatpush1.msra.mxu0 %v617
    %2450 = vmatprep.subr.mxu0 0.0
    %2451 = vmatpush1.msra.mxu0 %v618
    %2452 = vmatprep.subr.mxu0 0.0
    %2453 = vmatpush1.msra.mxu0 %v619
    %2454 = vmatprep.subr.mxu0 0.0
    %2455 = vmatpush1.msra.mxu0 %v620
    %2456 = vmatprep.subr.mxu0 0.0
    %2457 = vmatpush1.msra.mxu0 %v621
    %2458 = vmatprep.subr.mxu0 0.0
    %2459 = vmatpush1.msra.mxu0 %v622
    %2460 = vmatprep.subr.mxu0 0.0
    %2461 = vmatpush1.msra.mxu0 0.0
    %2462 = vmatprep.subr.mxu0 0.0
    %2463 = vmatpush1.msra.mxu0 0.0
    %2464 = vmatprep.subr.mxu0 0.0
    %2465 = vmatpush1.msra.mxu0 0.0
    %2466 = vmatprep.subr.mxu0 0.0
    %2467 = vmatpush1.msra.mxu0 0.0
    %2468 = vmatprep.subr.mxu0 0.0
    %2469 = vmatpush1.msra.mxu0 0.0
    %2470 = vmatprep.subr.mxu0 0.0
    %2471 = vmatpush1.msra.mxu0 0.0
    %2472 = vmatprep.subr.mxu0 0.0
    %2473 = vmatpush1.msra.mxu0 0.0
    %2474 = vmatprep.subr.mxu0 0.0
    %2475 = vmatpush1.msra.mxu0 0.0
    %2476 = vmatprep.subr.mxu0 0.0
    %2477 = vmatpush1.msra.mxu0 0.0
    %2478 = vmatprep.subr.mxu0 0.0
    %2479 = vmatpush1.msra.mxu0 0.0
    %2480 = vmatprep.subr.mxu0 0.0
    %2481 = vmatpush1.msra.mxu0 0.0
    %2482 = vmatprep.subr.mxu0 0.0
    %2483 = vmatpush1.msra.mxu0 0.0
    %2484 = vmatprep.subr.mxu0 0.0
    %2485 = vmatpush1.msra.mxu0 0.0
    %2486 = vmatprep.subr.mxu0 0.0
    %2487 = vmatpush1.msra.mxu0 0.0
    %2488 = vmatprep.subr.mxu0 0.0
    %2489 = vmatpush1.msra.mxu0 0.0
    %2490 = vmatprep.mubr.f32.mxu0 %v2258
    %2491 = vmatmul.mubr.f32.gmra.mrb[0].mxu0 %v2207
    %v2492 = vpop.f32.mrb[0].mxu0
    %v2493 = vadd.f32 %v2363, %v2492
    %v2494 = vpop.f32.mrb[0].mxu0
    %2495 = vmatprep.mubr.f32.mxu0 %v2261
    %2496 = vmatmul.mubr.f32.gmra.mrb[0].mxu0 %v2211
    %v2497 = vpop.f32.mrb[0].mxu0
    %v2498 = vadd.f32 %v2368, %v2497
    %v2499 = vpop.f32.mrb[0].mxu0
    %2500 = vmatprep.mubr.f32.mxu0 %v2264
    %2501 = vmatmul.mubr.f32.gmra.mrb[0].mxu0 %v2215
    %v2502 = vpop.f32.mrb[0].mxu0
    %v2503 = vadd.f32 %v2373, %v2502
    %v2504 = vpop.f32.mrb[0].mxu0
    %2505 = vmatprep.mubr.f32.mxu0 %v2267
    %2506 = vmatmul.mubr.f32.gmra.mrb[0].mxu0 %v2219
    %v2507 = vpop.f32.mrb[0].mxu0
    %v2508 = vadd.f32 %v2378, %v2507
    %v2509 = vpop.f32.mrb[0].mxu0
    %2510 = vmatprep.mubr.f32.mxu0 %v2270
    %2511 = vmatmul.mubr.f32.gmra.mrb[0].mxu0 %v2223
    %v2512 = vpop.f32.mrb[0].mxu0
    %v2513 = vadd.f32 %v2383, %v2512
    %v2514 = vpop.f32.mrb[0].mxu0
    %2515 = vmatprep.mubr.f32.mxu0 %v2273
    %2516 = vmatmul.mubr.f32.gmra.mrb[0].mxu0 %v2227
    %v2517 = vpop.f32.mrb[0].mxu0
    %v2518 = vadd.f32 %v2388, %v2517
    %v2519 = vpop.f32.mrb[0].mxu0
    %2520 = vmatprep.mubr.f32.mxu0 %v2276
    %2521 = vmatmul.mubr.f32.gmra.mrb[0].mxu0 %v2231
    %v2522 = vpop.f32.mrb[0].mxu0
    %v2523 = vadd.f32 %v2393, %v2522
    %v2524 = vpop.f32.mrb[0].mxu0
    %2525 = vmatprep.mubr.f32.mxu0 %v2279
    %2526 = vmatmul.mubr.f32.gmra.mrb[0].mxu0 %v2235
    %v2527 = vpop.f32.mrb[0].mxu0
    %v2528 = vadd.f32 %v2398, %v2527
    %v2529 = vpop.f32.mrb[0].mxu0
    %2530 = vmatprep.mubr.f32.mxu0 %v2282
    %2531 = vmatmul.mubr.f32.gmra.mrb[0].mxu0 %v2239
    %v2532 = vpop.f32.mrb[0].mxu0
    %v2533 = vadd.f32 %v2403, %v2532
    %v2534 = vpop.f32.mrb[0].mxu0
    %2535 = vmatprep.mubr.f32.mxu0 %v2285
    %2536 = vmatmul.mubr.f32.gmra.mrb[0].mxu0 %v2243
    %v2537 = vpop.f32.mrb[0].mxu0
    %v2538 = vadd.f32 %v2408, %v2537
    %v2539 = vpop.f32.mrb[0].mxu0
    %2540 = vmatprep.mubr.f32.mxu0 %v2288
    %2541 = vmatmul.mubr.f32.gmra.mrb[0].mxu0 %v2247
    %v2542 = vpop.f32.mrb[0].mxu0
    %v2543 = vadd.f32 %v2413, %v2542
    %v2544 = vpop.f32.mrb[0].mxu0
    %2545 = vmatprep.mubr.f32.mxu0 %v2291
    %2546 = vmatmul.mubr.f32.gmra.mrb[0].mxu0 %v2251
    %v2547 = vpop.f32.mrb[0].mxu0
    %v2548 = vadd.f32 %v2418, %v2547
    %v2549 = vpop.f32.mrb[0].mxu0
    %2550 = vmatprep.mubr.f32.mxu0 %v2294
    %2551 = vmatmul.mubr.f32.gmra.mrb[0].mxu0 %v2255
    %v2552 = vpop.f32.mrb[0].mxu0
    %v2553 = vadd.f32 %v2423, %v2552
    %v2554 = vpop.f32.mrb[0].mxu0
    %2555 = vdwg.mxu0
    %s2556 = scalar_lea.vmem %s4, 24
    %v2557 = vld [vmem:[%s2556] sm:$0xff]
    %v2559 = vsel %vm675, %v2493, 0
    %v2562 = vsel %vm675, %v2498, 0
    %v2565 = vsel %vm675, %v2503, 0
    %v2568 = vsel %vm675, %v2508, 0
    %v2571 = vsel %vm675, %v2513, 0
    %v2574 = vsel %vm675, %v2518, 0
    %v2577 = vsel %vm675, %v2523, 0
    %v2580 = vsel %vm675, %v2528, 0
    %v2583 = vsel %vm675, %v2533, 0
    %v2586 = vsel %vm675, %v2538, 0
    %v2589 = vsel %vm675, %v2543, 0
    %v2592 = vsel %vm675, %v2548, 0
    %v2595 = vsel %vm675, %v2553, 0
    %2597 = vmatprep.subr.mxu0 0.0
    %2598 = vmatpush1.msra.mxu0 %v2557
    %2599 = vmatprep.subr.mxu0 0.0
    %2600 = vmatpush1.msra.mxu0 0.0
    %2601 = vmatprep.subr.mxu0 0.0
    %2602 = vmatpush1.msra.mxu0 0.0
    %2603 = vmatprep.subr.mxu0 0.0
    %2604 = vmatpush1.msra.mxu0 0.0
    %2605 = vmatprep.subr.mxu0 0.0
    %2606 = vmatpush1.msra.mxu0 0.0
    %2607 = vmatprep.subr.mxu0 0.0
    %2608 = vmatpush1.msra.mxu0 0.0
    %2609 = vmatprep.subr.mxu0 0.0
    %2610 = vmatpush1.msra.mxu0 0.0
    %2611 = vmatprep.subr.mxu0 0.0
    %2612 = vmatpush1.msra.mxu0 0.0
    %2613 = vmatprep.subr.mxu0 0.0
    %2614 = vmatpush1.msra.mxu0 0.0
    %2615 = vmatprep.subr.mxu0 0.0
    %2616 = vmatpush1.msra.mxu0 0.0
    %2617 = vmatprep.subr.mxu0 0.0
    %2618 = vmatpush1.msra.mxu0 0.0
    %2619 = vmatprep.subr.mxu0 0.0
    %2620 = vmatpush1.msra.mxu0 0.0
    %2621 = vmatprep.subr.mxu0 0.0
    %2622 = vmatpush1.msra.mxu0 0.0
    %2623 = vmatprep.subr.mxu0 0.0
    %2624 = vmatpush1.msra.mxu0 0.0
    %2625 = vmatprep.subr.mxu0 0.0
    %2626 = vmatpush1.msra.mxu0 0.0
    %2627 = vmatprep.subr.mxu0 0.0
    %2628 = vmatpush1.msra.mxu0 0.0
    %2629 = vmatprep.subr.mxu0 0.0
    %2630 = vmatpush1.msra.mxu0 0.0
    %2631 = vmatprep.subr.mxu0 0.0
    %2632 = vmatpush1.msra.mxu0 0.0
    %2633 = vmatprep.subr.mxu0 0.0
    %2634 = vmatpush1.msra.mxu0 0.0
    %2635 = vmatprep.subr.mxu0 0.0
    %2636 = vmatpush1.msra.mxu0 0.0
    %2637 = vmatprep.subr.mxu0 0.0
    %2638 = vmatpush1.msra.mxu0 0.0
    %2639 = vmatprep.subr.mxu0 0.0
    %2640 = vmatpush1.msra.mxu0 0.0
    %2641 = vmatprep.subr.mxu0 0.0
    %2642 = vmatpush1.msra.mxu0 0.0
    %2643 = vmatprep.subr.mxu0 0.0
    %2644 = vmatpush1.msra.mxu0 0.0
    %2645 = vmatprep.subr.mxu0 0.0
    %2646 = vmatpush1.msra.mxu0 0.0
    %2647 = vmatprep.subr.mxu0 0.0
    %2648 = vmatpush1.msra.mxu0 0.0
    %2649 = vmatprep.subr.mxu0 0.0
    %2650 = vmatpush1.msra.mxu0 0.0
    %2651 = vmatprep.subr.mxu0 0.0
    %2652 = vmatpush1.msra.mxu0 0.0
    %2653 = vmatprep.subr.mxu0 0.0
    %2654 = vmatpush1.msra.mxu0 0.0
    %2655 = vmatprep.subr.mxu0 0.0
    %2656 = vmatpush1.msra.mxu0 0.0
    %2657 = vmatprep.subr.mxu0 0.0
    %2658 = vmatpush1.msra.mxu0 0.0
    %2659 = vmatprep.subr.mxu0 0.0
    %2660 = vmatpush1.msra.mxu0 0.0
    %2661 = vmatprep.mubr.f32.mxu0 0.0
    %2662 = vmatmul.mubr.f32.gmra.mrb[0].mxu0 %v2559
    %v2663 = vpop.f32.mrb[0].mxu0
    %v2664 = vadd.f32 0.0, %v2663
    %v2665 = vpop.f32.mrb[0].mxu0
    %2666 = vmatprep.mubr.f32.mxu0 0.0
    %2667 = vmatmul.mubr.f32.gmra.mrb[0].mxu0 %v2562
    %v2668 = vpop.f32.mrb[0].mxu0
    %v2669 = vadd.f32 0.0, %v2668
    %v2670 = vpop.f32.mrb[0].mxu0
    %2671 = vmatprep.mubr.f32.mxu0 0.0
    %2672 = vmatmul.mubr.f32.gmra.mrb[0].mxu0 %v2565
    %v2673 = vpop.f32.mrb[0].mxu0
    %v2674 = vadd.f32 0.0, %v2673
    %v2675 = vpop.f32.mrb[0].mxu0
    %2676 = vmatprep.mubr.f32.mxu0 0.0
    %2677 = vmatmul.mubr.f32.gmra.mrb[0].mxu0 %v2568
    %v2678 = vpop.f32.mrb[0].mxu0
    %v2679 = vadd.f32 0.0, %v2678
    %v2680 = vpop.f32.mrb[0].mxu0
    %2681 = vmatprep.mubr.f32.mxu0 0.0
    %2682 = vmatmul.mubr.f32.gmra.mrb[0].mxu0 %v2571
    %v2683 = vpop.f32.mrb[0].mxu0
    %v2684 = vadd.f32 0.0, %v2683
    %v2685 = vpop.f32.mrb[0].mxu0
    %2686 = vmatprep.mubr.f32.mxu0 0.0
    %2687 = vmatmul.mubr.f32.gmra.mrb[0].mxu0 %v2574
    %v2688 = vpop.f32.mrb[0].mxu0
    %v2689 = vadd.f32 0.0, %v2688
    %v2690 = vpop.f32.mrb[0].mxu0
    %2691 = vmatprep.mubr.f32.mxu0 0.0
    %2692 = vmatmul.mubr.f32.gmra.mrb[0].mxu0 %v2577
    %v2693 = vpop.f32.mrb[0].mxu0
    %v2694 = vadd.f32 0.0, %v2693
    %v2695 = vpop.f32.mrb[0].mxu0
    %2696 = vmatprep.mubr.f32.mxu0 0.0
    %2697 = vmatmul.mubr.f32.gmra.mrb[0].mxu0 %v2580
    %v2698 = vpop.f32.mrb[0].mxu0
    %v2699 = vadd.f32 0.0, %v2698
    %v2700 = vpop.f32.mrb[0].mxu0
    %2701 = vmatprep.mubr.f32.mxu0 0.0
    %2702 = vmatmul.mubr.f32.gmra.mrb[0].mxu0 %v2583
    %v2703 = vpop.f32.mrb[0].mxu0
    %v2704 = vadd.f32 0.0, %v2703
    %v2705 = vpop.f32.mrb[0].mxu0
    %2706 = vmatprep.mubr.f32.mxu0 0.0
    %2707 = vmatmul.mubr.f32.gmra.mrb[0].mxu0 %v2586
    %v2708 = vpop.f32.mrb[0].mxu0
    %v2709 = vadd.f32 0.0, %v2708
    %v2710 = vpop.f32.mrb[0].mxu0
    %2711 = vmatprep.mubr.f32.mxu0 0.0
    %2712 = vmatmul.mubr.f32.gmra.mrb[0].mxu0 %v2589
    %v2713 = vpop.f32.mrb[0].mxu0
    %v2714 = vadd.f32 0.0, %v2713
    %v2715 = vpop.f32.mrb[0].mxu0
    %2716 = vmatprep.mubr.f32.mxu0 0.0
    %2717 = vmatmul.mubr.f32.gmra.mrb[0].mxu0 %v2592
    %v2718 = vpop.f32.mrb[0].mxu0
    %v2719 = vadd.f32 0.0, %v2718
    %v2720 = vpop.f32.mrb[0].mxu0
    %2721 = vmatprep.mubr.f32.mxu0 0.0
    %2722 = vmatmul.mubr.f32.gmra.mrb[0].mxu0 %v2595
    %v2723 = vpop.f32.mrb[0].mxu0
    %v2724 = vadd.f32 0.0, %v2723
    %v2725 = vpop.f32.mrb[0].mxu0
    %2726 = vdwg.mxu0
    %v2727 = vadd.f32 %v2191, %v2664
    %v2728 = vadd.f32 %v2192, %v2669
    %v2729 = vadd.f32 %v2193, %v2674
    %v2730 = vadd.f32 %v2194, %v2679
    %v2731 = vadd.f32 %v2195, %v2684
    %v2732 = vadd.f32 %v2196, %v2689
    %v2733 = vadd.f32 %v2197, %v2694
    %v2734 = vadd.f32 %v2198, %v2699
    %v2735 = vadd.f32 %v2199, %v2704
    %v2736 = vadd.f32 %v2200, %v2709
    %v2737 = vadd.f32 %v2201, %v2714
    %v2738 = vadd.f32 %v2202, %v2719
    %v2739 = vadd.f32 %v2203, %v2724
    %s2740 = scalar_lea.vmem %s3, 1664
    %v2741 = vld [vmem:[%s2740] sm:$0xff]
    %v2742 = vld [vmem:[%s2740 + $0x8] sm:$0xff]
    %v2743 = vld [vmem:[%s2740 + $0x10] sm:$0xff]
    %v2744 = vld [vmem:[%s2740 + $0x18] sm:$0xff]
    %v2745 = vld [vmem:[%s2740 + $0x20] sm:$0xff]
    %v2746 = vld [vmem:[%s2740 + $0x28] sm:$0xff]
    %v2747 = vld [vmem:[%s2740 + $0x30] sm:$0xff]
    %v2748 = vld [vmem:[%s2740 + $0x38] sm:$0xff]
    %v2749 = vld [vmem:[%s2740 + $0x40] sm:$0xff]
    %v2750 = vld [vmem:[%s2740 + $0x48] sm:$0xff]
    %v2751 = vld [vmem:[%s2740 + $0x50] sm:$0xff]
    %v2752 = vld [vmem:[%s2740 + $0x58] sm:$0xff]
    %v2753 = vld [vmem:[%s2740 + $0x60] sm:$0xff]
    %v2754 = vld [vmem:[%s2740 + $0x68] sm:$0xff]
    %v2755 = vld [vmem:[%s2740 + $0x70] sm:$0xff]
    %v2756 = vld [vmem:[%s2740 + $0x78] sm:$0xff]
    %v2757 = vld [vmem:[%s2740 + $0x80] sm:$0xff]
    %v2758 = vld [vmem:[%s2740 + $0x88] sm:$0xff]
    %v2759 = vld [vmem:[%s2740 + $0x90] sm:$0xff]
    %v2760 = vld [vmem:[%s2740 + $0x98] sm:$0xff]
    %v2761 = vld [vmem:[%s2740 + $0xa0] sm:$0xff]
    %v2762 = vld [vmem:[%s2740 + $0xa8] sm:$0xff]
    %v2763 = vld [vmem:[%s2740 + $0xb0] sm:$0xff]
    %v2764 = vld [vmem:[%s2740 + $0xb8] sm:$0xff]
    %v2765 = vld [vmem:[%s2740 + $0xc0] sm:$0xff]
    %v2766 = vld [vmem:[%s2740 + $0xc8] sm:$0xff]
    %v2767 = vld [vmem:[%s2740 + $0xd0] sm:$0xff]
    %v2768 = vld [vmem:[%s2740 + $0xd8] sm:$0xff]
    %v2769 = vld [vmem:[%s2740 + $0xe0] sm:$0xff]
    %v2770 = vld [vmem:[%s2740 + $0xe8] sm:$0xff]
    %v2771 = vld [vmem:[%s2740 + $0xf0] sm:$0xff]
    %v2772 = vld [vmem:[%s2740 + $0xf8] sm:$0xff]
    %v2773 = vld [vmem:[%s2740 + $0x100] sm:$0xff]
    %v2774 = vld [vmem:[%s2740 + $0x108] sm:$0xff]
    %v2775 = vld [vmem:[%s2740 + $0x110] sm:$0xff]
    %v2776 = vld [vmem:[%s2740 + $0x118] sm:$0xff]
    %v2777 = vld [vmem:[%s2740 + $0x120] sm:$0xff]
    %v2778 = vld [vmem:[%s2740 + $0x128] sm:$0xff]
    %v2779 = vld [vmem:[%s2740 + $0x130] sm:$0xff]
    %v2780 = vld [vmem:[%s2740 + $0x138] sm:$0xff]
    %v2781 = vld [vmem:[%s2740 + $0x140] sm:$0xff]
    %v2782 = vld [vmem:[%s2740 + $0x148] sm:$0xff]
    %v2783 = vld [vmem:[%s2740 + $0x150] sm:$0xff]
    %v2784 = vld [vmem:[%s2740 + $0x158] sm:$0xff]
    %v2785 = vld [vmem:[%s2740 + $0x160] sm:$0xff]
    %v2786 = vld [vmem:[%s2740 + $0x168] sm:$0xff]
    %v2787 = vld [vmem:[%s2740 + $0x170] sm:$0xff]
    %v2788 = vld [vmem:[%s2740 + $0x178] sm:$0xff]
    %v2789 = vld [vmem:[%s2740 + $0x180] sm:$0x3]
    %v2790 = vld [vmem:[%s2740 + $0x188] sm:$0x3]
    %v2791 = vld [vmem:[%s2740 + $0x190] sm:$0x3]
    %v2792 = vld [vmem:[%s2740 + $0x198] sm:$0x3]
    %v2794 = vsel %vm675, %v2744, 0
    %v2797 = vsel %vm675, %v2748, 0
    %v2800 = vsel %vm675, %v2752, 0
    %v2803 = vsel %vm675, %v2756, 0
    %v2806 = vsel %vm675, %v2760, 0
    %v2809 = vsel %vm675, %v2764, 0
    %v2812 = vsel %vm675, %v2768, 0
    %v2815 = vsel %vm675, %v2772, 0
    %v2818 = vsel %vm675, %v2776, 0
    %v2821 = vsel %vm675, %v2780, 0
    %v2824 = vsel %vm675, %v2784, 0
    %v2827 = vsel %vm675, %v2788, 0
    %v2830 = vsel %vm675, %v2792, 0
    %2832 = vmatprep.subr.mxu0 0.0
    %2833 = vmatpush1.msra.mxu0 %v574
    %2834 = vmatprep.subr.mxu0 0.0
    %2835 = vmatpush1.msra.mxu0 %v575
    %2836 = vmatprep.subr.mxu0 0.0
    %2837 = vmatpush1.msra.mxu0 %v576
    %2838 = vmatprep.subr.mxu0 0.0
    %2839 = vmatpush1.msra.mxu0 %v577
    %2840 = vmatprep.subr.mxu0 0.0
    %2841 = vmatpush1.msra.mxu0 %v578
    %2842 = vmatprep.subr.mxu0 0.0
    %2843 = vmatpush1.msra.mxu0 %v579
    %2844 = vmatprep.subr.mxu0 0.0
    %2845 = vmatpush1.msra.mxu0 %v580
    %2846 = vmatprep.subr.mxu0 0.0
    %2847 = vmatpush1.msra.mxu0 %v581
    %2848 = vmatprep.subr.mxu0 0.0
    %2849 = vmatpush1.msra.mxu0 %v582
    %2850 = vmatprep.subr.mxu0 0.0
    %2851 = vmatpush1.msra.mxu0 %v583
    %2852 = vmatprep.subr.mxu0 0.0
    %2853 = vmatpush1.msra.mxu0 %v584
    %2854 = vmatprep.subr.mxu0 0.0
    %2855 = vmatpush1.msra.mxu0 %v585
    %2856 = vmatprep.subr.mxu0 0.0
    %2857 = vmatpush1.msra.mxu0 %v586
    %2858 = vmatprep.subr.mxu0 0.0
    %2859 = vmatpush1.msra.mxu0 %v587
    %2860 = vmatprep.subr.mxu0 0.0
    %2861 = vmatpush1.msra.mxu0 %v588
    %2862 = vmatprep.subr.mxu0 0.0
    %2863 = vmatpush1.msra.mxu0 %v589
    %2864 = vmatprep.subr.mxu0 0.0
    %2865 = vmatpush1.msra.mxu0 %v590
    %2866 = vmatprep.subr.mxu0 0.0
    %2867 = vmatpush1.msra.mxu0 %v591
    %2868 = vmatprep.subr.mxu0 0.0
    %2869 = vmatpush1.msra.mxu0 %v592
    %2870 = vmatprep.subr.mxu0 0.0
    %2871 = vmatpush1.msra.mxu0 %v593
    %2872 = vmatprep.subr.mxu0 0.0
    %2873 = vmatpush1.msra.mxu0 %v594
    %2874 = vmatprep.subr.mxu0 0.0
    %2875 = vmatpush1.msra.mxu0 %v595
    %2876 = vmatprep.subr.mxu0 0.0
    %2877 = vmatpush1.msra.mxu0 %v596
    %2878 = vmatprep.subr.mxu0 0.0
    %2879 = vmatpush1.msra.mxu0 %v597
    %2880 = vmatprep.subr.mxu0 0.0
    %2881 = vmatpush1.msra.mxu0 %v598
    %2882 = vmatprep.subr.mxu0 0.0
    %2883 = vmatpush1.msra.mxu0 %v599
    %2884 = vmatprep.subr.mxu0 0.0
    %2885 = vmatpush1.msra.mxu0 %v600
    %2886 = vmatprep.subr.mxu0 0.0
    %2887 = vmatpush1.msra.mxu0 %v601
    %2888 = vmatprep.subr.mxu0 0.0
    %2889 = vmatpush1.msra.mxu0 %v602
    %2890 = vmatprep.subr.mxu0 0.0
    %2891 = vmatpush1.msra.mxu0 %v603
    %2892 = vmatprep.subr.mxu0 0.0
    %2893 = vmatpush1.msra.mxu0 %v604
    %2894 = vmatprep.subr.mxu0 0.0
    %2895 = vmatpush1.msra.mxu0 %v605
    %2896 = vmatprep.mubr.f32.mxu0 %v2742
    %2897 = vmatmul.mubr.f32.gmra.mrb[0].mxu0 %v2741
    %v2898 = vpop.f32.mrb[0].mxu0
    %v2899 = vadd.f32 0.0, %v2898
    %v2900 = vpop.f32.mrb[0].mxu0
    %2901 = vmatprep.mubr.f32.mxu0 %v2746
    %2902 = vmatmul.mubr.f32.gmra.mrb[0].mxu0 %v2745
    %v2903 = vpop.f32.mrb[0].mxu0
    %v2904 = vadd.f32 0.0, %v2903
    %v2905 = vpop.f32.mrb[0].mxu0
    %2906 = vmatprep.mubr.f32.mxu0 %v2750
    %2907 = vmatmul.mubr.f32.gmra.mrb[0].mxu0 %v2749
    %v2908 = vpop.f32.mrb[0].mxu0
    %v2909 = vadd.f32 0.0, %v2908
    %v2910 = vpop.f32.mrb[0].mxu0
    %2911 = vmatprep.mubr.f32.mxu0 %v2754
    %2912 = vmatmul.mubr.f32.gmra.mrb[0].mxu0 %v2753
    %v2913 = vpop.f32.mrb[0].mxu0
    %v2914 = vadd.f32 0.0, %v2913
    %v2915 = vpop.f32.mrb[0].mxu0
    %2916 = vmatprep.mubr.f32.mxu0 %v2758
    %2917 = vmatmul.mubr.f32.gmra.mrb[0].mxu0 %v2757
    %v2918 = vpop.f32.mrb[0].mxu0
    %v2919 = vadd.f32 0.0, %v2918
    %v2920 = vpop.f32.mrb[0].mxu0
    %2921 = vmatprep.mubr.f32.mxu0 %v2762
    %2922 = vmatmul.mubr.f32.gmra.mrb[0].mxu0 %v2761
    %v2923 = vpop.f32.mrb[0].mxu0
    %v2924 = vadd.f32 0.0, %v2923
    %v2925 = vpop.f32.mrb[0].mxu0
    %2926 = vmatprep.mubr.f32.mxu0 %v2766
    %2927 = vmatmul.mubr.f32.gmra.mrb[0].mxu0 %v2765
    %v2928 = vpop.f32.mrb[0].mxu0
    %v2929 = vadd.f32 0.0, %v2928
    %v2930 = vpop.f32.mrb[0].mxu0
    %2931 = vmatprep.mubr.f32.mxu0 %v2770
    %2932 = vmatmul.mubr.f32.gmra.mrb[0].mxu0 %v2769
    %v2933 = vpop.f32.mrb[0].mxu0
    %v2934 = vadd.f32 0.0, %v2933
    %v2935 = vpop.f32.mrb[0].mxu0
    %2936 = vmatprep.mubr.f32.mxu0 %v2774
    %2937 = vmatmul.mubr.f32.gmra.mrb[0].mxu0 %v2773
    %v2938 = vpop.f32.mrb[0].mxu0
    %v2939 = vadd.f32 0.0, %v2938
    %v2940 = vpop.f32.mrb[0].mxu0
    %2941 = vmatprep.mubr.f32.mxu0 %v2778
    %2942 = vmatmul.mubr.f32.gmra.mrb[0].mxu0 %v2777
    %v2943 = vpop.f32.mrb[0].mxu0
    %v2944 = vadd.f32 0.0, %v2943
    %v2945 = vpop.f32.mrb[0].mxu0
    %2946 = vmatprep.mubr.f32.mxu0 %v2782
    %2947 = vmatmul.mubr.f32.gmra.mrb[0].mxu0 %v2781
    %v2948 = vpop.f32.mrb[0].mxu0
    %v2949 = vadd.f32 0.0, %v2948
    %v2950 = vpop.f32.mrb[0].mxu0
    %2951 = vmatprep.mubr.f32.mxu0 %v2786
    %2952 = vmatmul.mubr.f32.gmra.mrb[0].mxu0 %v2785
    %v2953 = vpop.f32.mrb[0].mxu0
    %v2954 = vadd.f32 0.0, %v2953
    %v2955 = vpop.f32.mrb[0].mxu0
    %2956 = vmatprep.mubr.f32.mxu0 %v2790
    %2957 = vmatmul.mubr.f32.gmra.mrb[0].mxu0 %v2789
    %v2958 = vpop.f32.mrb[0].mxu0
    %v2959 = vadd.f32 0.0, %v2958
    %v2960 = vpop.f32.mrb[0].mxu0
    %2961 = vdwg.mxu0
    %2962 = vmatprep.subr.mxu0 0.0
    %2963 = vmatpush1.msra.mxu0 %v606
    %2964 = vmatprep.subr.mxu0 0.0
    %2965 = vmatpush1.msra.mxu0 %v607
    %2966 = vmatprep.subr.mxu0 0.0
    %2967 = vmatpush1.msra.mxu0 %v608
    %2968 = vmatprep.subr.mxu0 0.0
    %2969 = vmatpush1.msra.mxu0 %v609
    %2970 = vmatprep.subr.mxu0 0.0
    %2971 = vmatpush1.msra.mxu0 %v610
    %2972 = vmatprep.subr.mxu0 0.0
    %2973 = vmatpush1.msra.mxu0 %v611
    %2974 = vmatprep.subr.mxu0 0.0
    %2975 = vmatpush1.msra.mxu0 %v612
    %2976 = vmatprep.subr.mxu0 0.0
    %2977 = vmatpush1.msra.mxu0 %v613
    %2978 = vmatprep.subr.mxu0 0.0
    %2979 = vmatpush1.msra.mxu0 %v614
    %2980 = vmatprep.subr.mxu0 0.0
    %2981 = vmatpush1.msra.mxu0 %v615
    %2982 = vmatprep.subr.mxu0 0.0
    %2983 = vmatpush1.msra.mxu0 %v616
    %2984 = vmatprep.subr.mxu0 0.0
    %2985 = vmatpush1.msra.mxu0 %v617
    %2986 = vmatprep.subr.mxu0 0.0
    %2987 = vmatpush1.msra.mxu0 %v618
    %2988 = vmatprep.subr.mxu0 0.0
    %2989 = vmatpush1.msra.mxu0 %v619
    %2990 = vmatprep.subr.mxu0 0.0
    %2991 = vmatpush1.msra.mxu0 %v620
    %2992 = vmatprep.subr.mxu0 0.0
    %2993 = vmatpush1.msra.mxu0 %v621
    %2994 = vmatprep.subr.mxu0 0.0
    %2995 = vmatpush1.msra.mxu0 %v622
    %2996 = vmatprep.subr.mxu0 0.0
    %2997 = vmatpush1.msra.mxu0 0.0
    %2998 = vmatprep.subr.mxu0 0.0
    %2999 = vmatpush1.msra.mxu0 0.0
    %3000 = vmatprep.subr.mxu0 0.0
    %3001 = vmatpush1.msra.mxu0 0.0
    %3002 = vmatprep.subr.mxu0 0.0
    %3003 = vmatpush1.msra.mxu0 0.0
    %3004 = vmatprep.subr.mxu0 0.0
    %3005 = vmatpush1.msra.mxu0 0.0
    %3006 = vmatprep.subr.mxu0 0.0
    %3007 = vmatpush1.msra.mxu0 0.0
    %3008 = vmatprep.subr.mxu0 0.0
    %3009 = vmatpush1.msra.mxu0 0.0
    %3010 = vmatprep.subr.mxu0 0.0
    %3011 = vmatpush1.msra.mxu0 0.0
    %3012 = vmatprep.subr.mxu0 0.0
    %3013 = vmatpush1.msra.mxu0 0.0
    %3014 = vmatprep.subr.mxu0 0.0
    %3015 = vmatpush1.msra.mxu0 0.0
    %3016 = vmatprep.subr.mxu0 0.0
    %3017 = vmatpush1.msra.mxu0 0.0
    %3018 = vmatprep.subr.mxu0 0.0
    %3019 = vmatpush1.msra.mxu0 0.0
    %3020 = vmatprep.subr.mxu0 0.0
    %3021 = vmatpush1.msra.mxu0 0.0
    %3022 = vmatprep.subr.mxu0 0.0
    %3023 = vmatpush1.msra.mxu0 0.0
    %3024 = vmatprep.subr.mxu0 0.0
    %3025 = vmatpush1.msra.mxu0 0.0
    %3026 = vmatprep.mubr.f32.mxu0 %v2794
    %3027 = vmatmul.mubr.f32.gmra.mrb[0].mxu0 %v2743
    %v3028 = vpop.f32.mrb[0].mxu0
    %v3029 = vadd.f32 %v2899, %v3028
    %v3030 = vpop.f32.mrb[0].mxu0
    %3031 = vmatprep.mubr.f32.mxu0 %v2797
    %3032 = vmatmul.mubr.f32.gmra.mrb[0].mxu0 %v2747
    %v3033 = vpop.f32.mrb[0].mxu0
    %v3034 = vadd.f32 %v2904, %v3033
    %v3035 = vpop.f32.mrb[0].mxu0
    %3036 = vmatprep.mubr.f32.mxu0 %v2800
    %3037 = vmatmul.mubr.f32.gmra.mrb[0].mxu0 %v2751
    %v3038 = vpop.f32.mrb[0].mxu0
    %v3039 = vadd.f32 %v2909, %v3038
    %v3040 = vpop.f32.mrb[0].mxu0
    %3041 = vmatprep.mubr.f32.mxu0 %v2803
    %3042 = vmatmul.mubr.f32.gmra.mrb[0].mxu0 %v2755
    %v3043 = vpop.f32.mrb[0].mxu0
    %v3044 = vadd.f32 %v2914, %v3043
    %v3045 = vpop.f32.mrb[0].mxu0
    %3046 = vmatprep.mubr.f32.mxu0 %v2806
    %3047 = vmatmul.mubr.f32.gmra.mrb[0].mxu0 %v2759
    %v3048 = vpop.f32.mrb[0].mxu0
    %v3049 = vadd.f32 %v2919, %v3048
    %v3050 = vpop.f32.mrb[0].mxu0
    %3051 = vmatprep.mubr.f32.mxu0 %v2809
    %3052 = vmatmul.mubr.f32.gmra.mrb[0].mxu0 %v2763
    %v3053 = vpop.f32.mrb[0].mxu0
    %v3054 = vadd.f32 %v2924, %v3053
    %v3055 = vpop.f32.mrb[0].mxu0
    %3056 = vmatprep.mubr.f32.mxu0 %v2812
    %3057 = vmatmul.mubr.f32.gmra.mrb[0].mxu0 %v2767
    %v3058 = vpop.f32.mrb[0].mxu0
    %v3059 = vadd.f32 %v2929, %v3058
    %v3060 = vpop.f32.mrb[0].mxu0
    %3061 = vmatprep.mubr.f32.mxu0 %v2815
    %3062 = vmatmul.mubr.f32.gmra.mrb[0].mxu0 %v2771
    %v3063 = vpop.f32.mrb[0].mxu0
    %v3064 = vadd.f32 %v2934, %v3063
    %v3065 = vpop.f32.mrb[0].mxu0
    %3066 = vmatprep.mubr.f32.mxu0 %v2818
    %3067 = vmatmul.mubr.f32.gmra.mrb[0].mxu0 %v2775
    %v3068 = vpop.f32.mrb[0].mxu0
    %v3069 = vadd.f32 %v2939, %v3068
    %v3070 = vpop.f32.mrb[0].mxu0
    %3071 = vmatprep.mubr.f32.mxu0 %v2821
    %3072 = vmatmul.mubr.f32.gmra.mrb[0].mxu0 %v2779
    %v3073 = vpop.f32.mrb[0].mxu0
    %v3074 = vadd.f32 %v2944, %v3073
    %v3075 = vpop.f32.mrb[0].mxu0
    %3076 = vmatprep.mubr.f32.mxu0 %v2824
    %3077 = vmatmul.mubr.f32.gmra.mrb[0].mxu0 %v2783
    %v3078 = vpop.f32.mrb[0].mxu0
    %v3079 = vadd.f32 %v2949, %v3078
    %v3080 = vpop.f32.mrb[0].mxu0
    %3081 = vmatprep.mubr.f32.mxu0 %v2827
    %3082 = vmatmul.mubr.f32.gmra.mrb[0].mxu0 %v2787
    %v3083 = vpop.f32.mrb[0].mxu0
    %v3084 = vadd.f32 %v2954, %v3083
    %v3085 = vpop.f32.mrb[0].mxu0
    %3086 = vmatprep.mubr.f32.mxu0 %v2830
    %3087 = vmatmul.mubr.f32.gmra.mrb[0].mxu0 %v2791
    %v3088 = vpop.f32.mrb[0].mxu0
    %v3089 = vadd.f32 %v2959, %v3088
    %v3090 = vpop.f32.mrb[0].mxu0
    %3091 = vdwg.mxu0
    %s3092 = scalar_lea.vmem %s4, 32
    %v3093 = vld [vmem:[%s3092] sm:$0xff]
    %v3095 = vsel %vm675, %v3029, 0
    %v3098 = vsel %vm675, %v3034, 0
    %v3101 = vsel %vm675, %v3039, 0
    %v3104 = vsel %vm675, %v3044, 0
    %v3107 = vsel %vm675, %v3049, 0
    %v3110 = vsel %vm675, %v3054, 0
    %v3113 = vsel %vm675, %v3059, 0
    %v3116 = vsel %vm675, %v3064, 0
    %v3119 = vsel %vm675, %v3069, 0
    %v3122 = vsel %vm675, %v3074, 0
    %v3125 = vsel %vm675, %v3079, 0
    %v3128 = vsel %vm675, %v3084, 0
    %v3131 = vsel %vm675, %v3089, 0
    %3133 = vmatprep.subr.mxu0 0.0
    %3134 = vmatpush1.msra.mxu0 %v3093
    %3135 = vmatprep.subr.mxu0 0.0
    %3136 = vmatpush1.msra.mxu0 0.0
    %3137 = vmatprep.subr.mxu0 0.0
    %3138 = vmatpush1.msra.mxu0 0.0
    %3139 = vmatprep.subr.mxu0 0.0
    %3140 = vmatpush1.msra.mxu0 0.0
    %3141 = vmatprep.subr.mxu0 0.0
    %3142 = vmatpush1.msra.mxu0 0.0
    %3143 = vmatprep.subr.mxu0 0.0
    %3144 = vmatpush1.msra.mxu0 0.0
    %3145 = vmatprep.subr.mxu0 0.0
    %3146 = vmatpush1.msra.mxu0 0.0
    %3147 = vmatprep.subr.mxu0 0.0
    %3148 = vmatpush1.msra.mxu0 0.0
    %3149 = vmatprep.subr.mxu0 0.0
    %3150 = vmatpush1.msra.mxu0 0.0
    %3151 = vmatprep.subr.mxu0 0.0
    %3152 = vmatpush1.msra.mxu0 0.0
    %3153 = vmatprep.subr.mxu0 0.0
    %3154 = vmatpush1.msra.mxu0 0.0
    %3155 = vmatprep.subr.mxu0 0.0
    %3156 = vmatpush1.msra.mxu0 0.0
    %3157 = vmatprep.subr.mxu0 0.0
    %3158 = vmatpush1.msra.mxu0 0.0
    %3159 = vmatprep.subr.mxu0 0.0
    %3160 = vmatpush1.msra.mxu0 0.0
    %3161 = vmatprep.subr.mxu0 0.0
    %3162 = vmatpush1.msra.mxu0 0.0
    %3163 = vmatprep.subr.mxu0 0.0
    %3164 = vmatpush1.msra.mxu0 0.0
    %3165 = vmatprep.subr.mxu0 0.0
    %3166 = vmatpush1.msra.mxu0 0.0
    %3167 = vmatprep.subr.mxu0 0.0
    %3168 = vmatpush1.msra.mxu0 0.0
    %3169 = vmatprep.subr.mxu0 0.0
    %3170 = vmatpush1.msra.mxu0 0.0
    %3171 = vmatprep.subr.mxu0 0.0
    %3172 = vmatpush1.msra.mxu0 0.0
    %3173 = vmatprep.subr.mxu0 0.0
    %3174 = vmatpush1.msra.mxu0 0.0
    %3175 = vmatprep.subr.mxu0 0.0
    %3176 = vmatpush1.msra.mxu0 0.0
    %3177 = vmatprep.subr.mxu0 0.0
    %3178 = vmatpush1.msra.mxu0 0.0
    %3179 = vmatprep.subr.mxu0 0.0
    %3180 = vmatpush1.msra.mxu0 0.0
    %3181 = vmatprep.subr.mxu0 0.0
    %3182 = vmatpush1.msra.mxu0 0.0
    %3183 = vmatprep.subr.mxu0 0.0
    %3184 = vmatpush1.msra.mxu0 0.0
    %3185 = vmatprep.subr.mxu0 0.0
    %3186 = vmatpush1.msra.mxu0 0.0
    %3187 = vmatprep.subr.mxu0 0.0
    %3188 = vmatpush1.msra.mxu0 0.0
    %3189 = vmatprep.subr.mxu0 0.0
    %3190 = vmatpush1.msra.mxu0 0.0
    %3191 = vmatprep.subr.mxu0 0.0
    %3192 = vmatpush1.msra.mxu0 0.0
    %3193 = vmatprep.subr.mxu0 0.0
    %3194 = vmatpush1.msra.mxu0 0.0
    %3195 = vmatprep.subr.mxu0 0.0
    %3196 = vmatpush1.msra.mxu0 0.0
    %3197 = vmatprep.mubr.f32.mxu0 0.0
    %3198 = vmatmul.mubr.f32.gmra.mrb[0].mxu0 %v3095
    %v3199 = vpop.f32.mrb[0].mxu0
    %v3200 = vadd.f32 0.0, %v3199
    %v3201 = vpop.f32.mrb[0].mxu0
    %3202 = vmatprep.mubr.f32.mxu0 0.0
    %3203 = vmatmul.mubr.f32.gmra.mrb[0].mxu0 %v3098
    %v3204 = vpop.f32.mrb[0].mxu0
    %v3205 = vadd.f32 0.0, %v3204
    %v3206 = vpop.f32.mrb[0].mxu0
    %3207 = vmatprep.mubr.f32.mxu0 0.0
    %3208 = vmatmul.mubr.f32.gmra.mrb[0].mxu0 %v3101
    %v3209 = vpop.f32.mrb[0].mxu0
    %v3210 = vadd.f32 0.0, %v3209
    %v3211 = vpop.f32.mrb[0].mxu0
    %3212 = vmatprep.mubr.f32.mxu0 0.0
    %3213 = vmatmul.mubr.f32.gmra.mrb[0].mxu0 %v3104
    %v3214 = vpop.f32.mrb[0].mxu0
    %v3215 = vadd.f32 0.0, %v3214
    %v3216 = vpop.f32.mrb[0].mxu0
    %3217 = vmatprep.mubr.f32.mxu0 0.0
    %3218 = vmatmul.mubr.f32.gmra.mrb[0].mxu0 %v3107
    %v3219 = vpop.f32.mrb[0].mxu0
    %v3220 = vadd.f32 0.0, %v3219
    %v3221 = vpop.f32.mrb[0].mxu0
    %3222 = vmatprep.mubr.f32.mxu0 0.0
    %3223 = vmatmul.mubr.f32.gmra.mrb[0].mxu0 %v3110
    %v3224 = vpop.f32.mrb[0].mxu0
    %v3225 = vadd.f32 0.0, %v3224
    %v3226 = vpop.f32.mrb[0].mxu0
    %3227 = vmatprep.mubr.f32.mxu0 0.0
    %3228 = vmatmul.mubr.f32.gmra.mrb[0].mxu0 %v3113
    %v3229 = vpop.f32.mrb[0].mxu0
    %v3230 = vadd.f32 0.0, %v3229
    %v3231 = vpop.f32.mrb[0].mxu0
    %3232 = vmatprep.mubr.f32.mxu0 0.0
    %3233 = vmatmul.mubr.f32.gmra.mrb[0].mxu0 %v3116
    %v3234 = vpop.f32.mrb[0].mxu0
    %v3235 = vadd.f32 0.0, %v3234
    %v3236 = vpop.f32.mrb[0].mxu0
    %3237 = vmatprep.mubr.f32.mxu0 0.0
    %3238 = vmatmul.mubr.f32.gmra.mrb[0].mxu0 %v3119
    %v3239 = vpop.f32.mrb[0].mxu0
    %v3240 = vadd.f32 0.0, %v3239
    %v3241 = vpop.f32.mrb[0].mxu0
    %3242 = vmatprep.mubr.f32.mxu0 0.0
    %3243 = vmatmul.mubr.f32.gmra.mrb[0].mxu0 %v3122
    %v3244 = vpop.f32.mrb[0].mxu0
    %v3245 = vadd.f32 0.0, %v3244
    %v3246 = vpop.f32.mrb[0].mxu0
    %3247 = vmatprep.mubr.f32.mxu0 0.0
    %3248 = vmatmul.mubr.f32.gmra.mrb[0].mxu0 %v3125
    %v3249 = vpop.f32.mrb[0].mxu0
    %v3250 = vadd.f32 0.0, %v3249
    %v3251 = vpop.f32.mrb[0].mxu0
    %3252 = vmatprep.mubr.f32.mxu0 0.0
    %3253 = vmatmul.mubr.f32.gmra.mrb[0].mxu0 %v3128
    %v3254 = vpop.f32.mrb[0].mxu0
    %v3255 = vadd.f32 0.0, %v3254
    %v3256 = vpop.f32.mrb[0].mxu0
    %3257 = vmatprep.mubr.f32.mxu0 0.0
    %3258 = vmatmul.mubr.f32.gmra.mrb[0].mxu0 %v3131
    %v3259 = vpop.f32.mrb[0].mxu0
    %v3260 = vadd.f32 0.0, %v3259
    %v3261 = vpop.f32.mrb[0].mxu0
    %3262 = vdwg.mxu0
    %v3263 = vadd.f32 %v2727, %v3200
    %v3264 = vadd.f32 %v2728, %v3205
    %v3265 = vadd.f32 %v2729, %v3210
    %v3266 = vadd.f32 %v2730, %v3215
    %v3267 = vadd.f32 %v2731, %v3220
    %v3268 = vadd.f32 %v2732, %v3225
    %v3269 = vadd.f32 %v2733, %v3230
    %v3270 = vadd.f32 %v2734, %v3235
    %v3271 = vadd.f32 %v2735, %v3240
    %v3272 = vadd.f32 %v2736, %v3245
    %v3273 = vadd.f32 %v2737, %v3250
    %v3274 = vadd.f32 %v2738, %v3255
    %v3275 = vadd.f32 %v2739, %v3260
    %s3276 = scalar_lea.vmem %s3, 2080
    %v3277 = vld [vmem:[%s3276] sm:$0xff]
    %v3278 = vld [vmem:[%s3276 + $0x8] sm:$0xff]
    %v3279 = vld [vmem:[%s3276 + $0x10] sm:$0xff]
    %v3280 = vld [vmem:[%s3276 + $0x18] sm:$0xff]
    %v3281 = vld [vmem:[%s3276 + $0x20] sm:$0xff]
    %v3282 = vld [vmem:[%s3276 + $0x28] sm:$0xff]
    %v3283 = vld [vmem:[%s3276 + $0x30] sm:$0xff]
    %v3284 = vld [vmem:[%s3276 + $0x38] sm:$0xff]
    %v3285 = vld [vmem:[%s3276 + $0x40] sm:$0xff]
    %v3286 = vld [vmem:[%s3276 + $0x48] sm:$0xff]
    %v3287 = vld [vmem:[%s3276 + $0x50] sm:$0xff]
    %v3288 = vld [vmem:[%s3276 + $0x58] sm:$0xff]
    %v3289 = vld [vmem:[%s3276 + $0x60] sm:$0xff]
    %v3290 = vld [vmem:[%s3276 + $0x68] sm:$0xff]
    %v3291 = vld [vmem:[%s3276 + $0x70] sm:$0xff]
    %v3292 = vld [vmem:[%s3276 + $0x78] sm:$0xff]
    %v3293 = vld [vmem:[%s3276 + $0x80] sm:$0xff]
    %v3294 = vld [vmem:[%s3276 + $0x88] sm:$0xff]
    %v3295 = vld [vmem:[%s3276 + $0x90] sm:$0xff]
    %v3296 = vld [vmem:[%s3276 + $0x98] sm:$0xff]
    %v3297 = vld [vmem:[%s3276 + $0xa0] sm:$0xff]
    %v3298 = vld [vmem:[%s3276 + $0xa8] sm:$0xff]
    %v3299 = vld [vmem:[%s3276 + $0xb0] sm:$0xff]
    %v3300 = vld [vmem:[%s3276 + $0xb8] sm:$0xff]
    %v3301 = vld [vmem:[%s3276 + $0xc0] sm:$0xff]
    %v3302 = vld [vmem:[%s3276 + $0xc8] sm:$0xff]
    %v3303 = vld [vmem:[%s3276 + $0xd0] sm:$0xff]
    %v3304 = vld [vmem:[%s3276 + $0xd8] sm:$0xff]
    %v3305 = vld [vmem:[%s3276 + $0xe0] sm:$0xff]
    %v3306 = vld [vmem:[%s3276 + $0xe8] sm:$0xff]
    %v3307 = vld [vmem:[%s3276 + $0xf0] sm:$0xff]
    %v3308 = vld [vmem:[%s3276 + $0xf8] sm:$0xff]
    %v3309 = vld [vmem:[%s3276 + $0x100] sm:$0xff]
    %v3310 = vld [vmem:[%s3276 + $0x108] sm:$0xff]
    %v3311 = vld [vmem:[%s3276 + $0x110] sm:$0xff]
    %v3312 = vld [vmem:[%s3276 + $0x118] sm:$0xff]
    %v3313 = vld [vmem:[%s3276 + $0x120] sm:$0xff]
    %v3314 = vld [vmem:[%s3276 + $0x128] sm:$0xff]
    %v3315 = vld [vmem:[%s3276 + $0x130] sm:$0xff]
    %v3316 = vld [vmem:[%s3276 + $0x138] sm:$0xff]
    %v3317 = vld [vmem:[%s3276 + $0x140] sm:$0xff]
    %v3318 = vld [vmem:[%s3276 + $0x148] sm:$0xff]
    %v3319 = vld [vmem:[%s3276 + $0x150] sm:$0xff]
    %v3320 = vld [vmem:[%s3276 + $0x158] sm:$0xff]
    %v3321 = vld [vmem:[%s3276 + $0x160] sm:$0xff]
    %v3322 = vld [vmem:[%s3276 + $0x168] sm:$0xff]
    %v3323 = vld [vmem:[%s3276 + $0x170] sm:$0xff]
    %v3324 = vld [vmem:[%s3276 + $0x178] sm:$0xff]
    %v3325 = vld [vmem:[%s3276 + $0x180] sm:$0x3]
    %v3326 = vld [vmem:[%s3276 + $0x188] sm:$0x3]
    %v3327 = vld [vmem:[%s3276 + $0x190] sm:$0x3]
    %v3328 = vld [vmem:[%s3276 + $0x198] sm:$0x3]
    %v3330 = vsel %vm675, %v3280, 0
    %v3333 = vsel %vm675, %v3284, 0
    %v3336 = vsel %vm675, %v3288, 0
    %v3339 = vsel %vm675, %v3292, 0
    %v3342 = vsel %vm675, %v3296, 0
    %v3345 = vsel %vm675, %v3300, 0
    %v3348 = vsel %vm675, %v3304, 0
    %v3351 = vsel %vm675, %v3308, 0
    %v3354 = vsel %vm675, %v3312, 0
    %v3357 = vsel %vm675, %v3316, 0
    %v3360 = vsel %vm675, %v3320, 0
    %v3363 = vsel %vm675, %v3324, 0
    %v3366 = vsel %vm675, %v3328, 0
    %3368 = vmatprep.subr.mxu0 0.0
    %3369 = vmatpush1.msra.mxu0 %v574
    %3370 = vmatprep.subr.mxu0 0.0
    %3371 = vmatpush1.msra.mxu0 %v575
    %3372 = vmatprep.subr.mxu0 0.0
    %3373 = vmatpush1.msra.mxu0 %v576
    %3374 = vmatprep.subr.mxu0 0.0
    %3375 = vmatpush1.msra.mxu0 %v577
    %3376 = vmatprep.subr.mxu0 0.0
    %3377 = vmatpush1.msra.mxu0 %v578
    %3378 = vmatprep.subr.mxu0 0.0
    %3379 = vmatpush1.msra.mxu0 %v579
    %3380 = vmatprep.subr.mxu0 0.0
    %3381 = vmatpush1.msra.mxu0 %v580
    %3382 = vmatprep.subr.mxu0 0.0
    %3383 = vmatpush1.msra.mxu0 %v581
    %3384 = vmatprep.subr.mxu0 0.0
    %3385 = vmatpush1.msra.mxu0 %v582
    %3386 = vmatprep.subr.mxu0 0.0
    %3387 = vmatpush1.msra.mxu0 %v583
    %3388 = vmatprep.subr.mxu0 0.0
    %3389 = vmatpush1.msra.mxu0 %v584
    %3390 = vmatprep.subr.mxu0 0.0
    %3391 = vmatpush1.msra.mxu0 %v585
    %3392 = vmatprep.subr.mxu0 0.0
    %3393 = vmatpush1.msra.mxu0 %v586
    %3394 = vmatprep.subr.mxu0 0.0
    %3395 = vmatpush1.msra.mxu0 %v587
    %3396 = vmatprep.subr.mxu0 0.0
    %3397 = vmatpush1.msra.mxu0 %v588
    %3398 = vmatprep.subr.mxu0 0.0
    %3399 = vmatpush1.msra.mxu0 %v589
    %3400 = vmatprep.subr.mxu0 0.0
    %3401 = vmatpush1.msra.mxu0 %v590
    %3402 = vmatprep.subr.mxu0 0.0
    %3403 = vmatpush1.msra.mxu0 %v591
    %3404 = vmatprep.subr.mxu0 0.0
    %3405 = vmatpush1.msra.mxu0 %v592
    %3406 = vmatprep.subr.mxu0 0.0
    %3407 = vmatpush1.msra.mxu0 %v593
    %3408 = vmatprep.subr.mxu0 0.0
    %3409 = vmatpush1.msra.mxu0 %v594
    %3410 = vmatprep.subr.mxu0 0.0
    %3411 = vmatpush1.msra.mxu0 %v595
    %3412 = vmatprep.subr.mxu0 0.0
    %3413 = vmatpush1.msra.mxu0 %v596
    %3414 = vmatprep.subr.mxu0 0.0
    %3415 = vmatpush1.msra.mxu0 %v597
    %3416 = vmatprep.subr.mxu0 0.0
    %3417 = vmatpush1.msra.mxu0 %v598
    %3418 = vmatprep.subr.mxu0 0.0
    %3419 = vmatpush1.msra.mxu0 %v599
    %3420 = vmatprep.subr.mxu0 0.0
    %3421 = vmatpush1.msra.mxu0 %v600
    %3422 = vmatprep.subr.mxu0 0.0
    %3423 = vmatpush1.msra.mxu0 %v601
    %3424 = vmatprep.subr.mxu0 0.0
    %3425 = vmatpush1.msra.mxu0 %v602
    %3426 = vmatprep.subr.mxu0 0.0
    %3427 = vmatpush1.msra.mxu0 %v603
    %3428 = vmatprep.subr.mxu0 0.0
    %3429 = vmatpush1.msra.mxu0 %v604
    %3430 = vmatprep.subr.mxu0 0.0
    %3431 = vmatpush1.msra.mxu0 %v605
    %3432 = vmatprep.mubr.f32.mxu0 %v3278
    %3433 = vmatmul.mubr.f32.gmra.mrb[0].mxu0 %v3277
    %v3434 = vpop.f32.mrb[0].mxu0
    %v3435 = vadd.f32 0.0, %v3434
    %v3436 = vpop.f32.mrb[0].mxu0
    %3437 = vmatprep.mubr.f32.mxu0 %v3282
    %3438 = vmatmul.mubr.f32.gmra.mrb[0].mxu0 %v3281
    %v3439 = vpop.f32.mrb[0].mxu0
    %v3440 = vadd.f32 0.0, %v3439
    %v3441 = vpop.f32.mrb[0].mxu0
    %3442 = vmatprep.mubr.f32.mxu0 %v3286
    %3443 = vmatmul.mubr.f32.gmra.mrb[0].mxu0 %v3285
    %v3444 = vpop.f32.mrb[0].mxu0
    %v3445 = vadd.f32 0.0, %v3444
    %v3446 = vpop.f32.mrb[0].mxu0
    %3447 = vmatprep.mubr.f32.mxu0 %v3290
    %3448 = vmatmul.mubr.f32.gmra.mrb[0].mxu0 %v3289
    %v3449 = vpop.f32.mrb[0].mxu0
    %v3450 = vadd.f32 0.0, %v3449
    %v3451 = vpop.f32.mrb[0].mxu0
    %3452 = vmatprep.mubr.f32.mxu0 %v3294
    %3453 = vmatmul.mubr.f32.gmra.mrb[0].mxu0 %v3293
    %v3454 = vpop.f32.mrb[0].mxu0
    %v3455 = vadd.f32 0.0, %v3454
    %v3456 = vpop.f32.mrb[0].mxu0
    %3457 = vmatprep.mubr.f32.mxu0 %v3298
    %3458 = vmatmul.mubr.f32.gmra.mrb[0].mxu0 %v3297
    %v3459 = vpop.f32.mrb[0].mxu0
    %v3460 = vadd.f32 0.0, %v3459
    %v3461 = vpop.f32.mrb[0].mxu0
    %3462 = vmatprep.mubr.f32.mxu0 %v3302
    %3463 = vmatmul.mubr.f32.gmra.mrb[0].mxu0 %v3301
    %v3464 = vpop.f32.mrb[0].mxu0
    %v3465 = vadd.f32 0.0, %v3464
    %v3466 = vpop.f32.mrb[0].mxu0
    %3467 = vmatprep.mubr.f32.mxu0 %v3306
    %3468 = vmatmul.mubr.f32.gmra.mrb[0].mxu0 %v3305
    %v3469 = vpop.f32.mrb[0].mxu0
    %v3470 = vadd.f32 0.0, %v3469
    %v3471 = vpop.f32.mrb[0].mxu0
    %3472 = vmatprep.mubr.f32.mxu0 %v3310
    %3473 = vmatmul.mubr.f32.gmra.mrb[0].mxu0 %v3309
    %v3474 = vpop.f32.mrb[0].mxu0
    %v3475 = vadd.f32 0.0, %v3474
    %v3476 = vpop.f32.mrb[0].mxu0
    %3477 = vmatprep.mubr.f32.mxu0 %v3314
    %3478 = vmatmul.mubr.f32.gmra.mrb[0].mxu0 %v3313
    %v3479 = vpop.f32.mrb[0].mxu0
    %v3480 = vadd.f32 0.0, %v3479
    %v3481 = vpop.f32.mrb[0].mxu0
    %3482 = vmatprep.mubr.f32.mxu0 %v3318
    %3483 = vmatmul.mubr.f32.gmra.mrb[0].mxu0 %v3317
    %v3484 = vpop.f32.mrb[0].mxu0
    %v3485 = vadd.f32 0.0, %v3484
    %v3486 = vpop.f32.mrb[0].mxu0
    %3487 = vmatprep.mubr.f32.mxu0 %v3322
    %3488 = vmatmul.mubr.f32.gmra.mrb[0].mxu0 %v3321
    %v3489 = vpop.f32.mrb[0].mxu0
    %v3490 = vadd.f32 0.0, %v3489
    %v3491 = vpop.f32.mrb[0].mxu0
    %3492 = vmatprep.mubr.f32.mxu0 %v3326
    %3493 = vmatmul.mubr.f32.gmra.mrb[0].mxu0 %v3325
    %v3494 = vpop.f32.mrb[0].mxu0
    %v3495 = vadd.f32 0.0, %v3494
    %v3496 = vpop.f32.mrb[0].mxu0
    %3497 = vdwg.mxu0
    %3498 = vmatprep.subr.mxu0 0.0
    %3499 = vmatpush1.msra.mxu0 %v606
    %3500 = vmatprep.subr.mxu0 0.0
    %3501 = vmatpush1.msra.mxu0 %v607
    %3502 = vmatprep.subr.mxu0 0.0
    %3503 = vmatpush1.msra.mxu0 %v608
    %3504 = vmatprep.subr.mxu0 0.0
    %3505 = vmatpush1.msra.mxu0 %v609
    %3506 = vmatprep.subr.mxu0 0.0
    %3507 = vmatpush1.msra.mxu0 %v610
    %3508 = vmatprep.subr.mxu0 0.0
    %3509 = vmatpush1.msra.mxu0 %v611
    %3510 = vmatprep.subr.mxu0 0.0
    %3511 = vmatpush1.msra.mxu0 %v612
    %3512 = vmatprep.subr.mxu0 0.0
    %3513 = vmatpush1.msra.mxu0 %v613
    %3514 = vmatprep.subr.mxu0 0.0
    %3515 = vmatpush1.msra.mxu0 %v614
    %3516 = vmatprep.subr.mxu0 0.0
    %3517 = vmatpush1.msra.mxu0 %v615
    %3518 = vmatprep.subr.mxu0 0.0
    %3519 = vmatpush1.msra.mxu0 %v616
    %3520 = vmatprep.subr.mxu0 0.0
    %3521 = vmatpush1.msra.mxu0 %v617
    %3522 = vmatprep.subr.mxu0 0.0
    %3523 = vmatpush1.msra.mxu0 %v618
    %3524 = vmatprep.subr.mxu0 0.0
    %3525 = vmatpush1.msra.mxu0 %v619
    %3526 = vmatprep.subr.mxu0 0.0
    %3527 = vmatpush1.msra.mxu0 %v620
    %3528 = vmatprep.subr.mxu0 0.0
    %3529 = vmatpush1.msra.mxu0 %v621
    %3530 = vmatprep.subr.mxu0 0.0
    %3531 = vmatpush1.msra.mxu0 %v622
    %3532 = vmatprep.subr.mxu0 0.0
    %3533 = vmatpush1.msra.mxu0 0.0
    %3534 = vmatprep.subr.mxu0 0.0
    %3535 = vmatpush1.msra.mxu0 0.0
    %3536 = vmatprep.subr.mxu0 0.0
    %3537 = vmatpush1.msra.mxu0 0.0
    %3538 = vmatprep.subr.mxu0 0.0
    %3539 = vmatpush1.msra.mxu0 0.0
    %3540 = vmatprep.subr.mxu0 0.0
    %3541 = vmatpush1.msra.mxu0 0.0
    %3542 = vmatprep.subr.mxu0 0.0
    %3543 = vmatpush1.msra.mxu0 0.0
    %3544 = vmatprep.subr.mxu0 0.0
    %3545 = vmatpush1.msra.mxu0 0.0
    %3546 = vmatprep.subr.mxu0 0.0
    %3547 = vmatpush1.msra.mxu0 0.0
    %3548 = vmatprep.subr.mxu0 0.0
    %3549 = vmatpush1.msra.mxu0 0.0
    %3550 = vmatprep.subr.mxu0 0.0
    %3551 = vmatpush1.msra.mxu0 0.0
    %3552 = vmatprep.subr.mxu0 0.0
    %3553 = vmatpush1.msra.mxu0 0.0
    %3554 = vmatprep.subr.mxu0 0.0
    %3555 = vmatpush1.msra.mxu0 0.0
    %3556 = vmatprep.subr.mxu0 0.0
    %3557 = vmatpush1.msra.mxu0 0.0
    %3558 = vmatprep.subr.mxu0 0.0
    %3559 = vmatpush1.msra.mxu0 0.0
    %3560 = vmatprep.subr.mxu0 0.0
    %3561 = vmatpush1.msra.mxu0 0.0
    %3562 = vmatprep.mubr.f32.mxu0 %v3330
    %3563 = vmatmul.mubr.f32.gmra.mrb[0].mxu0 %v3279
    %v3564 = vpop.f32.mrb[0].mxu0
    %v3565 = vadd.f32 %v3435, %v3564
    %v3566 = vpop.f32.mrb[0].mxu0
    %3567 = vmatprep.mubr.f32.mxu0 %v3333
    %3568 = vmatmul.mubr.f32.gmra.mrb[0].mxu0 %v3283
    %v3569 = vpop.f32.mrb[0].mxu0
    %v3570 = vadd.f32 %v3440, %v3569
    %v3571 = vpop.f32.mrb[0].mxu0
    %3572 = vmatprep.mubr.f32.mxu0 %v3336
    %3573 = vmatmul.mubr.f32.gmra.mrb[0].mxu0 %v3287
    %v3574 = vpop.f32.mrb[0].mxu0
    %v3575 = vadd.f32 %v3445, %v3574
    %v3576 = vpop.f32.mrb[0].mxu0
    %3577 = vmatprep.mubr.f32.mxu0 %v3339
    %3578 = vmatmul.mubr.f32.gmra.mrb[0].mxu0 %v3291
    %v3579 = vpop.f32.mrb[0].mxu0
    %v3580 = vadd.f32 %v3450, %v3579
    %v3581 = vpop.f32.mrb[0].mxu0
    %3582 = vmatprep.mubr.f32.mxu0 %v3342
    %3583 = vmatmul.mubr.f32.gmra.mrb[0].mxu0 %v3295
    %v3584 = vpop.f32.mrb[0].mxu0
    %v3585 = vadd.f32 %v3455, %v3584
    %v3586 = vpop.f32.mrb[0].mxu0
    %3587 = vmatprep.mubr.f32.mxu0 %v3345
    %3588 = vmatmul.mubr.f32.gmra.mrb[0].mxu0 %v3299
    %v3589 = vpop.f32.mrb[0].mxu0
    %v3590 = vadd.f32 %v3460, %v3589
    %v3591 = vpop.f32.mrb[0].mxu0
    %3592 = vmatprep.mubr.f32.mxu0 %v3348
    %3593 = vmatmul.mubr.f32.gmra.mrb[0].mxu0 %v3303
    %v3594 = vpop.f32.mrb[0].mxu0
    %v3595 = vadd.f32 %v3465, %v3594
    %v3596 = vpop.f32.mrb[0].mxu0
    %3597 = vmatprep.mubr.f32.mxu0 %v3351
    %3598 = vmatmul.mubr.f32.gmra.mrb[0].mxu0 %v3307
    %v3599 = vpop.f32.mrb[0].mxu0
    %v3600 = vadd.f32 %v3470, %v3599
    %v3601 = vpop.f32.mrb[0].mxu0
    %3602 = vmatprep.mubr.f32.mxu0 %v3354
    %3603 = vmatmul.mubr.f32.gmra.mrb[0].mxu0 %v3311
    %v3604 = vpop.f32.mrb[0].mxu0
    %v3605 = vadd.f32 %v3475, %v3604
    %v3606 = vpop.f32.mrb[0].mxu0
    %3607 = vmatprep.mubr.f32.mxu0 %v3357
    %3608 = vmatmul.mubr.f32.gmra.mrb[0].mxu0 %v3315
    %v3609 = vpop.f32.mrb[0].mxu0
    %v3610 = vadd.f32 %v3480, %v3609
    %v3611 = vpop.f32.mrb[0].mxu0
    %3612 = vmatprep.mubr.f32.mxu0 %v3360
    %3613 = vmatmul.mubr.f32.gmra.mrb[0].mxu0 %v3319
    %v3614 = vpop.f32.mrb[0].mxu0
    %v3615 = vadd.f32 %v3485, %v3614
    %v3616 = vpop.f32.mrb[0].mxu0
    %3617 = vmatprep.mubr.f32.mxu0 %v3363
    %3618 = vmatmul.mubr.f32.gmra.mrb[0].mxu0 %v3323
    %v3619 = vpop.f32.mrb[0].mxu0
    %v3620 = vadd.f32 %v3490, %v3619
    %v3621 = vpop.f32.mrb[0].mxu0
    %3622 = vmatprep.mubr.f32.mxu0 %v3366
    %3623 = vmatmul.mubr.f32.gmra.mrb[0].mxu0 %v3327
    %v3624 = vpop.f32.mrb[0].mxu0
    %v3625 = vadd.f32 %v3495, %v3624
    %v3626 = vpop.f32.mrb[0].mxu0
    %3627 = vdwg.mxu0
    %s3628 = scalar_lea.vmem %s4, 40
    %v3629 = vld [vmem:[%s3628] sm:$0xff]
    %v3631 = vsel %vm675, %v3565, 0
    %v3634 = vsel %vm675, %v3570, 0
    %v3637 = vsel %vm675, %v3575, 0
    %v3640 = vsel %vm675, %v3580, 0
    %v3643 = vsel %vm675, %v3585, 0
    %v3646 = vsel %vm675, %v3590, 0
    %v3649 = vsel %vm675, %v3595, 0
    %v3652 = vsel %vm675, %v3600, 0
    %v3655 = vsel %vm675, %v3605, 0
    %v3658 = vsel %vm675, %v3610, 0
    %v3661 = vsel %vm675, %v3615, 0
    %v3664 = vsel %vm675, %v3620, 0
    %v3667 = vsel %vm675, %v3625, 0
    %3669 = vmatprep.subr.mxu0 0.0
    %3670 = vmatpush1.msra.mxu0 %v3629
    %3671 = vmatprep.subr.mxu0 0.0
    %3672 = vmatpush1.msra.mxu0 0.0
    %3673 = vmatprep.subr.mxu0 0.0
    %3674 = vmatpush1.msra.mxu0 0.0
    %3675 = vmatprep.subr.mxu0 0.0
    %3676 = vmatpush1.msra.mxu0 0.0
    %3677 = vmatprep.subr.mxu0 0.0
    %3678 = vmatpush1.msra.mxu0 0.0
    %3679 = vmatprep.subr.mxu0 0.0
    %3680 = vmatpush1.msra.mxu0 0.0
    %3681 = vmatprep.subr.mxu0 0.0
    %3682 = vmatpush1.msra.mxu0 0.0
    %3683 = vmatprep.subr.mxu0 0.0
    %3684 = vmatpush1.msra.mxu0 0.0
    %3685 = vmatprep.subr.mxu0 0.0
    %3686 = vmatpush1.msra.mxu0 0.0
    %3687 = vmatprep.subr.mxu0 0.0
    %3688 = vmatpush1.msra.mxu0 0.0
    %3689 = vmatprep.subr.mxu0 0.0
    %3690 = vmatpush1.msra.mxu0 0.0
    %3691 = vmatprep.subr.mxu0 0.0
    %3692 = vmatpush1.msra.mxu0 0.0
    %3693 = vmatprep.subr.mxu0 0.0
    %3694 = vmatpush1.msra.mxu0 0.0
    %3695 = vmatprep.subr.mxu0 0.0
    %3696 = vmatpush1.msra.mxu0 0.0
    %3697 = vmatprep.subr.mxu0 0.0
    %3698 = vmatpush1.msra.mxu0 0.0
    %3699 = vmatprep.subr.mxu0 0.0
    %3700 = vmatpush1.msra.mxu0 0.0
    %3701 = vmatprep.subr.mxu0 0.0
    %3702 = vmatpush1.msra.mxu0 0.0
    %3703 = vmatprep.subr.mxu0 0.0
    %3704 = vmatpush1.msra.mxu0 0.0
    %3705 = vmatprep.subr.mxu0 0.0
    %3706 = vmatpush1.msra.mxu0 0.0
    %3707 = vmatprep.subr.mxu0 0.0
    %3708 = vmatpush1.msra.mxu0 0.0
    %3709 = vmatprep.subr.mxu0 0.0
    %3710 = vmatpush1.msra.mxu0 0.0
    %3711 = vmatprep.subr.mxu0 0.0
    %3712 = vmatpush1.msra.mxu0 0.0
    %3713 = vmatprep.subr.mxu0 0.0
    %3714 = vmatpush1.msra.mxu0 0.0
    %3715 = vmatprep.subr.mxu0 0.0
    %3716 = vmatpush1.msra.mxu0 0.0
    %3717 = vmatprep.subr.mxu0 0.0
    %3718 = vmatpush1.msra.mxu0 0.0
    %3719 = vmatprep.subr.mxu0 0.0
    %3720 = vmatpush1.msra.mxu0 0.0
    %3721 = vmatprep.subr.mxu0 0.0
    %3722 = vmatpush1.msra.mxu0 0.0
    %3723 = vmatprep.subr.mxu0 0.0
    %3724 = vmatpush1.msra.mxu0 0.0
    %3725 = vmatprep.subr.mxu0 0.0
    %3726 = vmatpush1.msra.mxu0 0.0
    %3727 = vmatprep.subr.mxu0 0.0
    %3728 = vmatpush1.msra.mxu0 0.0
    %3729 = vmatprep.subr.mxu0 0.0
    %3730 = vmatpush1.msra.mxu0 0.0
    %3731 = vmatprep.subr.mxu0 0.0
    %3732 = vmatpush1.msra.mxu0 0.0
    %3733 = vmatprep.mubr.f32.mxu0 0.0
    %3734 = vmatmul.mubr.f32.gmra.mrb[0].mxu0 %v3631
    %v3735 = vpop.f32.mrb[0].mxu0
    %v3736 = vadd.f32 0.0, %v3735
    %v3737 = vpop.f32.mrb[0].mxu0
    %3738 = vmatprep.mubr.f32.mxu0 0.0
    %3739 = vmatmul.mubr.f32.gmra.mrb[0].mxu0 %v3634
    %v3740 = vpop.f32.mrb[0].mxu0
    %v3741 = vadd.f32 0.0, %v3740
    %v3742 = vpop.f32.mrb[0].mxu0
    %3743 = vmatprep.mubr.f32.mxu0 0.0
    %3744 = vmatmul.mubr.f32.gmra.mrb[0].mxu0 %v3637
    %v3745 = vpop.f32.mrb[0].mxu0
    %v3746 = vadd.f32 0.0, %v3745
    %v3747 = vpop.f32.mrb[0].mxu0
    %3748 = vmatprep.mubr.f32.mxu0 0.0
    %3749 = vmatmul.mubr.f32.gmra.mrb[0].mxu0 %v3640
    %v3750 = vpop.f32.mrb[0].mxu0
    %v3751 = vadd.f32 0.0, %v3750
    %v3752 = vpop.f32.mrb[0].mxu0
    %3753 = vmatprep.mubr.f32.mxu0 0.0
    %3754 = vmatmul.mubr.f32.gmra.mrb[0].mxu0 %v3643
    %v3755 = vpop.f32.mrb[0].mxu0
    %v3756 = vadd.f32 0.0, %v3755
    %v3757 = vpop.f32.mrb[0].mxu0
    %3758 = vmatprep.mubr.f32.mxu0 0.0
    %3759 = vmatmul.mubr.f32.gmra.mrb[0].mxu0 %v3646
    %v3760 = vpop.f32.mrb[0].mxu0
    %v3761 = vadd.f32 0.0, %v3760
    %v3762 = vpop.f32.mrb[0].mxu0
    %3763 = vmatprep.mubr.f32.mxu0 0.0
    %3764 = vmatmul.mubr.f32.gmra.mrb[0].mxu0 %v3649
    %v3765 = vpop.f32.mrb[0].mxu0
    %v3766 = vadd.f32 0.0, %v3765
    %v3767 = vpop.f32.mrb[0].mxu0
    %3768 = vmatprep.mubr.f32.mxu0 0.0
    %3769 = vmatmul.mubr.f32.gmra.mrb[0].mxu0 %v3652
    %v3770 = vpop.f32.mrb[0].mxu0
    %v3771 = vadd.f32 0.0, %v3770
    %v3772 = vpop.f32.mrb[0].mxu0
    %3773 = vmatprep.mubr.f32.mxu0 0.0
    %3774 = vmatmul.mubr.f32.gmra.mrb[0].mxu0 %v3655
    %v3775 = vpop.f32.mrb[0].mxu0
    %v3776 = vadd.f32 0.0, %v3775
    %v3777 = vpop.f32.mrb[0].mxu0
    %3778 = vmatprep.mubr.f32.mxu0 0.0
    %3779 = vmatmul.mubr.f32.gmra.mrb[0].mxu0 %v3658
    %v3780 = vpop.f32.mrb[0].mxu0
    %v3781 = vadd.f32 0.0, %v3780
    %v3782 = vpop.f32.mrb[0].mxu0
    %3783 = vmatprep.mubr.f32.mxu0 0.0
    %3784 = vmatmul.mubr.f32.gmra.mrb[0].mxu0 %v3661
    %v3785 = vpop.f32.mrb[0].mxu0
    %v3786 = vadd.f32 0.0, %v3785
    %v3787 = vpop.f32.mrb[0].mxu0
    %3788 = vmatprep.mubr.f32.mxu0 0.0
    %3789 = vmatmul.mubr.f32.gmra.mrb[0].mxu0 %v3664
    %v3790 = vpop.f32.mrb[0].mxu0
    %v3791 = vadd.f32 0.0, %v3790
    %v3792 = vpop.f32.mrb[0].mxu0
    %3793 = vmatprep.mubr.f32.mxu0 0.0
    %3794 = vmatmul.mubr.f32.gmra.mrb[0].mxu0 %v3667
    %v3795 = vpop.f32.mrb[0].mxu0
    %v3796 = vadd.f32 0.0, %v3795
    %v3797 = vpop.f32.mrb[0].mxu0
    %3798 = vdwg.mxu0
    %v3799 = vadd.f32 %v3263, %v3736
    %v3800 = vadd.f32 %v3264, %v3741
    %v3801 = vadd.f32 %v3265, %v3746
    %v3802 = vadd.f32 %v3266, %v3751
    %v3803 = vadd.f32 %v3267, %v3756
    %v3804 = vadd.f32 %v3268, %v3761
    %v3805 = vadd.f32 %v3269, %v3766
    %v3806 = vadd.f32 %v3270, %v3771
    %v3807 = vadd.f32 %v3271, %v3776
    %v3808 = vadd.f32 %v3272, %v3781
    %v3809 = vadd.f32 %v3273, %v3786
    %v3810 = vadd.f32 %v3274, %v3791
    %v3811 = vadd.f32 %v3275, %v3796
    %s3812 = scalar_lea.vmem %s3, 2496
    %v3813 = vld [vmem:[%s3812] sm:$0xff]
    %v3814 = vld [vmem:[%s3812 + $0x8] sm:$0xff]
    %v3815 = vld [vmem:[%s3812 + $0x10] sm:$0xff]
    %v3816 = vld [vmem:[%s3812 + $0x18] sm:$0xff]
    %v3817 = vld [vmem:[%s3812 + $0x20] sm:$0xff]
    %v3818 = vld [vmem:[%s3812 + $0x28] sm:$0xff]
    %v3819 = vld [vmem:[%s3812 + $0x30] sm:$0xff]
    %v3820 = vld [vmem:[%s3812 + $0x38] sm:$0xff]
    %v3821 = vld [vmem:[%s3812 + $0x40] sm:$0xff]
    %v3822 = vld [vmem:[%s3812 + $0x48] sm:$0xff]
    %v3823 = vld [vmem:[%s3812 + $0x50] sm:$0xff]
    %v3824 = vld [vmem:[%s3812 + $0x58] sm:$0xff]
    %v3825 = vld [vmem:[%s3812 + $0x60] sm:$0xff]
    %v3826 = vld [vmem:[%s3812 + $0x68] sm:$0xff]
    %v3827 = vld [vmem:[%s3812 + $0x70] sm:$0xff]
    %v3828 = vld [vmem:[%s3812 + $0x78] sm:$0xff]
    %v3829 = vld [vmem:[%s3812 + $0x80] sm:$0xff]
    %v3830 = vld [vmem:[%s3812 + $0x88] sm:$0xff]
    %v3831 = vld [vmem:[%s3812 + $0x90] sm:$0xff]
    %v3832 = vld [vmem:[%s3812 + $0x98] sm:$0xff]
    %v3833 = vld [vmem:[%s3812 + $0xa0] sm:$0xff]
    %v3834 = vld [vmem:[%s3812 + $0xa8] sm:$0xff]
    %v3835 = vld [vmem:[%s3812 + $0xb0] sm:$0xff]
    %v3836 = vld [vmem:[%s3812 + $0xb8] sm:$0xff]
    %v3837 = vld [vmem:[%s3812 + $0xc0] sm:$0xff]
    %v3838 = vld [vmem:[%s3812 + $0xc8] sm:$0xff]
    %v3839 = vld [vmem:[%s3812 + $0xd0] sm:$0xff]
    %v3840 = vld [vmem:[%s3812 + $0xd8] sm:$0xff]
    %v3841 = vld [vmem:[%s3812 + $0xe0] sm:$0xff]
    %v3842 = vld [vmem:[%s3812 + $0xe8] sm:$0xff]
    %v3843 = vld [vmem:[%s3812 + $0xf0] sm:$0xff]
    %v3844 = vld [vmem:[%s3812 + $0xf8] sm:$0xff]
    %v3845 = vld [vmem:[%s3812 + $0x100] sm:$0xff]
    %v3846 = vld [vmem:[%s3812 + $0x108] sm:$0xff]
    %v3847 = vld [vmem:[%s3812 + $0x110] sm:$0xff]
    %v3848 = vld [vmem:[%s3812 + $0x118] sm:$0xff]
    %v3849 = vld [vmem:[%s3812 + $0x120] sm:$0xff]
    %v3850 = vld [vmem:[%s3812 + $0x128] sm:$0xff]
    %v3851 = vld [vmem:[%s3812 + $0x130] sm:$0xff]
    %v3852 = vld [vmem:[%s3812 + $0x138] sm:$0xff]
    %v3853 = vld [vmem:[%s3812 + $0x140] sm:$0xff]
    %v3854 = vld [vmem:[%s3812 + $0x148] sm:$0xff]
    %v3855 = vld [vmem:[%s3812 + $0x150] sm:$0xff]
    %v3856 = vld [vmem:[%s3812 + $0x158] sm:$0xff]
    %v3857 = vld [vmem:[%s3812 + $0x160] sm:$0xff]
    %v3858 = vld [vmem:[%s3812 + $0x168] sm:$0xff]
    %v3859 = vld [vmem:[%s3812 + $0x170] sm:$0xff]
    %v3860 = vld [vmem:[%s3812 + $0x178] sm:$0xff]
    %v3861 = vld [vmem:[%s3812 + $0x180] sm:$0x3]
    %v3862 = vld [vmem:[%s3812 + $0x188] sm:$0x3]
    %v3863 = vld [vmem:[%s3812 + $0x190] sm:$0x3]
    %v3864 = vld [vmem:[%s3812 + $0x198] sm:$0x3]
    %v3866 = vsel %vm675, %v3816, 0
    %v3869 = vsel %vm675, %v3820, 0
    %v3872 = vsel %vm675, %v3824, 0
    %v3875 = vsel %vm675, %v3828, 0
    %v3878 = vsel %vm675, %v3832, 0
    %v3881 = vsel %vm675, %v3836, 0
    %v3884 = vsel %vm675, %v3840, 0
    %v3887 = vsel %vm675, %v3844, 0
    %v3890 = vsel %vm675, %v3848, 0
    %v3893 = vsel %vm675, %v3852, 0
    %v3896 = vsel %vm675, %v3856, 0
    %v3899 = vsel %vm675, %v3860, 0
    %v3902 = vsel %vm675, %v3864, 0
    %3904 = vmatprep.subr.mxu0 0.0
    %3905 = vmatpush1.msra.mxu0 %v574
    %3906 = vmatprep.subr.mxu0 0.0
    %3907 = vmatpush1.msra.mxu0 %v575
    %3908 = vmatprep.subr.mxu0 0.0
    %3909 = vmatpush1.msra.mxu0 %v576
    %3910 = vmatprep.subr.mxu0 0.0
    %3911 = vmatpush1.msra.mxu0 %v577
    %3912 = vmatprep.subr.mxu0 0.0
    %3913 = vmatpush1.msra.mxu0 %v578
    %3914 = vmatprep.subr.mxu0 0.0
    %3915 = vmatpush1.msra.mxu0 %v579
    %3916 = vmatprep.subr.mxu0 0.0
    %3917 = vmatpush1.msra.mxu0 %v580
    %3918 = vmatprep.subr.mxu0 0.0
    %3919 = vmatpush1.msra.mxu0 %v581
    %3920 = vmatprep.subr.mxu0 0.0
    %3921 = vmatpush1.msra.mxu0 %v582
    %3922 = vmatprep.subr.mxu0 0.0
    %3923 = vmatpush1.msra.mxu0 %v583
    %3924 = vmatprep.subr.mxu0 0.0
    %3925 = vmatpush1.msra.mxu0 %v584
    %3926 = vmatprep.subr.mxu0 0.0
    %3927 = vmatpush1.msra.mxu0 %v585
    %3928 = vmatprep.subr.mxu0 0.0
    %3929 = vmatpush1.msra.mxu0 %v586
    %3930 = vmatprep.subr.mxu0 0.0
    %3931 = vmatpush1.msra.mxu0 %v587
    %3932 = vmatprep.subr.mxu0 0.0
    %3933 = vmatpush1.msra.mxu0 %v588
    %3934 = vmatprep.subr.mxu0 0.0
    %3935 = vmatpush1.msra.mxu0 %v589
    %3936 = vmatprep.subr.mxu0 0.0
    %3937 = vmatpush1.msra.mxu0 %v590
    %3938 = vmatprep.subr.mxu0 0.0
    %3939 = vmatpush1.msra.mxu0 %v591
    %3940 = vmatprep.subr.mxu0 0.0
    %3941 = vmatpush1.msra.mxu0 %v592
    %3942 = vmatprep.subr.mxu0 0.0
    %3943 = vmatpush1.msra.mxu0 %v593
    %3944 = vmatprep.subr.mxu0 0.0
    %3945 = vmatpush1.msra.mxu0 %v594
    %3946 = vmatprep.subr.mxu0 0.0
    %3947 = vmatpush1.msra.mxu0 %v595
    %3948 = vmatprep.subr.mxu0 0.0
    %3949 = vmatpush1.msra.mxu0 %v596
    %3950 = vmatprep.subr.mxu0 0.0
    %3951 = vmatpush1.msra.mxu0 %v597
    %3952 = vmatprep.subr.mxu0 0.0
    %3953 = vmatpush1.msra.mxu0 %v598
    %3954 = vmatprep.subr.mxu0 0.0
    %3955 = vmatpush1.msra.mxu0 %v599
    %3956 = vmatprep.subr.mxu0 0.0
    %3957 = vmatpush1.msra.mxu0 %v600
    %3958 = vmatprep.subr.mxu0 0.0
    %3959 = vmatpush1.msra.mxu0 %v601
    %3960 = vmatprep.subr.mxu0 0.0
    %3961 = vmatpush1.msra.mxu0 %v602
    %3962 = vmatprep.subr.mxu0 0.0
    %3963 = vmatpush1.msra.mxu0 %v603
    %3964 = vmatprep.subr.mxu0 0.0
    %3965 = vmatpush1.msra.mxu0 %v604
    %3966 = vmatprep.subr.mxu0 0.0
    %3967 = vmatpush1.msra.mxu0 %v605
    %3968 = vmatprep.mubr.f32.mxu0 %v3814
    %3969 = vmatmul.mubr.f32.gmra.mrb[0].mxu0 %v3813
    %v3970 = vpop.f32.mrb[0].mxu0
    %v3971 = vadd.f32 0.0, %v3970
    %v3972 = vpop.f32.mrb[0].mxu0
    %3973 = vmatprep.mubr.f32.mxu0 %v3818
    %3974 = vmatmul.mubr.f32.gmra.mrb[0].mxu0 %v3817
    %v3975 = vpop.f32.mrb[0].mxu0
    %v3976 = vadd.f32 0.0, %v3975
    %v3977 = vpop.f32.mrb[0].mxu0
    %3978 = vmatprep.mubr.f32.mxu0 %v3822
    %3979 = vmatmul.mubr.f32.gmra.mrb[0].mxu0 %v3821
    %v3980 = vpop.f32.mrb[0].mxu0
    %v3981 = vadd.f32 0.0, %v3980
    %v3982 = vpop.f32.mrb[0].mxu0
    %3983 = vmatprep.mubr.f32.mxu0 %v3826
    %3984 = vmatmul.mubr.f32.gmra.mrb[0].mxu0 %v3825
    %v3985 = vpop.f32.mrb[0].mxu0
    %v3986 = vadd.f32 0.0, %v3985
    %v3987 = vpop.f32.mrb[0].mxu0
    %3988 = vmatprep.mubr.f32.mxu0 %v3830
    %3989 = vmatmul.mubr.f32.gmra.mrb[0].mxu0 %v3829
    %v3990 = vpop.f32.mrb[0].mxu0
    %v3991 = vadd.f32 0.0, %v3990
    %v3992 = vpop.f32.mrb[0].mxu0
    %3993 = vmatprep.mubr.f32.mxu0 %v3834
    %3994 = vmatmul.mubr.f32.gmra.mrb[0].mxu0 %v3833
    %v3995 = vpop.f32.mrb[0].mxu0
    %v3996 = vadd.f32 0.0, %v3995
    %v3997 = vpop.f32.mrb[0].mxu0
    %3998 = vmatprep.mubr.f32.mxu0 %v3838
    %3999 = vmatmul.mubr.f32.gmra.mrb[0].mxu0 %v3837
    %v4000 = vpop.f32.mrb[0].mxu0
    %v4001 = vadd.f32 0.0, %v4000
    %v4002 = vpop.f32.mrb[0].mxu0
    %4003 = vmatprep.mubr.f32.mxu0 %v3842
    %4004 = vmatmul.mubr.f32.gmra.mrb[0].mxu0 %v3841
    %v4005 = vpop.f32.mrb[0].mxu0
    %v4006 = vadd.f32 0.0, %v4005
    %v4007 = vpop.f32.mrb[0].mxu0
    %4008 = vmatprep.mubr.f32.mxu0 %v3846
    %4009 = vmatmul.mubr.f32.gmra.mrb[0].mxu0 %v3845
    %v4010 = vpop.f32.mrb[0].mxu0
    %v4011 = vadd.f32 0.0, %v4010
    %v4012 = vpop.f32.mrb[0].mxu0
    %4013 = vmatprep.mubr.f32.mxu0 %v3850
    %4014 = vmatmul.mubr.f32.gmra.mrb[0].mxu0 %v3849
    %v4015 = vpop.f32.mrb[0].mxu0
    %v4016 = vadd.f32 0.0, %v4015
    %v4017 = vpop.f32.mrb[0].mxu0
    %4018 = vmatprep.mubr.f32.mxu0 %v3854
    %4019 = vmatmul.mubr.f32.gmra.mrb[0].mxu0 %v3853
    %v4020 = vpop.f32.mrb[0].mxu0
    %v4021 = vadd.f32 0.0, %v4020
    %v4022 = vpop.f32.mrb[0].mxu0
    %4023 = vmatprep.mubr.f32.mxu0 %v3858
    %4024 = vmatmul.mubr.f32.gmra.mrb[0].mxu0 %v3857
    %v4025 = vpop.f32.mrb[0].mxu0
    %v4026 = vadd.f32 0.0, %v4025
    %v4027 = vpop.f32.mrb[0].mxu0
    %4028 = vmatprep.mubr.f32.mxu0 %v3862
    %4029 = vmatmul.mubr.f32.gmra.mrb[0].mxu0 %v3861
    %v4030 = vpop.f32.mrb[0].mxu0
    %v4031 = vadd.f32 0.0, %v4030
    %v4032 = vpop.f32.mrb[0].mxu0
    %4033 = vdwg.mxu0
    %4034 = vmatprep.subr.mxu0 0.0
    %4035 = vmatpush1.msra.mxu0 %v606
    %4036 = vmatprep.subr.mxu0 0.0
    %4037 = vmatpush1.msra.mxu0 %v607
    %4038 = vmatprep.subr.mxu0 0.0
    %4039 = vmatpush1.msra.mxu0 %v608
    %4040 = vmatprep.subr.mxu0 0.0
    %4041 = vmatpush1.msra.mxu0 %v609
    %4042 = vmatprep.subr.mxu0 0.0
    %4043 = vmatpush1.msra.mxu0 %v610
    %4044 = vmatprep.subr.mxu0 0.0
    %4045 = vmatpush1.msra.mxu0 %v611
    %4046 = vmatprep.subr.mxu0 0.0
    %4047 = vmatpush1.msra.mxu0 %v612
    %4048 = vmatprep.subr.mxu0 0.0
    %4049 = vmatpush1.msra.mxu0 %v613
    %4050 = vmatprep.subr.mxu0 0.0
    %4051 = vmatpush1.msra.mxu0 %v614
    %4052 = vmatprep.subr.mxu0 0.0
    %4053 = vmatpush1.msra.mxu0 %v615
    %4054 = vmatprep.subr.mxu0 0.0
    %4055 = vmatpush1.msra.mxu0 %v616
    %4056 = vmatprep.subr.mxu0 0.0
    %4057 = vmatpush1.msra.mxu0 %v617
    %4058 = vmatprep.subr.mxu0 0.0
    %4059 = vmatpush1.msra.mxu0 %v618
    %4060 = vmatprep.subr.mxu0 0.0
    %4061 = vmatpush1.msra.mxu0 %v619
    %4062 = vmatprep.subr.mxu0 0.0
    %4063 = vmatpush1.msra.mxu0 %v620
    %4064 = vmatprep.subr.mxu0 0.0
    %4065 = vmatpush1.msra.mxu0 %v621
    %4066 = vmatprep.subr.mxu0 0.0
    %4067 = vmatpush1.msra.mxu0 %v622
    %4068 = vmatprep.subr.mxu0 0.0
    %4069 = vmatpush1.msra.mxu0 0.0
    %4070 = vmatprep.subr.mxu0 0.0
    %4071 = vmatpush1.msra.mxu0 0.0
    %4072 = vmatprep.subr.mxu0 0.0
    %4073 = vmatpush1.msra.mxu0 0.0
    %4074 = vmatprep.subr.mxu0 0.0
    %4075 = vmatpush1.msra.mxu0 0.0
    %4076 = vmatprep.subr.mxu0 0.0
    %4077 = vmatpush1.msra.mxu0 0.0
    %4078 = vmatprep.subr.mxu0 0.0
    %4079 = vmatpush1.msra.mxu0 0.0
    %4080 = vmatprep.subr.mxu0 0.0
    %4081 = vmatpush1.msra.mxu0 0.0
    %4082 = vmatprep.subr.mxu0 0.0
    %4083 = vmatpush1.msra.mxu0 0.0
    %4084 = vmatprep.subr.mxu0 0.0
    %4085 = vmatpush1.msra.mxu0 0.0
    %4086 = vmatprep.subr.mxu0 0.0
    %4087 = vmatpush1.msra.mxu0 0.0
    %4088 = vmatprep.subr.mxu0 0.0
    %4089 = vmatpush1.msra.mxu0 0.0
    %4090 = vmatprep.subr.mxu0 0.0
    %4091 = vmatpush1.msra.mxu0 0.0
    %4092 = vmatprep.subr.mxu0 0.0
    %4093 = vmatpush1.msra.mxu0 0.0
    %4094 = vmatprep.subr.mxu0 0.0
    %4095 = vmatpush1.msra.mxu0 0.0
    %4096 = vmatprep.subr.mxu0 0.0
    %4097 = vmatpush1.msra.mxu0 0.0
    %4098 = vmatprep.mubr.f32.mxu0 %v3866
    %4099 = vmatmul.mubr.f32.gmra.mrb[0].mxu0 %v3815
    %v4100 = vpop.f32.mrb[0].mxu0
    %v4101 = vadd.f32 %v3971, %v4100
    %v4102 = vpop.f32.mrb[0].mxu0
    %4103 = vmatprep.mubr.f32.mxu0 %v3869
    %4104 = vmatmul.mubr.f32.gmra.mrb[0].mxu0 %v3819
    %v4105 = vpop.f32.mrb[0].mxu0
    %v4106 = vadd.f32 %v3976, %v4105
    %v4107 = vpop.f32.mrb[0].mxu0
    %4108 = vmatprep.mubr.f32.mxu0 %v3872
    %4109 = vmatmul.mubr.f32.gmra.mrb[0].mxu0 %v3823
    %v4110 = vpop.f32.mrb[0].mxu0
    %v4111 = vadd.f32 %v3981, %v4110
    %v4112 = vpop.f32.mrb[0].mxu0
    %4113 = vmatprep.mubr.f32.mxu0 %v3875
    %4114 = vmatmul.mubr.f32.gmra.mrb[0].mxu0 %v3827
    %v4115 = vpop.f32.mrb[0].mxu0
    %v4116 = vadd.f32 %v3986, %v4115
    %v4117 = vpop.f32.mrb[0].mxu0
    %4118 = vmatprep.mubr.f32.mxu0 %v3878
    %4119 = vmatmul.mubr.f32.gmra.mrb[0].mxu0 %v3831
    %v4120 = vpop.f32.mrb[0].mxu0
    %v4121 = vadd.f32 %v3991, %v4120
    %v4122 = vpop.f32.mrb[0].mxu0
    %4123 = vmatprep.mubr.f32.mxu0 %v3881
    %4124 = vmatmul.mubr.f32.gmra.mrb[0].mxu0 %v3835
    %v4125 = vpop.f32.mrb[0].mxu0
    %v4126 = vadd.f32 %v3996, %v4125
    %v4127 = vpop.f32.mrb[0].mxu0
    %4128 = vmatprep.mubr.f32.mxu0 %v3884
    %4129 = vmatmul.mubr.f32.gmra.mrb[0].mxu0 %v3839
    %v4130 = vpop.f32.mrb[0].mxu0
    %v4131 = vadd.f32 %v4001, %v4130
    %v4132 = vpop.f32.mrb[0].mxu0
    %4133 = vmatprep.mubr.f32.mxu0 %v3887
    %4134 = vmatmul.mubr.f32.gmra.mrb[0].mxu0 %v3843
    %v4135 = vpop.f32.mrb[0].mxu0
    %v4136 = vadd.f32 %v4006, %v4135
    %v4137 = vpop.f32.mrb[0].mxu0
    %4138 = vmatprep.mubr.f32.mxu0 %v3890
    %4139 = vmatmul.mubr.f32.gmra.mrb[0].mxu0 %v3847
    %v4140 = vpop.f32.mrb[0].mxu0
    %v4141 = vadd.f32 %v4011, %v4140
    %v4142 = vpop.f32.mrb[0].mxu0
    %4143 = vmatprep.mubr.f32.mxu0 %v3893
    %4144 = vmatmul.mubr.f32.gmra.mrb[0].mxu0 %v3851
    %v4145 = vpop.f32.mrb[0].mxu0
    %v4146 = vadd.f32 %v4016, %v4145
    %v4147 = vpop.f32.mrb[0].mxu0
    %4148 = vmatprep.mubr.f32.mxu0 %v3896
    %4149 = vmatmul.mubr.f32.gmra.mrb[0].mxu0 %v3855
    %v4150 = vpop.f32.mrb[0].mxu0
    %v4151 = vadd.f32 %v4021, %v4150
    %v4152 = vpop.f32.mrb[0].mxu0
    %4153 = vmatprep.mubr.f32.mxu0 %v3899
    %4154 = vmatmul.mubr.f32.gmra.mrb[0].mxu0 %v3859
    %v4155 = vpop.f32.mrb[0].mxu0
    %v4156 = vadd.f32 %v4026, %v4155
    %v4157 = vpop.f32.mrb[0].mxu0
    %4158 = vmatprep.mubr.f32.mxu0 %v3902
    %4159 = vmatmul.mubr.f32.gmra.mrb[0].mxu0 %v3863
    %v4160 = vpop.f32.mrb[0].mxu0
    %v4161 = vadd.f32 %v4031, %v4160
    %v4162 = vpop.f32.mrb[0].mxu0
    %4163 = vdwg.mxu0
    %s4164 = scalar_lea.vmem %s4, 48
    %v4165 = vld [vmem:[%s4164] sm:$0xff]
    %v4167 = vsel %vm675, %v4101, 0
    %v4170 = vsel %vm675, %v4106, 0
    %v4173 = vsel %vm675, %v4111, 0
    %v4176 = vsel %vm675, %v4116, 0
    %v4179 = vsel %vm675, %v4121, 0
    %v4182 = vsel %vm675, %v4126, 0
    %v4185 = vsel %vm675, %v4131, 0
    %v4188 = vsel %vm675, %v4136, 0
    %v4191 = vsel %vm675, %v4141, 0
    %v4194 = vsel %vm675, %v4146, 0
    %v4197 = vsel %vm675, %v4151, 0
    %v4200 = vsel %vm675, %v4156, 0
    %v4203 = vsel %vm675, %v4161, 0
    %4205 = vmatprep.subr.mxu0 0.0
    %4206 = vmatpush1.msra.mxu0 %v4165
    %4207 = vmatprep.subr.mxu0 0.0
    %4208 = vmatpush1.msra.mxu0 0.0
    %4209 = vmatprep.subr.mxu0 0.0
    %4210 = vmatpush1.msra.mxu0 0.0
    %4211 = vmatprep.subr.mxu0 0.0
    %4212 = vmatpush1.msra.mxu0 0.0
    %4213 = vmatprep.subr.mxu0 0.0
    %4214 = vmatpush1.msra.mxu0 0.0
    %4215 = vmatprep.subr.mxu0 0.0
    %4216 = vmatpush1.msra.mxu0 0.0
    %4217 = vmatprep.subr.mxu0 0.0
    %4218 = vmatpush1.msra.mxu0 0.0
    %4219 = vmatprep.subr.mxu0 0.0
    %4220 = vmatpush1.msra.mxu0 0.0
    %4221 = vmatprep.subr.mxu0 0.0
    %4222 = vmatpush1.msra.mxu0 0.0
    %4223 = vmatprep.subr.mxu0 0.0
    %4224 = vmatpush1.msra.mxu0 0.0
    %4225 = vmatprep.subr.mxu0 0.0
    %4226 = vmatpush1.msra.mxu0 0.0
    %4227 = vmatprep.subr.mxu0 0.0
    %4228 = vmatpush1.msra.mxu0 0.0
    %4229 = vmatprep.subr.mxu0 0.0
    %4230 = vmatpush1.msra.mxu0 0.0
    %4231 = vmatprep.subr.mxu0 0.0
    %4232 = vmatpush1.msra.mxu0 0.0
    %4233 = vmatprep.subr.mxu0 0.0
    %4234 = vmatpush1.msra.mxu0 0.0
    %4235 = vmatprep.subr.mxu0 0.0
    %4236 = vmatpush1.msra.mxu0 0.0
    %4237 = vmatprep.subr.mxu0 0.0
    %4238 = vmatpush1.msra.mxu0 0.0
    %4239 = vmatprep.subr.mxu0 0.0
    %4240 = vmatpush1.msra.mxu0 0.0
    %4241 = vmatprep.subr.mxu0 0.0
    %4242 = vmatpush1.msra.mxu0 0.0
    %4243 = vmatprep.subr.mxu0 0.0
    %4244 = vmatpush1.msra.mxu0 0.0
    %4245 = vmatprep.subr.mxu0 0.0
    %4246 = vmatpush1.msra.mxu0 0.0
    %4247 = vmatprep.subr.mxu0 0.0
    %4248 = vmatpush1.msra.mxu0 0.0
    %4249 = vmatprep.subr.mxu0 0.0
    %4250 = vmatpush1.msra.mxu0 0.0
    %4251 = vmatprep.subr.mxu0 0.0
    %4252 = vmatpush1.msra.mxu0 0.0
    %4253 = vmatprep.subr.mxu0 0.0
    %4254 = vmatpush1.msra.mxu0 0.0
    %4255 = vmatprep.subr.mxu0 0.0
    %4256 = vmatpush1.msra.mxu0 0.0
    %4257 = vmatprep.subr.mxu0 0.0
    %4258 = vmatpush1.msra.mxu0 0.0
    %4259 = vmatprep.subr.mxu0 0.0
    %4260 = vmatpush1.msra.mxu0 0.0
    %4261 = vmatprep.subr.mxu0 0.0
    %4262 = vmatpush1.msra.mxu0 0.0
    %4263 = vmatprep.subr.mxu0 0.0
    %4264 = vmatpush1.msra.mxu0 0.0
    %4265 = vmatprep.subr.mxu0 0.0
    %4266 = vmatpush1.msra.mxu0 0.0
    %4267 = vmatprep.subr.mxu0 0.0
    %4268 = vmatpush1.msra.mxu0 0.0
    %4269 = vmatprep.mubr.f32.mxu0 0.0
    %4270 = vmatmul.mubr.f32.gmra.mrb[0].mxu0 %v4167
    %v4271 = vpop.f32.mrb[0].mxu0
    %v4272 = vadd.f32 0.0, %v4271
    %v4273 = vpop.f32.mrb[0].mxu0
    %4274 = vmatprep.mubr.f32.mxu0 0.0
    %4275 = vmatmul.mubr.f32.gmra.mrb[0].mxu0 %v4170
    %v4276 = vpop.f32.mrb[0].mxu0
    %v4277 = vadd.f32 0.0, %v4276
    %v4278 = vpop.f32.mrb[0].mxu0
    %4279 = vmatprep.mubr.f32.mxu0 0.0
    %4280 = vmatmul.mubr.f32.gmra.mrb[0].mxu0 %v4173
    %v4281 = vpop.f32.mrb[0].mxu0
    %v4282 = vadd.f32 0.0, %v4281
    %v4283 = vpop.f32.mrb[0].mxu0
    %4284 = vmatprep.mubr.f32.mxu0 0.0
    %4285 = vmatmul.mubr.f32.gmra.mrb[0].mxu0 %v4176
    %v4286 = vpop.f32.mrb[0].mxu0
    %v4287 = vadd.f32 0.0, %v4286
    %v4288 = vpop.f32.mrb[0].mxu0
    %4289 = vmatprep.mubr.f32.mxu0 0.0
    %4290 = vmatmul.mubr.f32.gmra.mrb[0].mxu0 %v4179
    %v4291 = vpop.f32.mrb[0].mxu0
    %v4292 = vadd.f32 0.0, %v4291
    %v4293 = vpop.f32.mrb[0].mxu0
    %4294 = vmatprep.mubr.f32.mxu0 0.0
    %4295 = vmatmul.mubr.f32.gmra.mrb[0].mxu0 %v4182
    %v4296 = vpop.f32.mrb[0].mxu0
    %v4297 = vadd.f32 0.0, %v4296
    %v4298 = vpop.f32.mrb[0].mxu0
    %4299 = vmatprep.mubr.f32.mxu0 0.0
    %4300 = vmatmul.mubr.f32.gmra.mrb[0].mxu0 %v4185
    %v4301 = vpop.f32.mrb[0].mxu0
    %v4302 = vadd.f32 0.0, %v4301
    %v4303 = vpop.f32.mrb[0].mxu0
    %4304 = vmatprep.mubr.f32.mxu0 0.0
    %4305 = vmatmul.mubr.f32.gmra.mrb[0].mxu0 %v4188
    %v4306 = vpop.f32.mrb[0].mxu0
    %v4307 = vadd.f32 0.0, %v4306
    %v4308 = vpop.f32.mrb[0].mxu0
    %4309 = vmatprep.mubr.f32.mxu0 0.0
    %4310 = vmatmul.mubr.f32.gmra.mrb[0].mxu0 %v4191
    %v4311 = vpop.f32.mrb[0].mxu0
    %v4312 = vadd.f32 0.0, %v4311
    %v4313 = vpop.f32.mrb[0].mxu0
    %4314 = vmatprep.mubr.f32.mxu0 0.0
    %4315 = vmatmul.mubr.f32.gmra.mrb[0].mxu0 %v4194
    %v4316 = vpop.f32.mrb[0].mxu0
    %v4317 = vadd.f32 0.0, %v4316
    %v4318 = vpop.f32.mrb[0].mxu0
    %4319 = vmatprep.mubr.f32.mxu0 0.0
    %4320 = vmatmul.mubr.f32.gmra.mrb[0].mxu0 %v4197
    %v4321 = vpop.f32.mrb[0].mxu0
    %v4322 = vadd.f32 0.0, %v4321
    %v4323 = vpop.f32.mrb[0].mxu0
    %4324 = vmatprep.mubr.f32.mxu0 0.0
    %4325 = vmatmul.mubr.f32.gmra.mrb[0].mxu0 %v4200
    %v4326 = vpop.f32.mrb[0].mxu0
    %v4327 = vadd.f32 0.0, %v4326
    %v4328 = vpop.f32.mrb[0].mxu0
    %4329 = vmatprep.mubr.f32.mxu0 0.0
    %4330 = vmatmul.mubr.f32.gmra.mrb[0].mxu0 %v4203
    %v4331 = vpop.f32.mrb[0].mxu0
    %v4332 = vadd.f32 0.0, %v4331
    %v4333 = vpop.f32.mrb[0].mxu0
    %4334 = vdwg.mxu0
    %v4335 = vadd.f32 %v3799, %v4272
    %v4336 = vadd.f32 %v3800, %v4277
    %v4337 = vadd.f32 %v3801, %v4282
    %v4338 = vadd.f32 %v3802, %v4287
    %v4339 = vadd.f32 %v3803, %v4292
    %v4340 = vadd.f32 %v3804, %v4297
    %v4341 = vadd.f32 %v3805, %v4302
    %v4342 = vadd.f32 %v3806, %v4307
    %v4343 = vadd.f32 %v3807, %v4312
    %v4344 = vadd.f32 %v3808, %v4317
    %v4345 = vadd.f32 %v3809, %v4322
    %v4346 = vadd.f32 %v3810, %v4327
    %v4347 = vadd.f32 %v3811, %v4332
    %s4348 = scalar_lea.vmem %s3, 2912
    %v4349 = vld [vmem:[%s4348] sm:$0xff]
    %v4350 = vld [vmem:[%s4348 + $0x8] sm:$0xff]
    %v4351 = vld [vmem:[%s4348 + $0x10] sm:$0xff]
    %v4352 = vld [vmem:[%s4348 + $0x18] sm:$0xff]
    %v4353 = vld [vmem:[%s4348 + $0x20] sm:$0xff]
    %v4354 = vld [vmem:[%s4348 + $0x28] sm:$0xff]
    %v4355 = vld [vmem:[%s4348 + $0x30] sm:$0xff]
    %v4356 = vld [vmem:[%s4348 + $0x38] sm:$0xff]
    %v4357 = vld [vmem:[%s4348 + $0x40] sm:$0xff]
    %v4358 = vld [vmem:[%s4348 + $0x48] sm:$0xff]
    %v4359 = vld [vmem:[%s4348 + $0x50] sm:$0xff]
    %v4360 = vld [vmem:[%s4348 + $0x58] sm:$0xff]
    %v4361 = vld [vmem:[%s4348 + $0x60] sm:$0xff]
    %v4362 = vld [vmem:[%s4348 + $0x68] sm:$0xff]
    %v4363 = vld [vmem:[%s4348 + $0x70] sm:$0xff]
    %v4364 = vld [vmem:[%s4348 + $0x78] sm:$0xff]
    %v4365 = vld [vmem:[%s4348 + $0x80] sm:$0xff]
    %v4366 = vld [vmem:[%s4348 + $0x88] sm:$0xff]
    %v4367 = vld [vmem:[%s4348 + $0x90] sm:$0xff]
    %v4368 = vld [vmem:[%s4348 + $0x98] sm:$0xff]
    %v4369 = vld [vmem:[%s4348 + $0xa0] sm:$0xff]
    %v4370 = vld [vmem:[%s4348 + $0xa8] sm:$0xff]
    %v4371 = vld [vmem:[%s4348 + $0xb0] sm:$0xff]
    %v4372 = vld [vmem:[%s4348 + $0xb8] sm:$0xff]
    %v4373 = vld [vmem:[%s4348 + $0xc0] sm:$0xff]
    %v4374 = vld [vmem:[%s4348 + $0xc8] sm:$0xff]
    %v4375 = vld [vmem:[%s4348 + $0xd0] sm:$0xff]
    %v4376 = vld [vmem:[%s4348 + $0xd8] sm:$0xff]
    %v4377 = vld [vmem:[%s4348 + $0xe0] sm:$0xff]
    %v4378 = vld [vmem:[%s4348 + $0xe8] sm:$0xff]
    %v4379 = vld [vmem:[%s4348 + $0xf0] sm:$0xff]
    %v4380 = vld [vmem:[%s4348 + $0xf8] sm:$0xff]
    %v4381 = vld [vmem:[%s4348 + $0x100] sm:$0xff]
    %v4382 = vld [vmem:[%s4348 + $0x108] sm:$0xff]
    %v4383 = vld [vmem:[%s4348 + $0x110] sm:$0xff]
    %v4384 = vld [vmem:[%s4348 + $0x118] sm:$0xff]
    %v4385 = vld [vmem:[%s4348 + $0x120] sm:$0xff]
    %v4386 = vld [vmem:[%s4348 + $0x128] sm:$0xff]
    %v4387 = vld [vmem:[%s4348 + $0x130] sm:$0xff]
    %v4388 = vld [vmem:[%s4348 + $0x138] sm:$0xff]
    %v4389 = vld [vmem:[%s4348 + $0x140] sm:$0xff]
    %v4390 = vld [vmem:[%s4348 + $0x148] sm:$0xff]
    %v4391 = vld [vmem:[%s4348 + $0x150] sm:$0xff]
    %v4392 = vld [vmem:[%s4348 + $0x158] sm:$0xff]
    %v4393 = vld [vmem:[%s4348 + $0x160] sm:$0xff]
    %v4394 = vld [vmem:[%s4348 + $0x168] sm:$0xff]
    %v4395 = vld [vmem:[%s4348 + $0x170] sm:$0xff]
    %v4396 = vld [vmem:[%s4348 + $0x178] sm:$0xff]
    %v4397 = vld [vmem:[%s4348 + $0x180] sm:$0x3]
    %v4398 = vld [vmem:[%s4348 + $0x188] sm:$0x3]
    %v4399 = vld [vmem:[%s4348 + $0x190] sm:$0x3]
    %v4400 = vld [vmem:[%s4348 + $0x198] sm:$0x3]
    %v4402 = vsel %vm675, %v4352, 0
    %v4405 = vsel %vm675, %v4356, 0
    %v4408 = vsel %vm675, %v4360, 0
    %v4411 = vsel %vm675, %v4364, 0
    %v4414 = vsel %vm675, %v4368, 0
    %v4417 = vsel %vm675, %v4372, 0
    %v4420 = vsel %vm675, %v4376, 0
    %v4423 = vsel %vm675, %v4380, 0
    %v4426 = vsel %vm675, %v4384, 0
    %v4429 = vsel %vm675, %v4388, 0
    %v4432 = vsel %vm675, %v4392, 0
    %v4435 = vsel %vm675, %v4396, 0
    %v4438 = vsel %vm675, %v4400, 0
    %4440 = vmatprep.subr.mxu0 0.0
    %4441 = vmatpush1.msra.mxu0 %v574
    %4442 = vmatprep.subr.mxu0 0.0
    %4443 = vmatpush1.msra.mxu0 %v575
    %4444 = vmatprep.subr.mxu0 0.0
    %4445 = vmatpush1.msra.mxu0 %v576
    %4446 = vmatprep.subr.mxu0 0.0
    %4447 = vmatpush1.msra.mxu0 %v577
    %4448 = vmatprep.subr.mxu0 0.0
    %4449 = vmatpush1.msra.mxu0 %v578
    %4450 = vmatprep.subr.mxu0 0.0
    %4451 = vmatpush1.msra.mxu0 %v579
    %4452 = vmatprep.subr.mxu0 0.0
    %4453 = vmatpush1.msra.mxu0 %v580
    %4454 = vmatprep.subr.mxu0 0.0
    %4455 = vmatpush1.msra.mxu0 %v581
    %4456 = vmatprep.subr.mxu0 0.0
    %4457 = vmatpush1.msra.mxu0 %v582
    %4458 = vmatprep.subr.mxu0 0.0
    %4459 = vmatpush1.msra.mxu0 %v583
    %4460 = vmatprep.subr.mxu0 0.0
    %4461 = vmatpush1.msra.mxu0 %v584
    %4462 = vmatprep.subr.mxu0 0.0
    %4463 = vmatpush1.msra.mxu0 %v585
    %4464 = vmatprep.subr.mxu0 0.0
    %4465 = vmatpush1.msra.mxu0 %v586
    %4466 = vmatprep.subr.mxu0 0.0
    %4467 = vmatpush1.msra.mxu0 %v587
    %4468 = vmatprep.subr.mxu0 0.0
    %4469 = vmatpush1.msra.mxu0 %v588
    %4470 = vmatprep.subr.mxu0 0.0
    %4471 = vmatpush1.msra.mxu0 %v589
    %4472 = vmatprep.subr.mxu0 0.0
    %4473 = vmatpush1.msra.mxu0 %v590
    %4474 = vmatprep.subr.mxu0 0.0
    %4475 = vmatpush1.msra.mxu0 %v591
    %4476 = vmatprep.subr.mxu0 0.0
    %4477 = vmatpush1.msra.mxu0 %v592
    %4478 = vmatprep.subr.mxu0 0.0
    %4479 = vmatpush1.msra.mxu0 %v593
    %4480 = vmatprep.subr.mxu0 0.0
    %4481 = vmatpush1.msra.mxu0 %v594
    %4482 = vmatprep.subr.mxu0 0.0
    %4483 = vmatpush1.msra.mxu0 %v595
    %4484 = vmatprep.subr.mxu0 0.0
    %4485 = vmatpush1.msra.mxu0 %v596
    %4486 = vmatprep.subr.mxu0 0.0
    %4487 = vmatpush1.msra.mxu0 %v597
    %4488 = vmatprep.subr.mxu0 0.0
    %4489 = vmatpush1.msra.mxu0 %v598
    %4490 = vmatprep.subr.mxu0 0.0
    %4491 = vmatpush1.msra.mxu0 %v599
    %4492 = vmatprep.subr.mxu0 0.0
    %4493 = vmatpush1.msra.mxu0 %v600
    %4494 = vmatprep.subr.mxu0 0.0
    %4495 = vmatpush1.msra.mxu0 %v601
    %4496 = vmatprep.subr.mxu0 0.0
    %4497 = vmatpush1.msra.mxu0 %v602
    %4498 = vmatprep.subr.mxu0 0.0
    %4499 = vmatpush1.msra.mxu0 %v603
    %4500 = vmatprep.subr.mxu0 0.0
    %4501 = vmatpush1.msra.mxu0 %v604
    %4502 = vmatprep.subr.mxu0 0.0
    %4503 = vmatpush1.msra.mxu0 %v605
    %4504 = vmatprep.mubr.f32.mxu0 %v4350
    %4505 = vmatmul.mubr.f32.gmra.mrb[0].mxu0 %v4349
    %v4506 = vpop.f32.mrb[0].mxu0
    %v4507 = vadd.f32 0.0, %v4506
    %v4508 = vpop.f32.mrb[0].mxu0
    %4509 = vmatprep.mubr.f32.mxu0 %v4354
    %4510 = vmatmul.mubr.f32.gmra.mrb[0].mxu0 %v4353
    %v4511 = vpop.f32.mrb[0].mxu0
    %v4512 = vadd.f32 0.0, %v4511
    %v4513 = vpop.f32.mrb[0].mxu0
    %4514 = vmatprep.mubr.f32.mxu0 %v4358
    %4515 = vmatmul.mubr.f32.gmra.mrb[0].mxu0 %v4357
    %v4516 = vpop.f32.mrb[0].mxu0
    %v4517 = vadd.f32 0.0, %v4516
    %v4518 = vpop.f32.mrb[0].mxu0
    %4519 = vmatprep.mubr.f32.mxu0 %v4362
    %4520 = vmatmul.mubr.f32.gmra.mrb[0].mxu0 %v4361
    %v4521 = vpop.f32.mrb[0].mxu0
    %v4522 = vadd.f32 0.0, %v4521
    %v4523 = vpop.f32.mrb[0].mxu0
    %4524 = vmatprep.mubr.f32.mxu0 %v4366
    %4525 = vmatmul.mubr.f32.gmra.mrb[0].mxu0 %v4365
    %v4526 = vpop.f32.mrb[0].mxu0
    %v4527 = vadd.f32 0.0, %v4526
    %v4528 = vpop.f32.mrb[0].mxu0
    %4529 = vmatprep.mubr.f32.mxu0 %v4370
    %4530 = vmatmul.mubr.f32.gmra.mrb[0].mxu0 %v4369
    %v4531 = vpop.f32.mrb[0].mxu0
    %v4532 = vadd.f32 0.0, %v4531
    %v4533 = vpop.f32.mrb[0].mxu0
    %4534 = vmatprep.mubr.f32.mxu0 %v4374
    %4535 = vmatmul.mubr.f32.gmra.mrb[0].mxu0 %v4373
    %v4536 = vpop.f32.mrb[0].mxu0
    %v4537 = vadd.f32 0.0, %v4536
    %v4538 = vpop.f32.mrb[0].mxu0
    %4539 = vmatprep.mubr.f32.mxu0 %v4378
    %4540 = vmatmul.mubr.f32.gmra.mrb[0].mxu0 %v4377
    %v4541 = vpop.f32.mrb[0].mxu0
    %v4542 = vadd.f32 0.0, %v4541
    %v4543 = vpop.f32.mrb[0].mxu0
    %4544 = vmatprep.mubr.f32.mxu0 %v4382
    %4545 = vmatmul.mubr.f32.gmra.mrb[0].mxu0 %v4381
    %v4546 = vpop.f32.mrb[0].mxu0
    %v4547 = vadd.f32 0.0, %v4546
    %v4548 = vpop.f32.mrb[0].mxu0
    %4549 = vmatprep.mubr.f32.mxu0 %v4386
    %4550 = vmatmul.mubr.f32.gmra.mrb[0].mxu0 %v4385
    %v4551 = vpop.f32.mrb[0].mxu0
    %v4552 = vadd.f32 0.0, %v4551
    %v4553 = vpop.f32.mrb[0].mxu0
    %4554 = vmatprep.mubr.f32.mxu0 %v4390
    %4555 = vmatmul.mubr.f32.gmra.mrb[0].mxu0 %v4389
    %v4556 = vpop.f32.mrb[0].mxu0
    %v4557 = vadd.f32 0.0, %v4556
    %v4558 = vpop.f32.mrb[0].mxu0
    %4559 = vmatprep.mubr.f32.mxu0 %v4394
    %4560 = vmatmul.mubr.f32.gmra.mrb[0].mxu0 %v4393
    %v4561 = vpop.f32.mrb[0].mxu0
    %v4562 = vadd.f32 0.0, %v4561
    %v4563 = vpop.f32.mrb[0].mxu0
    %4564 = vmatprep.mubr.f32.mxu0 %v4398
    %4565 = vmatmul.mubr.f32.gmra.mrb[0].mxu0 %v4397
    %v4566 = vpop.f32.mrb[0].mxu0
    %v4567 = vadd.f32 0.0, %v4566
    %v4568 = vpop.f32.mrb[0].mxu0
    %4569 = vdwg.mxu0
    %4570 = vmatprep.subr.mxu0 0.0
    %4571 = vmatpush1.msra.mxu0 %v606
    %4572 = vmatprep.subr.mxu0 0.0
    %4573 = vmatpush1.msra.mxu0 %v607
    %4574 = vmatprep.subr.mxu0 0.0
    %4575 = vmatpush1.msra.mxu0 %v608
    %4576 = vmatprep.subr.mxu0 0.0
    %4577 = vmatpush1.msra.mxu0 %v609
    %4578 = vmatprep.subr.mxu0 0.0
    %4579 = vmatpush1.msra.mxu0 %v610
    %4580 = vmatprep.subr.mxu0 0.0
    %4581 = vmatpush1.msra.mxu0 %v611
    %4582 = vmatprep.subr.mxu0 0.0
    %4583 = vmatpush1.msra.mxu0 %v612
    %4584 = vmatprep.subr.mxu0 0.0
    %4585 = vmatpush1.msra.mxu0 %v613
    %4586 = vmatprep.subr.mxu0 0.0
    %4587 = vmatpush1.msra.mxu0 %v614
    %4588 = vmatprep.subr.mxu0 0.0
    %4589 = vmatpush1.msra.mxu0 %v615
    %4590 = vmatprep.subr.mxu0 0.0
    %4591 = vmatpush1.msra.mxu0 %v616
    %4592 = vmatprep.subr.mxu0 0.0
    %4593 = vmatpush1.msra.mxu0 %v617
    %4594 = vmatprep.subr.mxu0 0.0
    %4595 = vmatpush1.msra.mxu0 %v618
    %4596 = vmatprep.subr.mxu0 0.0
    %4597 = vmatpush1.msra.mxu0 %v619
    %4598 = vmatprep.subr.mxu0 0.0
    %4599 = vmatpush1.msra.mxu0 %v620
    %4600 = vmatprep.subr.mxu0 0.0
    %4601 = vmatpush1.msra.mxu0 %v621
    %4602 = vmatprep.subr.mxu0 0.0
    %4603 = vmatpush1.msra.mxu0 %v622
    %4604 = vmatprep.subr.mxu0 0.0
    %4605 = vmatpush1.msra.mxu0 0.0
    %4606 = vmatprep.subr.mxu0 0.0
    %4607 = vmatpush1.msra.mxu0 0.0
    %4608 = vmatprep.subr.mxu0 0.0
    %4609 = vmatpush1.msra.mxu0 0.0
    %4610 = vmatprep.subr.mxu0 0.0
    %4611 = vmatpush1.msra.mxu0 0.0
    %4612 = vmatprep.subr.mxu0 0.0
    %4613 = vmatpush1.msra.mxu0 0.0
    %4614 = vmatprep.subr.mxu0 0.0
    %4615 = vmatpush1.msra.mxu0 0.0
    %4616 = vmatprep.subr.mxu0 0.0
    %4617 = vmatpush1.msra.mxu0 0.0
    %4618 = vmatprep.subr.mxu0 0.0
    %4619 = vmatpush1.msra.mxu0 0.0
    %4620 = vmatprep.subr.mxu0 0.0
    %4621 = vmatpush1.msra.mxu0 0.0
    %4622 = vmatprep.subr.mxu0 0.0
    %4623 = vmatpush1.msra.mxu0 0.0
    %4624 = vmatprep.subr.mxu0 0.0
    %4625 = vmatpush1.msra.mxu0 0.0
    %4626 = vmatprep.subr.mxu0 0.0
    %4627 = vmatpush1.msra.mxu0 0.0
    %4628 = vmatprep.subr.mxu0 0.0
    %4629 = vmatpush1.msra.mxu0 0.0
    %4630 = vmatprep.subr.mxu0 0.0
    %4631 = vmatpush1.msra.mxu0 0.0
    %4632 = vmatprep.subr.mxu0 0.0
    %4633 = vmatpush1.msra.mxu0 0.0
    %4634 = vmatprep.mubr.f32.mxu0 %v4402
    %4635 = vmatmul.mubr.f32.gmra.mrb[0].mxu0 %v4351
    %v4636 = vpop.f32.mrb[0].mxu0
    %v4637 = vadd.f32 %v4507, %v4636
    %v4638 = vpop.f32.mrb[0].mxu0
    %4639 = vmatprep.mubr.f32.mxu0 %v4405
    %4640 = vmatmul.mubr.f32.gmra.mrb[0].mxu0 %v4355
    %v4641 = vpop.f32.mrb[0].mxu0
    %v4642 = vadd.f32 %v4512, %v4641
    %v4643 = vpop.f32.mrb[0].mxu0
    %4644 = vmatprep.mubr.f32.mxu0 %v4408
    %4645 = vmatmul.mubr.f32.gmra.mrb[0].mxu0 %v4359
    %v4646 = vpop.f32.mrb[0].mxu0
    %v4647 = vadd.f32 %v4517, %v4646
    %v4648 = vpop.f32.mrb[0].mxu0
    %4649 = vmatprep.mubr.f32.mxu0 %v4411
    %4650 = vmatmul.mubr.f32.gmra.mrb[0].mxu0 %v4363
    %v4651 = vpop.f32.mrb[0].mxu0
    %v4652 = vadd.f32 %v4522, %v4651
    %v4653 = vpop.f32.mrb[0].mxu0
    %4654 = vmatprep.mubr.f32.mxu0 %v4414
    %4655 = vmatmul.mubr.f32.gmra.mrb[0].mxu0 %v4367
    %v4656 = vpop.f32.mrb[0].mxu0
    %v4657 = vadd.f32 %v4527, %v4656
    %v4658 = vpop.f32.mrb[0].mxu0
    %4659 = vmatprep.mubr.f32.mxu0 %v4417
    %4660 = vmatmul.mubr.f32.gmra.mrb[0].mxu0 %v4371
    %v4661 = vpop.f32.mrb[0].mxu0
    %v4662 = vadd.f32 %v4532, %v4661
    %v4663 = vpop.f32.mrb[0].mxu0
    %4664 = vmatprep.mubr.f32.mxu0 %v4420
    %4665 = vmatmul.mubr.f32.gmra.mrb[0].mxu0 %v4375
    %v4666 = vpop.f32.mrb[0].mxu0
    %v4667 = vadd.f32 %v4537, %v4666
    %v4668 = vpop.f32.mrb[0].mxu0
    %4669 = vmatprep.mubr.f32.mxu0 %v4423
    %4670 = vmatmul.mubr.f32.gmra.mrb[0].mxu0 %v4379
    %v4671 = vpop.f32.mrb[0].mxu0
    %v4672 = vadd.f32 %v4542, %v4671
    %v4673 = vpop.f32.mrb[0].mxu0
    %4674 = vmatprep.mubr.f32.mxu0 %v4426
    %4675 = vmatmul.mubr.f32.gmra.mrb[0].mxu0 %v4383
    %v4676 = vpop.f32.mrb[0].mxu0
    %v4677 = vadd.f32 %v4547, %v4676
    %v4678 = vpop.f32.mrb[0].mxu0
    %4679 = vmatprep.mubr.f32.mxu0 %v4429
    %4680 = vmatmul.mubr.f32.gmra.mrb[0].mxu0 %v4387
    %v4681 = vpop.f32.mrb[0].mxu0
    %v4682 = vadd.f32 %v4552, %v4681
    %v4683 = vpop.f32.mrb[0].mxu0
    %4684 = vmatprep.mubr.f32.mxu0 %v4432
    %4685 = vmatmul.mubr.f32.gmra.mrb[0].mxu0 %v4391
    %v4686 = vpop.f32.mrb[0].mxu0
    %v4687 = vadd.f32 %v4557, %v4686
    %v4688 = vpop.f32.mrb[0].mxu0
    %4689 = vmatprep.mubr.f32.mxu0 %v4435
    %4690 = vmatmul.mubr.f32.gmra.mrb[0].mxu0 %v4395
    %v4691 = vpop.f32.mrb[0].mxu0
    %v4692 = vadd.f32 %v4562, %v4691
    %v4693 = vpop.f32.mrb[0].mxu0
    %4694 = vmatprep.mubr.f32.mxu0 %v4438
    %4695 = vmatmul.mubr.f32.gmra.mrb[0].mxu0 %v4399
    %v4696 = vpop.f32.mrb[0].mxu0
    %v4697 = vadd.f32 %v4567, %v4696
    %v4698 = vpop.f32.mrb[0].mxu0
    %4699 = vdwg.mxu0
    %s4700 = scalar_lea.vmem %s4, 56
    %v4701 = vld [vmem:[%s4700] sm:$0xff]
    %v4703 = vsel %vm675, %v4637, 0
    %v4706 = vsel %vm675, %v4642, 0
    %v4709 = vsel %vm675, %v4647, 0
    %v4712 = vsel %vm675, %v4652, 0
    %v4715 = vsel %vm675, %v4657, 0
    %v4718 = vsel %vm675, %v4662, 0
    %v4721 = vsel %vm675, %v4667, 0
    %v4724 = vsel %vm675, %v4672, 0
    %v4727 = vsel %vm675, %v4677, 0
    %v4730 = vsel %vm675, %v4682, 0
    %v4733 = vsel %vm675, %v4687, 0
    %v4736 = vsel %vm675, %v4692, 0
    %v4739 = vsel %vm675, %v4697, 0
    %4741 = vmatprep.subr.mxu0 0.0
    %4742 = vmatpush1.msra.mxu0 %v4701
    %4743 = vmatprep.subr.mxu0 0.0
    %4744 = vmatpush1.msra.mxu0 0.0
    %4745 = vmatprep.subr.mxu0 0.0
    %4746 = vmatpush1.msra.mxu0 0.0
    %4747 = vmatprep.subr.mxu0 0.0
    %4748 = vmatpush1.msra.mxu0 0.0
    %4749 = vmatprep.subr.mxu0 0.0
    %4750 = vmatpush1.msra.mxu0 0.0
    %4751 = vmatprep.subr.mxu0 0.0
    %4752 = vmatpush1.msra.mxu0 0.0
    %4753 = vmatprep.subr.mxu0 0.0
    %4754 = vmatpush1.msra.mxu0 0.0
    %4755 = vmatprep.subr.mxu0 0.0
    %4756 = vmatpush1.msra.mxu0 0.0
    %4757 = vmatprep.subr.mxu0 0.0
    %4758 = vmatpush1.msra.mxu0 0.0
    %4759 = vmatprep.subr.mxu0 0.0
    %4760 = vmatpush1.msra.mxu0 0.0
    %4761 = vmatprep.subr.mxu0 0.0
    %4762 = vmatpush1.msra.mxu0 0.0
    %4763 = vmatprep.subr.mxu0 0.0
    %4764 = vmatpush1.msra.mxu0 0.0
    %4765 = vmatprep.subr.mxu0 0.0
    %4766 = vmatpush1.msra.mxu0 0.0
    %4767 = vmatprep.subr.mxu0 0.0
    %4768 = vmatpush1.msra.mxu0 0.0
    %4769 = vmatprep.subr.mxu0 0.0
    %4770 = vmatpush1.msra.mxu0 0.0
    %4771 = vmatprep.subr.mxu0 0.0
    %4772 = vmatpush1.msra.mxu0 0.0
    %4773 = vmatprep.subr.mxu0 0.0
    %4774 = vmatpush1.msra.mxu0 0.0
    %4775 = vmatprep.subr.mxu0 0.0
    %4776 = vmatpush1.msra.mxu0 0.0
    %4777 = vmatprep.subr.mxu0 0.0
    %4778 = vmatpush1.msra.mxu0 0.0
    %4779 = vmatprep.subr.mxu0 0.0
    %4780 = vmatpush1.msra.mxu0 0.0
    %4781 = vmatprep.subr.mxu0 0.0
    %4782 = vmatpush1.msra.mxu0 0.0
    %4783 = vmatprep.subr.mxu0 0.0
    %4784 = vmatpush1.msra.mxu0 0.0
    %4785 = vmatprep.subr.mxu0 0.0
    %4786 = vmatpush1.msra.mxu0 0.0
    %4787 = vmatprep.subr.mxu0 0.0
    %4788 = vmatpush1.msra.mxu0 0.0
    %4789 = vmatprep.subr.mxu0 0.0
    %4790 = vmatpush1.msra.mxu0 0.0
    %4791 = vmatprep.subr.mxu0 0.0
    %4792 = vmatpush1.msra.mxu0 0.0
    %4793 = vmatprep.subr.mxu0 0.0
    %4794 = vmatpush1.msra.mxu0 0.0
    %4795 = vmatprep.subr.mxu0 0.0
    %4796 = vmatpush1.msra.mxu0 0.0
    %4797 = vmatprep.subr.mxu0 0.0
    %4798 = vmatpush1.msra.mxu0 0.0
    %4799 = vmatprep.subr.mxu0 0.0
    %4800 = vmatpush1.msra.mxu0 0.0
    %4801 = vmatprep.subr.mxu0 0.0
    %4802 = vmatpush1.msra.mxu0 0.0
    %4803 = vmatprep.subr.mxu0 0.0
    %4804 = vmatpush1.msra.mxu0 0.0
    %4805 = vmatprep.mubr.f32.mxu0 0.0
    %4806 = vmatmul.mubr.f32.gmra.mrb[0].mxu0 %v4703
    %v4807 = vpop.f32.mrb[0].mxu0
    %v4808 = vadd.f32 0.0, %v4807
    %v4809 = vpop.f32.mrb[0].mxu0
    %4810 = vmatprep.mubr.f32.mxu0 0.0
    %4811 = vmatmul.mubr.f32.gmra.mrb[0].mxu0 %v4706
    %v4812 = vpop.f32.mrb[0].mxu0
    %v4813 = vadd.f32 0.0, %v4812
    %v4814 = vpop.f32.mrb[0].mxu0
    %4815 = vmatprep.mubr.f32.mxu0 0.0
    %4816 = vmatmul.mubr.f32.gmra.mrb[0].mxu0 %v4709
    %v4817 = vpop.f32.mrb[0].mxu0
    %v4818 = vadd.f32 0.0, %v4817
    %v4819 = vpop.f32.mrb[0].mxu0
    %4820 = vmatprep.mubr.f32.mxu0 0.0
    %4821 = vmatmul.mubr.f32.gmra.mrb[0].mxu0 %v4712
    %v4822 = vpop.f32.mrb[0].mxu0
    %v4823 = vadd.f32 0.0, %v4822
    %v4824 = vpop.f32.mrb[0].mxu0
    %4825 = vmatprep.mubr.f32.mxu0 0.0
    %4826 = vmatmul.mubr.f32.gmra.mrb[0].mxu0 %v4715
    %v4827 = vpop.f32.mrb[0].mxu0
    %v4828 = vadd.f32 0.0, %v4827
    %v4829 = vpop.f32.mrb[0].mxu0
    %4830 = vmatprep.mubr.f32.mxu0 0.0
    %4831 = vmatmul.mubr.f32.gmra.mrb[0].mxu0 %v4718
    %v4832 = vpop.f32.mrb[0].mxu0
    %v4833 = vadd.f32 0.0, %v4832
    %v4834 = vpop.f32.mrb[0].mxu0
    %4835 = vmatprep.mubr.f32.mxu0 0.0
    %4836 = vmatmul.mubr.f32.gmra.mrb[0].mxu0 %v4721
    %v4837 = vpop.f32.mrb[0].mxu0
    %v4838 = vadd.f32 0.0, %v4837
    %v4839 = vpop.f32.mrb[0].mxu0
    %4840 = vmatprep.mubr.f32.mxu0 0.0
    %4841 = vmatmul.mubr.f32.gmra.mrb[0].mxu0 %v4724
    %v4842 = vpop.f32.mrb[0].mxu0
    %v4843 = vadd.f32 0.0, %v4842
    %v4844 = vpop.f32.mrb[0].mxu0
    %4845 = vmatprep.mubr.f32.mxu0 0.0
    %4846 = vmatmul.mubr.f32.gmra.mrb[0].mxu0 %v4727
    %v4847 = vpop.f32.mrb[0].mxu0
    %v4848 = vadd.f32 0.0, %v4847
    %v4849 = vpop.f32.mrb[0].mxu0
    %4850 = vmatprep.mubr.f32.mxu0 0.0
    %4851 = vmatmul.mubr.f32.gmra.mrb[0].mxu0 %v4730
    %v4852 = vpop.f32.mrb[0].mxu0
    %v4853 = vadd.f32 0.0, %v4852
    %v4854 = vpop.f32.mrb[0].mxu0
    %4855 = vmatprep.mubr.f32.mxu0 0.0
    %4856 = vmatmul.mubr.f32.gmra.mrb[0].mxu0 %v4733
    %v4857 = vpop.f32.mrb[0].mxu0
    %v4858 = vadd.f32 0.0, %v4857
    %v4859 = vpop.f32.mrb[0].mxu0
    %4860 = vmatprep.mubr.f32.mxu0 0.0
    %4861 = vmatmul.mubr.f32.gmra.mrb[0].mxu0 %v4736
    %v4862 = vpop.f32.mrb[0].mxu0
    %v4863 = vadd.f32 0.0, %v4862
    %v4864 = vpop.f32.mrb[0].mxu0
    %4865 = vmatprep.mubr.f32.mxu0 0.0
    %4866 = vmatmul.mubr.f32.gmra.mrb[0].mxu0 %v4739
    %v4867 = vpop.f32.mrb[0].mxu0
    %v4868 = vadd.f32 0.0, %v4867
    %v4869 = vpop.f32.mrb[0].mxu0
    %4870 = vdwg.mxu0
    %v4871 = vadd.f32 %v4335, %v4808
    %v4872 = vadd.f32 %v4336, %v4813
    %v4873 = vadd.f32 %v4337, %v4818
    %v4874 = vadd.f32 %v4338, %v4823
    %v4875 = vadd.f32 %v4339, %v4828
    %v4876 = vadd.f32 %v4340, %v4833
    %v4877 = vadd.f32 %v4341, %v4838
    %v4878 = vadd.f32 %v4342, %v4843
    %v4879 = vadd.f32 %v4343, %v4848
    %v4880 = vadd.f32 %v4344, %v4853
    %v4881 = vadd.f32 %v4345, %v4858
    %v4882 = vadd.f32 %v4346, %v4863
    %v4883 = vadd.f32 %v4347, %v4868
    %s4884 = scalar_lea.vmem %s3, 3328
    %v4885 = vld [vmem:[%s4884] sm:$0xff]
    %v4886 = vld [vmem:[%s4884 + $0x8] sm:$0xff]
    %v4887 = vld [vmem:[%s4884 + $0x10] sm:$0xff]
    %v4888 = vld [vmem:[%s4884 + $0x18] sm:$0xff]
    %v4889 = vld [vmem:[%s4884 + $0x20] sm:$0xff]
    %v4890 = vld [vmem:[%s4884 + $0x28] sm:$0xff]
    %v4891 = vld [vmem:[%s4884 + $0x30] sm:$0xff]
    %v4892 = vld [vmem:[%s4884 + $0x38] sm:$0xff]
    %v4893 = vld [vmem:[%s4884 + $0x40] sm:$0xff]
    %v4894 = vld [vmem:[%s4884 + $0x48] sm:$0xff]
    %v4895 = vld [vmem:[%s4884 + $0x50] sm:$0xff]
    %v4896 = vld [vmem:[%s4884 + $0x58] sm:$0xff]
    %v4897 = vld [vmem:[%s4884 + $0x60] sm:$0xff]
    %v4898 = vld [vmem:[%s4884 + $0x68] sm:$0xff]
    %v4899 = vld [vmem:[%s4884 + $0x70] sm:$0xff]
    %v4900 = vld [vmem:[%s4884 + $0x78] sm:$0xff]
    %v4901 = vld [vmem:[%s4884 + $0x80] sm:$0xff]
    %v4902 = vld [vmem:[%s4884 + $0x88] sm:$0xff]
    %v4903 = vld [vmem:[%s4884 + $0x90] sm:$0xff]
    %v4904 = vld [vmem:[%s4884 + $0x98] sm:$0xff]
    %v4905 = vld [vmem:[%s4884 + $0xa0] sm:$0xff]
    %v4906 = vld [vmem:[%s4884 + $0xa8] sm:$0xff]
    %v4907 = vld [vmem:[%s4884 + $0xb0] sm:$0xff]
    %v4908 = vld [vmem:[%s4884 + $0xb8] sm:$0xff]
    %v4909 = vld [vmem:[%s4884 + $0xc0] sm:$0xff]
    %v4910 = vld [vmem:[%s4884 + $0xc8] sm:$0xff]
    %v4911 = vld [vmem:[%s4884 + $0xd0] sm:$0xff]
    %v4912 = vld [vmem:[%s4884 + $0xd8] sm:$0xff]
    %v4913 = vld [vmem:[%s4884 + $0xe0] sm:$0xff]
    %v4914 = vld [vmem:[%s4884 + $0xe8] sm:$0xff]
    %v4915 = vld [vmem:[%s4884 + $0xf0] sm:$0xff]
    %v4916 = vld [vmem:[%s4884 + $0xf8] sm:$0xff]
    %v4917 = vld [vmem:[%s4884 + $0x100] sm:$0xff]
    %v4918 = vld [vmem:[%s4884 + $0x108] sm:$0xff]
    %v4919 = vld [vmem:[%s4884 + $0x110] sm:$0xff]
    %v4920 = vld [vmem:[%s4884 + $0x118] sm:$0xff]
    %v4921 = vld [vmem:[%s4884 + $0x120] sm:$0xff]
    %v4922 = vld [vmem:[%s4884 + $0x128] sm:$0xff]
    %v4923 = vld [vmem:[%s4884 + $0x130] sm:$0xff]
    %v4924 = vld [vmem:[%s4884 + $0x138] sm:$0xff]
    %v4925 = vld [vmem:[%s4884 + $0x140] sm:$0xff]
    %v4926 = vld [vmem:[%s4884 + $0x148] sm:$0xff]
    %v4927 = vld [vmem:[%s4884 + $0x150] sm:$0xff]
    %v4928 = vld [vmem:[%s4884 + $0x158] sm:$0xff]
    %v4929 = vld [vmem:[%s4884 + $0x160] sm:$0xff]
    %v4930 = vld [vmem:[%s4884 + $0x168] sm:$0xff]
    %v4931 = vld [vmem:[%s4884 + $0x170] sm:$0xff]
    %v4932 = vld [vmem:[%s4884 + $0x178] sm:$0xff]
    %v4933 = vld [vmem:[%s4884 + $0x180] sm:$0x3]
    %v4934 = vld [vmem:[%s4884 + $0x188] sm:$0x3]
    %v4935 = vld [vmem:[%s4884 + $0x190] sm:$0x3]
    %v4936 = vld [vmem:[%s4884 + $0x198] sm:$0x3]
    %v4938 = vsel %vm675, %v4888, 0
    %v4941 = vsel %vm675, %v4892, 0
    %v4944 = vsel %vm675, %v4896, 0
    %v4947 = vsel %vm675, %v4900, 0
    %v4950 = vsel %vm675, %v4904, 0
    %v4953 = vsel %vm675, %v4908, 0
    %v4956 = vsel %vm675, %v4912, 0
    %v4959 = vsel %vm675, %v4916, 0
    %v4962 = vsel %vm675, %v4920, 0
    %v4965 = vsel %vm675, %v4924, 0
    %v4968 = vsel %vm675, %v4928, 0
    %v4971 = vsel %vm675, %v4932, 0
    %v4974 = vsel %vm675, %v4936, 0
    %4976 = vmatprep.subr.mxu0 0.0
    %4977 = vmatpush1.msra.mxu0 %v574
    %4978 = vmatprep.subr.mxu0 0.0
    %4979 = vmatpush1.msra.mxu0 %v575
    %4980 = vmatprep.subr.mxu0 0.0
    %4981 = vmatpush1.msra.mxu0 %v576
    %4982 = vmatprep.subr.mxu0 0.0
    %4983 = vmatpush1.msra.mxu0 %v577
    %4984 = vmatprep.subr.mxu0 0.0
    %4985 = vmatpush1.msra.mxu0 %v578
    %4986 = vmatprep.subr.mxu0 0.0
    %4987 = vmatpush1.msra.mxu0 %v579
    %4988 = vmatprep.subr.mxu0 0.0
    %4989 = vmatpush1.msra.mxu0 %v580
    %4990 = vmatprep.subr.mxu0 0.0
    %4991 = vmatpush1.msra.mxu0 %v581
    %4992 = vmatprep.subr.mxu0 0.0
    %4993 = vmatpush1.msra.mxu0 %v582
    %4994 = vmatprep.subr.mxu0 0.0
    %4995 = vmatpush1.msra.mxu0 %v583
    %4996 = vmatprep.subr.mxu0 0.0
    %4997 = vmatpush1.msra.mxu0 %v584
    %4998 = vmatprep.subr.mxu0 0.0
    %4999 = vmatpush1.msra.mxu0 %v585
    %5000 = vmatprep.subr.mxu0 0.0
    %5001 = vmatpush1.msra.mxu0 %v586
    %5002 = vmatprep.subr.mxu0 0.0
    %5003 = vmatpush1.msra.mxu0 %v587
    %5004 = vmatprep.subr.mxu0 0.0
    %5005 = vmatpush1.msra.mxu0 %v588
    %5006 = vmatprep.subr.mxu0 0.0
    %5007 = vmatpush1.msra.mxu0 %v589
    %5008 = vmatprep.subr.mxu0 0.0
    %5009 = vmatpush1.msra.mxu0 %v590
    %5010 = vmatprep.subr.mxu0 0.0
    %5011 = vmatpush1.msra.mxu0 %v591
    %5012 = vmatprep.subr.mxu0 0.0
    %5013 = vmatpush1.msra.mxu0 %v592
    %5014 = vmatprep.subr.mxu0 0.0
    %5015 = vmatpush1.msra.mxu0 %v593
    %5016 = vmatprep.subr.mxu0 0.0
    %5017 = vmatpush1.msra.mxu0 %v594
    %5018 = vmatprep.subr.mxu0 0.0
    %5019 = vmatpush1.msra.mxu0 %v595
    %5020 = vmatprep.subr.mxu0 0.0
    %5021 = vmatpush1.msra.mxu0 %v596
    %5022 = vmatprep.subr.mxu0 0.0
    %5023 = vmatpush1.msra.mxu0 %v597
    %5024 = vmatprep.subr.mxu0 0.0
    %5025 = vmatpush1.msra.mxu0 %v598
    %5026 = vmatprep.subr.mxu0 0.0
    %5027 = vmatpush1.msra.mxu0 %v599
    %5028 = vmatprep.subr.mxu0 0.0
    %5029 = vmatpush1.msra.mxu0 %v600
    %5030 = vmatprep.subr.mxu0 0.0
    %5031 = vmatpush1.msra.mxu0 %v601
    %5032 = vmatprep.subr.mxu0 0.0
    %5033 = vmatpush1.msra.mxu0 %v602
    %5034 = vmatprep.subr.mxu0 0.0
    %5035 = vmatpush1.msra.mxu0 %v603
    %5036 = vmatprep.subr.mxu0 0.0
    %5037 = vmatpush1.msra.mxu0 %v604
    %5038 = vmatprep.subr.mxu0 0.0
    %5039 = vmatpush1.msra.mxu0 %v605
    %5040 = vmatprep.mubr.f32.mxu0 %v4886
    %5041 = vmatmul.mubr.f32.gmra.mrb[0].mxu0 %v4885
    %v5042 = vpop.f32.mrb[0].mxu0
    %v5043 = vadd.f32 0.0, %v5042
    %v5044 = vpop.f32.mrb[0].mxu0
    %5045 = vmatprep.mubr.f32.mxu0 %v4890
    %5046 = vmatmul.mubr.f32.gmra.mrb[0].mxu0 %v4889
    %v5047 = vpop.f32.mrb[0].mxu0
    %v5048 = vadd.f32 0.0, %v5047
    %v5049 = vpop.f32.mrb[0].mxu0
    %5050 = vmatprep.mubr.f32.mxu0 %v4894
    %5051 = vmatmul.mubr.f32.gmra.mrb[0].mxu0 %v4893
    %v5052 = vpop.f32.mrb[0].mxu0
    %v5053 = vadd.f32 0.0, %v5052
    %v5054 = vpop.f32.mrb[0].mxu0
    %5055 = vmatprep.mubr.f32.mxu0 %v4898
    %5056 = vmatmul.mubr.f32.gmra.mrb[0].mxu0 %v4897
    %v5057 = vpop.f32.mrb[0].mxu0
    %v5058 = vadd.f32 0.0, %v5057
    %v5059 = vpop.f32.mrb[0].mxu0
    %5060 = vmatprep.mubr.f32.mxu0 %v4902
    %5061 = vmatmul.mubr.f32.gmra.mrb[0].mxu0 %v4901
    %v5062 = vpop.f32.mrb[0].mxu0
    %v5063 = vadd.f32 0.0, %v5062
    %v5064 = vpop.f32.mrb[0].mxu0
    %5065 = vmatprep.mubr.f32.mxu0 %v4906
    %5066 = vmatmul.mubr.f32.gmra.mrb[0].mxu0 %v4905
    %v5067 = vpop.f32.mrb[0].mxu0
    %v5068 = vadd.f32 0.0, %v5067
    %v5069 = vpop.f32.mrb[0].mxu0
    %5070 = vmatprep.mubr.f32.mxu0 %v4910
    %5071 = vmatmul.mubr.f32.gmra.mrb[0].mxu0 %v4909
    %v5072 = vpop.f32.mrb[0].mxu0
    %v5073 = vadd.f32 0.0, %v5072
    %v5074 = vpop.f32.mrb[0].mxu0
    %5075 = vmatprep.mubr.f32.mxu0 %v4914
    %5076 = vmatmul.mubr.f32.gmra.mrb[0].mxu0 %v4913
    %v5077 = vpop.f32.mrb[0].mxu0
    %v5078 = vadd.f32 0.0, %v5077
    %v5079 = vpop.f32.mrb[0].mxu0
    %5080 = vmatprep.mubr.f32.mxu0 %v4918
    %5081 = vmatmul.mubr.f32.gmra.mrb[0].mxu0 %v4917
    %v5082 = vpop.f32.mrb[0].mxu0
    %v5083 = vadd.f32 0.0, %v5082
    %v5084 = vpop.f32.mrb[0].mxu0
    %5085 = vmatprep.mubr.f32.mxu0 %v4922
    %5086 = vmatmul.mubr.f32.gmra.mrb[0].mxu0 %v4921
    %v5087 = vpop.f32.mrb[0].mxu0
    %v5088 = vadd.f32 0.0, %v5087
    %v5089 = vpop.f32.mrb[0].mxu0
    %5090 = vmatprep.mubr.f32.mxu0 %v4926
    %5091 = vmatmul.mubr.f32.gmra.mrb[0].mxu0 %v4925
    %v5092 = vpop.f32.mrb[0].mxu0
    %v5093 = vadd.f32 0.0, %v5092
    %v5094 = vpop.f32.mrb[0].mxu0
    %5095 = vmatprep.mubr.f32.mxu0 %v4930
    %5096 = vmatmul.mubr.f32.gmra.mrb[0].mxu0 %v4929
    %v5097 = vpop.f32.mrb[0].mxu0
    %v5098 = vadd.f32 0.0, %v5097
    %v5099 = vpop.f32.mrb[0].mxu0
    %5100 = vmatprep.mubr.f32.mxu0 %v4934
    %5101 = vmatmul.mubr.f32.gmra.mrb[0].mxu0 %v4933
    %v5102 = vpop.f32.mrb[0].mxu0
    %v5103 = vadd.f32 0.0, %v5102
    %v5104 = vpop.f32.mrb[0].mxu0
    %5105 = vdwg.mxu0
    %5106 = vmatprep.subr.mxu0 0.0
    %5107 = vmatpush1.msra.mxu0 %v606
    %5108 = vmatprep.subr.mxu0 0.0
    %5109 = vmatpush1.msra.mxu0 %v607
    %5110 = vmatprep.subr.mxu0 0.0
    %5111 = vmatpush1.msra.mxu0 %v608
    %5112 = vmatprep.subr.mxu0 0.0
    %5113 = vmatpush1.msra.mxu0 %v609
    %5114 = vmatprep.subr.mxu0 0.0
    %5115 = vmatpush1.msra.mxu0 %v610
    %5116 = vmatprep.subr.mxu0 0.0
    %5117 = vmatpush1.msra.mxu0 %v611
    %5118 = vmatprep.subr.mxu0 0.0
    %5119 = vmatpush1.msra.mxu0 %v612
    %5120 = vmatprep.subr.mxu0 0.0
    %5121 = vmatpush1.msra.mxu0 %v613
    %5122 = vmatprep.subr.mxu0 0.0
    %5123 = vmatpush1.msra.mxu0 %v614
    %5124 = vmatprep.subr.mxu0 0.0
    %5125 = vmatpush1.msra.mxu0 %v615
    %5126 = vmatprep.subr.mxu0 0.0
    %5127 = vmatpush1.msra.mxu0 %v616
    %5128 = vmatprep.subr.mxu0 0.0
    %5129 = vmatpush1.msra.mxu0 %v617
    %5130 = vmatprep.subr.mxu0 0.0
    %5131 = vmatpush1.msra.mxu0 %v618
    %5132 = vmatprep.subr.mxu0 0.0
    %5133 = vmatpush1.msra.mxu0 %v619
    %5134 = vmatprep.subr.mxu0 0.0
    %5135 = vmatpush1.msra.mxu0 %v620
    %5136 = vmatprep.subr.mxu0 0.0
    %5137 = vmatpush1.msra.mxu0 %v621
    %5138 = vmatprep.subr.mxu0 0.0
    %5139 = vmatpush1.msra.mxu0 %v622
    %5140 = vmatprep.subr.mxu0 0.0
    %5141 = vmatpush1.msra.mxu0 0.0
    %5142 = vmatprep.subr.mxu0 0.0
    %5143 = vmatpush1.msra.mxu0 0.0
    %5144 = vmatprep.subr.mxu0 0.0
    %5145 = vmatpush1.msra.mxu0 0.0
    %5146 = vmatprep.subr.mxu0 0.0
    %5147 = vmatpush1.msra.mxu0 0.0
    %5148 = vmatprep.subr.mxu0 0.0
    %5149 = vmatpush1.msra.mxu0 0.0
    %5150 = vmatprep.subr.mxu0 0.0
    %5151 = vmatpush1.msra.mxu0 0.0
    %5152 = vmatprep.subr.mxu0 0.0
    %5153 = vmatpush1.msra.mxu0 0.0
    %5154 = vmatprep.subr.mxu0 0.0
    %5155 = vmatpush1.msra.mxu0 0.0
    %5156 = vmatprep.subr.mxu0 0.0
    %5157 = vmatpush1.msra.mxu0 0.0
    %5158 = vmatprep.subr.mxu0 0.0
    %5159 = vmatpush1.msra.mxu0 0.0
    %5160 = vmatprep.subr.mxu0 0.0
    %5161 = vmatpush1.msra.mxu0 0.0
    %5162 = vmatprep.subr.mxu0 0.0
    %5163 = vmatpush1.msra.mxu0 0.0
    %5164 = vmatprep.subr.mxu0 0.0
    %5165 = vmatpush1.msra.mxu0 0.0
    %5166 = vmatprep.subr.mxu0 0.0
    %5167 = vmatpush1.msra.mxu0 0.0
    %5168 = vmatprep.subr.mxu0 0.0
    %5169 = vmatpush1.msra.mxu0 0.0
    %5170 = vmatprep.mubr.f32.mxu0 %v4938
    %5171 = vmatmul.mubr.f32.gmra.mrb[0].mxu0 %v4887
    %v5172 = vpop.f32.mrb[0].mxu0
    %v5173 = vadd.f32 %v5043, %v5172
    %v5174 = vpop.f32.mrb[0].mxu0
    %5175 = vmatprep.mubr.f32.mxu0 %v4941
    %5176 = vmatmul.mubr.f32.gmra.mrb[0].mxu0 %v4891
    %v5177 = vpop.f32.mrb[0].mxu0
    %v5178 = vadd.f32 %v5048, %v5177
    %v5179 = vpop.f32.mrb[0].mxu0
    %5180 = vmatprep.mubr.f32.mxu0 %v4944
    %5181 = vmatmul.mubr.f32.gmra.mrb[0].mxu0 %v4895
    %v5182 = vpop.f32.mrb[0].mxu0
    %v5183 = vadd.f32 %v5053, %v5182
    %v5184 = vpop.f32.mrb[0].mxu0
    %5185 = vmatprep.mubr.f32.mxu0 %v4947
    %5186 = vmatmul.mubr.f32.gmra.mrb[0].mxu0 %v4899
    %v5187 = vpop.f32.mrb[0].mxu0
    %v5188 = vadd.f32 %v5058, %v5187
    %v5189 = vpop.f32.mrb[0].mxu0
    %5190 = vmatprep.mubr.f32.mxu0 %v4950
    %5191 = vmatmul.mubr.f32.gmra.mrb[0].mxu0 %v4903
    %v5192 = vpop.f32.mrb[0].mxu0
    %v5193 = vadd.f32 %v5063, %v5192
    %v5194 = vpop.f32.mrb[0].mxu0
    %5195 = vmatprep.mubr.f32.mxu0 %v4953
    %5196 = vmatmul.mubr.f32.gmra.mrb[0].mxu0 %v4907
    %v5197 = vpop.f32.mrb[0].mxu0
    %v5198 = vadd.f32 %v5068, %v5197
    %v5199 = vpop.f32.mrb[0].mxu0
    %5200 = vmatprep.mubr.f32.mxu0 %v4956
    %5201 = vmatmul.mubr.f32.gmra.mrb[0].mxu0 %v4911
    %v5202 = vpop.f32.mrb[0].mxu0
    %v5203 = vadd.f32 %v5073, %v5202
    %v5204 = vpop.f32.mrb[0].mxu0
    %5205 = vmatprep.mubr.f32.mxu0 %v4959
    %5206 = vmatmul.mubr.f32.gmra.mrb[0].mxu0 %v4915
    %v5207 = vpop.f32.mrb[0].mxu0
    %v5208 = vadd.f32 %v5078, %v5207
    %v5209 = vpop.f32.mrb[0].mxu0
    %5210 = vmatprep.mubr.f32.mxu0 %v4962
    %5211 = vmatmul.mubr.f32.gmra.mrb[0].mxu0 %v4919
    %v5212 = vpop.f32.mrb[0].mxu0
    %v5213 = vadd.f32 %v5083, %v5212
    %v5214 = vpop.f32.mrb[0].mxu0
    %5215 = vmatprep.mubr.f32.mxu0 %v4965
    %5216 = vmatmul.mubr.f32.gmra.mrb[0].mxu0 %v4923
    %v5217 = vpop.f32.mrb[0].mxu0
    %v5218 = vadd.f32 %v5088, %v5217
    %v5219 = vpop.f32.mrb[0].mxu0
    %5220 = vmatprep.mubr.f32.mxu0 %v4968
    %5221 = vmatmul.mubr.f32.gmra.mrb[0].mxu0 %v4927
    %v5222 = vpop.f32.mrb[0].mxu0
    %v5223 = vadd.f32 %v5093, %v5222
    %v5224 = vpop.f32.mrb[0].mxu0
    %5225 = vmatprep.mubr.f32.mxu0 %v4971
    %5226 = vmatmul.mubr.f32.gmra.mrb[0].mxu0 %v4931
    %v5227 = vpop.f32.mrb[0].mxu0
    %v5228 = vadd.f32 %v5098, %v5227
    %v5229 = vpop.f32.mrb[0].mxu0
    %5230 = vmatprep.mubr.f32.mxu0 %v4974
    %5231 = vmatmul.mubr.f32.gmra.mrb[0].mxu0 %v4935
    %v5232 = vpop.f32.mrb[0].mxu0
    %v5233 = vadd.f32 %v5103, %v5232
    %v5234 = vpop.f32.mrb[0].mxu0
    %5235 = vdwg.mxu0
    %s5236 = scalar_lea.vmem %s4, 64
    %v5237 = vld [vmem:[%s5236] sm:$0xff]
    %v5239 = vsel %vm675, %v5173, 0
    %v5242 = vsel %vm675, %v5178, 0
    %v5245 = vsel %vm675, %v5183, 0
    %v5248 = vsel %vm675, %v5188, 0
    %v5251 = vsel %vm675, %v5193, 0
    %v5254 = vsel %vm675, %v5198, 0
    %v5257 = vsel %vm675, %v5203, 0
    %v5260 = vsel %vm675, %v5208, 0
    %v5263 = vsel %vm675, %v5213, 0
    %v5266 = vsel %vm675, %v5218, 0
    %v5269 = vsel %vm675, %v5223, 0
    %v5272 = vsel %vm675, %v5228, 0
    %v5275 = vsel %vm675, %v5233, 0
    %5277 = vmatprep.subr.mxu0 0.0
    %5278 = vmatpush1.msra.mxu0 %v5237
    %5279 = vmatprep.subr.mxu0 0.0
    %5280 = vmatpush1.msra.mxu0 0.0
    %5281 = vmatprep.subr.mxu0 0.0
    %5282 = vmatpush1.msra.mxu0 0.0
    %5283 = vmatprep.subr.mxu0 0.0
    %5284 = vmatpush1.msra.mxu0 0.0
    %5285 = vmatprep.subr.mxu0 0.0
    %5286 = vmatpush1.msra.mxu0 0.0
    %5287 = vmatprep.subr.mxu0 0.0
    %5288 = vmatpush1.msra.mxu0 0.0
    %5289 = vmatprep.subr.mxu0 0.0
    %5290 = vmatpush1.msra.mxu0 0.0
    %5291 = vmatprep.subr.mxu0 0.0
    %5292 = vmatpush1.msra.mxu0 0.0
    %5293 = vmatprep.subr.mxu0 0.0
    %5294 = vmatpush1.msra.mxu0 0.0
    %5295 = vmatprep.subr.mxu0 0.0
    %5296 = vmatpush1.msra.mxu0 0.0
    %5297 = vmatprep.subr.mxu0 0.0
    %5298 = vmatpush1.msra.mxu0 0.0
    %5299 = vmatprep.subr.mxu0 0.0
    %5300 = vmatpush1.msra.mxu0 0.0
    %5301 = vmatprep.subr.mxu0 0.0
    %5302 = vmatpush1.msra.mxu0 0.0
    %5303 = vmatprep.subr.mxu0 0.0
    %5304 = vmatpush1.msra.mxu0 0.0
    %5305 = vmatprep.subr.mxu0 0.0
    %5306 = vmatpush1.msra.mxu0 0.0
    %5307 = vmatprep.subr.mxu0 0.0
    %5308 = vmatpush1.msra.mxu0 0.0
    %5309 = vmatprep.subr.mxu0 0.0
    %5310 = vmatpush1.msra.mxu0 0.0
    %5311 = vmatprep.subr.mxu0 0.0
    %5312 = vmatpush1.msra.mxu0 0.0
    %5313 = vmatprep.subr.mxu0 0.0
    %5314 = vmatpush1.msra.mxu0 0.0
    %5315 = vmatprep.subr.mxu0 0.0
    %5316 = vmatpush1.msra.mxu0 0.0
    %5317 = vmatprep.subr.mxu0 0.0
    %5318 = vmatpush1.msra.mxu0 0.0
    %5319 = vmatprep.subr.mxu0 0.0
    %5320 = vmatpush1.msra.mxu0 0.0
    %5321 = vmatprep.subr.mxu0 0.0
    %5322 = vmatpush1.msra.mxu0 0.0
    %5323 = vmatprep.subr.mxu0 0.0
    %5324 = vmatpush1.msra.mxu0 0.0
    %5325 = vmatprep.subr.mxu0 0.0
    %5326 = vmatpush1.msra.mxu0 0.0
    %5327 = vmatprep.subr.mxu0 0.0
    %5328 = vmatpush1.msra.mxu0 0.0
    %5329 = vmatprep.subr.mxu0 0.0
    %5330 = vmatpush1.msra.mxu0 0.0
    %5331 = vmatprep.subr.mxu0 0.0
    %5332 = vmatpush1.msra.mxu0 0.0
    %5333 = vmatprep.subr.mxu0 0.0
    %5334 = vmatpush1.msra.mxu0 0.0
    %5335 = vmatprep.subr.mxu0 0.0
    %5336 = vmatpush1.msra.mxu0 0.0
    %5337 = vmatprep.subr.mxu0 0.0
    %5338 = vmatpush1.msra.mxu0 0.0
    %5339 = vmatprep.subr.mxu0 0.0
    %5340 = vmatpush1.msra.mxu0 0.0
    %5341 = vmatprep.mubr.f32.mxu0 0.0
    %5342 = vmatmul.mubr.f32.gmra.mrb[0].mxu0 %v5239
    %v5343 = vpop.f32.mrb[0].mxu0
    %v5344 = vadd.f32 0.0, %v5343
    %v5345 = vpop.f32.mrb[0].mxu0
    %5346 = vmatprep.mubr.f32.mxu0 0.0
    %5347 = vmatmul.mubr.f32.gmra.mrb[0].mxu0 %v5242
    %v5348 = vpop.f32.mrb[0].mxu0
    %v5349 = vadd.f32 0.0, %v5348
    %v5350 = vpop.f32.mrb[0].mxu0
    %5351 = vmatprep.mubr.f32.mxu0 0.0
    %5352 = vmatmul.mubr.f32.gmra.mrb[0].mxu0 %v5245
    %v5353 = vpop.f32.mrb[0].mxu0
    %v5354 = vadd.f32 0.0, %v5353
    %v5355 = vpop.f32.mrb[0].mxu0
    %5356 = vmatprep.mubr.f32.mxu0 0.0
    %5357 = vmatmul.mubr.f32.gmra.mrb[0].mxu0 %v5248
    %v5358 = vpop.f32.mrb[0].mxu0
    %v5359 = vadd.f32 0.0, %v5358
    %v5360 = vpop.f32.mrb[0].mxu0
    %5361 = vmatprep.mubr.f32.mxu0 0.0
    %5362 = vmatmul.mubr.f32.gmra.mrb[0].mxu0 %v5251
    %v5363 = vpop.f32.mrb[0].mxu0
    %v5364 = vadd.f32 0.0, %v5363
    %v5365 = vpop.f32.mrb[0].mxu0
    %5366 = vmatprep.mubr.f32.mxu0 0.0
    %5367 = vmatmul.mubr.f32.gmra.mrb[0].mxu0 %v5254
    %v5368 = vpop.f32.mrb[0].mxu0
    %v5369 = vadd.f32 0.0, %v5368
    %v5370 = vpop.f32.mrb[0].mxu0
    %5371 = vmatprep.mubr.f32.mxu0 0.0
    %5372 = vmatmul.mubr.f32.gmra.mrb[0].mxu0 %v5257
    %v5373 = vpop.f32.mrb[0].mxu0
    %v5374 = vadd.f32 0.0, %v5373
    %v5375 = vpop.f32.mrb[0].mxu0
    %5376 = vmatprep.mubr.f32.mxu0 0.0
    %5377 = vmatmul.mubr.f32.gmra.mrb[0].mxu0 %v5260
    %v5378 = vpop.f32.mrb[0].mxu0
    %v5379 = vadd.f32 0.0, %v5378
    %v5380 = vpop.f32.mrb[0].mxu0
    %5381 = vmatprep.mubr.f32.mxu0 0.0
    %5382 = vmatmul.mubr.f32.gmra.mrb[0].mxu0 %v5263
    %v5383 = vpop.f32.mrb[0].mxu0
    %v5384 = vadd.f32 0.0, %v5383
    %v5385 = vpop.f32.mrb[0].mxu0
    %5386 = vmatprep.mubr.f32.mxu0 0.0
    %5387 = vmatmul.mubr.f32.gmra.mrb[0].mxu0 %v5266
    %v5388 = vpop.f32.mrb[0].mxu0
    %v5389 = vadd.f32 0.0, %v5388
    %v5390 = vpop.f32.mrb[0].mxu0
    %5391 = vmatprep.mubr.f32.mxu0 0.0
    %5392 = vmatmul.mubr.f32.gmra.mrb[0].mxu0 %v5269
    %v5393 = vpop.f32.mrb[0].mxu0
    %v5394 = vadd.f32 0.0, %v5393
    %v5395 = vpop.f32.mrb[0].mxu0
    %5396 = vmatprep.mubr.f32.mxu0 0.0
    %5397 = vmatmul.mubr.f32.gmra.mrb[0].mxu0 %v5272
    %v5398 = vpop.f32.mrb[0].mxu0
    %v5399 = vadd.f32 0.0, %v5398
    %v5400 = vpop.f32.mrb[0].mxu0
    %5401 = vmatprep.mubr.f32.mxu0 0.0
    %5402 = vmatmul.mubr.f32.gmra.mrb[0].mxu0 %v5275
    %v5403 = vpop.f32.mrb[0].mxu0
    %v5404 = vadd.f32 0.0, %v5403
    %v5405 = vpop.f32.mrb[0].mxu0
    %5406 = vdwg.mxu0
    %v5407 = vadd.f32 %v4871, %v5344
    %v5408 = vadd.f32 %v4872, %v5349
    %v5409 = vadd.f32 %v4873, %v5354
    %v5410 = vadd.f32 %v4874, %v5359
    %v5411 = vadd.f32 %v4875, %v5364
    %v5412 = vadd.f32 %v4876, %v5369
    %v5413 = vadd.f32 %v4877, %v5374
    %v5414 = vadd.f32 %v4878, %v5379
    %v5415 = vadd.f32 %v4879, %v5384
    %v5416 = vadd.f32 %v4880, %v5389
    %v5417 = vadd.f32 %v4881, %v5394
    %v5418 = vadd.f32 %v4882, %v5399
    %v5419 = vadd.f32 %v4883, %v5404
    %v5420 = vld [vmem:[%s5] sm:$0x1]
    %v5422 = vlaneseq
    %v5423 = vshrl.u32 %v5422, 7
    %v5424 = vsub.s32 0, %v5423
    %v5425 = vrot.slane %v5420, %v5424
    %v5427 = vadd.f32 %v5407, %v5425
    %v5428 = vadd.f32 %v5408, %v5425
    %v5429 = vadd.f32 %v5409, %v5425
    %v5430 = vadd.f32 %v5410, %v5425
    %v5431 = vadd.f32 %v5411, %v5425
    %v5432 = vadd.f32 %v5412, %v5425
    %v5433 = vadd.f32 %v5413, %v5425
    %v5434 = vadd.f32 %v5414, %v5425
    %v5435 = vadd.f32 %v5415, %v5425
    %v5436 = vadd.f32 %v5416, %v5425
    %v5437 = vadd.f32 %v5417, %v5425
    %v5438 = vadd.f32 %v5418, %v5425
    %v5439 = vadd.f32 %v5419, %v5425
    %vm5440 = vcmask 130048
    %v5441 = vsel %vm5440, %v5427, 0.0
    %v5442 = vsel %vm5440, %v5428, 0.0
    %v5443 = vadd.f32 %v5441, %v5442
    %v5444 = vsel %vm5440, %v5429, 0.0
    %v5445 = vadd.f32 %v5443, %v5444
    %v5446 = vsel %vm5440, %v5430, 0.0
    %v5447 = vadd.f32 %v5445, %v5446
    %v5448 = vsel %vm5440, %v5431, 0.0
    %v5449 = vadd.f32 %v5447, %v5448
    %v5450 = vsel %vm5440, %v5432, 0.0
    %v5451 = vadd.f32 %v5449, %v5450
    %v5452 = vsel %vm5440, %v5433, 0.0
    %v5453 = vadd.f32 %v5451, %v5452
    %v5454 = vsel %vm5440, %v5434, 0.0
    %v5455 = vadd.f32 %v5453, %v5454
    %v5456 = vsel %vm5440, %v5435, 0.0
    %v5457 = vadd.f32 %v5455, %v5456
    %v5458 = vsel %vm5440, %v5436, 0.0
    %v5459 = vadd.f32 %v5457, %v5458
    %v5460 = vsel %vm5440, %v5437, 0.0
    %v5461 = vadd.f32 %v5459, %v5460
    %v5462 = vsel %vm5440, %v5438, 0.0
    %v5463 = vadd.f32 %v5461, %v5462
    %vm5464 = vcmask 123904
    %v5465 = vsel %vm5464, %v5439, 0.0
    %v5466 = vadd.f32 %v5463, %v5465
    %v5467 = vrot.slane %v5466, 4
    %v5468 = vadd.f32 %v5466, %v5467
    %v5469 = vrot.slane %v5468, 2
    %v5470 = vadd.f32 %v5468, %v5469
    %v5471 = vrot.slane %v5470, 1
    %v5472 = vadd.f32 %v5470, %v5471
    %v5473 = vrcp.pop 98.0
    %v5474 = vmul.f32 %v5472, %v5473
    %v5475 = vsub.f32 %v5427, %v5474
    %v5476 = vsub.f32 %v5428, %v5474
    %v5477 = vsub.f32 %v5429, %v5474
    %v5478 = vsub.f32 %v5430, %v5474
    %v5479 = vsub.f32 %v5431, %v5474
    %v5480 = vsub.f32 %v5432, %v5474
    %v5481 = vsub.f32 %v5433, %v5474
    %v5482 = vsub.f32 %v5434, %v5474
    %v5483 = vsub.f32 %v5435, %v5474
    %v5484 = vsub.f32 %v5436, %v5474
    %v5485 = vsub.f32 %v5437, %v5474
    %v5486 = vsub.f32 %v5438, %v5474
    %v5487 = vsub.f32 %v5439, %v5474
    %v5488 = vmul.f32 %v5475, %v5475
    %v5489 = vmul.f32 %v5476, %v5476
    %v5490 = vmul.f32 %v5477, %v5477
    %v5491 = vmul.f32 %v5478, %v5478
    %v5492 = vmul.f32 %v5479, %v5479
    %v5493 = vmul.f32 %v5480, %v5480
    %v5494 = vmul.f32 %v5481, %v5481
    %v5495 = vmul.f32 %v5482, %v5482
    %v5496 = vmul.f32 %v5483, %v5483
    %v5497 = vmul.f32 %v5484, %v5484
    %v5498 = vmul.f32 %v5485, %v5485
    %v5499 = vmul.f32 %v5486, %v5486
    %v5500 = vmul.f32 %v5487, %v5487
    %v5501 = vsel %vm5440, %v5488, 0.0
    %v5502 = vsel %vm5440, %v5489, 0.0
    %v5503 = vadd.f32 %v5501, %v5502
    %v5504 = vsel %vm5440, %v5490, 0.0
    %v5505 = vadd.f32 %v5503, %v5504
    %v5506 = vsel %vm5440, %v5491, 0.0
    %v5507 = vadd.f32 %v5505, %v5506
    %v5508 = vsel %vm5440, %v5492, 0.0
    %v5509 = vadd.f32 %v5507, %v5508
    %v5510 = vsel %vm5440, %v5493, 0.0
    %v5511 = vadd.f32 %v5509, %v5510
    %v5512 = vsel %vm5440, %v5494, 0.0
    %v5513 = vadd.f32 %v5511, %v5512
    %v5514 = vsel %vm5440, %v5495, 0.0
    %v5515 = vadd.f32 %v5513, %v5514
    %v5516 = vsel %vm5440, %v5496, 0.0
    %v5517 = vadd.f32 %v5515, %v5516
    %v5518 = vsel %vm5440, %v5497, 0.0
    %v5519 = vadd.f32 %v5517, %v5518
    %v5520 = vsel %vm5440, %v5498, 0.0
    %v5521 = vadd.f32 %v5519, %v5520
    %v5522 = vsel %vm5440, %v5499, 0.0
    %v5523 = vadd.f32 %v5521, %v5522
    %v5524 = vsel %vm5464, %v5500, 0.0
    %v5525 = vadd.f32 %v5523, %v5524
    %v5526 = vrot.slane %v5525, 4
    %v5527 = vadd.f32 %v5525, %v5526
    %v5528 = vrot.slane %v5527, 2
    %v5529 = vadd.f32 %v5527, %v5528
    %v5530 = vrot.slane %v5529, 1
    %v5531 = vadd.f32 %v5529, %v5530
    %v5532 = vmul.f32 %v5531, %v5473
    %v5533 = vadd.f32 %v5532, 1e-05
    %v5534 = vrsqrt.pop %v5533
    %v5535 = vmul.f32 %v5475, %v5534
    %v5536 = vmul.f32 %v5476, %v5534
    %v5537 = vmul.f32 %v5477, %v5534
    %v5538 = vmul.f32 %v5478, %v5534
    %v5539 = vmul.f32 %v5479, %v5534
    %v5540 = vmul.f32 %v5480, %v5534
    %v5541 = vmul.f32 %v5481, %v5534
    %v5542 = vmul.f32 %v5482, %v5534
    %v5543 = vmul.f32 %v5483, %v5534
    %v5544 = vmul.f32 %v5484, %v5534
    %v5545 = vmul.f32 %v5485, %v5534
    %v5546 = vmul.f32 %v5486, %v5534
    %v5547 = vmul.f32 %v5487, %v5534
    %v5548 = vld [vmem:[%s6] sm:$0x1]
    %v5550 = vlaneseq
    %v5551 = vshrl.u32 %v5550, 7
    %v5552 = vsub.s32 0, %v5551
    %v5553 = vrot.slane %v5548, %v5552
    %v5555 = vmul.f32 %v5535, %v5553
    %v5556 = vmul.f32 %v5536, %v5553
    %v5557 = vmul.f32 %v5537, %v5553
    %v5558 = vmul.f32 %v5538, %v5553
    %v5559 = vmul.f32 %v5539, %v5553
    %v5560 = vmul.f32 %v5540, %v5553
    %v5561 = vmul.f32 %v5541, %v5553
    %v5562 = vmul.f32 %v5542, %v5553
    %v5563 = vmul.f32 %v5543, %v5553
    %v5564 = vmul.f32 %v5544, %v5553
    %v5565 = vmul.f32 %v5545, %v5553
    %v5566 = vmul.f32 %v5546, %v5553
    %v5567 = vmul.f32 %v5547, %v5553
    %v5568 = vld [vmem:[%s7] sm:$0x1]
    %v5570 = vlaneseq
    %v5571 = vshrl.u32 %v5570, 7
    %v5572 = vsub.s32 0, %v5571
    %v5573 = vrot.slane %v5568, %v5572
    %v5575 = vadd.f32 %v5555, %v5573
    %v5576 = vadd.f32 %v5556, %v5573
    %v5577 = vadd.f32 %v5557, %v5573
    %v5578 = vadd.f32 %v5558, %v5573
    %v5579 = vadd.f32 %v5559, %v5573
    %v5580 = vadd.f32 %v5560, %v5573
    %v5581 = vadd.f32 %v5561, %v5573
    %v5582 = vadd.f32 %v5562, %v5573
    %v5583 = vadd.f32 %v5563, %v5573
    %v5584 = vadd.f32 %v5564, %v5573
    %v5585 = vadd.f32 %v5565, %v5573
    %v5586 = vadd.f32 %v5566, %v5573
    %v5587 = vadd.f32 %v5567, %v5573
    %v5588 = vmax.f32 %v5575, 0.0
    %v5589 = vmax.f32 %v5576, 0.0
    %v5590 = vmax.f32 %v5577, 0.0
    %v5591 = vmax.f32 %v5578, 0.0
    %v5592 = vmax.f32 %v5579, 0.0
    %v5593 = vmax.f32 %v5580, 0.0
    %v5594 = vmax.f32 %v5581, 0.0
    %v5595 = vmax.f32 %v5582, 0.0
    %v5596 = vmax.f32 %v5583, 0.0
    %v5597 = vmax.f32 %v5584, 0.0
    %v5598 = vmax.f32 %v5585, 0.0
    %v5599 = vmax.f32 %v5586, 0.0
    %v5600 = vmax.f32 %v5587, 0.0
    %v5601 = vld [vmem:[%s8] sm:$0xff]
    %v5602 = vld [vmem:[%s8 + $0x8] sm:$0xff]
    %v5603 = vld [vmem:[%s8 + $0x10] sm:$0x3]
    %vm5604 = vcmask 801792
    %v5606 = vsel %vm5604, %v5601, 0
    %v5609 = vsel %vm5604, %v5602, 0
    %v5612 = vsel %vm5604, %v5603, 0
    %vm5614 = vcmask 1041408
    %v5616 = vsel %vm5614, %v5600, 0
    %5618 = vmatprep.subr.mxu0 0.0
    %5619 = vmatpush1.msra.mxu0 %v5588
    %5620 = vmatprep.subr.mxu0 0.0
    %5621 = vmatpush1.msra.mxu0 %v5589
    %5622 = vmatprep.subr.mxu0 0.0
    %5623 = vmatpush1.msra.mxu0 %v5590
    %5624 = vmatprep.subr.mxu0 0.0
    %5625 = vmatpush1.msra.mxu0 %v5591
    %5626 = vmatprep.subr.mxu0 0.0
    %5627 = vmatpush1.msra.mxu0 %v5592
    %5628 = vmatprep.subr.mxu0 0.0
    %5629 = vmatpush1.msra.mxu0 %v5593
    %5630 = vmatprep.subr.mxu0 0.0
    %5631 = vmatpush1.msra.mxu0 %v5594
    %5632 = vmatprep.subr.mxu0 0.0
    %5633 = vmatpush1.msra.mxu0 %v5595
    %5634 = vmatprep.subr.mxu0 0.0
    %5635 = vmatpush1.msra.mxu0 %v5596
    %5636 = vmatprep.subr.mxu0 0.0
    %5637 = vmatpush1.msra.mxu0 %v5597
    %5638 = vmatprep.subr.mxu0 0.0
    %5639 = vmatpush1.msra.mxu0 %v5598
    %5640 = vmatprep.subr.mxu0 0.0
    %5641 = vmatpush1.msra.mxu0 %v5599
    %5642 = vmatprep.subr.mxu0 0.0
    %5643 = vmatpush1.msra.mxu0 %v5616
    %5644 = vmatprep.subr.mxu0 0.0
    %5645 = vmatpush1.msra.mxu0 0.0
    %5646 = vmatprep.subr.mxu0 0.0
    %5647 = vmatpush1.msra.mxu0 0.0
    %5648 = vmatprep.subr.mxu0 0.0
    %5649 = vmatpush1.msra.mxu0 0.0
    %5650 = vmatprep.subr.mxu0 0.0
    %5651 = vmatpush1.msra.mxu0 0.0
    %5652 = vmatprep.subr.mxu0 0.0
    %5653 = vmatpush1.msra.mxu0 0.0
    %5654 = vmatprep.subr.mxu0 0.0
    %5655 = vmatpush1.msra.mxu0 0.0
    %5656 = vmatprep.subr.mxu0 0.0
    %5657 = vmatpush1.msra.mxu0 0.0
    %5658 = vmatprep.subr.mxu0 0.0
    %5659 = vmatpush1.msra.mxu0 0.0
    %5660 = vmatprep.subr.mxu0 0.0
    %5661 = vmatpush1.msra.mxu0 0.0
    %5662 = vmatprep.subr.mxu0 0.0
    %5663 = vmatpush1.msra.mxu0 0.0
    %5664 = vmatprep.subr.mxu0 0.0
    %5665 = vmatpush1.msra.mxu0 0.0
    %5666 = vmatprep.subr.mxu0 0.0
    %5667 = vmatpush1.msra.mxu0 0.0
    %5668 = vmatprep.subr.mxu0 0.0
    %5669 = vmatpush1.msra.mxu0 0.0
    %5670 = vmatprep.subr.mxu0 0.0
    %5671 = vmatpush1.msra.mxu0 0.0
    %5672 = vmatprep.subr.mxu0 0.0
    %5673 = vmatpush1.msra.mxu0 0.0
    %5674 = vmatprep.subr.mxu0 0.0
    %5675 = vmatpush1.msra.mxu0 0.0
    %5676 = vmatprep.subr.mxu0 0.0
    %5677 = vmatpush1.msra.mxu0 0.0
    %5678 = vmatprep.subr.mxu0 0.0
    %5679 = vmatpush1.msra.mxu0 0.0
    %5680 = vmatprep.subr.mxu0 0.0
    %5681 = vmatpush1.msra.mxu0 0.0
    %5682 = vmatprep.mubr.f32.mxu0 0.0
    %5683 = vmatmul.mubr.f32.gmra.mrb[0].mxu0 %v5606
    %v5684 = vpop.f32.mrb[0].mxu0
    %v5685 = vadd.f32 0.0, %v5684
    %v5686 = vpop.f32.mrb[0].mxu0
    %5687 = vmatprep.mubr.f32.mxu0 0.0
    %5688 = vmatmul.mubr.f32.gmra.mrb[0].mxu0 %v5609
    %v5689 = vpop.f32.mrb[0].mxu0
    %v5690 = vadd.f32 0.0, %v5689
    %v5691 = vpop.f32.mrb[0].mxu0
    %5692 = vmatprep.mubr.f32.mxu0 0.0
    %5693 = vmatmul.mubr.f32.gmra.mrb[0].mxu0 %v5612
    %v5694 = vpop.f32.mrb[0].mxu0
    %v5695 = vadd.f32 0.0, %v5694
    %v5696 = vpop.f32.mrb[0].mxu0
    %5697 = vdwg.mxu0
    %v5698 = vld [vmem:[%s9] sm:$0xff]
    %v5699 = vld [vmem:[%s9 + $0x8] sm:$0xff]
    %s5700 = scalar_lea.vmem %s8, 24
    %v5701 = vld [vmem:[%s5700] sm:$0xff]
    %v5702 = vld [vmem:[%s5700 + $0x8] sm:$0xff]
    %v5703 = vld [vmem:[%s5700 + $0x10] sm:$0x3]
    %v5705 = vsel %vm5604, %v5701, 0
    %v5708 = vsel %vm5604, %v5702, 0
    %v5711 = vsel %vm5604, %v5703, 0
    %5713 = vmatprep.subr.mxu0 0.0
    %5714 = vmatpush1.msra.mxu0 %v5588
    %5715 = vmatprep.subr.mxu0 0.0
    %5716 = vmatpush1.msra.mxu0 %v5589
    %5717 = vmatprep.subr.mxu0 0.0
    %5718 = vmatpush1.msra.mxu0 %v5590
    %5719 = vmatprep.subr.mxu0 0.0
    %5720 = vmatpush1.msra.mxu0 %v5591
    %5721 = vmatprep.subr.mxu0 0.0
    %5722 = vmatpush1.msra.mxu0 %v5592
    %5723 = vmatprep.subr.mxu0 0.0
    %5724 = vmatpush1.msra.mxu0 %v5593
    %5725 = vmatprep.subr.mxu0 0.0
    %5726 = vmatpush1.msra.mxu0 %v5594
    %5727 = vmatprep.subr.mxu0 0.0
    %5728 = vmatpush1.msra.mxu0 %v5595
    %5729 = vmatprep.subr.mxu0 0.0
    %5730 = vmatpush1.msra.mxu0 %v5596
    %5731 = vmatprep.subr.mxu0 0.0
    %5732 = vmatpush1.msra.mxu0 %v5597
    %5733 = vmatprep.subr.mxu0 0.0
    %5734 = vmatpush1.msra.mxu0 %v5598
    %5735 = vmatprep.subr.mxu0 0.0
    %5736 = vmatpush1.msra.mxu0 %v5599
    %5737 = vmatprep.subr.mxu0 0.0
    %5738 = vmatpush1.msra.mxu0 %v5616
    %5739 = vmatprep.subr.mxu0 0.0
    %5740 = vmatpush1.msra.mxu0 0.0
    %5741 = vmatprep.subr.mxu0 0.0
    %5742 = vmatpush1.msra.mxu0 0.0
    %5743 = vmatprep.subr.mxu0 0.0
    %5744 = vmatpush1.msra.mxu0 0.0
    %5745 = vmatprep.subr.mxu0 0.0
    %5746 = vmatpush1.msra.mxu0 0.0
    %5747 = vmatprep.subr.mxu0 0.0
    %5748 = vmatpush1.msra.mxu0 0.0
    %5749 = vmatprep.subr.mxu0 0.0
    %5750 = vmatpush1.msra.mxu0 0.0
    %5751 = vmatprep.subr.mxu0 0.0
    %5752 = vmatpush1.msra.mxu0 0.0
    %5753 = vmatprep.subr.mxu0 0.0
    %5754 = vmatpush1.msra.mxu0 0.0
    %5755 = vmatprep.subr.mxu0 0.0
    %5756 = vmatpush1.msra.mxu0 0.0
    %5757 = vmatprep.subr.mxu0 0.0
    %5758 = vmatpush1.msra.mxu0 0.0
    %5759 = vmatprep.subr.mxu0 0.0
    %5760 = vmatpush1.msra.mxu0 0.0
    %5761 = vmatprep.subr.mxu0 0.0
    %5762 = vmatpush1.msra.mxu0 0.0
    %5763 = vmatprep.subr.mxu0 0.0
    %5764 = vmatpush1.msra.mxu0 0.0
    %5765 = vmatprep.subr.mxu0 0.0
    %5766 = vmatpush1.msra.mxu0 0.0
    %5767 = vmatprep.subr.mxu0 0.0
    %5768 = vmatpush1.msra.mxu0 0.0
    %5769 = vmatprep.subr.mxu0 0.0
    %5770 = vmatpush1.msra.mxu0 0.0
    %5771 = vmatprep.subr.mxu0 0.0
    %5772 = vmatpush1.msra.mxu0 0.0
    %5773 = vmatprep.subr.mxu0 0.0
    %5774 = vmatpush1.msra.mxu0 0.0
    %5775 = vmatprep.subr.mxu0 0.0
    %5776 = vmatpush1.msra.mxu0 0.0
    %5777 = vmatprep.mubr.f32.mxu0 0.0
    %5778 = vmatmul.mubr.f32.gmra.mrb[0].mxu0 %v5705
    %v5779 = vpop.f32.mrb[0].mxu0
    %v5780 = vadd.f32 0.0, %v5779
    %v5781 = vpop.f32.mrb[0].mxu0
    %5782 = vmatprep.mubr.f32.mxu0 0.0
    %5783 = vmatmul.mubr.f32.gmra.mrb[0].mxu0 %v5708
    %v5784 = vpop.f32.mrb[0].mxu0
    %v5785 = vadd.f32 0.0, %v5784
    %v5786 = vpop.f32.mrb[0].mxu0
    %5787 = vmatprep.mubr.f32.mxu0 0.0
    %5788 = vmatmul.mubr.f32.gmra.mrb[0].mxu0 %v5711
    %v5789 = vpop.f32.mrb[0].mxu0
    %v5790 = vadd.f32 0.0, %v5789
    %v5791 = vpop.f32.mrb[0].mxu0
    %5792 = vdwg.mxu0
    %s5793 = scalar_lea.vmem %s9, 16
    %v5794 = vld [vmem:[%s5793] sm:$0xff]
    %v5795 = vld [vmem:[%s5793 + $0x8] sm:$0xff]
    %v5797 = vsel %vm5440, %v5780, 0
    %v5800 = vsel %vm5440, %v5785, 0
    %v5803 = vsel %vm5440, %v5790, 0
    %5805 = vmatprep.subr.mxu0 0.0
    %5806 = vmatpush1.msra.mxu0 %v5794
    %5807 = vmatprep.subr.mxu0 0.0
    %5808 = vmatpush1.msra.mxu0 %v5795
    %5809 = vmatprep.subr.mxu0 0.0
    %5810 = vmatpush1.msra.mxu0 0.0
    %5811 = vmatprep.subr.mxu0 0.0
    %5812 = vmatpush1.msra.mxu0 0.0
    %5813 = vmatprep.subr.mxu0 0.0
    %5814 = vmatpush1.msra.mxu0 0.0
    %5815 = vmatprep.subr.mxu0 0.0
    %5816 = vmatpush1.msra.mxu0 0.0
    %5817 = vmatprep.subr.mxu0 0.0
    %5818 = vmatpush1.msra.mxu0 0.0
    %5819 = vmatprep.subr.mxu0 0.0
    %5820 = vmatpush1.msra.mxu0 0.0
    %5821 = vmatprep.subr.mxu0 0.0
    %5822 = vmatpush1.msra.mxu0 0.0
    %5823 = vmatprep.subr.mxu0 0.0
    %5824 = vmatpush1.msra.mxu0 0.0
    %5825 = vmatprep.subr.mxu0 0.0
    %5826 = vmatpush1.msra.mxu0 0.0
    %5827 = vmatprep.subr.mxu0 0.0
    %5828 = vmatpush1.msra.mxu0 0.0
    %5829 = vmatprep.subr.mxu0 0.0
    %5830 = vmatpush1.msra.mxu0 0.0
    %5831 = vmatprep.subr.mxu0 0.0
    %5832 = vmatpush1.msra.mxu0 0.0
    %5833 = vmatprep.subr.mxu0 0.0
    %5834 = vmatpush1.msra.mxu0 0.0
    %5835 = vmatprep.subr.mxu0 0.0
    %5836 = vmatpush1.msra.mxu0 0.0
    %5837 = vmatprep.subr.mxu0 0.0
    %5838 = vmatpush1.msra.mxu0 0.0
    %5839 = vmatprep.subr.mxu0 0.0
    %5840 = vmatpush1.msra.mxu0 0.0
    %5841 = vmatprep.subr.mxu0 0.0
    %5842 = vmatpush1.msra.mxu0 0.0
    %5843 = vmatprep.subr.mxu0 0.0
    %5844 = vmatpush1.msra.mxu0 0.0
    %5845 = vmatprep.subr.mxu0 0.0
    %5846 = vmatpush1.msra.mxu0 0.0
    %5847 = vmatprep.subr.mxu0 0.0
    %5848 = vmatpush1.msra.mxu0 0.0
    %5849 = vmatprep.subr.mxu0 0.0
    %5850 = vmatpush1.msra.mxu0 0.0
    %5851 = vmatprep.subr.mxu0 0.0
    %5852 = vmatpush1.msra.mxu0 0.0
    %5853 = vmatprep.subr.mxu0 0.0
    %5854 = vmatpush1.msra.mxu0 0.0
    %5855 = vmatprep.subr.mxu0 0.0
    %5856 = vmatpush1.msra.mxu0 0.0
    %5857 = vmatprep.subr.mxu0 0.0
    %5858 = vmatpush1.msra.mxu0 0.0
    %5859 = vmatprep.subr.mxu0 0.0
    %5860 = vmatpush1.msra.mxu0 0.0
    %5861 = vmatprep.subr.mxu0 0.0
    %5862 = vmatpush1.msra.mxu0 0.0
    %5863 = vmatprep.subr.mxu0 0.0
    %5864 = vmatpush1.msra.mxu0 0.0
    %5865 = vmatprep.subr.mxu0 0.0
    %5866 = vmatpush1.msra.mxu0 0.0
    %5867 = vmatprep.subr.mxu0 0.0
    %5868 = vmatpush1.msra.mxu0 0.0
    %5869 = vmatprep.mubr.f32.mxu0 0.0
    %5870 = vmatmul.mubr.f32.gmra.mrb[0].mxu0 %v5797
    %v5871 = vpop.f32.mrb[0].mxu0
    %v5872 = vadd.f32 0.0, %v5871
    %v5873 = vpop.f32.mrb[0].mxu0
    %5874 = vmatprep.mubr.f32.mxu0 0.0
    %5875 = vmatmul.mubr.f32.gmra.mrb[0].mxu0 %v5800
    %v5876 = vpop.f32.mrb[0].mxu0
    %v5877 = vadd.f32 0.0, %v5876
    %v5878 = vpop.f32.mrb[0].mxu0
    %5879 = vmatprep.mubr.f32.mxu0 0.0
    %5880 = vmatmul.mubr.f32.gmra.mrb[0].mxu0 %v5803
    %v5881 = vpop.f32.mrb[0].mxu0
    %v5882 = vadd.f32 0.0, %v5881
    %v5883 = vpop.f32.mrb[0].mxu0
    %5884 = vdwg.mxu0
    %v5886 = vsel %vm5440, %v5685, 0
    %v5889 = vsel %vm5440, %v5690, 0
    %v5892 = vsel %vm5440, %v5695, 0
    %5894 = vmatprep.subr.mxu0 0.0
    %5895 = vmatpush1.msra.mxu0 %v5698
    %5896 = vmatprep.subr.mxu0 0.0
    %5897 = vmatpush1.msra.mxu0 %v5699
    %5898 = vmatprep.subr.mxu0 0.0
    %5899 = vmatpush1.msra.mxu0 0.0
    %5900 = vmatprep.subr.mxu0 0.0
    %5901 = vmatpush1.msra.mxu0 0.0
    %5902 = vmatprep.subr.mxu0 0.0
    %5903 = vmatpush1.msra.mxu0 0.0
    %5904 = vmatprep.subr.mxu0 0.0
    %5905 = vmatpush1.msra.mxu0 0.0
    %5906 = vmatprep.subr.mxu0 0.0
    %5907 = vmatpush1.msra.mxu0 0.0
    %5908 = vmatprep.subr.mxu0 0.0
    %5909 = vmatpush1.msra.mxu0 0.0
    %5910 = vmatprep.subr.mxu0 0.0
    %5911 = vmatpush1.msra.mxu0 0.0
    %5912 = vmatprep.subr.mxu0 0.0
    %5913 = vmatpush1.msra.mxu0 0.0
    %5914 = vmatprep.subr.mxu0 0.0
    %5915 = vmatpush1.msra.mxu0 0.0
    %5916 = vmatprep.subr.mxu0 0.0
    %5917 = vmatpush1.msra.mxu0 0.0
    %5918 = vmatprep.subr.mxu0 0.0
    %5919 = vmatpush1.msra.mxu0 0.0
    %5920 = vmatprep.subr.mxu0 0.0
    %5921 = vmatpush1.msra.mxu0 0.0
    %5922 = vmatprep.subr.mxu0 0.0
    %5923 = vmatpush1.msra.mxu0 0.0
    %5924 = vmatprep.subr.mxu0 0.0
    %5925 = vmatpush1.msra.mxu0 0.0
    %5926 = vmatprep.subr.mxu0 0.0
    %5927 = vmatpush1.msra.mxu0 0.0
    %5928 = vmatprep.subr.mxu0 0.0
    %5929 = vmatpush1.msra.mxu0 0.0
    %5930 = vmatprep.subr.mxu0 0.0
    %5931 = vmatpush1.msra.mxu0 0.0
    %5932 = vmatprep.subr.mxu0 0.0
    %5933 = vmatpush1.msra.mxu0 0.0
    %5934 = vmatprep.subr.mxu0 0.0
    %5935 = vmatpush1.msra.mxu0 0.0
    %5936 = vmatprep.subr.mxu0 0.0
    %5937 = vmatpush1.msra.mxu0 0.0
    %5938 = vmatprep.subr.mxu0 0.0
    %5939 = vmatpush1.msra.mxu0 0.0
    %5940 = vmatprep.subr.mxu0 0.0
    %5941 = vmatpush1.msra.mxu0 0.0
    %5942 = vmatprep.subr.mxu0 0.0
    %5943 = vmatpush1.msra.mxu0 0.0
    %5944 = vmatprep.subr.mxu0 0.0
    %5945 = vmatpush1.msra.mxu0 0.0
    %5946 = vmatprep.subr.mxu0 0.0
    %5947 = vmatpush1.msra.mxu0 0.0
    %5948 = vmatprep.subr.mxu0 0.0
    %5949 = vmatpush1.msra.mxu0 0.0
    %5950 = vmatprep.subr.mxu0 0.0
    %5951 = vmatpush1.msra.mxu0 0.0
    %5952 = vmatprep.subr.mxu0 0.0
    %5953 = vmatpush1.msra.mxu0 0.0
    %5954 = vmatprep.subr.mxu0 0.0
    %5955 = vmatpush1.msra.mxu0 0.0
    %5956 = vmatprep.subr.mxu0 0.0
    %5957 = vmatpush1.msra.mxu0 0.0
    %5958 = vmatprep.mubr.f32.mxu0 0.0
    %5959 = vmatmul.mubr.f32.gmra.mrb[0].mxu0 %v5886
    %v5960 = vpop.f32.mrb[0].mxu0
    %v5961 = vadd.f32 %v5872, %v5960
    %v5962 = vpop.f32.mrb[0].mxu0
    %5963 = vmatprep.mubr.f32.mxu0 0.0
    %5964 = vmatmul.mubr.f32.gmra.mrb[0].mxu0 %v5889
    %v5965 = vpop.f32.mrb[0].mxu0
    %v5966 = vadd.f32 %v5877, %v5965
    %v5967 = vpop.f32.mrb[0].mxu0
    %5968 = vmatprep.mubr.f32.mxu0 0.0
    %5969 = vmatmul.mubr.f32.gmra.mrb[0].mxu0 %v5892
    %v5970 = vpop.f32.mrb[0].mxu0
    %v5971 = vadd.f32 %v5882, %v5970
    %v5972 = vpop.f32.mrb[0].mxu0
    %5973 = vdwg.mxu0
    %s5974 = scalar_lea.vmem %s8, 48
    %v5975 = vld [vmem:[%s5974] sm:$0xff]
    %v5976 = vld [vmem:[%s5974 + $0x8] sm:$0xff]
    %v5977 = vld [vmem:[%s5974 + $0x10] sm:$0x3]
    %v5979 = vsel %vm5604, %v5975, 0
    %v5982 = vsel %vm5604, %v5976, 0
    %v5985 = vsel %vm5604, %v5977, 0
    %5987 = vmatprep.subr.mxu0 0.0
    %5988 = vmatpush1.msra.mxu0 %v5588
    %5989 = vmatprep.subr.mxu0 0.0
    %5990 = vmatpush1.msra.mxu0 %v5589
    %5991 = vmatprep.subr.mxu0 0.0
    %5992 = vmatpush1.msra.mxu0 %v5590
    %5993 = vmatprep.subr.mxu0 0.0
    %5994 = vmatpush1.msra.mxu0 %v5591
    %5995 = vmatprep.subr.mxu0 0.0
    %5996 = vmatpush1.msra.mxu0 %v5592
    %5997 = vmatprep.subr.mxu0 0.0
    %5998 = vmatpush1.msra.mxu0 %v5593
    %5999 = vmatprep.subr.mxu0 0.0
    %6000 = vmatpush1.msra.mxu0 %v5594
    %6001 = vmatprep.subr.mxu0 0.0
    %6002 = vmatpush1.msra.mxu0 %v5595
    %6003 = vmatprep.subr.mxu0 0.0
    %6004 = vmatpush1.msra.mxu0 %v5596
    %6005 = vmatprep.subr.mxu0 0.0
    %6006 = vmatpush1.msra.mxu0 %v5597
    %6007 = vmatprep.subr.mxu0 0.0
    %6008 = vmatpush1.msra.mxu0 %v5598
    %6009 = vmatprep.subr.mxu0 0.0
    %6010 = vmatpush1.msra.mxu0 %v5599
    %6011 = vmatprep.subr.mxu0 0.0
    %6012 = vmatpush1.msra.mxu0 %v5616
    %6013 = vmatprep.subr.mxu0 0.0
    %6014 = vmatpush1.msra.mxu0 0.0
    %6015 = vmatprep.subr.mxu0 0.0
    %6016 = vmatpush1.msra.mxu0 0.0
    %6017 = vmatprep.subr.mxu0 0.0
    %6018 = vmatpush1.msra.mxu0 0.0
    %6019 = vmatprep.subr.mxu0 0.0
    %6020 = vmatpush1.msra.mxu0 0.0
    %6021 = vmatprep.subr.mxu0 0.0
    %6022 = vmatpush1.msra.mxu0 0.0
    %6023 = vmatprep.subr.mxu0 0.0
    %6024 = vmatpush1.msra.mxu0 0.0
    %6025 = vmatprep.subr.mxu0 0.0
    %6026 = vmatpush1.msra.mxu0 0.0
    %6027 = vmatprep.subr.mxu0 0.0
    %6028 = vmatpush1.msra.mxu0 0.0
    %6029 = vmatprep.subr.mxu0 0.0
    %6030 = vmatpush1.msra.mxu0 0.0
    %6031 = vmatprep.subr.mxu0 0.0
    %6032 = vmatpush1.msra.mxu0 0.0
    %6033 = vmatprep.subr.mxu0 0.0
    %6034 = vmatpush1.msra.mxu0 0.0
    %6035 = vmatprep.subr.mxu0 0.0
    %6036 = vmatpush1.msra.mxu0 0.0
    %6037 = vmatprep.subr.mxu0 0.0
    %6038 = vmatpush1.msra.mxu0 0.0
    %6039 = vmatprep.subr.mxu0 0.0
    %6040 = vmatpush1.msra.mxu0 0.0
    %6041 = vmatprep.subr.mxu0 0.0
    %6042 = vmatpush1.msra.mxu0 0.0
    %6043 = vmatprep.subr.mxu0 0.0
    %6044 = vmatpush1.msra.mxu0 0.0
    %6045 = vmatprep.subr.mxu0 0.0
    %6046 = vmatpush1.msra.mxu0 0.0
    %6047 = vmatprep.subr.mxu0 0.0
    %6048 = vmatpush1.msra.mxu0 0.0
    %6049 = vmatprep.subr.mxu0 0.0
    %6050 = vmatpush1.msra.mxu0 0.0
    %6051 = vmatprep.mubr.f32.mxu0 0.0
    %6052 = vmatmul.mubr.f32.gmra.mrb[0].mxu0 %v5979
    %v6053 = vpop.f32.mrb[0].mxu0
    %v6054 = vadd.f32 0.0, %v6053
    %v6055 = vpop.f32.mrb[0].mxu0
    %6056 = vmatprep.mubr.f32.mxu0 0.0
    %6057 = vmatmul.mubr.f32.gmra.mrb[0].mxu0 %v5982
    %v6058 = vpop.f32.mrb[0].mxu0
    %v6059 = vadd.f32 0.0, %v6058
    %v6060 = vpop.f32.mrb[0].mxu0
    %6061 = vmatprep.mubr.f32.mxu0 0.0
    %6062 = vmatmul.mubr.f32.gmra.mrb[0].mxu0 %v5985
    %v6063 = vpop.f32.mrb[0].mxu0
    %v6064 = vadd.f32 0.0, %v6063
    %v6065 = vpop.f32.mrb[0].mxu0
    %6066 = vdwg.mxu0
    %s6067 = scalar_lea.vmem %s9, 32
    %v6068 = vld [vmem:[%s6067] sm:$0xff]
    %v6069 = vld [vmem:[%s6067 + $0x8] sm:$0xff]
    %v6071 = vsel %vm5440, %v6054, 0
    %v6074 = vsel %vm5440, %v6059, 0
    %v6077 = vsel %vm5440, %v6064, 0
    %6079 = vmatprep.subr.mxu0 0.0
    %6080 = vmatpush1.msra.mxu0 %v6068
    %6081 = vmatprep.subr.mxu0 0.0
    %6082 = vmatpush1.msra.mxu0 %v6069
    %6083 = vmatprep.subr.mxu0 0.0
    %6084 = vmatpush1.msra.mxu0 0.0
    %6085 = vmatprep.subr.mxu0 0.0
    %6086 = vmatpush1.msra.mxu0 0.0
    %6087 = vmatprep.subr.mxu0 0.0
    %6088 = vmatpush1.msra.mxu0 0.0
    %6089 = vmatprep.subr.mxu0 0.0
    %6090 = vmatpush1.msra.mxu0 0.0
    %6091 = vmatprep.subr.mxu0 0.0
    %6092 = vmatpush1.msra.mxu0 0.0
    %6093 = vmatprep.subr.mxu0 0.0
    %6094 = vmatpush1.msra.mxu0 0.0
    %6095 = vmatprep.subr.mxu0 0.0
    %6096 = vmatpush1.msra.mxu0 0.0
    %6097 = vmatprep.subr.mxu0 0.0
    %6098 = vmatpush1.msra.mxu0 0.0
    %6099 = vmatprep.subr.mxu0 0.0
    %6100 = vmatpush1.msra.mxu0 0.0
    %6101 = vmatprep.subr.mxu0 0.0
    %6102 = vmatpush1.msra.mxu0 0.0
    %6103 = vmatprep.subr.mxu0 0.0
    %6104 = vmatpush1.msra.mxu0 0.0
    %6105 = vmatprep.subr.mxu0 0.0
    %6106 = vmatpush1.msra.mxu0 0.0
    %6107 = vmatprep.subr.mxu0 0.0
    %6108 = vmatpush1.msra.mxu0 0.0
    %6109 = vmatprep.subr.mxu0 0.0
    %6110 = vmatpush1.msra.mxu0 0.0
    %6111 = vmatprep.subr.mxu0 0.0
    %6112 = vmatpush1.msra.mxu0 0.0
    %6113 = vmatprep.subr.mxu0 0.0
    %6114 = vmatpush1.msra.mxu0 0.0
    %6115 = vmatprep.subr.mxu0 0.0
    %6116 = vmatpush1.msra.mxu0 0.0
    %6117 = vmatprep.subr.mxu0 0.0
    %6118 = vmatpush1.msra.mxu0 0.0
    %6119 = vmatprep.subr.mxu0 0.0
    %6120 = vmatpush1.msra.mxu0 0.0
    %6121 = vmatprep.subr.mxu0 0.0
    %6122 = vmatpush1.msra.mxu0 0.0
    %6123 = vmatprep.subr.mxu0 0.0
    %6124 = vmatpush1.msra.mxu0 0.0
    %6125 = vmatprep.subr.mxu0 0.0
    %6126 = vmatpush1.msra.mxu0 0.0
    %6127 = vmatprep.subr.mxu0 0.0
    %6128 = vmatpush1.msra.mxu0 0.0
    %6129 = vmatprep.subr.mxu0 0.0
    %6130 = vmatpush1.msra.mxu0 0.0
    %6131 = vmatprep.subr.mxu0 0.0
    %6132 = vmatpush1.msra.mxu0 0.0
    %6133 = vmatprep.subr.mxu0 0.0
    %6134 = vmatpush1.msra.mxu0 0.0
    %6135 = vmatprep.subr.mxu0 0.0
    %6136 = vmatpush1.msra.mxu0 0.0
    %6137 = vmatprep.subr.mxu0 0.0
    %6138 = vmatpush1.msra.mxu0 0.0
    %6139 = vmatprep.subr.mxu0 0.0
    %6140 = vmatpush1.msra.mxu0 0.0
    %6141 = vmatprep.subr.mxu0 0.0
    %6142 = vmatpush1.msra.mxu0 0.0
    %6143 = vmatprep.mubr.f32.mxu0 0.0
    %6144 = vmatmul.mubr.f32.gmra.mrb[0].mxu0 %v6071
    %v6145 = vpop.f32.mrb[0].mxu0
    %v6146 = vadd.f32 0.0, %v6145
    %v6147 = vpop.f32.mrb[0].mxu0
    %6148 = vmatprep.mubr.f32.mxu0 0.0
    %6149 = vmatmul.mubr.f32.gmra.mrb[0].mxu0 %v6074
    %v6150 = vpop.f32.mrb[0].mxu0
    %v6151 = vadd.f32 0.0, %v6150
    %v6152 = vpop.f32.mrb[0].mxu0
    %6153 = vmatprep.mubr.f32.mxu0 0.0
    %6154 = vmatmul.mubr.f32.gmra.mrb[0].mxu0 %v6077
    %v6155 = vpop.f32.mrb[0].mxu0
    %v6156 = vadd.f32 0.0, %v6155
    %v6157 = vpop.f32.mrb[0].mxu0
    %6158 = vdwg.mxu0
    %v6159 = vadd.f32 %v5961, %v6146
    %v6160 = vadd.f32 %v5966, %v6151
    %v6161 = vadd.f32 %v5971, %v6156
    %s6162 = scalar_lea.vmem %s8, 72
    %v6163 = vld [vmem:[%s6162] sm:$0xff]
    %v6164 = vld [vmem:[%s6162 + $0x8] sm:$0xff]
    %v6165 = vld [vmem:[%s6162 + $0x10] sm:$0x3]
    %v6167 = vsel %vm5604, %v6163, 0
    %v6170 = vsel %vm5604, %v6164, 0
    %v6173 = vsel %vm5604, %v6165, 0
    %6175 = vmatprep.subr.mxu0 0.0
    %6176 = vmatpush1.msra.mxu0 %v5588
    %6177 = vmatprep.subr.mxu0 0.0
    %6178 = vmatpush1.msra.mxu0 %v5589
    %6179 = vmatprep.subr.mxu0 0.0
    %6180 = vmatpush1.msra.mxu0 %v5590
    %6181 = vmatprep.subr.mxu0 0.0
    %6182 = vmatpush1.msra.mxu0 %v5591
    %6183 = vmatprep.subr.mxu0 0.0
    %6184 = vmatpush1.msra.mxu0 %v5592
    %6185 = vmatprep.subr.mxu0 0.0
    %6186 = vmatpush1.msra.mxu0 %v5593
    %6187 = vmatprep.subr.mxu0 0.0
    %6188 = vmatpush1.msra.mxu0 %v5594
    %6189 = vmatprep.subr.mxu0 0.0
    %6190 = vmatpush1.msra.mxu0 %v5595
    %6191 = vmatprep.subr.mxu0 0.0
    %6192 = vmatpush1.msra.mxu0 %v5596
    %6193 = vmatprep.subr.mxu0 0.0
    %6194 = vmatpush1.msra.mxu0 %v5597
    %6195 = vmatprep.subr.mxu0 0.0
    %6196 = vmatpush1.msra.mxu0 %v5598
    %6197 = vmatprep.subr.mxu0 0.0
    %6198 = vmatpush1.msra.mxu0 %v5599
    %6199 = vmatprep.subr.mxu0 0.0
    %6200 = vmatpush1.msra.mxu0 %v5616
    %6201 = vmatprep.subr.mxu0 0.0
    %6202 = vmatpush1.msra.mxu0 0.0
    %6203 = vmatprep.subr.mxu0 0.0
    %6204 = vmatpush1.msra.mxu0 0.0
    %6205 = vmatprep.subr.mxu0 0.0
    %6206 = vmatpush1.msra.mxu0 0.0
    %6207 = vmatprep.subr.mxu0 0.0
    %6208 = vmatpush1.msra.mxu0 0.0
    %6209 = vmatprep.subr.mxu0 0.0
    %6210 = vmatpush1.msra.mxu0 0.0
    %6211 = vmatprep.subr.mxu0 0.0
    %6212 = vmatpush1.msra.mxu0 0.0
    %6213 = vmatprep.subr.mxu0 0.0
    %6214 = vmatpush1.msra.mxu0 0.0
    %6215 = vmatprep.subr.mxu0 0.0
    %6216 = vmatpush1.msra.mxu0 0.0
    %6217 = vmatprep.subr.mxu0 0.0
    %6218 = vmatpush1.msra.mxu0 0.0
    %6219 = vmatprep.subr.mxu0 0.0
    %6220 = vmatpush1.msra.mxu0 0.0
    %6221 = vmatprep.subr.mxu0 0.0
    %6222 = vmatpush1.msra.mxu0 0.0
    %6223 = vmatprep.subr.mxu0 0.0
    %6224 = vmatpush1.msra.mxu0 0.0
    %6225 = vmatprep.subr.mxu0 0.0
    %6226 = vmatpush1.msra.mxu0 0.0
    %6227 = vmatprep.subr.mxu0 0.0
    %6228 = vmatpush1.msra.mxu0 0.0
    %6229 = vmatprep.subr.mxu0 0.0
    %6230 = vmatpush1.msra.mxu0 0.0
    %6231 = vmatprep.subr.mxu0 0.0
    %6232 = vmatpush1.msra.mxu0 0.0
    %6233 = vmatprep.subr.mxu0 0.0
    %6234 = vmatpush1.msra.mxu0 0.0
    %6235 = vmatprep.subr.mxu0 0.0
    %6236 = vmatpush1.msra.mxu0 0.0
    %6237 = vmatprep.subr.mxu0 0.0
    %6238 = vmatpush1.msra.mxu0 0.0
    %6239 = vmatprep.mubr.f32.mxu0 0.0
    %6240 = vmatmul.mubr.f32.gmra.mrb[0].mxu0 %v6167
    %v6241 = vpop.f32.mrb[0].mxu0
    %v6242 = vadd.f32 0.0, %v6241
    %v6243 = vpop.f32.mrb[0].mxu0
    %6244 = vmatprep.mubr.f32.mxu0 0.0
    %6245 = vmatmul.mubr.f32.gmra.mrb[0].mxu0 %v6170
    %v6246 = vpop.f32.mrb[0].mxu0
    %v6247 = vadd.f32 0.0, %v6246
    %v6248 = vpop.f32.mrb[0].mxu0
    %6249 = vmatprep.mubr.f32.mxu0 0.0
    %6250 = vmatmul.mubr.f32.gmra.mrb[0].mxu0 %v6173
    %v6251 = vpop.f32.mrb[0].mxu0
    %v6252 = vadd.f32 0.0, %v6251
    %v6253 = vpop.f32.mrb[0].mxu0
    %6254 = vdwg.mxu0
    %s6255 = scalar_lea.vmem %s9, 48
    %v6256 = vld [vmem:[%s6255] sm:$0xff]
    %v6257 = vld [vmem:[%s6255 + $0x8] sm:$0xff]
    %v6259 = vsel %vm5440, %v6242, 0
    %v6262 = vsel %vm5440, %v6247, 0
    %v6265 = vsel %vm5440, %v6252, 0
    %6267 = vmatprep.subr.mxu0 0.0
    %6268 = vmatpush1.msra.mxu0 %v6256
    %6269 = vmatprep.subr.mxu0 0.0
    %6270 = vmatpush1.msra.mxu0 %v6257
    %6271 = vmatprep.subr.mxu0 0.0
    %6272 = vmatpush1.msra.mxu0 0.0
    %6273 = vmatprep.subr.mxu0 0.0
    %6274 = vmatpush1.msra.mxu0 0.0
    %6275 = vmatprep.subr.mxu0 0.0
    %6276 = vmatpush1.msra.mxu0 0.0
    %6277 = vmatprep.subr.mxu0 0.0
    %6278 = vmatpush1.msra.mxu0 0.0
    %6279 = vmatprep.subr.mxu0 0.0
    %6280 = vmatpush1.msra.mxu0 0.0
    %6281 = vmatprep.subr.mxu0 0.0
    %6282 = vmatpush1.msra.mxu0 0.0
    %6283 = vmatprep.subr.mxu0 0.0
    %6284 = vmatpush1.msra.mxu0 0.0
    %6285 = vmatprep.subr.mxu0 0.0
    %6286 = vmatpush1.msra.mxu0 0.0
    %6287 = vmatprep.subr.mxu0 0.0
    %6288 = vmatpush1.msra.mxu0 0.0
    %6289 = vmatprep.subr.mxu0 0.0
    %6290 = vmatpush1.msra.mxu0 0.0
    %6291 = vmatprep.subr.mxu0 0.0
    %6292 = vmatpush1.msra.mxu0 0.0
    %6293 = vmatprep.subr.mxu0 0.0
    %6294 = vmatpush1.msra.mxu0 0.0
    %6295 = vmatprep.subr.mxu0 0.0
    %6296 = vmatpush1.msra.mxu0 0.0
    %6297 = vmatprep.subr.mxu0 0.0
    %6298 = vmatpush1.msra.mxu0 0.0
    %6299 = vmatprep.subr.mxu0 0.0
    %6300 = vmatpush1.msra.mxu0 0.0
    %6301 = vmatprep.subr.mxu0 0.0
    %6302 = vmatpush1.msra.mxu0 0.0
    %6303 = vmatprep.subr.mxu0 0.0
    %6304 = vmatpush1.msra.mxu0 0.0
    %6305 = vmatprep.subr.mxu0 0.0
    %6306 = vmatpush1.msra.mxu0 0.0
    %6307 = vmatprep.subr.mxu0 0.0
    %6308 = vmatpush1.msra.mxu0 0.0
    %6309 = vmatprep.subr.mxu0 0.0
    %6310 = vmatpush1.msra.mxu0 0.0
    %6311 = vmatprep.subr.mxu0 0.0
    %6312 = vmatpush1.msra.mxu0 0.0
    %6313 = vmatprep.subr.mxu0 0.0
    %6314 = vmatpush1.msra.mxu0 0.0
    %6315 = vmatprep.subr.mxu0 0.0
    %6316 = vmatpush1.msra.mxu0 0.0
    %6317 = vmatprep.subr.mxu0 0.0
    %6318 = vmatpush1.msra.mxu0 0.0
    %6319 = vmatprep.subr.mxu0 0.0
    %6320 = vmatpush1.msra.mxu0 0.0
    %6321 = vmatprep.subr.mxu0 0.0
    %6322 = vmatpush1.msra.mxu0 0.0
    %6323 = vmatprep.subr.mxu0 0.0
    %6324 = vmatpush1.msra.mxu0 0.0
    %6325 = vmatprep.subr.mxu0 0.0
    %6326 = vmatpush1.msra.mxu0 0.0
    %6327 = vmatprep.subr.mxu0 0.0
    %6328 = vmatpush1.msra.mxu0 0.0
    %6329 = vmatprep.subr.mxu0 0.0
    %6330 = vmatpush1.msra.mxu0 0.0
    %6331 = vmatprep.mubr.f32.mxu0 0.0
    %6332 = vmatmul.mubr.f32.gmra.mrb[0].mxu0 %v6259
    %v6333 = vpop.f32.mrb[0].mxu0
    %v6334 = vadd.f32 0.0, %v6333
    %v6335 = vpop.f32.mrb[0].mxu0
    %6336 = vmatprep.mubr.f32.mxu0 0.0
    %6337 = vmatmul.mubr.f32.gmra.mrb[0].mxu0 %v6262
    %v6338 = vpop.f32.mrb[0].mxu0
    %v6339 = vadd.f32 0.0, %v6338
    %v6340 = vpop.f32.mrb[0].mxu0
    %6341 = vmatprep.mubr.f32.mxu0 0.0
    %6342 = vmatmul.mubr.f32.gmra.mrb[0].mxu0 %v6265
    %v6343 = vpop.f32.mrb[0].mxu0
    %v6344 = vadd.f32 0.0, %v6343
    %v6345 = vpop.f32.mrb[0].mxu0
    %6346 = vdwg.mxu0
    %v6347 = vadd.f32 %v6159, %v6334
    %v6348 = vadd.f32 %v6160, %v6339
    %v6349 = vadd.f32 %v6161, %v6344
    %s6350 = scalar_lea.vmem %s8, 96
    %v6351 = vld [vmem:[%s6350] sm:$0xff]
    %v6352 = vld [vmem:[%s6350 + $0x8] sm:$0xff]
    %v6353 = vld [vmem:[%s6350 + $0x10] sm:$0x3]
    %v6355 = vsel %vm5604, %v6351, 0
    %v6358 = vsel %vm5604, %v6352, 0
    %v6361 = vsel %vm5604, %v6353, 0
    %6363 = vmatprep.subr.mxu0 0.0
    %6364 = vmatpush1.msra.mxu0 %v5588
    %6365 = vmatprep.subr.mxu0 0.0
    %6366 = vmatpush1.msra.mxu0 %v5589
    %6367 = vmatprep.subr.mxu0 0.0
    %6368 = vmatpush1.msra.mxu0 %v5590
    %6369 = vmatprep.subr.mxu0 0.0
    %6370 = vmatpush1.msra.mxu0 %v5591
    %6371 = vmatprep.subr.mxu0 0.0
    %6372 = vmatpush1.msra.mxu0 %v5592
    %6373 = vmatprep.subr.mxu0 0.0
    %6374 = vmatpush1.msra.mxu0 %v5593
    %6375 = vmatprep.subr.mxu0 0.0
    %6376 = vmatpush1.msra.mxu0 %v5594
    %6377 = vmatprep.subr.mxu0 0.0
    %6378 = vmatpush1.msra.mxu0 %v5595
    %6379 = vmatprep.subr.mxu0 0.0
    %6380 = vmatpush1.msra.mxu0 %v5596
    %6381 = vmatprep.subr.mxu0 0.0
    %6382 = vmatpush1.msra.mxu0 %v5597
    %6383 = vmatprep.subr.mxu0 0.0
    %6384 = vmatpush1.msra.mxu0 %v5598
    %6385 = vmatprep.subr.mxu0 0.0
    %6386 = vmatpush1.msra.mxu0 %v5599
    %6387 = vmatprep.subr.mxu0 0.0
    %6388 = vmatpush1.msra.mxu0 %v5616
    %6389 = vmatprep.subr.mxu0 0.0
    %6390 = vmatpush1.msra.mxu0 0.0
    %6391 = vmatprep.subr.mxu0 0.0
    %6392 = vmatpush1.msra.mxu0 0.0
    %6393 = vmatprep.subr.mxu0 0.0
    %6394 = vmatpush1.msra.mxu0 0.0
    %6395 = vmatprep.subr.mxu0 0.0
    %6396 = vmatpush1.msra.mxu0 0.0
    %6397 = vmatprep.subr.mxu0 0.0
    %6398 = vmatpush1.msra.mxu0 0.0
    %6399 = vmatprep.subr.mxu0 0.0
    %6400 = vmatpush1.msra.mxu0 0.0
    %6401 = vmatprep.subr.mxu0 0.0
    %6402 = vmatpush1.msra.mxu0 0.0
    %6403 = vmatprep.subr.mxu0 0.0
    %6404 = vmatpush1.msra.mxu0 0.0
    %6405 = vmatprep.subr.mxu0 0.0
    %6406 = vmatpush1.msra.mxu0 0.0
    %6407 = vmatprep.subr.mxu0 0.0
    %6408 = vmatpush1.msra.mxu0 0.0
    %6409 = vmatprep.subr.mxu0 0.0
    %6410 = vmatpush1.msra.mxu0 0.0
    %6411 = vmatprep.subr.mxu0 0.0
    %6412 = vmatpush1.msra.mxu0 0.0
    %6413 = vmatprep.subr.mxu0 0.0
    %6414 = vmatpush1.msra.mxu0 0.0
    %6415 = vmatprep.subr.mxu0 0.0
    %6416 = vmatpush1.msra.mxu0 0.0
    %6417 = vmatprep.subr.mxu0 0.0
    %6418 = vmatpush1.msra.mxu0 0.0
    %6419 = vmatprep.subr.mxu0 0.0
    %6420 = vmatpush1.msra.mxu0 0.0
    %6421 = vmatprep.subr.mxu0 0.0
    %6422 = vmatpush1.msra.mxu0 0.0
    %6423 = vmatprep.subr.mxu0 0.0
    %6424 = vmatpush1.msra.mxu0 0.0
    %6425 = vmatprep.subr.mxu0 0.0
    %6426 = vmatpush1.msra.mxu0 0.0
    %6427 = vmatprep.mubr.f32.mxu0 0.0
    %6428 = vmatmul.mubr.f32.gmra.mrb[0].mxu0 %v6355
    %v6429 = vpop.f32.mrb[0].mxu0
    %v6430 = vadd.f32 0.0, %v6429
    %v6431 = vpop.f32.mrb[0].mxu0
    %6432 = vmatprep.mubr.f32.mxu0 0.0
    %6433 = vmatmul.mubr.f32.gmra.mrb[0].mxu0 %v6358
    %v6434 = vpop.f32.mrb[0].mxu0
    %v6435 = vadd.f32 0.0, %v6434
    %v6436 = vpop.f32.mrb[0].mxu0
    %6437 = vmatprep.mubr.f32.mxu0 0.0
    %6438 = vmatmul.mubr.f32.gmra.mrb[0].mxu0 %v6361
    %v6439 = vpop.f32.mrb[0].mxu0
    %v6440 = vadd.f32 0.0, %v6439
    %v6441 = vpop.f32.mrb[0].mxu0
    %6442 = vdwg.mxu0
    %s6443 = scalar_lea.vmem %s9, 64
    %v6444 = vld [vmem:[%s6443] sm:$0xff]
    %v6445 = vld [vmem:[%s6443 + $0x8] sm:$0xff]
    %v6447 = vsel %vm5440, %v6430, 0
    %v6450 = vsel %vm5440, %v6435, 0
    %v6453 = vsel %vm5440, %v6440, 0
    %6455 = vmatprep.subr.mxu0 0.0
    %6456 = vmatpush1.msra.mxu0 %v6444
    %6457 = vmatprep.subr.mxu0 0.0
    %6458 = vmatpush1.msra.mxu0 %v6445
    %6459 = vmatprep.subr.mxu0 0.0
    %6460 = vmatpush1.msra.mxu0 0.0
    %6461 = vmatprep.subr.mxu0 0.0
    %6462 = vmatpush1.msra.mxu0 0.0
    %6463 = vmatprep.subr.mxu0 0.0
    %6464 = vmatpush1.msra.mxu0 0.0
    %6465 = vmatprep.subr.mxu0 0.0
    %6466 = vmatpush1.msra.mxu0 0.0
    %6467 = vmatprep.subr.mxu0 0.0
    %6468 = vmatpush1.msra.mxu0 0.0
    %6469 = vmatprep.subr.mxu0 0.0
    %6470 = vmatpush1.msra.mxu0 0.0
    %6471 = vmatprep.subr.mxu0 0.0
    %6472 = vmatpush1.msra.mxu0 0.0
    %6473 = vmatprep.subr.mxu0 0.0
    %6474 = vmatpush1.msra.mxu0 0.0
    %6475 = vmatprep.subr.mxu0 0.0
    %6476 = vmatpush1.msra.mxu0 0.0
    %6477 = vmatprep.subr.mxu0 0.0
    %6478 = vmatpush1.msra.mxu0 0.0
    %6479 = vmatprep.subr.mxu0 0.0
    %6480 = vmatpush1.msra.mxu0 0.0
    %6481 = vmatprep.subr.mxu0 0.0
    %6482 = vmatpush1.msra.mxu0 0.0
    %6483 = vmatprep.subr.mxu0 0.0
    %6484 = vmatpush1.msra.mxu0 0.0
    %6485 = vmatprep.subr.mxu0 0.0
    %6486 = vmatpush1.msra.mxu0 0.0
    %6487 = vmatprep.subr.mxu0 0.0
    %6488 = vmatpush1.msra.mxu0 0.0
    %6489 = vmatprep.subr.mxu0 0.0
    %6490 = vmatpush1.msra.mxu0 0.0
    %6491 = vmatprep.subr.mxu0 0.0
    %6492 = vmatpush1.msra.mxu0 0.0
    %6493 = vmatprep.subr.mxu0 0.0
    %6494 = vmatpush1.msra.mxu0 0.0
    %6495 = vmatprep.subr.mxu0 0.0
    %6496 = vmatpush1.msra.mxu0 0.0
    %6497 = vmatprep.subr.mxu0 0.0
    %6498 = vmatpush1.msra.mxu0 0.0
    %6499 = vmatprep.subr.mxu0 0.0
    %6500 = vmatpush1.msra.mxu0 0.0
    %6501 = vmatprep.subr.mxu0 0.0
    %6502 = vmatpush1.msra.mxu0 0.0
    %6503 = vmatprep.subr.mxu0 0.0
    %6504 = vmatpush1.msra.mxu0 0.0
    %6505 = vmatprep.subr.mxu0 0.0
    %6506 = vmatpush1.msra.mxu0 0.0
    %6507 = vmatprep.subr.mxu0 0.0
    %6508 = vmatpush1.msra.mxu0 0.0
    %6509 = vmatprep.subr.mxu0 0.0
    %6510 = vmatpush1.msra.mxu0 0.0
    %6511 = vmatprep.subr.mxu0 0.0
    %6512 = vmatpush1.msra.mxu0 0.0
    %6513 = vmatprep.subr.mxu0 0.0
    %6514 = vmatpush1.msra.mxu0 0.0
    %6515 = vmatprep.subr.mxu0 0.0
    %6516 = vmatpush1.msra.mxu0 0.0
    %6517 = vmatprep.subr.mxu0 0.0
    %6518 = vmatpush1.msra.mxu0 0.0
    %6519 = vmatprep.mubr.f32.mxu0 0.0
    %6520 = vmatmul.mubr.f32.gmra.mrb[0].mxu0 %v6447
    %v6521 = vpop.f32.mrb[0].mxu0
    %v6522 = vadd.f32 0.0, %v6521
    %v6523 = vpop.f32.mrb[0].mxu0
    %6524 = vmatprep.mubr.f32.mxu0 0.0
    %6525 = vmatmul.mubr.f32.gmra.mrb[0].mxu0 %v6450
    %v6526 = vpop.f32.mrb[0].mxu0
    %v6527 = vadd.f32 0.0, %v6526
    %v6528 = vpop.f32.mrb[0].mxu0
    %6529 = vmatprep.mubr.f32.mxu0 0.0
    %6530 = vmatmul.mubr.f32.gmra.mrb[0].mxu0 %v6453
    %v6531 = vpop.f32.mrb[0].mxu0
    %v6532 = vadd.f32 0.0, %v6531
    %v6533 = vpop.f32.mrb[0].mxu0
    %6534 = vdwg.mxu0
    %v6535 = vadd.f32 %v6347, %v6522
    %v6536 = vadd.f32 %v6348, %v6527
    %v6537 = vadd.f32 %v6349, %v6532
    %s6538 = scalar_lea.vmem %s8, 120
    %v6539 = vld [vmem:[%s6538] sm:$0xff]
    %v6540 = vld [vmem:[%s6538 + $0x8] sm:$0xff]
    %v6541 = vld [vmem:[%s6538 + $0x10] sm:$0x3]
    %v6543 = vsel %vm5604, %v6539, 0
    %v6546 = vsel %vm5604, %v6540, 0
    %v6549 = vsel %vm5604, %v6541, 0
    %6551 = vmatprep.subr.mxu0 0.0
    %6552 = vmatpush1.msra.mxu0 %v5588
    %6553 = vmatprep.subr.mxu0 0.0
    %6554 = vmatpush1.msra.mxu0 %v5589
    %6555 = vmatprep.subr.mxu0 0.0
    %6556 = vmatpush1.msra.mxu0 %v5590
    %6557 = vmatprep.subr.mxu0 0.0
    %6558 = vmatpush1.msra.mxu0 %v5591
    %6559 = vmatprep.subr.mxu0 0.0
    %6560 = vmatpush1.msra.mxu0 %v5592
    %6561 = vmatprep.subr.mxu0 0.0
    %6562 = vmatpush1.msra.mxu0 %v5593
    %6563 = vmatprep.subr.mxu0 0.0
    %6564 = vmatpush1.msra.mxu0 %v5594
    %6565 = vmatprep.subr.mxu0 0.0
    %6566 = vmatpush1.msra.mxu0 %v5595
    %6567 = vmatprep.subr.mxu0 0.0
    %6568 = vmatpush1.msra.mxu0 %v5596
    %6569 = vmatprep.subr.mxu0 0.0
    %6570 = vmatpush1.msra.mxu0 %v5597
    %6571 = vmatprep.subr.mxu0 0.0
    %6572 = vmatpush1.msra.mxu0 %v5598
    %6573 = vmatprep.subr.mxu0 0.0
    %6574 = vmatpush1.msra.mxu0 %v5599
    %6575 = vmatprep.subr.mxu0 0.0
    %6576 = vmatpush1.msra.mxu0 %v5616
    %6577 = vmatprep.subr.mxu0 0.0
    %6578 = vmatpush1.msra.mxu0 0.0
    %6579 = vmatprep.subr.mxu0 0.0
    %6580 = vmatpush1.msra.mxu0 0.0
    %6581 = vmatprep.subr.mxu0 0.0
    %6582 = vmatpush1.msra.mxu0 0.0
    %6583 = vmatprep.subr.mxu0 0.0
    %6584 = vmatpush1.msra.mxu0 0.0
    %6585 = vmatprep.subr.mxu0 0.0
    %6586 = vmatpush1.msra.mxu0 0.0
    %6587 = vmatprep.subr.mxu0 0.0
    %6588 = vmatpush1.msra.mxu0 0.0
    %6589 = vmatprep.subr.mxu0 0.0
    %6590 = vmatpush1.msra.mxu0 0.0
    %6591 = vmatprep.subr.mxu0 0.0
    %6592 = vmatpush1.msra.mxu0 0.0
    %6593 = vmatprep.subr.mxu0 0.0
    %6594 = vmatpush1.msra.mxu0 0.0
    %6595 = vmatprep.subr.mxu0 0.0
    %6596 = vmatpush1.msra.mxu0 0.0
    %6597 = vmatprep.subr.mxu0 0.0
    %6598 = vmatpush1.msra.mxu0 0.0
    %6599 = vmatprep.subr.mxu0 0.0
    %6600 = vmatpush1.msra.mxu0 0.0
    %6601 = vmatprep.subr.mxu0 0.0
    %6602 = vmatpush1.msra.mxu0 0.0
    %6603 = vmatprep.subr.mxu0 0.0
    %6604 = vmatpush1.msra.mxu0 0.0
    %6605 = vmatprep.subr.mxu0 0.0
    %6606 = vmatpush1.msra.mxu0 0.0
    %6607 = vmatprep.subr.mxu0 0.0
    %6608 = vmatpush1.msra.mxu0 0.0
    %6609 = vmatprep.subr.mxu0 0.0
    %6610 = vmatpush1.msra.mxu0 0.0
    %6611 = vmatprep.subr.mxu0 0.0
    %6612 = vmatpush1.msra.mxu0 0.0
    %6613 = vmatprep.subr.mxu0 0.0
    %6614 = vmatpush1.msra.mxu0 0.0
    %6615 = vmatprep.mubr.f32.mxu0 0.0
    %6616 = vmatmul.mubr.f32.gmra.mrb[0].mxu0 %v6543
    %v6617 = vpop.f32.mrb[0].mxu0
    %v6618 = vadd.f32 0.0, %v6617
    %v6619 = vpop.f32.mrb[0].mxu0
    %6620 = vmatprep.mubr.f32.mxu0 0.0
    %6621 = vmatmul.mubr.f32.gmra.mrb[0].mxu0 %v6546
    %v6622 = vpop.f32.mrb[0].mxu0
    %v6623 = vadd.f32 0.0, %v6622
    %v6624 = vpop.f32.mrb[0].mxu0
    %6625 = vmatprep.mubr.f32.mxu0 0.0
    %6626 = vmatmul.mubr.f32.gmra.mrb[0].mxu0 %v6549
    %v6627 = vpop.f32.mrb[0].mxu0
    %v6628 = vadd.f32 0.0, %v6627
    %v6629 = vpop.f32.mrb[0].mxu0
    %6630 = vdwg.mxu0
    %s6631 = scalar_lea.vmem %s9, 80
    %v6632 = vld [vmem:[%s6631] sm:$0xff]
    %v6633 = vld [vmem:[%s6631 + $0x8] sm:$0xff]
    %v6635 = vsel %vm5440, %v6618, 0
    %v6638 = vsel %vm5440, %v6623, 0
    %v6641 = vsel %vm5440, %v6628, 0
    %6643 = vmatprep.subr.mxu0 0.0
    %6644 = vmatpush1.msra.mxu0 %v6632
    %6645 = vmatprep.subr.mxu0 0.0
    %6646 = vmatpush1.msra.mxu0 %v6633
    %6647 = vmatprep.subr.mxu0 0.0
    %6648 = vmatpush1.msra.mxu0 0.0
    %6649 = vmatprep.subr.mxu0 0.0
    %6650 = vmatpush1.msra.mxu0 0.0
    %6651 = vmatprep.subr.mxu0 0.0
    %6652 = vmatpush1.msra.mxu0 0.0
    %6653 = vmatprep.subr.mxu0 0.0
    %6654 = vmatpush1.msra.mxu0 0.0
    %6655 = vmatprep.subr.mxu0 0.0
    %6656 = vmatpush1.msra.mxu0 0.0
    %6657 = vmatprep.subr.mxu0 0.0
    %6658 = vmatpush1.msra.mxu0 0.0
    %6659 = vmatprep.subr.mxu0 0.0
    %6660 = vmatpush1.msra.mxu0 0.0
    %6661 = vmatprep.subr.mxu0 0.0
    %6662 = vmatpush1.msra.mxu0 0.0
    %6663 = vmatprep.subr.mxu0 0.0
    %6664 = vmatpush1.msra.mxu0 0.0
    %6665 = vmatprep.subr.mxu0 0.0
    %6666 = vmatpush1.msra.mxu0 0.0
    %6667 = vmatprep.subr.mxu0 0.0
    %6668 = vmatpush1.msra.mxu0 0.0
    %6669 = vmatprep.subr.mxu0 0.0
    %6670 = vmatpush1.msra.mxu0 0.0
    %6671 = vmatprep.subr.mxu0 0.0
    %6672 = vmatpush1.msra.mxu0 0.0
    %6673 = vmatprep.subr.mxu0 0.0
    %6674 = vmatpush1.msra.mxu0 0.0
    %6675 = vmatprep.subr.mxu0 0.0
    %6676 = vmatpush1.msra.mxu0 0.0
    %6677 = vmatprep.subr.mxu0 0.0
    %6678 = vmatpush1.msra.mxu0 0.0
    %6679 = vmatprep.subr.mxu0 0.0
    %6680 = vmatpush1.msra.mxu0 0.0
    %6681 = vmatprep.subr.mxu0 0.0
    %6682 = vmatpush1.msra.mxu0 0.0
    %6683 = vmatprep.subr.mxu0 0.0
    %6684 = vmatpush1.msra.mxu0 0.0
    %6685 = vmatprep.subr.mxu0 0.0
    %6686 = vmatpush1.msra.mxu0 0.0
    %6687 = vmatprep.subr.mxu0 0.0
    %6688 = vmatpush1.msra.mxu0 0.0
    %6689 = vmatprep.subr.mxu0 0.0
    %6690 = vmatpush1.msra.mxu0 0.0
    %6691 = vmatprep.subr.mxu0 0.0
    %6692 = vmatpush1.msra.mxu0 0.0
    %6693 = vmatprep.subr.mxu0 0.0
    %6694 = vmatpush1.msra.mxu0 0.0
    %6695 = vmatprep.subr.mxu0 0.0
    %6696 = vmatpush1.msra.mxu0 0.0
    %6697 = vmatprep.subr.mxu0 0.0
    %6698 = vmatpush1.msra.mxu0 0.0
    %6699 = vmatprep.subr.mxu0 0.0
    %6700 = vmatpush1.msra.mxu0 0.0
    %6701 = vmatprep.subr.mxu0 0.0
    %6702 = vmatpush1.msra.mxu0 0.0
    %6703 = vmatprep.subr.mxu0 0.0
    %6704 = vmatpush1.msra.mxu0 0.0
    %6705 = vmatprep.subr.mxu0 0.0
    %6706 = vmatpush1.msra.mxu0 0.0
    %6707 = vmatprep.mubr.f32.mxu0 0.0
    %6708 = vmatmul.mubr.f32.gmra.mrb[0].mxu0 %v6635
    %v6709 = vpop.f32.mrb[0].mxu0
    %v6710 = vadd.f32 0.0, %v6709
    %v6711 = vpop.f32.mrb[0].mxu0
    %6712 = vmatprep.mubr.f32.mxu0 0.0
    %6713 = vmatmul.mubr.f32.gmra.mrb[0].mxu0 %v6638
    %v6714 = vpop.f32.mrb[0].mxu0
    %v6715 = vadd.f32 0.0, %v6714
    %v6716 = vpop.f32.mrb[0].mxu0
    %6717 = vmatprep.mubr.f32.mxu0 0.0
    %6718 = vmatmul.mubr.f32.gmra.mrb[0].mxu0 %v6641
    %v6719 = vpop.f32.mrb[0].mxu0
    %v6720 = vadd.f32 0.0, %v6719
    %v6721 = vpop.f32.mrb[0].mxu0
    %6722 = vdwg.mxu0
    %v6723 = vadd.f32 %v6535, %v6710
    %v6724 = vadd.f32 %v6536, %v6715
    %v6725 = vadd.f32 %v6537, %v6720
    %s6726 = scalar_lea.vmem %s8, 144
    %v6727 = vld [vmem:[%s6726] sm:$0xff]
    %v6728 = vld [vmem:[%s6726 + $0x8] sm:$0xff]
    %v6729 = vld [vmem:[%s6726 + $0x10] sm:$0x3]
    %v6731 = vsel %vm5604, %v6727, 0
    %v6734 = vsel %vm5604, %v6728, 0
    %v6737 = vsel %vm5604, %v6729, 0
    %6739 = vmatprep.subr.mxu0 0.0
    %6740 = vmatpush1.msra.mxu0 %v5588
    %6741 = vmatprep.subr.mxu0 0.0
    %6742 = vmatpush1.msra.mxu0 %v5589
    %6743 = vmatprep.subr.mxu0 0.0
    %6744 = vmatpush1.msra.mxu0 %v5590
    %6745 = vmatprep.subr.mxu0 0.0
    %6746 = vmatpush1.msra.mxu0 %v5591
    %6747 = vmatprep.subr.mxu0 0.0
    %6748 = vmatpush1.msra.mxu0 %v5592
    %6749 = vmatprep.subr.mxu0 0.0
    %6750 = vmatpush1.msra.mxu0 %v5593
    %6751 = vmatprep.subr.mxu0 0.0
    %6752 = vmatpush1.msra.mxu0 %v5594
    %6753 = vmatprep.subr.mxu0 0.0
    %6754 = vmatpush1.msra.mxu0 %v5595
    %6755 = vmatprep.subr.mxu0 0.0
    %6756 = vmatpush1.msra.mxu0 %v5596
    %6757 = vmatprep.subr.mxu0 0.0
    %6758 = vmatpush1.msra.mxu0 %v5597
    %6759 = vmatprep.subr.mxu0 0.0
    %6760 = vmatpush1.msra.mxu0 %v5598
    %6761 = vmatprep.subr.mxu0 0.0
    %6762 = vmatpush1.msra.mxu0 %v5599
    %6763 = vmatprep.subr.mxu0 0.0
    %6764 = vmatpush1.msra.mxu0 %v5616
    %6765 = vmatprep.subr.mxu0 0.0
    %6766 = vmatpush1.msra.mxu0 0.0
    %6767 = vmatprep.subr.mxu0 0.0
    %6768 = vmatpush1.msra.mxu0 0.0
    %6769 = vmatprep.subr.mxu0 0.0
    %6770 = vmatpush1.msra.mxu0 0.0
    %6771 = vmatprep.subr.mxu0 0.0
    %6772 = vmatpush1.msra.mxu0 0.0
    %6773 = vmatprep.subr.mxu0 0.0
    %6774 = vmatpush1.msra.mxu0 0.0
    %6775 = vmatprep.subr.mxu0 0.0
    %6776 = vmatpush1.msra.mxu0 0.0
    %6777 = vmatprep.subr.mxu0 0.0
    %6778 = vmatpush1.msra.mxu0 0.0
    %6779 = vmatprep.subr.mxu0 0.0
    %6780 = vmatpush1.msra.mxu0 0.0
    %6781 = vmatprep.subr.mxu0 0.0
    %6782 = vmatpush1.msra.mxu0 0.0
    %6783 = vmatprep.subr.mxu0 0.0
    %6784 = vmatpush1.msra.mxu0 0.0
    %6785 = vmatprep.subr.mxu0 0.0
    %6786 = vmatpush1.msra.mxu0 0.0
    %6787 = vmatprep.subr.mxu0 0.0
    %6788 = vmatpush1.msra.mxu0 0.0
    %6789 = vmatprep.subr.mxu0 0.0
    %6790 = vmatpush1.msra.mxu0 0.0
    %6791 = vmatprep.subr.mxu0 0.0
    %6792 = vmatpush1.msra.mxu0 0.0
    %6793 = vmatprep.subr.mxu0 0.0
    %6794 = vmatpush1.msra.mxu0 0.0
    %6795 = vmatprep.subr.mxu0 0.0
    %6796 = vmatpush1.msra.mxu0 0.0
    %6797 = vmatprep.subr.mxu0 0.0
    %6798 = vmatpush1.msra.mxu0 0.0
    %6799 = vmatprep.subr.mxu0 0.0
    %6800 = vmatpush1.msra.mxu0 0.0
    %6801 = vmatprep.subr.mxu0 0.0
    %6802 = vmatpush1.msra.mxu0 0.0
    %6803 = vmatprep.mubr.f32.mxu0 0.0
    %6804 = vmatmul.mubr.f32.gmra.mrb[0].mxu0 %v6731
    %v6805 = vpop.f32.mrb[0].mxu0
    %v6806 = vadd.f32 0.0, %v6805
    %v6807 = vpop.f32.mrb[0].mxu0
    %6808 = vmatprep.mubr.f32.mxu0 0.0
    %6809 = vmatmul.mubr.f32.gmra.mrb[0].mxu0 %v6734
    %v6810 = vpop.f32.mrb[0].mxu0
    %v6811 = vadd.f32 0.0, %v6810
    %v6812 = vpop.f32.mrb[0].mxu0
    %6813 = vmatprep.mubr.f32.mxu0 0.0
    %6814 = vmatmul.mubr.f32.gmra.mrb[0].mxu0 %v6737
    %v6815 = vpop.f32.mrb[0].mxu0
    %v6816 = vadd.f32 0.0, %v6815
    %v6817 = vpop.f32.mrb[0].mxu0
    %6818 = vdwg.mxu0
    %s6819 = scalar_lea.vmem %s9, 96
    %v6820 = vld [vmem:[%s6819] sm:$0xff]
    %v6821 = vld [vmem:[%s6819 + $0x8] sm:$0xff]
    %v6823 = vsel %vm5440, %v6806, 0
    %v6826 = vsel %vm5440, %v6811, 0
    %v6829 = vsel %vm5440, %v6816, 0
    %6831 = vmatprep.subr.mxu0 0.0
    %6832 = vmatpush1.msra.mxu0 %v6820
    %6833 = vmatprep.subr.mxu0 0.0
    %6834 = vmatpush1.msra.mxu0 %v6821
    %6835 = vmatprep.subr.mxu0 0.0
    %6836 = vmatpush1.msra.mxu0 0.0
    %6837 = vmatprep.subr.mxu0 0.0
    %6838 = vmatpush1.msra.mxu0 0.0
    %6839 = vmatprep.subr.mxu0 0.0
    %6840 = vmatpush1.msra.mxu0 0.0
    %6841 = vmatprep.subr.mxu0 0.0
    %6842 = vmatpush1.msra.mxu0 0.0
    %6843 = vmatprep.subr.mxu0 0.0
    %6844 = vmatpush1.msra.mxu0 0.0
    %6845 = vmatprep.subr.mxu0 0.0
    %6846 = vmatpush1.msra.mxu0 0.0
    %6847 = vmatprep.subr.mxu0 0.0
    %6848 = vmatpush1.msra.mxu0 0.0
    %6849 = vmatprep.subr.mxu0 0.0
    %6850 = vmatpush1.msra.mxu0 0.0
    %6851 = vmatprep.subr.mxu0 0.0
    %6852 = vmatpush1.msra.mxu0 0.0
    %6853 = vmatprep.subr.mxu0 0.0
    %6854 = vmatpush1.msra.mxu0 0.0
    %6855 = vmatprep.subr.mxu0 0.0
    %6856 = vmatpush1.msra.mxu0 0.0
    %6857 = vmatprep.subr.mxu0 0.0
    %6858 = vmatpush1.msra.mxu0 0.0
    %6859 = vmatprep.subr.mxu0 0.0
    %6860 = vmatpush1.msra.mxu0 0.0
    %6861 = vmatprep.subr.mxu0 0.0
    %6862 = vmatpush1.msra.mxu0 0.0
    %6863 = vmatprep.subr.mxu0 0.0
    %6864 = vmatpush1.msra.mxu0 0.0
    %6865 = vmatprep.subr.mxu0 0.0
    %6866 = vmatpush1.msra.mxu0 0.0
    %6867 = vmatprep.subr.mxu0 0.0
    %6868 = vmatpush1.msra.mxu0 0.0
    %6869 = vmatprep.subr.mxu0 0.0
    %6870 = vmatpush1.msra.mxu0 0.0
    %6871 = vmatprep.subr.mxu0 0.0
    %6872 = vmatpush1.msra.mxu0 0.0
    %6873 = vmatprep.subr.mxu0 0.0
    %6874 = vmatpush1.msra.mxu0 0.0
    %6875 = vmatprep.subr.mxu0 0.0
    %6876 = vmatpush1.msra.mxu0 0.0
    %6877 = vmatprep.subr.mxu0 0.0
    %6878 = vmatpush1.msra.mxu0 0.0
    %6879 = vmatprep.subr.mxu0 0.0
    %6880 = vmatpush1.msra.mxu0 0.0
    %6881 = vmatprep.subr.mxu0 0.0
    %6882 = vmatpush1.msra.mxu0 0.0
    %6883 = vmatprep.subr.mxu0 0.0
    %6884 = vmatpush1.msra.mxu0 0.0
    %6885 = vmatprep.subr.mxu0 0.0
    %6886 = vmatpush1.msra.mxu0 0.0
    %6887 = vmatprep.subr.mxu0 0.0
    %6888 = vmatpush1.msra.mxu0 0.0
    %6889 = vmatprep.subr.mxu0 0.0
    %6890 = vmatpush1.msra.mxu0 0.0
    %6891 = vmatprep.subr.mxu0 0.0
    %6892 = vmatpush1.msra.mxu0 0.0
    %6893 = vmatprep.subr.mxu0 0.0
    %6894 = vmatpush1.msra.mxu0 0.0
    %6895 = vmatprep.mubr.f32.mxu0 0.0
    %6896 = vmatmul.mubr.f32.gmra.mrb[0].mxu0 %v6823
    %v6897 = vpop.f32.mrb[0].mxu0
    %v6898 = vadd.f32 0.0, %v6897
    %v6899 = vpop.f32.mrb[0].mxu0
    %6900 = vmatprep.mubr.f32.mxu0 0.0
    %6901 = vmatmul.mubr.f32.gmra.mrb[0].mxu0 %v6826
    %v6902 = vpop.f32.mrb[0].mxu0
    %v6903 = vadd.f32 0.0, %v6902
    %v6904 = vpop.f32.mrb[0].mxu0
    %6905 = vmatprep.mubr.f32.mxu0 0.0
    %6906 = vmatmul.mubr.f32.gmra.mrb[0].mxu0 %v6829
    %v6907 = vpop.f32.mrb[0].mxu0
    %v6908 = vadd.f32 0.0, %v6907
    %v6909 = vpop.f32.mrb[0].mxu0
    %6910 = vdwg.mxu0
    %v6911 = vadd.f32 %v6723, %v6898
    %v6912 = vadd.f32 %v6724, %v6903
    %v6913 = vadd.f32 %v6725, %v6908
    %s6914 = scalar_lea.vmem %s8, 168
    %v6915 = vld [vmem:[%s6914] sm:$0xff]
    %v6916 = vld [vmem:[%s6914 + $0x8] sm:$0xff]
    %v6917 = vld [vmem:[%s6914 + $0x10] sm:$0x3]
    %v6919 = vsel %vm5604, %v6915, 0
    %v6922 = vsel %vm5604, %v6916, 0
    %v6925 = vsel %vm5604, %v6917, 0
    %6927 = vmatprep.subr.mxu0 0.0
    %6928 = vmatpush1.msra.mxu0 %v5588
    %6929 = vmatprep.subr.mxu0 0.0
    %6930 = vmatpush1.msra.mxu0 %v5589
    %6931 = vmatprep.subr.mxu0 0.0
    %6932 = vmatpush1.msra.mxu0 %v5590
    %6933 = vmatprep.subr.mxu0 0.0
    %6934 = vmatpush1.msra.mxu0 %v5591
    %6935 = vmatprep.subr.mxu0 0.0
    %6936 = vmatpush1.msra.mxu0 %v5592
    %6937 = vmatprep.subr.mxu0 0.0
    %6938 = vmatpush1.msra.mxu0 %v5593
    %6939 = vmatprep.subr.mxu0 0.0
    %6940 = vmatpush1.msra.mxu0 %v5594
    %6941 = vmatprep.subr.mxu0 0.0
    %6942 = vmatpush1.msra.mxu0 %v5595
    %6943 = vmatprep.subr.mxu0 0.0
    %6944 = vmatpush1.msra.mxu0 %v5596
    %6945 = vmatprep.subr.mxu0 0.0
    %6946 = vmatpush1.msra.mxu0 %v5597
    %6947 = vmatprep.subr.mxu0 0.0
    %6948 = vmatpush1.msra.mxu0 %v5598
    %6949 = vmatprep.subr.mxu0 0.0
    %6950 = vmatpush1.msra.mxu0 %v5599
    %6951 = vmatprep.subr.mxu0 0.0
    %6952 = vmatpush1.msra.mxu0 %v5616
    %6953 = vmatprep.subr.mxu0 0.0
    %6954 = vmatpush1.msra.mxu0 0.0
    %6955 = vmatprep.subr.mxu0 0.0
    %6956 = vmatpush1.msra.mxu0 0.0
    %6957 = vmatprep.subr.mxu0 0.0
    %6958 = vmatpush1.msra.mxu0 0.0
    %6959 = vmatprep.subr.mxu0 0.0
    %6960 = vmatpush1.msra.mxu0 0.0
    %6961 = vmatprep.subr.mxu0 0.0
    %6962 = vmatpush1.msra.mxu0 0.0
    %6963 = vmatprep.subr.mxu0 0.0
    %6964 = vmatpush1.msra.mxu0 0.0
    %6965 = vmatprep.subr.mxu0 0.0
    %6966 = vmatpush1.msra.mxu0 0.0
    %6967 = vmatprep.subr.mxu0 0.0
    %6968 = vmatpush1.msra.mxu0 0.0
    %6969 = vmatprep.subr.mxu0 0.0
    %6970 = vmatpush1.msra.mxu0 0.0
    %6971 = vmatprep.subr.mxu0 0.0
    %6972 = vmatpush1.msra.mxu0 0.0
    %6973 = vmatprep.subr.mxu0 0.0
    %6974 = vmatpush1.msra.mxu0 0.0
    %6975 = vmatprep.subr.mxu0 0.0
    %6976 = vmatpush1.msra.mxu0 0.0
    %6977 = vmatprep.subr.mxu0 0.0
    %6978 = vmatpush1.msra.mxu0 0.0
    %6979 = vmatprep.subr.mxu0 0.0
    %6980 = vmatpush1.msra.mxu0 0.0
    %6981 = vmatprep.subr.mxu0 0.0
    %6982 = vmatpush1.msra.mxu0 0.0
    %6983 = vmatprep.subr.mxu0 0.0
    %6984 = vmatpush1.msra.mxu0 0.0
    %6985 = vmatprep.subr.mxu0 0.0
    %6986 = vmatpush1.msra.mxu0 0.0
    %6987 = vmatprep.subr.mxu0 0.0
    %6988 = vmatpush1.msra.mxu0 0.0
    %6989 = vmatprep.subr.mxu0 0.0
    %6990 = vmatpush1.msra.mxu0 0.0
    %6991 = vmatprep.mubr.f32.mxu0 0.0
    %6992 = vmatmul.mubr.f32.gmra.mrb[0].mxu0 %v6919
    %v6993 = vpop.f32.mrb[0].mxu0
    %v6994 = vadd.f32 0.0, %v6993
    %v6995 = vpop.f32.mrb[0].mxu0
    %6996 = vmatprep.mubr.f32.mxu0 0.0
    %6997 = vmatmul.mubr.f32.gmra.mrb[0].mxu0 %v6922
    %v6998 = vpop.f32.mrb[0].mxu0
    %v6999 = vadd.f32 0.0, %v6998
    %v7000 = vpop.f32.mrb[0].mxu0
    %7001 = vmatprep.mubr.f32.mxu0 0.0
    %7002 = vmatmul.mubr.f32.gmra.mrb[0].mxu0 %v6925
    %v7003 = vpop.f32.mrb[0].mxu0
    %v7004 = vadd.f32 0.0, %v7003
    %v7005 = vpop.f32.mrb[0].mxu0
    %7006 = vdwg.mxu0
    %s7007 = scalar_lea.vmem %s9, 112
    %v7008 = vld [vmem:[%s7007] sm:$0xff]
    %v7009 = vld [vmem:[%s7007 + $0x8] sm:$0xff]
    %v7011 = vsel %vm5440, %v6994, 0
    %v7014 = vsel %vm5440, %v6999, 0
    %v7017 = vsel %vm5440, %v7004, 0
    %7019 = vmatprep.subr.mxu0 0.0
    %7020 = vmatpush1.msra.mxu0 %v7008
    %7021 = vmatprep.subr.mxu0 0.0
    %7022 = vmatpush1.msra.mxu0 %v7009
    %7023 = vmatprep.subr.mxu0 0.0
    %7024 = vmatpush1.msra.mxu0 0.0
    %7025 = vmatprep.subr.mxu0 0.0
    %7026 = vmatpush1.msra.mxu0 0.0
    %7027 = vmatprep.subr.mxu0 0.0
    %7028 = vmatpush1.msra.mxu0 0.0
    %7029 = vmatprep.subr.mxu0 0.0
    %7030 = vmatpush1.msra.mxu0 0.0
    %7031 = vmatprep.subr.mxu0 0.0
    %7032 = vmatpush1.msra.mxu0 0.0
    %7033 = vmatprep.subr.mxu0 0.0
    %7034 = vmatpush1.msra.mxu0 0.0
    %7035 = vmatprep.subr.mxu0 0.0
    %7036 = vmatpush1.msra.mxu0 0.0
    %7037 = vmatprep.subr.mxu0 0.0
    %7038 = vmatpush1.msra.mxu0 0.0
    %7039 = vmatprep.subr.mxu0 0.0
    %7040 = vmatpush1.msra.mxu0 0.0
    %7041 = vmatprep.subr.mxu0 0.0
    %7042 = vmatpush1.msra.mxu0 0.0
    %7043 = vmatprep.subr.mxu0 0.0
    %7044 = vmatpush1.msra.mxu0 0.0
    %7045 = vmatprep.subr.mxu0 0.0
    %7046 = vmatpush1.msra.mxu0 0.0
    %7047 = vmatprep.subr.mxu0 0.0
    %7048 = vmatpush1.msra.mxu0 0.0
    %7049 = vmatprep.subr.mxu0 0.0
    %7050 = vmatpush1.msra.mxu0 0.0
    %7051 = vmatprep.subr.mxu0 0.0
    %7052 = vmatpush1.msra.mxu0 0.0
    %7053 = vmatprep.subr.mxu0 0.0
    %7054 = vmatpush1.msra.mxu0 0.0
    %7055 = vmatprep.subr.mxu0 0.0
    %7056 = vmatpush1.msra.mxu0 0.0
    %7057 = vmatprep.subr.mxu0 0.0
    %7058 = vmatpush1.msra.mxu0 0.0
    %7059 = vmatprep.subr.mxu0 0.0
    %7060 = vmatpush1.msra.mxu0 0.0
    %7061 = vmatprep.subr.mxu0 0.0
    %7062 = vmatpush1.msra.mxu0 0.0
    %7063 = vmatprep.subr.mxu0 0.0
    %7064 = vmatpush1.msra.mxu0 0.0
    %7065 = vmatprep.subr.mxu0 0.0
    %7066 = vmatpush1.msra.mxu0 0.0
    %7067 = vmatprep.subr.mxu0 0.0
    %7068 = vmatpush1.msra.mxu0 0.0
    %7069 = vmatprep.subr.mxu0 0.0
    %7070 = vmatpush1.msra.mxu0 0.0
    %7071 = vmatprep.subr.mxu0 0.0
    %7072 = vmatpush1.msra.mxu0 0.0
    %7073 = vmatprep.subr.mxu0 0.0
    %7074 = vmatpush1.msra.mxu0 0.0
    %7075 = vmatprep.subr.mxu0 0.0
    %7076 = vmatpush1.msra.mxu0 0.0
    %7077 = vmatprep.subr.mxu0 0.0
    %7078 = vmatpush1.msra.mxu0 0.0
    %7079 = vmatprep.subr.mxu0 0.0
    %7080 = vmatpush1.msra.mxu0 0.0
    %7081 = vmatprep.subr.mxu0 0.0
    %7082 = vmatpush1.msra.mxu0 0.0
    %7083 = vmatprep.mubr.f32.mxu0 0.0
    %7084 = vmatmul.mubr.f32.gmra.mrb[0].mxu0 %v7011
    %v7085 = vpop.f32.mrb[0].mxu0
    %v7086 = vadd.f32 0.0, %v7085
    %v7087 = vpop.f32.mrb[0].mxu0
    %7088 = vmatprep.mubr.f32.mxu0 0.0
    %7089 = vmatmul.mubr.f32.gmra.mrb[0].mxu0 %v7014
    %v7090 = vpop.f32.mrb[0].mxu0
    %v7091 = vadd.f32 0.0, %v7090
    %v7092 = vpop.f32.mrb[0].mxu0
    %7093 = vmatprep.mubr.f32.mxu0 0.0
    %7094 = vmatmul.mubr.f32.gmra.mrb[0].mxu0 %v7017
    %v7095 = vpop.f32.mrb[0].mxu0
    %v7096 = vadd.f32 0.0, %v7095
    %v7097 = vpop.f32.mrb[0].mxu0
    %7098 = vdwg.mxu0
    %v7099 = vadd.f32 %v6911, %v7086
    %v7100 = vadd.f32 %v6912, %v7091
    %v7101 = vadd.f32 %v6913, %v7096
    %s7102 = scalar_lea.vmem %s8, 192
    %v7103 = vld [vmem:[%s7102] sm:$0xff]
    %v7104 = vld [vmem:[%s7102 + $0x8] sm:$0xff]
    %v7105 = vld [vmem:[%s7102 + $0x10] sm:$0x3]
    %v7107 = vsel %vm5604, %v7103, 0
    %v7110 = vsel %vm5604, %v7104, 0
    %v7113 = vsel %vm5604, %v7105, 0
    %7115 = vmatprep.subr.mxu0 0.0
    %7116 = vmatpush1.msra.mxu0 %v5588
    %7117 = vmatprep.subr.mxu0 0.0
    %7118 = vmatpush1.msra.mxu0 %v5589
    %7119 = vmatprep.subr.mxu0 0.0
    %7120 = vmatpush1.msra.mxu0 %v5590
    %7121 = vmatprep.subr.mxu0 0.0
    %7122 = vmatpush1.msra.mxu0 %v5591
    %7123 = vmatprep.subr.mxu0 0.0
    %7124 = vmatpush1.msra.mxu0 %v5592
    %7125 = vmatprep.subr.mxu0 0.0
    %7126 = vmatpush1.msra.mxu0 %v5593
    %7127 = vmatprep.subr.mxu0 0.0
    %7128 = vmatpush1.msra.mxu0 %v5594
    %7129 = vmatprep.subr.mxu0 0.0
    %7130 = vmatpush1.msra.mxu0 %v5595
    %7131 = vmatprep.subr.mxu0 0.0
    %7132 = vmatpush1.msra.mxu0 %v5596
    %7133 = vmatprep.subr.mxu0 0.0
    %7134 = vmatpush1.msra.mxu0 %v5597
    %7135 = vmatprep.subr.mxu0 0.0
    %7136 = vmatpush1.msra.mxu0 %v5598
    %7137 = vmatprep.subr.mxu0 0.0
    %7138 = vmatpush1.msra.mxu0 %v5599
    %7139 = vmatprep.subr.mxu0 0.0
    %7140 = vmatpush1.msra.mxu0 %v5616
    %7141 = vmatprep.subr.mxu0 0.0
    %7142 = vmatpush1.msra.mxu0 0.0
    %7143 = vmatprep.subr.mxu0 0.0
    %7144 = vmatpush1.msra.mxu0 0.0
    %7145 = vmatprep.subr.mxu0 0.0
    %7146 = vmatpush1.msra.mxu0 0.0
    %7147 = vmatprep.subr.mxu0 0.0
    %7148 = vmatpush1.msra.mxu0 0.0
    %7149 = vmatprep.subr.mxu0 0.0
    %7150 = vmatpush1.msra.mxu0 0.0
    %7151 = vmatprep.subr.mxu0 0.0
    %7152 = vmatpush1.msra.mxu0 0.0
    %7153 = vmatprep.subr.mxu0 0.0
    %7154 = vmatpush1.msra.mxu0 0.0
    %7155 = vmatprep.subr.mxu0 0.0
    %7156 = vmatpush1.msra.mxu0 0.0
    %7157 = vmatprep.subr.mxu0 0.0
    %7158 = vmatpush1.msra.mxu0 0.0
    %7159 = vmatprep.subr.mxu0 0.0
    %7160 = vmatpush1.msra.mxu0 0.0
    %7161 = vmatprep.subr.mxu0 0.0
    %7162 = vmatpush1.msra.mxu0 0.0
    %7163 = vmatprep.subr.mxu0 0.0
    %7164 = vmatpush1.msra.mxu0 0.0
    %7165 = vmatprep.subr.mxu0 0.0
    %7166 = vmatpush1.msra.mxu0 0.0
    %7167 = vmatprep.subr.mxu0 0.0
    %7168 = vmatpush1.msra.mxu0 0.0
    %7169 = vmatprep.subr.mxu0 0.0
    %7170 = vmatpush1.msra.mxu0 0.0
    %7171 = vmatprep.subr.mxu0 0.0
    %7172 = vmatpush1.msra.mxu0 0.0
    %7173 = vmatprep.subr.mxu0 0.0
    %7174 = vmatpush1.msra.mxu0 0.0
    %7175 = vmatprep.subr.mxu0 0.0
    %7176 = vmatpush1.msra.mxu0 0.0
    %7177 = vmatprep.subr.mxu0 0.0
    %7178 = vmatpush1.msra.mxu0 0.0
    %7179 = vmatprep.mubr.f32.mxu0 0.0
    %7180 = vmatmul.mubr.f32.gmra.mrb[0].mxu0 %v7107
    %v7181 = vpop.f32.mrb[0].mxu0
    %v7182 = vadd.f32 0.0, %v7181
    %v7183 = vpop.f32.mrb[0].mxu0
    %7184 = vmatprep.mubr.f32.mxu0 0.0
    %7185 = vmatmul.mubr.f32.gmra.mrb[0].mxu0 %v7110
    %v7186 = vpop.f32.mrb[0].mxu0
    %v7187 = vadd.f32 0.0, %v7186
    %v7188 = vpop.f32.mrb[0].mxu0
    %7189 = vmatprep.mubr.f32.mxu0 0.0
    %7190 = vmatmul.mubr.f32.gmra.mrb[0].mxu0 %v7113
    %v7191 = vpop.f32.mrb[0].mxu0
    %v7192 = vadd.f32 0.0, %v7191
    %v7193 = vpop.f32.mrb[0].mxu0
    %7194 = vdwg.mxu0
    %s7195 = scalar_lea.vmem %s9, 128
    %v7196 = vld [vmem:[%s7195] sm:$0xff]
    %v7197 = vld [vmem:[%s7195 + $0x8] sm:$0xff]
    %v7199 = vsel %vm5440, %v7182, 0
    %v7202 = vsel %vm5440, %v7187, 0
    %v7205 = vsel %vm5440, %v7192, 0
    %7207 = vmatprep.subr.mxu0 0.0
    %7208 = vmatpush1.msra.mxu0 %v7196
    %7209 = vmatprep.subr.mxu0 0.0
    %7210 = vmatpush1.msra.mxu0 %v7197
    %7211 = vmatprep.subr.mxu0 0.0
    %7212 = vmatpush1.msra.mxu0 0.0
    %7213 = vmatprep.subr.mxu0 0.0
    %7214 = vmatpush1.msra.mxu0 0.0
    %7215 = vmatprep.subr.mxu0 0.0
    %7216 = vmatpush1.msra.mxu0 0.0
    %7217 = vmatprep.subr.mxu0 0.0
    %7218 = vmatpush1.msra.mxu0 0.0
    %7219 = vmatprep.subr.mxu0 0.0
    %7220 = vmatpush1.msra.mxu0 0.0
    %7221 = vmatprep.subr.mxu0 0.0
    %7222 = vmatpush1.msra.mxu0 0.0
    %7223 = vmatprep.subr.mxu0 0.0
    %7224 = vmatpush1.msra.mxu0 0.0
    %7225 = vmatprep.subr.mxu0 0.0
    %7226 = vmatpush1.msra.mxu0 0.0
    %7227 = vmatprep.subr.mxu0 0.0
    %7228 = vmatpush1.msra.mxu0 0.0
    %7229 = vmatprep.subr.mxu0 0.0
    %7230 = vmatpush1.msra.mxu0 0.0
    %7231 = vmatprep.subr.mxu0 0.0
    %7232 = vmatpush1.msra.mxu0 0.0
    %7233 = vmatprep.subr.mxu0 0.0
    %7234 = vmatpush1.msra.mxu0 0.0
    %7235 = vmatprep.subr.mxu0 0.0
    %7236 = vmatpush1.msra.mxu0 0.0
    %7237 = vmatprep.subr.mxu0 0.0
    %7238 = vmatpush1.msra.mxu0 0.0
    %7239 = vmatprep.subr.mxu0 0.0
    %7240 = vmatpush1.msra.mxu0 0.0
    %7241 = vmatprep.subr.mxu0 0.0
    %7242 = vmatpush1.msra.mxu0 0.0
    %7243 = vmatprep.subr.mxu0 0.0
    %7244 = vmatpush1.msra.mxu0 0.0
    %7245 = vmatprep.subr.mxu0 0.0
    %7246 = vmatpush1.msra.mxu0 0.0
    %7247 = vmatprep.subr.mxu0 0.0
    %7248 = vmatpush1.msra.mxu0 0.0
    %7249 = vmatprep.subr.mxu0 0.0
    %7250 = vmatpush1.msra.mxu0 0.0
    %7251 = vmatprep.subr.mxu0 0.0
    %7252 = vmatpush1.msra.mxu0 0.0
    %7253 = vmatprep.subr.mxu0 0.0
    %7254 = vmatpush1.msra.mxu0 0.0
    %7255 = vmatprep.subr.mxu0 0.0
    %7256 = vmatpush1.msra.mxu0 0.0
    %7257 = vmatprep.subr.mxu0 0.0
    %7258 = vmatpush1.msra.mxu0 0.0
    %7259 = vmatprep.subr.mxu0 0.0
    %7260 = vmatpush1.msra.mxu0 0.0
    %7261 = vmatprep.subr.mxu0 0.0
    %7262 = vmatpush1.msra.mxu0 0.0
    %7263 = vmatprep.subr.mxu0 0.0
    %7264 = vmatpush1.msra.mxu0 0.0
    %7265 = vmatprep.subr.mxu0 0.0
    %7266 = vmatpush1.msra.mxu0 0.0
    %7267 = vmatprep.subr.mxu0 0.0
    %7268 = vmatpush1.msra.mxu0 0.0
    %7269 = vmatprep.subr.mxu0 0.0
    %7270 = vmatpush1.msra.mxu0 0.0
    %7271 = vmatprep.mubr.f32.mxu0 0.0
    %7272 = vmatmul.mubr.f32.gmra.mrb[0].mxu0 %v7199
    %v7273 = vpop.f32.mrb[0].mxu0
    %v7274 = vadd.f32 0.0, %v7273
    %v7275 = vpop.f32.mrb[0].mxu0
    %7276 = vmatprep.mubr.f32.mxu0 0.0
    %7277 = vmatmul.mubr.f32.gmra.mrb[0].mxu0 %v7202
    %v7278 = vpop.f32.mrb[0].mxu0
    %v7279 = vadd.f32 0.0, %v7278
    %v7280 = vpop.f32.mrb[0].mxu0
    %7281 = vmatprep.mubr.f32.mxu0 0.0
    %7282 = vmatmul.mubr.f32.gmra.mrb[0].mxu0 %v7205
    %v7283 = vpop.f32.mrb[0].mxu0
    %v7284 = vadd.f32 0.0, %v7283
    %v7285 = vpop.f32.mrb[0].mxu0
    %7286 = vdwg.mxu0
    %v7287 = vadd.f32 %v7099, %v7274
    %v7288 = vadd.f32 %v7100, %v7279
    %v7289 = vadd.f32 %v7101, %v7284
    %v7290 = vld [vmem:[%s10] sm:$0x1]
    %v7292 = vlaneseq
    %v7293 = vshrl.u32 %v7292, 7
    %v7294 = vsub.s32 0, %v7293
    %v7295 = vrot.slane %v7290, %v7294
    %v7297 = vadd.f32 %v7287, %v7295
    %v7298 = vadd.f32 %v7288, %v7295
    %v7299 = vadd.f32 %v7289, %v7295
    %v7300 = vmax.f32 %v7297, 0.0
    %v7301 = vmax.f32 %v7298, 0.0
    %v7302 = vmax.f32 %v7299, 0.0
    %v7303 = vld [vmem:[%s11] sm:$0x3]
    %vm7304 = vcmask 146432
    %v7306 = vsel %vm7304, %v7303, 0
    %v7309 = vsel %vm5614, %v7302, 0
    %7311 = vmatprep.subr.mxu0 0.0
    %7312 = vmatpush1.msra.mxu0 %v7300
    %7313 = vmatprep.subr.mxu0 0.0
    %7314 = vmatpush1.msra.mxu0 %v7301
    %7315 = vmatprep.subr.mxu0 0.0
    %7316 = vmatpush1.msra.mxu0 %v7309
    %7317 = vmatprep.subr.mxu0 0.0
    %7318 = vmatpush1.msra.mxu0 0.0
    %7319 = vmatprep.subr.mxu0 0.0
    %7320 = vmatpush1.msra.mxu0 0.0
    %7321 = vmatprep.subr.mxu0 0.0
    %7322 = vmatpush1.msra.mxu0 0.0
    %7323 = vmatprep.subr.mxu0 0.0
    %7324 = vmatpush1.msra.mxu0 0.0
    %7325 = vmatprep.subr.mxu0 0.0
    %7326 = vmatpush1.msra.mxu0 0.0
    %7327 = vmatprep.subr.mxu0 0.0
    %7328 = vmatpush1.msra.mxu0 0.0
    %7329 = vmatprep.subr.mxu0 0.0
    %7330 = vmatpush1.msra.mxu0 0.0
    %7331 = vmatprep.subr.mxu0 0.0
    %7332 = vmatpush1.msra.mxu0 0.0
    %7333 = vmatprep.subr.mxu0 0.0
    %7334 = vmatpush1.msra.mxu0 0.0
    %7335 = vmatprep.subr.mxu0 0.0
    %7336 = vmatpush1.msra.mxu0 0.0
    %7337 = vmatprep.subr.mxu0 0.0
    %7338 = vmatpush1.msra.mxu0 0.0
    %7339 = vmatprep.subr.mxu0 0.0
    %7340 = vmatpush1.msra.mxu0 0.0
    %7341 = vmatprep.subr.mxu0 0.0
    %7342 = vmatpush1.msra.mxu0 0.0
    %7343 = vmatprep.subr.mxu0 0.0
    %7344 = vmatpush1.msra.mxu0 0.0
    %7345 = vmatprep.subr.mxu0 0.0
    %7346 = vmatpush1.msra.mxu0 0.0
    %7347 = vmatprep.subr.mxu0 0.0
    %7348 = vmatpush1.msra.mxu0 0.0
    %7349 = vmatprep.subr.mxu0 0.0
    %7350 = vmatpush1.msra.mxu0 0.0
    %7351 = vmatprep.subr.mxu0 0.0
    %7352 = vmatpush1.msra.mxu0 0.0
    %7353 = vmatprep.subr.mxu0 0.0
    %7354 = vmatpush1.msra.mxu0 0.0
    %7355 = vmatprep.subr.mxu0 0.0
    %7356 = vmatpush1.msra.mxu0 0.0
    %7357 = vmatprep.subr.mxu0 0.0
    %7358 = vmatpush1.msra.mxu0 0.0
    %7359 = vmatprep.subr.mxu0 0.0
    %7360 = vmatpush1.msra.mxu0 0.0
    %7361 = vmatprep.subr.mxu0 0.0
    %7362 = vmatpush1.msra.mxu0 0.0
    %7363 = vmatprep.subr.mxu0 0.0
    %7364 = vmatpush1.msra.mxu0 0.0
    %7365 = vmatprep.subr.mxu0 0.0
    %7366 = vmatpush1.msra.mxu0 0.0
    %7367 = vmatprep.subr.mxu0 0.0
    %7368 = vmatpush1.msra.mxu0 0.0
    %7369 = vmatprep.subr.mxu0 0.0
    %7370 = vmatpush1.msra.mxu0 0.0
    %7371 = vmatprep.subr.mxu0 0.0
    %7372 = vmatpush1.msra.mxu0 0.0
    %7373 = vmatprep.subr.mxu0 0.0
    %7374 = vmatpush1.msra.mxu0 0.0
    %7375 = vmatprep.mubr.f32.mxu0 0.0
    %7376 = vmatmul.mubr.f32.gmra.mrb[0].mxu0 %v7306
    %v7377 = vpop.f32.mrb[0].mxu0
    %v7378 = vadd.f32 0.0, %v7377
    %v7379 = vpop.f32.mrb[0].mxu0
    %7380 = vdwg.mxu0
    %v7381 = vld [vmem:[%s12] sm:$0xff]
    %v7382 = vld [vmem:[%s12 + $0x8] sm:$0xff]
    %v7383 = vld [vmem:[%s12 + $0x10] sm:$0xff]
    %v7384 = vld [vmem:[%s12 + $0x18] sm:$0xff]
    %s7385 = scalar_lea.vmem %s11, 2
    %v7386 = vld [vmem:[%s7385] sm:$0x3]
    %v7388 = vsel %vm7304, %v7386, 0
    %7390 = vmatprep.subr.mxu0 0.0
    %7391 = vmatpush1.msra.mxu0 %v7300
    %7392 = vmatprep.subr.mxu0 0.0
    %7393 = vmatpush1.msra.mxu0 %v7301
    %7394 = vmatprep.subr.mxu0 0.0
    %7395 = vmatpush1.msra.mxu0 %v7309
    %7396 = vmatprep.subr.mxu0 0.0
    %7397 = vmatpush1.msra.mxu0 0.0
    %7398 = vmatprep.subr.mxu0 0.0
    %7399 = vmatpush1.msra.mxu0 0.0
    %7400 = vmatprep.subr.mxu0 0.0
    %7401 = vmatpush1.msra.mxu0 0.0
    %7402 = vmatprep.subr.mxu0 0.0
    %7403 = vmatpush1.msra.mxu0 0.0
    %7404 = vmatprep.subr.mxu0 0.0
    %7405 = vmatpush1.msra.mxu0 0.0
    %7406 = vmatprep.subr.mxu0 0.0
    %7407 = vmatpush1.msra.mxu0 0.0
    %7408 = vmatprep.subr.mxu0 0.0
    %7409 = vmatpush1.msra.mxu0 0.0
    %7410 = vmatprep.subr.mxu0 0.0
    %7411 = vmatpush1.msra.mxu0 0.0
    %7412 = vmatprep.subr.mxu0 0.0
    %7413 = vmatpush1.msra.mxu0 0.0
    %7414 = vmatprep.subr.mxu0 0.0
    %7415 = vmatpush1.msra.mxu0 0.0
    %7416 = vmatprep.subr.mxu0 0.0
    %7417 = vmatpush1.msra.mxu0 0.0
    %7418 = vmatprep.subr.mxu0 0.0
    %7419 = vmatpush1.msra.mxu0 0.0
    %7420 = vmatprep.subr.mxu0 0.0
    %7421 = vmatpush1.msra.mxu0 0.0
    %7422 = vmatprep.subr.mxu0 0.0
    %7423 = vmatpush1.msra.mxu0 0.0
    %7424 = vmatprep.subr.mxu0 0.0
    %7425 = vmatpush1.msra.mxu0 0.0
    %7426 = vmatprep.subr.mxu0 0.0
    %7427 = vmatpush1.msra.mxu0 0.0
    %7428 = vmatprep.subr.mxu0 0.0
    %7429 = vmatpush1.msra.mxu0 0.0
    %7430 = vmatprep.subr.mxu0 0.0
    %7431 = vmatpush1.msra.mxu0 0.0
    %7432 = vmatprep.subr.mxu0 0.0
    %7433 = vmatpush1.msra.mxu0 0.0
    %7434 = vmatprep.subr.mxu0 0.0
    %7435 = vmatpush1.msra.mxu0 0.0
    %7436 = vmatprep.subr.mxu0 0.0
    %7437 = vmatpush1.msra.mxu0 0.0
    %7438 = vmatprep.subr.mxu0 0.0
    %7439 = vmatpush1.msra.mxu0 0.0
    %7440 = vmatprep.subr.mxu0 0.0
    %7441 = vmatpush1.msra.mxu0 0.0
    %7442 = vmatprep.subr.mxu0 0.0
    %7443 = vmatpush1.msra.mxu0 0.0
    %7444 = vmatprep.subr.mxu0 0.0
    %7445 = vmatpush1.msra.mxu0 0.0
    %7446 = vmatprep.subr.mxu0 0.0
    %7447 = vmatpush1.msra.mxu0 0.0
    %7448 = vmatprep.subr.mxu0 0.0
    %7449 = vmatpush1.msra.mxu0 0.0
    %7450 = vmatprep.subr.mxu0 0.0
    %7451 = vmatpush1.msra.mxu0 0.0
    %7452 = vmatprep.subr.mxu0 0.0
    %7453 = vmatpush1.msra.mxu0 0.0
    %7454 = vmatprep.mubr.f32.mxu0 0.0
    %7455 = vmatmul.mubr.f32.gmra.mrb[0].mxu0 %v7388
    %v7456 = vpop.f32.mrb[0].mxu0
    %v7457 = vadd.f32 0.0, %v7456
    %v7458 = vpop.f32.mrb[0].mxu0
    %7459 = vdwg.mxu0
    %s7460 = scalar_lea.vmem %s12, 32
    %v7461 = vld [vmem:[%s7460] sm:$0xff]
    %v7462 = vld [vmem:[%s7460 + $0x8] sm:$0xff]
    %v7463 = vld [vmem:[%s7460 + $0x10] sm:$0xff]
    %v7464 = vld [vmem:[%s7460 + $0x18] sm:$0xff]
    %vm7465 = vcmask 261120
    %v7467 = vsel %vm7465, %v7457, 0
    %7469 = vmatprep.subr.mxu0 0.0
    %7470 = vmatpush1.msra.mxu0 %v7461
    %7471 = vmatprep.subr.mxu0 0.0
    %7472 = vmatpush1.msra.mxu0 %v7462
    %7473 = vmatprep.subr.mxu0 0.0
    %7474 = vmatpush1.msra.mxu0 %v7463
    %7475 = vmatprep.subr.mxu0 0.0
    %7476 = vmatpush1.msra.mxu0 %v7464
    %7477 = vmatprep.subr.mxu0 0.0
    %7478 = vmatpush1.msra.mxu0 0.0
    %7479 = vmatprep.subr.mxu0 0.0
    %7480 = vmatpush1.msra.mxu0 0.0
    %7481 = vmatprep.subr.mxu0 0.0
    %7482 = vmatpush1.msra.mxu0 0.0
    %7483 = vmatprep.subr.mxu0 0.0
    %7484 = vmatpush1.msra.mxu0 0.0
    %7485 = vmatprep.subr.mxu0 0.0
    %7486 = vmatpush1.msra.mxu0 0.0
    %7487 = vmatprep.subr.mxu0 0.0
    %7488 = vmatpush1.msra.mxu0 0.0
    %7489 = vmatprep.subr.mxu0 0.0
    %7490 = vmatpush1.msra.mxu0 0.0
    %7491 = vmatprep.subr.mxu0 0.0
    %7492 = vmatpush1.msra.mxu0 0.0
    %7493 = vmatprep.subr.mxu0 0.0
    %7494 = vmatpush1.msra.mxu0 0.0
    %7495 = vmatprep.subr.mxu0 0.0
    %7496 = vmatpush1.msra.mxu0 0.0
    %7497 = vmatprep.subr.mxu0 0.0
    %7498 = vmatpush1.msra.mxu0 0.0
    %7499 = vmatprep.subr.mxu0 0.0
    %7500 = vmatpush1.msra.mxu0 0.0
    %7501 = vmatprep.subr.mxu0 0.0
    %7502 = vmatpush1.msra.mxu0 0.0
    %7503 = vmatprep.subr.mxu0 0.0
    %7504 = vmatpush1.msra.mxu0 0.0
    %7505 = vmatprep.subr.mxu0 0.0
    %7506 = vmatpush1.msra.mxu0 0.0
    %7507 = vmatprep.subr.mxu0 0.0
    %7508 = vmatpush1.msra.mxu0 0.0
    %7509 = vmatprep.subr.mxu0 0.0
    %7510 = vmatpush1.msra.mxu0 0.0
    %7511 = vmatprep.subr.mxu0 0.0
    %7512 = vmatpush1.msra.mxu0 0.0
    %7513 = vmatprep.subr.mxu0 0.0
    %7514 = vmatpush1.msra.mxu0 0.0
    %7515 = vmatprep.subr.mxu0 0.0
    %7516 = vmatpush1.msra.mxu0 0.0
    %7517 = vmatprep.subr.mxu0 0.0
    %7518 = vmatpush1.msra.mxu0 0.0
    %7519 = vmatprep.subr.mxu0 0.0
    %7520 = vmatpush1.msra.mxu0 0.0
    %7521 = vmatprep.subr.mxu0 0.0
    %7522 = vmatpush1.msra.mxu0 0.0
    %7523 = vmatprep.subr.mxu0 0.0
    %7524 = vmatpush1.msra.mxu0 0.0
    %7525 = vmatprep.subr.mxu0 0.0
    %7526 = vmatpush1.msra.mxu0 0.0
    %7527 = vmatprep.subr.mxu0 0.0
    %7528 = vmatpush1.msra.mxu0 0.0
    %7529 = vmatprep.subr.mxu0 0.0
    %7530 = vmatpush1.msra.mxu0 0.0
    %7531 = vmatprep.subr.mxu0 0.0
    %7532 = vmatpush1.msra.mxu0 0.0
    %7533 = vmatprep.mubr.f32.mxu0 0.0
    %7534 = vmatmul.mubr.f32.gmra.mrb[0].mxu0 %v7467
    %v7535 = vpop.f32.mrb[0].mxu0
    %v7536 = vadd.f32 0.0, %v7535
    %v7537 = vpop.f32.mrb[0].mxu0
    %7538 = vdwg.mxu0
    %v7540 = vsel %vm7465, %v7378, 0
    %7542 = vmatprep.subr.mxu0 0.0
    %7543 = vmatpush1.msra.mxu0 %v7381
    %7544 = vmatprep.subr.mxu0 0.0
    %7545 = vmatpush1.msra.mxu0 %v7382
    %7546 = vmatprep.subr.mxu0 0.0
    %7547 = vmatpush1.msra.mxu0 %v7383
    %7548 = vmatprep.subr.mxu0 0.0
    %7549 = vmatpush1.msra.mxu0 %v7384
    %7550 = vmatprep.subr.mxu0 0.0
    %7551 = vmatpush1.msra.mxu0 0.0
    %7552 = vmatprep.subr.mxu0 0.0
    %7553 = vmatpush1.msra.mxu0 0.0
    %7554 = vmatprep.subr.mxu0 0.0
    %7555 = vmatpush1.msra.mxu0 0.0
    %7556 = vmatprep.subr.mxu0 0.0
    %7557 = vmatpush1.msra.mxu0 0.0
    %7558 = vmatprep.subr.mxu0 0.0
    %7559 = vmatpush1.msra.mxu0 0.0
    %7560 = vmatprep.subr.mxu0 0.0
    %7561 = vmatpush1.msra.mxu0 0.0
    %7562 = vmatprep.subr.mxu0 0.0
    %7563 = vmatpush1.msra.mxu0 0.0
    %7564 = vmatprep.subr.mxu0 0.0
    %7565 = vmatpush1.msra.mxu0 0.0
    %7566 = vmatprep.subr.mxu0 0.0
    %7567 = vmatpush1.msra.mxu0 0.0
    %7568 = vmatprep.subr.mxu0 0.0
    %7569 = vmatpush1.msra.mxu0 0.0
    %7570 = vmatprep.subr.mxu0 0.0
    %7571 = vmatpush1.msra.mxu0 0.0
    %7572 = vmatprep.subr.mxu0 0.0
    %7573 = vmatpush1.msra.mxu0 0.0
    %7574 = vmatprep.subr.mxu0 0.0
    %7575 = vmatpush1.msra.mxu0 0.0
    %7576 = vmatprep.subr.mxu0 0.0
    %7577 = vmatpush1.msra.mxu0 0.0
    %7578 = vmatprep.subr.mxu0 0.0
    %7579 = vmatpush1.msra.mxu0 0.0
    %7580 = vmatprep.subr.mxu0 0.0
    %7581 = vmatpush1.msra.mxu0 0.0
    %7582 = vmatprep.subr.mxu0 0.0
    %7583 = vmatpush1.msra.mxu0 0.0
    %7584 = vmatprep.subr.mxu0 0.0
    %7585 = vmatpush1.msra.mxu0 0.0
    %7586 = vmatprep.subr.mxu0 0.0
    %7587 = vmatpush1.msra.mxu0 0.0
    %7588 = vmatprep.subr.mxu0 0.0
    %7589 = vmatpush1.msra.mxu0 0.0
    %7590 = vmatprep.subr.mxu0 0.0
    %7591 = vmatpush1.msra.mxu0 0.0
    %7592 = vmatprep.subr.mxu0 0.0
    %7593 = vmatpush1.msra.mxu0 0.0
    %7594 = vmatprep.subr.mxu0 0.0
    %7595 = vmatpush1.msra.mxu0 0.0
    %7596 = vmatprep.subr.mxu0 0.0
    %7597 = vmatpush1.msra.mxu0 0.0
    %7598 = vmatprep.subr.mxu0 0.0
    %7599 = vmatpush1.msra.mxu0 0.0
    %7600 = vmatprep.subr.mxu0 0.0
    %7601 = vmatpush1.msra.mxu0 0.0
    %7602 = vmatprep.subr.mxu0 0.0
    %7603 = vmatpush1.msra.mxu0 0.0
    %7604 = vmatprep.subr.mxu0 0.0
    %7605 = vmatpush1.msra.mxu0 0.0
    %7606 = vmatprep.mubr.f32.mxu0 0.0
    %7607 = vmatmul.mubr.f32.gmra.mrb[0].mxu0 %v7540
    %v7608 = vpop.f32.mrb[0].mxu0
    %v7609 = vadd.f32 %v7536, %v7608
    %v7610 = vpop.f32.mrb[0].mxu0
    %7611 = vdwg.mxu0
    %s7612 = scalar_lea.vmem %s11, 4
    %v7613 = vld [vmem:[%s7612] sm:$0x3]
    %v7615 = vsel %vm7304, %v7613, 0
    %7617 = vmatprep.subr.mxu0 0.0
    %7618 = vmatpush1.msra.mxu0 %v7300
    %7619 = vmatprep.subr.mxu0 0.0
    %7620 = vmatpush1.msra.mxu0 %v7301
    %7621 = vmatprep.subr.mxu0 0.0
    %7622 = vmatpush1.msra.mxu0 %v7309
    %7623 = vmatprep.subr.mxu0 0.0
    %7624 = vmatpush1.msra.mxu0 0.0
    %7625 = vmatprep.subr.mxu0 0.0
    %7626 = vmatpush1.msra.mxu0 0.0
    %7627 = vmatprep.subr.mxu0 0.0
    %7628 = vmatpush1.msra.mxu0 0.0
    %7629 = vmatprep.subr.mxu0 0.0
    %7630 = vmatpush1.msra.mxu0 0.0
    %7631 = vmatprep.subr.mxu0 0.0
    %7632 = vmatpush1.msra.mxu0 0.0
    %7633 = vmatprep.subr.mxu0 0.0
    %7634 = vmatpush1.msra.mxu0 0.0
    %7635 = vmatprep.subr.mxu0 0.0
    %7636 = vmatpush1.msra.mxu0 0.0
    %7637 = vmatprep.subr.mxu0 0.0
    %7638 = vmatpush1.msra.mxu0 0.0
    %7639 = vmatprep.subr.mxu0 0.0
    %7640 = vmatpush1.msra.mxu0 0.0
    %7641 = vmatprep.subr.mxu0 0.0
    %7642 = vmatpush1.msra.mxu0 0.0
    %7643 = vmatprep.subr.mxu0 0.0
    %7644 = vmatpush1.msra.mxu0 0.0
    %7645 = vmatprep.subr.mxu0 0.0
    %7646 = vmatpush1.msra.mxu0 0.0
    %7647 = vmatprep.subr.mxu0 0.0
    %7648 = vmatpush1.msra.mxu0 0.0
    %7649 = vmatprep.subr.mxu0 0.0
    %7650 = vmatpush1.msra.mxu0 0.0
    %7651 = vmatprep.subr.mxu0 0.0
    %7652 = vmatpush1.msra.mxu0 0.0
    %7653 = vmatprep.subr.mxu0 0.0
    %7654 = vmatpush1.msra.mxu0 0.0
    %7655 = vmatprep.subr.mxu0 0.0
    %7656 = vmatpush1.msra.mxu0 0.0
    %7657 = vmatprep.subr.mxu0 0.0
    %7658 = vmatpush1.msra.mxu0 0.0
    %7659 = vmatprep.subr.mxu0 0.0
    %7660 = vmatpush1.msra.mxu0 0.0
    %7661 = vmatprep.subr.mxu0 0.0
    %7662 = vmatpush1.msra.mxu0 0.0
    %7663 = vmatprep.subr.mxu0 0.0
    %7664 = vmatpush1.msra.mxu0 0.0
    %7665 = vmatprep.subr.mxu0 0.0
    %7666 = vmatpush1.msra.mxu0 0.0
    %7667 = vmatprep.subr.mxu0 0.0
    %7668 = vmatpush1.msra.mxu0 0.0
    %7669 = vmatprep.subr.mxu0 0.0
    %7670 = vmatpush1.msra.mxu0 0.0
    %7671 = vmatprep.subr.mxu0 0.0
    %7672 = vmatpush1.msra.mxu0 0.0
    %7673 = vmatprep.subr.mxu0 0.0
    %7674 = vmatpush1.msra.mxu0 0.0
    %7675 = vmatprep.subr.mxu0 0.0
    %7676 = vmatpush1.msra.mxu0 0.0
    %7677 = vmatprep.subr.mxu0 0.0
    %7678 = vmatpush1.msra.mxu0 0.0
    %7679 = vmatprep.subr.mxu0 0.0
    %7680 = vmatpush1.msra.mxu0 0.0
    %7681 = vmatprep.mubr.f32.mxu0 0.0
    %7682 = vmatmul.mubr.f32.gmra.mrb[0].mxu0 %v7615
    %v7683 = vpop.f32.mrb[0].mxu0
    %v7684 = vadd.f32 0.0, %v7683
    %v7685 = vpop.f32.mrb[0].mxu0
    %7686 = vdwg.mxu0
    %s7687 = scalar_lea.vmem %s12, 64
    %v7688 = vld [vmem:[%s7687] sm:$0xff]
    %v7689 = vld [vmem:[%s7687 + $0x8] sm:$0xff]
    %v7690 = vld [vmem:[%s7687 + $0x10] sm:$0xff]
    %v7691 = vld [vmem:[%s7687 + $0x18] sm:$0xff]
    %v7693 = vsel %vm7465, %v7684, 0
    %7695 = vmatprep.subr.mxu0 0.0
    %7696 = vmatpush1.msra.mxu0 %v7688
    %7697 = vmatprep.subr.mxu0 0.0
    %7698 = vmatpush1.msra.mxu0 %v7689
    %7699 = vmatprep.subr.mxu0 0.0
    %7700 = vmatpush1.msra.mxu0 %v7690
    %7701 = vmatprep.subr.mxu0 0.0
    %7702 = vmatpush1.msra.mxu0 %v7691
    %7703 = vmatprep.subr.mxu0 0.0
    %7704 = vmatpush1.msra.mxu0 0.0
    %7705 = vmatprep.subr.mxu0 0.0
    %7706 = vmatpush1.msra.mxu0 0.0
    %7707 = vmatprep.subr.mxu0 0.0
    %7708 = vmatpush1.msra.mxu0 0.0
    %7709 = vmatprep.subr.mxu0 0.0
    %7710 = vmatpush1.msra.mxu0 0.0
    %7711 = vmatprep.subr.mxu0 0.0
    %7712 = vmatpush1.msra.mxu0 0.0
    %7713 = vmatprep.subr.mxu0 0.0
    %7714 = vmatpush1.msra.mxu0 0.0
    %7715 = vmatprep.subr.mxu0 0.0
    %7716 = vmatpush1.msra.mxu0 0.0
    %7717 = vmatprep.subr.mxu0 0.0
    %7718 = vmatpush1.msra.mxu0 0.0
    %7719 = vmatprep.subr.mxu0 0.0
    %7720 = vmatpush1.msra.mxu0 0.0
    %7721 = vmatprep.subr.mxu0 0.0
    %7722 = vmatpush1.msra.mxu0 0.0
    %7723 = vmatprep.subr.mxu0 0.0
    %7724 = vmatpush1.msra.mxu0 0.0
    %7725 = vmatprep.subr.mxu0 0.0
    %7726 = vmatpush1.msra.mxu0 0.0
    %7727 = vmatprep.subr.mxu0 0.0
    %7728 = vmatpush1.msra.mxu0 0.0
    %7729 = vmatprep.subr.mxu0 0.0
    %7730 = vmatpush1.msra.mxu0 0.0
    %7731 = vmatprep.subr.mxu0 0.0
    %7732 = vmatpush1.msra.mxu0 0.0
    %7733 = vmatprep.subr.mxu0 0.0
    %7734 = vmatpush1.msra.mxu0 0.0
    %7735 = vmatprep.subr.mxu0 0.0
    %7736 = vmatpush1.msra.mxu0 0.0
    %7737 = vmatprep.subr.mxu0 0.0
    %7738 = vmatpush1.msra.mxu0 0.0
    %7739 = vmatprep.subr.mxu0 0.0
    %7740 = vmatpush1.msra.mxu0 0.0
    %7741 = vmatprep.subr.mxu0 0.0
    %7742 = vmatpush1.msra.mxu0 0.0
    %7743 = vmatprep.subr.mxu0 0.0
    %7744 = vmatpush1.msra.mxu0 0.0
    %7745 = vmatprep.subr.mxu0 0.0
    %7746 = vmatpush1.msra.mxu0 0.0
    %7747 = vmatprep.subr.mxu0 0.0
    %7748 = vmatpush1.msra.mxu0 0.0
    %7749 = vmatprep.subr.mxu0 0.0
    %7750 = vmatpush1.msra.mxu0 0.0
    %7751 = vmatprep.subr.mxu0 0.0
    %7752 = vmatpush1.msra.mxu0 0.0
    %7753 = vmatprep.subr.mxu0 0.0
    %7754 = vmatpush1.msra.mxu0 0.0
    %7755 = vmatprep.subr.mxu0 0.0
    %7756 = vmatpush1.msra.mxu0 0.0
    %7757 = vmatprep.subr.mxu0 0.0
    %7758 = vmatpush1.msra.mxu0 0.0
    %7759 = vmatprep.mubr.f32.mxu0 0.0
    %7760 = vmatmul.mubr.f32.gmra.mrb[0].mxu0 %v7693
    %v7761 = vpop.f32.mrb[0].mxu0
    %v7762 = vadd.f32 0.0, %v7761
    %v7763 = vpop.f32.mrb[0].mxu0
    %7764 = vdwg.mxu0
    %v7765 = vadd.f32 %v7609, %v7762
    %s7766 = scalar_lea.vmem %s11, 6
    %v7767 = vld [vmem:[%s7766] sm:$0x3]
    %v7769 = vsel %vm7304, %v7767, 0
    %7771 = vmatprep.subr.mxu0 0.0
    %7772 = vmatpush1.msra.mxu0 %v7300
    %7773 = vmatprep.subr.mxu0 0.0
    %7774 = vmatpush1.msra.mxu0 %v7301
    %7775 = vmatprep.subr.mxu0 0.0
    %7776 = vmatpush1.msra.mxu0 %v7309
    %7777 = vmatprep.subr.mxu0 0.0
    %7778 = vmatpush1.msra.mxu0 0.0
    %7779 = vmatprep.subr.mxu0 0.0
    %7780 = vmatpush1.msra.mxu0 0.0
    %7781 = vmatprep.subr.mxu0 0.0
    %7782 = vmatpush1.msra.mxu0 0.0
    %7783 = vmatprep.subr.mxu0 0.0
    %7784 = vmatpush1.msra.mxu0 0.0
    %7785 = vmatprep.subr.mxu0 0.0
    %7786 = vmatpush1.msra.mxu0 0.0
    %7787 = vmatprep.subr.mxu0 0.0
    %7788 = vmatpush1.msra.mxu0 0.0
    %7789 = vmatprep.subr.mxu0 0.0
    %7790 = vmatpush1.msra.mxu0 0.0
    %7791 = vmatprep.subr.mxu0 0.0
    %7792 = vmatpush1.msra.mxu0 0.0
    %7793 = vmatprep.subr.mxu0 0.0
    %7794 = vmatpush1.msra.mxu0 0.0
    %7795 = vmatprep.subr.mxu0 0.0
    %7796 = vmatpush1.msra.mxu0 0.0
    %7797 = vmatprep.subr.mxu0 0.0
    %7798 = vmatpush1.msra.mxu0 0.0
    %7799 = vmatprep.subr.mxu0 0.0
    %7800 = vmatpush1.msra.mxu0 0.0
    %7801 = vmatprep.subr.mxu0 0.0
    %7802 = vmatpush1.msra.mxu0 0.0
    %7803 = vmatprep.subr.mxu0 0.0
    %7804 = vmatpush1.msra.mxu0 0.0
    %7805 = vmatprep.subr.mxu0 0.0
    %7806 = vmatpush1.msra.mxu0 0.0
    %7807 = vmatprep.subr.mxu0 0.0
    %7808 = vmatpush1.msra.mxu0 0.0
    %7809 = vmatprep.subr.mxu0 0.0
    %7810 = vmatpush1.msra.mxu0 0.0
    %7811 = vmatprep.subr.mxu0 0.0
    %7812 = vmatpush1.msra.mxu0 0.0
    %7813 = vmatprep.subr.mxu0 0.0
    %7814 = vmatpush1.msra.mxu0 0.0
    %7815 = vmatprep.subr.mxu0 0.0
    %7816 = vmatpush1.msra.mxu0 0.0
    %7817 = vmatprep.subr.mxu0 0.0
    %7818 = vmatpush1.msra.mxu0 0.0
    %7819 = vmatprep.subr.mxu0 0.0
    %7820 = vmatpush1.msra.mxu0 0.0
    %7821 = vmatprep.subr.mxu0 0.0
    %7822 = vmatpush1.msra.mxu0 0.0
    %7823 = vmatprep.subr.mxu0 0.0
    %7824 = vmatpush1.msra.mxu0 0.0
    %7825 = vmatprep.subr.mxu0 0.0
    %7826 = vmatpush1.msra.mxu0 0.0
    %7827 = vmatprep.subr.mxu0 0.0
    %7828 = vmatpush1.msra.mxu0 0.0
    %7829 = vmatprep.subr.mxu0 0.0
    %7830 = vmatpush1.msra.mxu0 0.0
    %7831 = vmatprep.subr.mxu0 0.0
    %7832 = vmatpush1.msra.mxu0 0.0
    %7833 = vmatprep.subr.mxu0 0.0
    %7834 = vmatpush1.msra.mxu0 0.0
    %7835 = vmatprep.mubr.f32.mxu0 0.0
    %7836 = vmatmul.mubr.f32.gmra.mrb[0].mxu0 %v7769
    %v7837 = vpop.f32.mrb[0].mxu0
    %v7838 = vadd.f32 0.0, %v7837
    %v7839 = vpop.f32.mrb[0].mxu0
    %7840 = vdwg.mxu0
    %s7841 = scalar_lea.vmem %s12, 96
    %v7842 = vld [vmem:[%s7841] sm:$0xff]
    %v7843 = vld [vmem:[%s7841 + $0x8] sm:$0xff]
    %v7844 = vld [vmem:[%s7841 + $0x10] sm:$0xff]
    %v7845 = vld [vmem:[%s7841 + $0x18] sm:$0xff]
    %v7847 = vsel %vm7465, %v7838, 0
    %7849 = vmatprep.subr.mxu0 0.0
    %7850 = vmatpush1.msra.mxu0 %v7842
    %7851 = vmatprep.subr.mxu0 0.0
    %7852 = vmatpush1.msra.mxu0 %v7843
    %7853 = vmatprep.subr.mxu0 0.0
    %7854 = vmatpush1.msra.mxu0 %v7844
    %7855 = vmatprep.subr.mxu0 0.0
    %7856 = vmatpush1.msra.mxu0 %v7845
    %7857 = vmatprep.subr.mxu0 0.0
    %7858 = vmatpush1.msra.mxu0 0.0
    %7859 = vmatprep.subr.mxu0 0.0
    %7860 = vmatpush1.msra.mxu0 0.0
    %7861 = vmatprep.subr.mxu0 0.0
    %7862 = vmatpush1.msra.mxu0 0.0
    %7863 = vmatprep.subr.mxu0 0.0
    %7864 = vmatpush1.msra.mxu0 0.0
    %7865 = vmatprep.subr.mxu0 0.0
    %7866 = vmatpush1.msra.mxu0 0.0
    %7867 = vmatprep.subr.mxu0 0.0
    %7868 = vmatpush1.msra.mxu0 0.0
    %7869 = vmatprep.subr.mxu0 0.0
    %7870 = vmatpush1.msra.mxu0 0.0
    %7871 = vmatprep.subr.mxu0 0.0
    %7872 = vmatpush1.msra.mxu0 0.0
    %7873 = vmatprep.subr.mxu0 0.0
    %7874 = vmatpush1.msra.mxu0 0.0
    %7875 = vmatprep.subr.mxu0 0.0
    %7876 = vmatpush1.msra.mxu0 0.0
    %7877 = vmatprep.subr.mxu0 0.0
    %7878 = vmatpush1.msra.mxu0 0.0
    %7879 = vmatprep.subr.mxu0 0.0
    %7880 = vmatpush1.msra.mxu0 0.0
    %7881 = vmatprep.subr.mxu0 0.0
    %7882 = vmatpush1.msra.mxu0 0.0
    %7883 = vmatprep.subr.mxu0 0.0
    %7884 = vmatpush1.msra.mxu0 0.0
    %7885 = vmatprep.subr.mxu0 0.0
    %7886 = vmatpush1.msra.mxu0 0.0
    %7887 = vmatprep.subr.mxu0 0.0
    %7888 = vmatpush1.msra.mxu0 0.0
    %7889 = vmatprep.subr.mxu0 0.0
    %7890 = vmatpush1.msra.mxu0 0.0
    %7891 = vmatprep.subr.mxu0 0.0
    %7892 = vmatpush1.msra.mxu0 0.0
    %7893 = vmatprep.subr.mxu0 0.0
    %7894 = vmatpush1.msra.mxu0 0.0
    %7895 = vmatprep.subr.mxu0 0.0
    %7896 = vmatpush1.msra.mxu0 0.0
    %7897 = vmatprep.subr.mxu0 0.0
    %7898 = vmatpush1.msra.mxu0 0.0
    %7899 = vmatprep.subr.mxu0 0.0
    %7900 = vmatpush1.msra.mxu0 0.0
    %7901 = vmatprep.subr.mxu0 0.0
    %7902 = vmatpush1.msra.mxu0 0.0
    %7903 = vmatprep.subr.mxu0 0.0
    %7904 = vmatpush1.msra.mxu0 0.0
    %7905 = vmatprep.subr.mxu0 0.0
    %7906 = vmatpush1.msra.mxu0 0.0
    %7907 = vmatprep.subr.mxu0 0.0
    %7908 = vmatpush1.msra.mxu0 0.0
    %7909 = vmatprep.subr.mxu0 0.0
    %7910 = vmatpush1.msra.mxu0 0.0
    %7911 = vmatprep.subr.mxu0 0.0
    %7912 = vmatpush1.msra.mxu0 0.0
    %7913 = vmatprep.mubr.f32.mxu0 0.0
    %7914 = vmatmul.mubr.f32.gmra.mrb[0].mxu0 %v7847
    %v7915 = vpop.f32.mrb[0].mxu0
    %v7916 = vadd.f32 0.0, %v7915
    %v7917 = vpop.f32.mrb[0].mxu0
    %7918 = vdwg.mxu0
    %v7919 = vadd.f32 %v7765, %v7916
    %s7920 = scalar_lea.vmem %s11, 8
    %v7921 = vld [vmem:[%s7920] sm:$0x3]
    %v7923 = vsel %vm7304, %v7921, 0
    %7925 = vmatprep.subr.mxu0 0.0
    %7926 = vmatpush1.msra.mxu0 %v7300
    %7927 = vmatprep.subr.mxu0 0.0
    %7928 = vmatpush1.msra.mxu0 %v7301
    %7929 = vmatprep.subr.mxu0 0.0
    %7930 = vmatpush1.msra.mxu0 %v7309
    %7931 = vmatprep.subr.mxu0 0.0
    %7932 = vmatpush1.msra.mxu0 0.0
    %7933 = vmatprep.subr.mxu0 0.0
    %7934 = vmatpush1.msra.mxu0 0.0
    %7935 = vmatprep.subr.mxu0 0.0
    %7936 = vmatpush1.msra.mxu0 0.0
    %7937 = vmatprep.subr.mxu0 0.0
    %7938 = vmatpush1.msra.mxu0 0.0
    %7939 = vmatprep.subr.mxu0 0.0
    %7940 = vmatpush1.msra.mxu0 0.0
    %7941 = vmatprep.subr.mxu0 0.0
    %7942 = vmatpush1.msra.mxu0 0.0
    %7943 = vmatprep.subr.mxu0 0.0
    %7944 = vmatpush1.msra.mxu0 0.0
    %7945 = vmatprep.subr.mxu0 0.0
    %7946 = vmatpush1.msra.mxu0 0.0
    %7947 = vmatprep.subr.mxu0 0.0
    %7948 = vmatpush1.msra.mxu0 0.0
    %7949 = vmatprep.subr.mxu0 0.0
    %7950 = vmatpush1.msra.mxu0 0.0
    %7951 = vmatprep.subr.mxu0 0.0
    %7952 = vmatpush1.msra.mxu0 0.0
    %7953 = vmatprep.subr.mxu0 0.0
    %7954 = vmatpush1.msra.mxu0 0.0
    %7955 = vmatprep.subr.mxu0 0.0
    %7956 = vmatpush1.msra.mxu0 0.0
    %7957 = vmatprep.subr.mxu0 0.0
    %7958 = vmatpush1.msra.mxu0 0.0
    %7959 = vmatprep.subr.mxu0 0.0
    %7960 = vmatpush1.msra.mxu0 0.0
    %7961 = vmatprep.subr.mxu0 0.0
    %7962 = vmatpush1.msra.mxu0 0.0
    %7963 = vmatprep.subr.mxu0 0.0
    %7964 = vmatpush1.msra.mxu0 0.0
    %7965 = vmatprep.subr.mxu0 0.0
    %7966 = vmatpush1.msra.mxu0 0.0
    %7967 = vmatprep.subr.mxu0 0.0
    %7968 = vmatpush1.msra.mxu0 0.0
    %7969 = vmatprep.subr.mxu0 0.0
    %7970 = vmatpush1.msra.mxu0 0.0
    %7971 = vmatprep.subr.mxu0 0.0
    %7972 = vmatpush1.msra.mxu0 0.0
    %7973 = vmatprep.subr.mxu0 0.0
    %7974 = vmatpush1.msra.mxu0 0.0
    %7975 = vmatprep.subr.mxu0 0.0
    %7976 = vmatpush1.msra.mxu0 0.0
    %7977 = vmatprep.subr.mxu0 0.0
    %7978 = vmatpush1.msra.mxu0 0.0
    %7979 = vmatprep.subr.mxu0 0.0
    %7980 = vmatpush1.msra.mxu0 0.0
    %7981 = vmatprep.subr.mxu0 0.0
    %7982 = vmatpush1.msra.mxu0 0.0
    %7983 = vmatprep.subr.mxu0 0.0
    %7984 = vmatpush1.msra.mxu0 0.0
    %7985 = vmatprep.subr.mxu0 0.0
    %7986 = vmatpush1.msra.mxu0 0.0
    %7987 = vmatprep.subr.mxu0 0.0
    %7988 = vmatpush1.msra.mxu0 0.0
    %7989 = vmatprep.mubr.f32.mxu0 0.0
    %7990 = vmatmul.mubr.f32.gmra.mrb[0].mxu0 %v7923
    %v7991 = vpop.f32.mrb[0].mxu0
    %v7992 = vadd.f32 0.0, %v7991
    %v7993 = vpop.f32.mrb[0].mxu0
    %7994 = vdwg.mxu0
    %s7995 = scalar_lea.vmem %s12, 128
    %v7996 = vld [vmem:[%s7995] sm:$0xff]
    %v7997 = vld [vmem:[%s7995 + $0x8] sm:$0xff]
    %v7998 = vld [vmem:[%s7995 + $0x10] sm:$0xff]
    %v7999 = vld [vmem:[%s7995 + $0x18] sm:$0xff]
    %v8001 = vsel %vm7465, %v7992, 0
    %8003 = vmatprep.subr.mxu0 0.0
    %8004 = vmatpush1.msra.mxu0 %v7996
    %8005 = vmatprep.subr.mxu0 0.0
    %8006 = vmatpush1.msra.mxu0 %v7997
    %8007 = vmatprep.subr.mxu0 0.0
    %8008 = vmatpush1.msra.mxu0 %v7998
    %8009 = vmatprep.subr.mxu0 0.0
    %8010 = vmatpush1.msra.mxu0 %v7999
    %8011 = vmatprep.subr.mxu0 0.0
    %8012 = vmatpush1.msra.mxu0 0.0
    %8013 = vmatprep.subr.mxu0 0.0
    %8014 = vmatpush1.msra.mxu0 0.0
    %8015 = vmatprep.subr.mxu0 0.0
    %8016 = vmatpush1.msra.mxu0 0.0
    %8017 = vmatprep.subr.mxu0 0.0
    %8018 = vmatpush1.msra.mxu0 0.0
    %8019 = vmatprep.subr.mxu0 0.0
    %8020 = vmatpush1.msra.mxu0 0.0
    %8021 = vmatprep.subr.mxu0 0.0
    %8022 = vmatpush1.msra.mxu0 0.0
    %8023 = vmatprep.subr.mxu0 0.0
    %8024 = vmatpush1.msra.mxu0 0.0
    %8025 = vmatprep.subr.mxu0 0.0
    %8026 = vmatpush1.msra.mxu0 0.0
    %8027 = vmatprep.subr.mxu0 0.0
    %8028 = vmatpush1.msra.mxu0 0.0
    %8029 = vmatprep.subr.mxu0 0.0
    %8030 = vmatpush1.msra.mxu0 0.0
    %8031 = vmatprep.subr.mxu0 0.0
    %8032 = vmatpush1.msra.mxu0 0.0
    %8033 = vmatprep.subr.mxu0 0.0
    %8034 = vmatpush1.msra.mxu0 0.0
    %8035 = vmatprep.subr.mxu0 0.0
    %8036 = vmatpush1.msra.mxu0 0.0
    %8037 = vmatprep.subr.mxu0 0.0
    %8038 = vmatpush1.msra.mxu0 0.0
    %8039 = vmatprep.subr.mxu0 0.0
    %8040 = vmatpush1.msra.mxu0 0.0
    %8041 = vmatprep.subr.mxu0 0.0
    %8042 = vmatpush1.msra.mxu0 0.0
    %8043 = vmatprep.subr.mxu0 0.0
    %8044 = vmatpush1.msra.mxu0 0.0
    %8045 = vmatprep.subr.mxu0 0.0
    %8046 = vmatpush1.msra.mxu0 0.0
    %8047 = vmatprep.subr.mxu0 0.0
    %8048 = vmatpush1.msra.mxu0 0.0
    %8049 = vmatprep.subr.mxu0 0.0
    %8050 = vmatpush1.msra.mxu0 0.0
    %8051 = vmatprep.subr.mxu0 0.0
    %8052 = vmatpush1.msra.mxu0 0.0
    %8053 = vmatprep.subr.mxu0 0.0
    %8054 = vmatpush1.msra.mxu0 0.0
    %8055 = vmatprep.subr.mxu0 0.0
    %8056 = vmatpush1.msra.mxu0 0.0
    %8057 = vmatprep.subr.mxu0 0.0
    %8058 = vmatpush1.msra.mxu0 0.0
    %8059 = vmatprep.subr.mxu0 0.0
    %8060 = vmatpush1.msra.mxu0 0.0
    %8061 = vmatprep.subr.mxu0 0.0
    %8062 = vmatpush1.msra.mxu0 0.0
    %8063 = vmatprep.subr.mxu0 0.0
    %8064 = vmatpush1.msra.mxu0 0.0
    %8065 = vmatprep.subr.mxu0 0.0
    %8066 = vmatpush1.msra.mxu0 0.0
    %8067 = vmatprep.mubr.f32.mxu0 0.0
    %8068 = vmatmul.mubr.f32.gmra.mrb[0].mxu0 %v8001
    %v8069 = vpop.f32.mrb[0].mxu0
    %v8070 = vadd.f32 0.0, %v8069
    %v8071 = vpop.f32.mrb[0].mxu0
    %8072 = vdwg.mxu0
    %v8073 = vadd.f32 %v7919, %v8070
    %s8074 = scalar_lea.vmem %s11, 10
    %v8075 = vld [vmem:[%s8074] sm:$0x3]
    %v8077 = vsel %vm7304, %v8075, 0
    %8079 = vmatprep.subr.mxu0 0.0
    %8080 = vmatpush1.msra.mxu0 %v7300
    %8081 = vmatprep.subr.mxu0 0.0
    %8082 = vmatpush1.msra.mxu0 %v7301
    %8083 = vmatprep.subr.mxu0 0.0
    %8084 = vmatpush1.msra.mxu0 %v7309
    %8085 = vmatprep.subr.mxu0 0.0
    %8086 = vmatpush1.msra.mxu0 0.0
    %8087 = vmatprep.subr.mxu0 0.0
    %8088 = vmatpush1.msra.mxu0 0.0
    %8089 = vmatprep.subr.mxu0 0.0
    %8090 = vmatpush1.msra.mxu0 0.0
    %8091 = vmatprep.subr.mxu0 0.0
    %8092 = vmatpush1.msra.mxu0 0.0
    %8093 = vmatprep.subr.mxu0 0.0
    %8094 = vmatpush1.msra.mxu0 0.0
    %8095 = vmatprep.subr.mxu0 0.0
    %8096 = vmatpush1.msra.mxu0 0.0
    %8097 = vmatprep.subr.mxu0 0.0
    %8098 = vmatpush1.msra.mxu0 0.0
    %8099 = vmatprep.subr.mxu0 0.0
    %8100 = vmatpush1.msra.mxu0 0.0
    %8101 = vmatprep.subr.mxu0 0.0
    %8102 = vmatpush1.msra.mxu0 0.0
    %8103 = vmatprep.subr.mxu0 0.0
    %8104 = vmatpush1.msra.mxu0 0.0
    %8105 = vmatprep.subr.mxu0 0.0
    %8106 = vmatpush1.msra.mxu0 0.0
    %8107 = vmatprep.subr.mxu0 0.0
    %8108 = vmatpush1.msra.mxu0 0.0
    %8109 = vmatprep.subr.mxu0 0.0
    %8110 = vmatpush1.msra.mxu0 0.0
    %8111 = vmatprep.subr.mxu0 0.0
    %8112 = vmatpush1.msra.mxu0 0.0
    %8113 = vmatprep.subr.mxu0 0.0
    %8114 = vmatpush1.msra.mxu0 0.0
    %8115 = vmatprep.subr.mxu0 0.0
    %8116 = vmatpush1.msra.mxu0 0.0
    %8117 = vmatprep.subr.mxu0 0.0
    %8118 = vmatpush1.msra.mxu0 0.0
    %8119 = vmatprep.subr.mxu0 0.0
    %8120 = vmatpush1.msra.mxu0 0.0
    %8121 = vmatprep.subr.mxu0 0.0
    %8122 = vmatpush1.msra.mxu0 0.0
    %8123 = vmatprep.subr.mxu0 0.0
    %8124 = vmatpush1.msra.mxu0 0.0
    %8125 = vmatprep.subr.mxu0 0.0
    %8126 = vmatpush1.msra.mxu0 0.0
    %8127 = vmatprep.subr.mxu0 0.0
    %8128 = vmatpush1.msra.mxu0 0.0
    %8129 = vmatprep.subr.mxu0 0.0
    %8130 = vmatpush1.msra.mxu0 0.0
    %8131 = vmatprep.subr.mxu0 0.0
    %8132 = vmatpush1.msra.mxu0 0.0
    %8133 = vmatprep.subr.mxu0 0.0
    %8134 = vmatpush1.msra.mxu0 0.0
    %8135 = vmatprep.subr.mxu0 0.0
    %8136 = vmatpush1.msra.mxu0 0.0
    %8137 = vmatprep.subr.mxu0 0.0
    %8138 = vmatpush1.msra.mxu0 0.0
    %8139 = vmatprep.subr.mxu0 0.0
    %8140 = vmatpush1.msra.mxu0 0.0
    %8141 = vmatprep.subr.mxu0 0.0
    %8142 = vmatpush1.msra.mxu0 0.0
    %8143 = vmatprep.mubr.f32.mxu0 0.0
    %8144 = vmatmul.mubr.f32.gmra.mrb[0].mxu0 %v8077
    %v8145 = vpop.f32.mrb[0].mxu0
    %v8146 = vadd.f32 0.0, %v8145
    %v8147 = vpop.f32.mrb[0].mxu0
    %8148 = vdwg.mxu0
    %s8149 = scalar_lea.vmem %s12, 160
    %v8150 = vld [vmem:[%s8149] sm:$0xff]
    %v8151 = vld [vmem:[%s8149 + $0x8] sm:$0xff]
    %v8152 = vld [vmem:[%s8149 + $0x10] sm:$0xff]
    %v8153 = vld [vmem:[%s8149 + $0x18] sm:$0xff]
    %v8155 = vsel %vm7465, %v8146, 0
    %8157 = vmatprep.subr.mxu0 0.0
    %8158 = vmatpush1.msra.mxu0 %v8150
    %8159 = vmatprep.subr.mxu0 0.0
    %8160 = vmatpush1.msra.mxu0 %v8151
    %8161 = vmatprep.subr.mxu0 0.0
    %8162 = vmatpush1.msra.mxu0 %v8152
    %8163 = vmatprep.subr.mxu0 0.0
    %8164 = vmatpush1.msra.mxu0 %v8153
    %8165 = vmatprep.subr.mxu0 0.0
    %8166 = vmatpush1.msra.mxu0 0.0
    %8167 = vmatprep.subr.mxu0 0.0
    %8168 = vmatpush1.msra.mxu0 0.0
    %8169 = vmatprep.subr.mxu0 0.0
    %8170 = vmatpush1.msra.mxu0 0.0
    %8171 = vmatprep.subr.mxu0 0.0
    %8172 = vmatpush1.msra.mxu0 0.0
    %8173 = vmatprep.subr.mxu0 0.0
    %8174 = vmatpush1.msra.mxu0 0.0
    %8175 = vmatprep.subr.mxu0 0.0
    %8176 = vmatpush1.msra.mxu0 0.0
    %8177 = vmatprep.subr.mxu0 0.0
    %8178 = vmatpush1.msra.mxu0 0.0
    %8179 = vmatprep.subr.mxu0 0.0
    %8180 = vmatpush1.msra.mxu0 0.0
    %8181 = vmatprep.subr.mxu0 0.0
    %8182 = vmatpush1.msra.mxu0 0.0
    %8183 = vmatprep.subr.mxu0 0.0
    %8184 = vmatpush1.msra.mxu0 0.0
    %8185 = vmatprep.subr.mxu0 0.0
    %8186 = vmatpush1.msra.mxu0 0.0
    %8187 = vmatprep.subr.mxu0 0.0
    %8188 = vmatpush1.msra.mxu0 0.0
    %8189 = vmatprep.subr.mxu0 0.0
    %8190 = vmatpush1.msra.mxu0 0.0
    %8191 = vmatprep.subr.mxu0 0.0
    %8192 = vmatpush1.msra.mxu0 0.0
    %8193 = vmatprep.subr.mxu0 0.0
    %8194 = vmatpush1.msra.mxu0 0.0
    %8195 = vmatprep.subr.mxu0 0.0
    %8196 = vmatpush1.msra.mxu0 0.0
    %8197 = vmatprep.subr.mxu0 0.0
    %8198 = vmatpush1.msra.mxu0 0.0
    %8199 = vmatprep.subr.mxu0 0.0
    %8200 = vmatpush1.msra.mxu0 0.0
    %8201 = vmatprep.subr.mxu0 0.0
    %8202 = vmatpush1.msra.mxu0 0.0
    %8203 = vmatprep.subr.mxu0 0.0
    %8204 = vmatpush1.msra.mxu0 0.0
    %8205 = vmatprep.subr.mxu0 0.0
    %8206 = vmatpush1.msra.mxu0 0.0
    %8207 = vmatprep.subr.mxu0 0.0
    %8208 = vmatpush1.msra.mxu0 0.0
    %8209 = vmatprep.subr.mxu0 0.0
    %8210 = vmatpush1.msra.mxu0 0.0
    %8211 = vmatprep.subr.mxu0 0.0
    %8212 = vmatpush1.msra.mxu0 0.0
    %8213 = vmatprep.subr.mxu0 0.0
    %8214 = vmatpush1.msra.mxu0 0.0
    %8215 = vmatprep.subr.mxu0 0.0
    %8216 = vmatpush1.msra.mxu0 0.0
    %8217 = vmatprep.subr.mxu0 0.0
    %8218 = vmatpush1.msra.mxu0 0.0
    %8219 = vmatprep.subr.mxu0 0.0
    %8220 = vmatpush1.msra.mxu0 0.0
    %8221 = vmatprep.mubr.f32.mxu0 0.0
    %8222 = vmatmul.mubr.f32.gmra.mrb[0].mxu0 %v8155
    %v8223 = vpop.f32.mrb[0].mxu0
    %v8224 = vadd.f32 0.0, %v8223
    %v8225 = vpop.f32.mrb[0].mxu0
    %8226 = vdwg.mxu0
    %v8227 = vadd.f32 %v8073, %v8224
    %s8228 = scalar_lea.vmem %s11, 12
    %v8229 = vld [vmem:[%s8228] sm:$0x3]
    %v8231 = vsel %vm7304, %v8229, 0
    %8233 = vmatprep.subr.mxu0 0.0
    %8234 = vmatpush1.msra.mxu0 %v7300
    %8235 = vmatprep.subr.mxu0 0.0
    %8236 = vmatpush1.msra.mxu0 %v7301
    %8237 = vmatprep.subr.mxu0 0.0
    %8238 = vmatpush1.msra.mxu0 %v7309
    %8239 = vmatprep.subr.mxu0 0.0
    %8240 = vmatpush1.msra.mxu0 0.0
    %8241 = vmatprep.subr.mxu0 0.0
    %8242 = vmatpush1.msra.mxu0 0.0
    %8243 = vmatprep.subr.mxu0 0.0
    %8244 = vmatpush1.msra.mxu0 0.0
    %8245 = vmatprep.subr.mxu0 0.0
    %8246 = vmatpush1.msra.mxu0 0.0
    %8247 = vmatprep.subr.mxu0 0.0
    %8248 = vmatpush1.msra.mxu0 0.0
    %8249 = vmatprep.subr.mxu0 0.0
    %8250 = vmatpush1.msra.mxu0 0.0
    %8251 = vmatprep.subr.mxu0 0.0
    %8252 = vmatpush1.msra.mxu0 0.0
    %8253 = vmatprep.subr.mxu0 0.0
    %8254 = vmatpush1.msra.mxu0 0.0
    %8255 = vmatprep.subr.mxu0 0.0
    %8256 = vmatpush1.msra.mxu0 0.0
    %8257 = vmatprep.subr.mxu0 0.0
    %8258 = vmatpush1.msra.mxu0 0.0
    %8259 = vmatprep.subr.mxu0 0.0
    %8260 = vmatpush1.msra.mxu0 0.0
    %8261 = vmatprep.subr.mxu0 0.0
    %8262 = vmatpush1.msra.mxu0 0.0
    %8263 = vmatprep.subr.mxu0 0.0
    %8264 = vmatpush1.msra.mxu0 0.0
    %8265 = vmatprep.subr.mxu0 0.0
    %8266 = vmatpush1.msra.mxu0 0.0
    %8267 = vmatprep.subr.mxu0 0.0
    %8268 = vmatpush1.msra.mxu0 0.0
    %8269 = vmatprep.subr.mxu0 0.0
    %8270 = vmatpush1.msra.mxu0 0.0
    %8271 = vmatprep.subr.mxu0 0.0
    %8272 = vmatpush1.msra.mxu0 0.0
    %8273 = vmatprep.subr.mxu0 0.0
    %8274 = vmatpush1.msra.mxu0 0.0
    %8275 = vmatprep.subr.mxu0 0.0
    %8276 = vmatpush1.msra.mxu0 0.0
    %8277 = vmatprep.subr.mxu0 0.0
    %8278 = vmatpush1.msra.mxu0 0.0
    %8279 = vmatprep.subr.mxu0 0.0
    %8280 = vmatpush1.msra.mxu0 0.0
    %8281 = vmatprep.subr.mxu0 0.0
    %8282 = vmatpush1.msra.mxu0 0.0
    %8283 = vmatprep.subr.mxu0 0.0
    %8284 = vmatpush1.msra.mxu0 0.0
    %8285 = vmatprep.subr.mxu0 0.0
    %8286 = vmatpush1.msra.mxu0 0.0
    %8287 = vmatprep.subr.mxu0 0.0
    %8288 = vmatpush1.msra.mxu0 0.0
    %8289 = vmatprep.subr.mxu0 0.0
    %8290 = vmatpush1.msra.mxu0 0.0
    %8291 = vmatprep.subr.mxu0 0.0
    %8292 = vmatpush1.msra.mxu0 0.0
    %8293 = vmatprep.subr.mxu0 0.0
    %8294 = vmatpush1.msra.mxu0 0.0
    %8295 = vmatprep.subr.mxu0 0.0
    %8296 = vmatpush1.msra.mxu0 0.0
    %8297 = vmatprep.mubr.f32.mxu0 0.0
    %8298 = vmatmul.mubr.f32.gmra.mrb[0].mxu0 %v8231
    %v8299 = vpop.f32.mrb[0].mxu0
    %v8300 = vadd.f32 0.0, %v8299
    %v8301 = vpop.f32.mrb[0].mxu0
    %8302 = vdwg.mxu0
    %s8303 = scalar_lea.vmem %s12, 192
    %v8304 = vld [vmem:[%s8303] sm:$0xff]
    %v8305 = vld [vmem:[%s8303 + $0x8] sm:$0xff]
    %v8306 = vld [vmem:[%s8303 + $0x10] sm:$0xff]
    %v8307 = vld [vmem:[%s8303 + $0x18] sm:$0xff]
    %v8309 = vsel %vm7465, %v8300, 0
    %8311 = vmatprep.subr.mxu0 0.0
    %8312 = vmatpush1.msra.mxu0 %v8304
    %8313 = vmatprep.subr.mxu0 0.0
    %8314 = vmatpush1.msra.mxu0 %v8305
    %8315 = vmatprep.subr.mxu0 0.0
    %8316 = vmatpush1.msra.mxu0 %v8306
    %8317 = vmatprep.subr.mxu0 0.0
    %8318 = vmatpush1.msra.mxu0 %v8307
    %8319 = vmatprep.subr.mxu0 0.0
    %8320 = vmatpush1.msra.mxu0 0.0
    %8321 = vmatprep.subr.mxu0 0.0
    %8322 = vmatpush1.msra.mxu0 0.0
    %8323 = vmatprep.subr.mxu0 0.0
    %8324 = vmatpush1.msra.mxu0 0.0
    %8325 = vmatprep.subr.mxu0 0.0
    %8326 = vmatpush1.msra.mxu0 0.0
    %8327 = vmatprep.subr.mxu0 0.0
    %8328 = vmatpush1.msra.mxu0 0.0
    %8329 = vmatprep.subr.mxu0 0.0
    %8330 = vmatpush1.msra.mxu0 0.0
    %8331 = vmatprep.subr.mxu0 0.0
    %8332 = vmatpush1.msra.mxu0 0.0
    %8333 = vmatprep.subr.mxu0 0.0
    %8334 = vmatpush1.msra.mxu0 0.0
    %8335 = vmatprep.subr.mxu0 0.0
    %8336 = vmatpush1.msra.mxu0 0.0
    %8337 = vmatprep.subr.mxu0 0.0
    %8338 = vmatpush1.msra.mxu0 0.0
    %8339 = vmatprep.subr.mxu0 0.0
    %8340 = vmatpush1.msra.mxu0 0.0
    %8341 = vmatprep.subr.mxu0 0.0
    %8342 = vmatpush1.msra.mxu0 0.0
    %8343 = vmatprep.subr.mxu0 0.0
    %8344 = vmatpush1.msra.mxu0 0.0
    %8345 = vmatprep.subr.mxu0 0.0
    %8346 = vmatpush1.msra.mxu0 0.0
    %8347 = vmatprep.subr.mxu0 0.0
    %8348 = vmatpush1.msra.mxu0 0.0
    %8349 = vmatprep.subr.mxu0 0.0
    %8350 = vmatpush1.msra.mxu0 0.0
    %8351 = vmatprep.subr.mxu0 0.0
    %8352 = vmatpush1.msra.mxu0 0.0
    %8353 = vmatprep.subr.mxu0 0.0
    %8354 = vmatpush1.msra.mxu0 0.0
    %8355 = vmatprep.subr.mxu0 0.0
    %8356 = vmatpush1.msra.mxu0 0.0
    %8357 = vmatprep.subr.mxu0 0.0
    %8358 = vmatpush1.msra.mxu0 0.0
    %8359 = vmatprep.subr.mxu0 0.0
    %8360 = vmatpush1.msra.mxu0 0.0
    %8361 = vmatprep.subr.mxu0 0.0
    %8362 = vmatpush1.msra.mxu0 0.0
    %8363 = vmatprep.subr.mxu0 0.0
    %8364 = vmatpush1.msra.mxu0 0.0
    %8365 = vmatprep.subr.mxu0 0.0
    %8366 = vmatpush1.msra.mxu0 0.0
    %8367 = vmatprep.subr.mxu0 0.0
    %8368 = vmatpush1.msra.mxu0 0.0
    %8369 = vmatprep.subr.mxu0 0.0
    %8370 = vmatpush1.msra.mxu0 0.0
    %8371 = vmatprep.subr.mxu0 0.0
    %8372 = vmatpush1.msra.mxu0 0.0
    %8373 = vmatprep.subr.mxu0 0.0
    %8374 = vmatpush1.msra.mxu0 0.0
    %8375 = vmatprep.mubr.f32.mxu0 0.0
    %8376 = vmatmul.mubr.f32.gmra.mrb[0].mxu0 %v8309
    %v8377 = vpop.f32.mrb[0].mxu0
    %v8378 = vadd.f32 0.0, %v8377
    %v8379 = vpop.f32.mrb[0].mxu0
    %8380 = vdwg.mxu0
    %v8381 = vadd.f32 %v8227, %v8378
    %s8382 = scalar_lea.vmem %s11, 14
    %v8383 = vld [vmem:[%s8382] sm:$0x3]
    %v8385 = vsel %vm7304, %v8383, 0
    %8387 = vmatprep.subr.mxu0 0.0
    %8388 = vmatpush1.msra.mxu0 %v7300
    %8389 = vmatprep.subr.mxu0 0.0
    %8390 = vmatpush1.msra.mxu0 %v7301
    %8391 = vmatprep.subr.mxu0 0.0
    %8392 = vmatpush1.msra.mxu0 %v7309
    %8393 = vmatprep.subr.mxu0 0.0
    %8394 = vmatpush1.msra.mxu0 0.0
    %8395 = vmatprep.subr.mxu0 0.0
    %8396 = vmatpush1.msra.mxu0 0.0
    %8397 = vmatprep.subr.mxu0 0.0
    %8398 = vmatpush1.msra.mxu0 0.0
    %8399 = vmatprep.subr.mxu0 0.0
    %8400 = vmatpush1.msra.mxu0 0.0
    %8401 = vmatprep.subr.mxu0 0.0
    %8402 = vmatpush1.msra.mxu0 0.0
    %8403 = vmatprep.subr.mxu0 0.0
    %8404 = vmatpush1.msra.mxu0 0.0
    %8405 = vmatprep.subr.mxu0 0.0
    %8406 = vmatpush1.msra.mxu0 0.0
    %8407 = vmatprep.subr.mxu0 0.0
    %8408 = vmatpush1.msra.mxu0 0.0
    %8409 = vmatprep.subr.mxu0 0.0
    %8410 = vmatpush1.msra.mxu0 0.0
    %8411 = vmatprep.subr.mxu0 0.0
    %8412 = vmatpush1.msra.mxu0 0.0
    %8413 = vmatprep.subr.mxu0 0.0
    %8414 = vmatpush1.msra.mxu0 0.0
    %8415 = vmatprep.subr.mxu0 0.0
    %8416 = vmatpush1.msra.mxu0 0.0
    %8417 = vmatprep.subr.mxu0 0.0
    %8418 = vmatpush1.msra.mxu0 0.0
    %8419 = vmatprep.subr.mxu0 0.0
    %8420 = vmatpush1.msra.mxu0 0.0
    %8421 = vmatprep.subr.mxu0 0.0
    %8422 = vmatpush1.msra.mxu0 0.0
    %8423 = vmatprep.subr.mxu0 0.0
    %8424 = vmatpush1.msra.mxu0 0.0
    %8425 = vmatprep.subr.mxu0 0.0
    %8426 = vmatpush1.msra.mxu0 0.0
    %8427 = vmatprep.subr.mxu0 0.0
    %8428 = vmatpush1.msra.mxu0 0.0
    %8429 = vmatprep.subr.mxu0 0.0
    %8430 = vmatpush1.msra.mxu0 0.0
    %8431 = vmatprep.subr.mxu0 0.0
    %8432 = vmatpush1.msra.mxu0 0.0
    %8433 = vmatprep.subr.mxu0 0.0
    %8434 = vmatpush1.msra.mxu0 0.0
    %8435 = vmatprep.subr.mxu0 0.0
    %8436 = vmatpush1.msra.mxu0 0.0
    %8437 = vmatprep.subr.mxu0 0.0
    %8438 = vmatpush1.msra.mxu0 0.0
    %8439 = vmatprep.subr.mxu0 0.0
    %8440 = vmatpush1.msra.mxu0 0.0
    %8441 = vmatprep.subr.mxu0 0.0
    %8442 = vmatpush1.msra.mxu0 0.0
    %8443 = vmatprep.subr.mxu0 0.0
    %8444 = vmatpush1.msra.mxu0 0.0
    %8445 = vmatprep.subr.mxu0 0.0
    %8446 = vmatpush1.msra.mxu0 0.0
    %8447 = vmatprep.subr.mxu0 0.0
    %8448 = vmatpush1.msra.mxu0 0.0
    %8449 = vmatprep.subr.mxu0 0.0
    %8450 = vmatpush1.msra.mxu0 0.0
    %8451 = vmatprep.mubr.f32.mxu0 0.0
    %8452 = vmatmul.mubr.f32.gmra.mrb[0].mxu0 %v8385
    %v8453 = vpop.f32.mrb[0].mxu0
    %v8454 = vadd.f32 0.0, %v8453
    %v8455 = vpop.f32.mrb[0].mxu0
    %8456 = vdwg.mxu0
    %s8457 = scalar_lea.vmem %s12, 224
    %v8458 = vld [vmem:[%s8457] sm:$0xff]
    %v8459 = vld [vmem:[%s8457 + $0x8] sm:$0xff]
    %v8460 = vld [vmem:[%s8457 + $0x10] sm:$0xff]
    %v8461 = vld [vmem:[%s8457 + $0x18] sm:$0xff]
    %v8463 = vsel %vm7465, %v8454, 0
    %8465 = vmatprep.subr.mxu0 0.0
    %8466 = vmatpush1.msra.mxu0 %v8458
    %8467 = vmatprep.subr.mxu0 0.0
    %8468 = vmatpush1.msra.mxu0 %v8459
    %8469 = vmatprep.subr.mxu0 0.0
    %8470 = vmatpush1.msra.mxu0 %v8460
    %8471 = vmatprep.subr.mxu0 0.0
    %8472 = vmatpush1.msra.mxu0 %v8461
    %8473 = vmatprep.subr.mxu0 0.0
    %8474 = vmatpush1.msra.mxu0 0.0
    %8475 = vmatprep.subr.mxu0 0.0
    %8476 = vmatpush1.msra.mxu0 0.0
    %8477 = vmatprep.subr.mxu0 0.0
    %8478 = vmatpush1.msra.mxu0 0.0
    %8479 = vmatprep.subr.mxu0 0.0
    %8480 = vmatpush1.msra.mxu0 0.0
    %8481 = vmatprep.subr.mxu0 0.0
    %8482 = vmatpush1.msra.mxu0 0.0
    %8483 = vmatprep.subr.mxu0 0.0
    %8484 = vmatpush1.msra.mxu0 0.0
    %8485 = vmatprep.subr.mxu0 0.0
    %8486 = vmatpush1.msra.mxu0 0.0
    %8487 = vmatprep.subr.mxu0 0.0
    %8488 = vmatpush1.msra.mxu0 0.0
    %8489 = vmatprep.subr.mxu0 0.0
    %8490 = vmatpush1.msra.mxu0 0.0
    %8491 = vmatprep.subr.mxu0 0.0
    %8492 = vmatpush1.msra.mxu0 0.0
    %8493 = vmatprep.subr.mxu0 0.0
    %8494 = vmatpush1.msra.mxu0 0.0
    %8495 = vmatprep.subr.mxu0 0.0
    %8496 = vmatpush1.msra.mxu0 0.0
    %8497 = vmatprep.subr.mxu0 0.0
    %8498 = vmatpush1.msra.mxu0 0.0
    %8499 = vmatprep.subr.mxu0 0.0
    %8500 = vmatpush1.msra.mxu0 0.0
    %8501 = vmatprep.subr.mxu0 0.0
    %8502 = vmatpush1.msra.mxu0 0.0
    %8503 = vmatprep.subr.mxu0 0.0
    %8504 = vmatpush1.msra.mxu0 0.0
    %8505 = vmatprep.subr.mxu0 0.0
    %8506 = vmatpush1.msra.mxu0 0.0
    %8507 = vmatprep.subr.mxu0 0.0
    %8508 = vmatpush1.msra.mxu0 0.0
    %8509 = vmatprep.subr.mxu0 0.0
    %8510 = vmatpush1.msra.mxu0 0.0
    %8511 = vmatprep.subr.mxu0 0.0
    %8512 = vmatpush1.msra.mxu0 0.0
    %8513 = vmatprep.subr.mxu0 0.0
    %8514 = vmatpush1.msra.mxu0 0.0
    %8515 = vmatprep.subr.mxu0 0.0
    %8516 = vmatpush1.msra.mxu0 0.0
    %8517 = vmatprep.subr.mxu0 0.0
    %8518 = vmatpush1.msra.mxu0 0.0
    %8519 = vmatprep.subr.mxu0 0.0
    %8520 = vmatpush1.msra.mxu0 0.0
    %8521 = vmatprep.subr.mxu0 0.0
    %8522 = vmatpush1.msra.mxu0 0.0
    %8523 = vmatprep.subr.mxu0 0.0
    %8524 = vmatpush1.msra.mxu0 0.0
    %8525 = vmatprep.subr.mxu0 0.0
    %8526 = vmatpush1.msra.mxu0 0.0
    %8527 = vmatprep.subr.mxu0 0.0
    %8528 = vmatpush1.msra.mxu0 0.0
    %8529 = vmatprep.mubr.f32.mxu0 0.0
    %8530 = vmatmul.mubr.f32.gmra.mrb[0].mxu0 %v8463
    %v8531 = vpop.f32.mrb[0].mxu0
    %v8532 = vadd.f32 0.0, %v8531
    %v8533 = vpop.f32.mrb[0].mxu0
    %8534 = vdwg.mxu0
    %v8535 = vadd.f32 %v8381, %v8532
    %s8536 = scalar_lea.vmem %s11, 16
    %v8537 = vld [vmem:[%s8536] sm:$0x3]
    %v8539 = vsel %vm7304, %v8537, 0
    %8541 = vmatprep.subr.mxu0 0.0
    %8542 = vmatpush1.msra.mxu0 %v7300
    %8543 = vmatprep.subr.mxu0 0.0
    %8544 = vmatpush1.msra.mxu0 %v7301
    %8545 = vmatprep.subr.mxu0 0.0
    %8546 = vmatpush1.msra.mxu0 %v7309
    %8547 = vmatprep.subr.mxu0 0.0
    %8548 = vmatpush1.msra.mxu0 0.0
    %8549 = vmatprep.subr.mxu0 0.0
    %8550 = vmatpush1.msra.mxu0 0.0
    %8551 = vmatprep.subr.mxu0 0.0
    %8552 = vmatpush1.msra.mxu0 0.0
    %8553 = vmatprep.subr.mxu0 0.0
    %8554 = vmatpush1.msra.mxu0 0.0
    %8555 = vmatprep.subr.mxu0 0.0
    %8556 = vmatpush1.msra.mxu0 0.0
    %8557 = vmatprep.subr.mxu0 0.0
    %8558 = vmatpush1.msra.mxu0 0.0
    %8559 = vmatprep.subr.mxu0 0.0
    %8560 = vmatpush1.msra.mxu0 0.0
    %8561 = vmatprep.subr.mxu0 0.0
    %8562 = vmatpush1.msra.mxu0 0.0
    %8563 = vmatprep.subr.mxu0 0.0
    %8564 = vmatpush1.msra.mxu0 0.0
    %8565 = vmatprep.subr.mxu0 0.0
    %8566 = vmatpush1.msra.mxu0 0.0
    %8567 = vmatprep.subr.mxu0 0.0
    %8568 = vmatpush1.msra.mxu0 0.0
    %8569 = vmatprep.subr.mxu0 0.0
    %8570 = vmatpush1.msra.mxu0 0.0
    %8571 = vmatprep.subr.mxu0 0.0
    %8572 = vmatpush1.msra.mxu0 0.0
    %8573 = vmatprep.subr.mxu0 0.0
    %8574 = vmatpush1.msra.mxu0 0.0
    %8575 = vmatprep.subr.mxu0 0.0
    %8576 = vmatpush1.msra.mxu0 0.0
    %8577 = vmatprep.subr.mxu0 0.0
    %8578 = vmatpush1.msra.mxu0 0.0
    %8579 = vmatprep.subr.mxu0 0.0
    %8580 = vmatpush1.msra.mxu0 0.0
    %8581 = vmatprep.subr.mxu0 0.0
    %8582 = vmatpush1.msra.mxu0 0.0
    %8583 = vmatprep.subr.mxu0 0.0
    %8584 = vmatpush1.msra.mxu0 0.0
    %8585 = vmatprep.subr.mxu0 0.0
    %8586 = vmatpush1.msra.mxu0 0.0
    %8587 = vmatprep.subr.mxu0 0.0
    %8588 = vmatpush1.msra.mxu0 0.0
    %8589 = vmatprep.subr.mxu0 0.0
    %8590 = vmatpush1.msra.mxu0 0.0
    %8591 = vmatprep.subr.mxu0 0.0
    %8592 = vmatpush1.msra.mxu0 0.0
    %8593 = vmatprep.subr.mxu0 0.0
    %8594 = vmatpush1.msra.mxu0 0.0
    %8595 = vmatprep.subr.mxu0 0.0
    %8596 = vmatpush1.msra.mxu0 0.0
    %8597 = vmatprep.subr.mxu0 0.0
    %8598 = vmatpush1.msra.mxu0 0.0
    %8599 = vmatprep.subr.mxu0 0.0
    %8600 = vmatpush1.msra.mxu0 0.0
    %8601 = vmatprep.subr.mxu0 0.0
    %8602 = vmatpush1.msra.mxu0 0.0
    %8603 = vmatprep.subr.mxu0 0.0
    %8604 = vmatpush1.msra.mxu0 0.0
    %8605 = vmatprep.mubr.f32.mxu0 0.0
    %8606 = vmatmul.mubr.f32.gmra.mrb[0].mxu0 %v8539
    %v8607 = vpop.f32.mrb[0].mxu0
    %v8608 = vadd.f32 0.0, %v8607
    %v8609 = vpop.f32.mrb[0].mxu0
    %8610 = vdwg.mxu0
    %s8611 = scalar_lea.vmem %s12, 256
    %v8612 = vld [vmem:[%s8611] sm:$0xff]
    %v8613 = vld [vmem:[%s8611 + $0x8] sm:$0xff]
    %v8614 = vld [vmem:[%s8611 + $0x10] sm:$0xff]
    %v8615 = vld [vmem:[%s8611 + $0x18] sm:$0xff]
    %v8617 = vsel %vm7465, %v8608, 0
    %8619 = vmatprep.subr.mxu0 0.0
    %8620 = vmatpush1.msra.mxu0 %v8612
    %8621 = vmatprep.subr.mxu0 0.0
    %8622 = vmatpush1.msra.mxu0 %v8613
    %8623 = vmatprep.subr.mxu0 0.0
    %8624 = vmatpush1.msra.mxu0 %v8614
    %8625 = vmatprep.subr.mxu0 0.0
    %8626 = vmatpush1.msra.mxu0 %v8615
    %8627 = vmatprep.subr.mxu0 0.0
    %8628 = vmatpush1.msra.mxu0 0.0
    %8629 = vmatprep.subr.mxu0 0.0
    %8630 = vmatpush1.msra.mxu0 0.0
    %8631 = vmatprep.subr.mxu0 0.0
    %8632 = vmatpush1.msra.mxu0 0.0
    %8633 = vmatprep.subr.mxu0 0.0
    %8634 = vmatpush1.msra.mxu0 0.0
    %8635 = vmatprep.subr.mxu0 0.0
    %8636 = vmatpush1.msra.mxu0 0.0
    %8637 = vmatprep.subr.mxu0 0.0
    %8638 = vmatpush1.msra.mxu0 0.0
    %8639 = vmatprep.subr.mxu0 0.0
    %8640 = vmatpush1.msra.mxu0 0.0
    %8641 = vmatprep.subr.mxu0 0.0
    %8642 = vmatpush1.msra.mxu0 0.0
    %8643 = vmatprep.subr.mxu0 0.0
    %8644 = vmatpush1.msra.mxu0 0.0
    %8645 = vmatprep.subr.mxu0 0.0
    %8646 = vmatpush1.msra.mxu0 0.0
    %8647 = vmatprep.subr.mxu0 0.0
    %8648 = vmatpush1.msra.mxu0 0.0
    %8649 = vmatprep.subr.mxu0 0.0
    %8650 = vmatpush1.msra.mxu0 0.0
    %8651 = vmatprep.subr.mxu0 0.0
    %8652 = vmatpush1.msra.mxu0 0.0
    %8653 = vmatprep.subr.mxu0 0.0
    %8654 = vmatpush1.msra.mxu0 0.0
    %8655 = vmatprep.subr.mxu0 0.0
    %8656 = vmatpush1.msra.mxu0 0.0
    %8657 = vmatprep.subr.mxu0 0.0
    %8658 = vmatpush1.msra.mxu0 0.0
    %8659 = vmatprep.subr.mxu0 0.0
    %8660 = vmatpush1.msra.mxu0 0.0
    %8661 = vmatprep.subr.mxu0 0.0
    %8662 = vmatpush1.msra.mxu0 0.0
    %8663 = vmatprep.subr.mxu0 0.0
    %8664 = vmatpush1.msra.mxu0 0.0
    %8665 = vmatprep.subr.mxu0 0.0
    %8666 = vmatpush1.msra.mxu0 0.0
    %8667 = vmatprep.subr.mxu0 0.0
    %8668 = vmatpush1.msra.mxu0 0.0
    %8669 = vmatprep.subr.mxu0 0.0
    %8670 = vmatpush1.msra.mxu0 0.0
    %8671 = vmatprep.subr.mxu0 0.0
    %8672 = vmatpush1.msra.mxu0 0.0
    %8673 = vmatprep.subr.mxu0 0.0
    %8674 = vmatpush1.msra.mxu0 0.0
    %8675 = vmatprep.subr.mxu0 0.0
    %8676 = vmatpush1.msra.mxu0 0.0
    %8677 = vmatprep.subr.mxu0 0.0
    %8678 = vmatpush1.msra.mxu0 0.0
    %8679 = vmatprep.subr.mxu0 0.0
    %8680 = vmatpush1.msra.mxu0 0.0
    %8681 = vmatprep.subr.mxu0 0.0
    %8682 = vmatpush1.msra.mxu0 0.0
    %8683 = vmatprep.mubr.f32.mxu0 0.0
    %8684 = vmatmul.mubr.f32.gmra.mrb[0].mxu0 %v8617
    %v8685 = vpop.f32.mrb[0].mxu0
    %v8686 = vadd.f32 0.0, %v8685
    %v8687 = vpop.f32.mrb[0].mxu0
    %8688 = vdwg.mxu0
    %v8689 = vadd.f32 %v8535, %v8686
    %v8690 = vld [vmem:[%s13] sm:$0x1]
    %v8692 = vlaneseq
    %v8693 = vshrl.u32 %v8692, 7
    %v8694 = vsub.s32 0, %v8693
    %v8695 = vrot.slane %v8690, %v8694
    %v8697 = vadd.f32 %v8689, %v8695
    %v8698 = vmax.f32 %v8697, 0.0
    %v8699 = vld [vmem:[%s14] sm:$0xff]
    %v8700 = vld [vmem:[%s14 + $0x8] sm:$0xff]
    %v8701 = vld [vmem:[%s14 + $0x10] sm:$0xff]
    %v8702 = vld [vmem:[%s14 + $0x18] sm:$0xff]
    %v8703 = vld [vmem:[%s15] sm:$0x1]
    %v8705 = vlaneseq
    %v8706 = vshrl.u32 %v8705, 7
    %v8707 = vsub.s32 0, %v8706
    %v8708 = vrot.slane %v8703, %v8707
    %v8711 = vsel %vm7465, %v8698, 0
    %8713 = vmatprep.subr.mxu0 0.0
    %8714 = vmatpush1.msra.mxu0 %v8699
    %8715 = vmatprep.subr.mxu0 0.0
    %8716 = vmatpush1.msra.mxu0 %v8700
    %8717 = vmatprep.subr.mxu0 0.0
    %8718 = vmatpush1.msra.mxu0 %v8701
    %8719 = vmatprep.subr.mxu0 0.0
    %8720 = vmatpush1.msra.mxu0 %v8702
    %8721 = vmatprep.subr.mxu0 0.0
    %8722 = vmatpush1.msra.mxu0 0.0
    %8723 = vmatprep.subr.mxu0 0.0
    %8724 = vmatpush1.msra.mxu0 0.0
    %8725 = vmatprep.subr.mxu0 0.0
    %8726 = vmatpush1.msra.mxu0 0.0
    %8727 = vmatprep.subr.mxu0 0.0
    %8728 = vmatpush1.msra.mxu0 0.0
    %8729 = vmatprep.subr.mxu0 0.0
    %8730 = vmatpush1.msra.mxu0 0.0
    %8731 = vmatprep.subr.mxu0 0.0
    %8732 = vmatpush1.msra.mxu0 0.0
    %8733 = vmatprep.subr.mxu0 0.0
    %8734 = vmatpush1.msra.mxu0 0.0
    %8735 = vmatprep.subr.mxu0 0.0
    %8736 = vmatpush1.msra.mxu0 0.0
    %8737 = vmatprep.subr.mxu0 0.0
    %8738 = vmatpush1.msra.mxu0 0.0
    %8739 = vmatprep.subr.mxu0 0.0
    %8740 = vmatpush1.msra.mxu0 0.0
    %8741 = vmatprep.subr.mxu0 0.0
    %8742 = vmatpush1.msra.mxu0 0.0
    %8743 = vmatprep.subr.mxu0 0.0
    %8744 = vmatpush1.msra.mxu0 0.0
    %8745 = vmatprep.subr.mxu0 0.0
    %8746 = vmatpush1.msra.mxu0 0.0
    %8747 = vmatprep.subr.mxu0 0.0
    %8748 = vmatpush1.msra.mxu0 0.0
    %8749 = vmatprep.subr.mxu0 0.0
    %8750 = vmatpush1.msra.mxu0 0.0
    %8751 = vmatprep.subr.mxu0 0.0
    %8752 = vmatpush1.msra.mxu0 0.0
    %8753 = vmatprep.subr.mxu0 0.0
    %8754 = vmatpush1.msra.mxu0 0.0
    %8755 = vmatprep.subr.mxu0 0.0
    %8756 = vmatpush1.msra.mxu0 0.0
    %8757 = vmatprep.subr.mxu0 0.0
    %8758 = vmatpush1.msra.mxu0 0.0
    %8759 = vmatprep.subr.mxu0 0.0
    %8760 = vmatpush1.msra.mxu0 0.0
    %8761 = vmatprep.subr.mxu0 0.0
    %8762 = vmatpush1.msra.mxu0 0.0
    %8763 = vmatprep.subr.mxu0 0.0
    %8764 = vmatpush1.msra.mxu0 0.0
    %8765 = vmatprep.subr.mxu0 0.0
    %8766 = vmatpush1.msra.mxu0 0.0
    %8767 = vmatprep.subr.mxu0 0.0
    %8768 = vmatpush1.msra.mxu0 0.0
    %8769 = vmatprep.subr.mxu0 0.0
    %8770 = vmatpush1.msra.mxu0 0.0
    %8771 = vmatprep.subr.mxu0 0.0
    %8772 = vmatpush1.msra.mxu0 0.0
    %8773 = vmatprep.subr.mxu0 0.0
    %8774 = vmatpush1.msra.mxu0 0.0
    %8775 = vmatprep.subr.mxu0 0.0
    %8776 = vmatpush1.msra.mxu0 0.0
    %8777 = vmatprep.mubr.f32.mxu0 0.0
    %8778 = vmatmul.mubr.f32.gmra.mrb[0].mxu0 %v8711
    %v8779 = vpop.f32.mrb[0].mxu0
    %v8780 = vadd.f32 %v8708, %v8779
    %v8781 = vpop.f32.mrb[0].mxu0
    %8782 = vdwg.mxu0
    %vm8783 = vcmask 58368
    %8784 = vst.msk [vmem:[#allocation2] sm:$0x3] %vm8783, %v8780
    // Predicated region
    $region66: #{encoder_forward.1} parent=1 // pred_check
      _
    $region67: #{encoder_forward.1} parent=1 // pred_check_branch
      %8786 = sbr.rel (0) target = $region69
    $region68: #{encoder_forward.1} parent=1 // pred_region
      %s8788 = ssub.s32 32, 32
      %8789 = vsyncadd [#allocation3], %s8788
      %s8791 = sshll.u32 [#allocation2], 4
      %s8792 = int_to_ptr.vmem [resolvable:$true] %s8791
      %8794 = dma.vmem_to_hbm [thread:$0]  %s8792, 32, %s16, [#allocation3]
    $region69: #{encoder_forward.1} parent=1 // pred_fallthru
      _
    // Predicated region
    $region70: #{encoder_forward.1} parent=1 // pred_check
      _
    $region71: #{encoder_forward.1} parent=1 // pred_check_branch
      %8796 = sbr.rel (0) target = $region73
    $region72: #{encoder_forward.1} parent=1 // pred_region
      %8797 = dma.done [#allocation3], 32
    $region73: #{encoder_forward.1} parent=1 // pred_fallthru
      _
    %8798 = vsyncpa [#allocation3], 1

</llo_original>
